<compile_context>
chip_gen: v6e
topology: v6e:2x2x1
jax: 0.10.0
libtpu: 0.0.40
codegen_flags: <defaults>
</compile_context>

<pallas_src>
import functools

import jax
import jax.numpy as jnp
from jax import lax
from jax.experimental import pallas as pl
from jax.experimental.pallas import tpu as pltpu

EPS = 1e-5
LRELU_SLOPE = 0.2
LANE = 128          # channel padding target (lane-dense)
ROW_TILE = 256      # row tile for 1x1-conv / BN-apply kernels (multiple of 8)
EXPANSION = 4

_PARALLEL1 = pltpu.CompilerParams(dimension_semantics=("parallel",))


def _round_up(x, m):
    return (x + m - 1) // m * m


def _row_plan(rows):
    tm = min(ROW_TILE, _round_up(rows, 8))
    return tm, _round_up(rows, tm)


def _pad_axis(a, axis, target):
    if a.shape[axis] == target:
        return a
    widths = [(0, 0)] * a.ndim
    widths[axis] = (0, target - a.shape[axis])
    return jnp.pad(a, widths)


def _lrelu(x):
    return jnp.where(x >= 0, x, LRELU_SLOPE * x)


# ----------------------------- kernels -----------------------------

def _matmul_stats_kernel(x_ref, w_ref, y_ref, ps_ref):
    # x: (TM, Cin) bf16, w: (Cin, Cout) bf16 -> y: (TM, Cout) bf16,
    # ps: (1, 2, Cout) f32 per-tile [sum, sum-of-squares] BN partials.
    y = jnp.dot(x_ref[...], w_ref[...], preferred_element_type=jnp.float32)
    y_ref[...] = y.astype(y_ref.dtype)
    ps_ref[0, 0:1, :] = jnp.sum(y, axis=0, keepdims=True)
    ps_ref[0, 1:2, :] = jnp.sum(y * y, axis=0, keepdims=True)


def _bn_act_kernel(y_ref, sc_ref, sh_ref, o_ref):
    a = y_ref[...].astype(jnp.float32) * sc_ref[...] + sh_ref[...]
    o_ref[...] = _lrelu(a).astype(o_ref.dtype)


def _bn_act_matmul_stats_kernel(y_ref, sc_ref, sh_ref, w_ref, yn_ref, ps_ref,
                                *, tm, rows_valid):
    # Fused: apply previous conv's BN + LeakyReLU, then the next 1x1 conv + BN partials.
    a = _lrelu(y_ref[...].astype(jnp.float32) * sc_ref[...] + sh_ref[...])
    row = pl.program_id(0) * tm + lax.broadcasted_iota(jnp.int32, a.shape, 0)
    a = jnp.where(row < rows_valid, a, 0.0)   # padded rows must not pollute BN stats
    y = jnp.dot(a.astype(w_ref.dtype), w_ref[...], preferred_element_type=jnp.float32)
    yn_ref[...] = y.astype(yn_ref.dtype)
    ps_ref[0, 0:1, :] = jnp.sum(y, axis=0, keepdims=True)
    ps_ref[0, 1:2, :] = jnp.sum(y * y, axis=0, keepdims=True)


def _bn_act_add_relu_kernel(y_ref, sc_ref, sh_ref, id_ref, o_ref):
    a = _lrelu(y_ref[...].astype(jnp.float32) * sc_ref[...] + sh_ref[...])
    o_ref[...] = jnp.maximum(a + id_ref[...].astype(jnp.float32), 0.0)


def _conv3x3_stats_kernel(xp_ref, w_ref, y_ref, ps_ref, *, stride, h_out, w_out):
    # xp: (stride*stride, Hpp, Wpp, Cin) bf16 -- one sample, spatially zero-padded and
    #     phase-decomposed so every 3x3 tap is a unit-stride slice (no im2col in HBM).
    # w : (9, Cin, Cout) bf16, tap-major.
    acc = None
    for kh in range(3):
        for kw in range(3):
            phase = (kh % stride) * stride + (kw % stride)
            dh, dw = kh // stride, kw // stride
            win = xp_ref[phase, dh:dh + h_out, dw:dw + w_out, :]
            win = win.reshape(h_out * w_out, win.shape[-1])
            part = jnp.dot(win, w_ref[kh * 3 + kw],
                           preferred_element_type=jnp.float32)
            acc = part if acc is None else acc + part
    y_ref[0] = acc.astype(y_ref.dtype)
    ps_ref[0, 0:1, :] = jnp.sum(acc, axis=0, keepdims=True)
    ps_ref[0, 1:2, :] = jnp.sum(acc * acc, axis=0, keepdims=True)


# ----------------------------- pallas_call wrappers -----------------------------

def _pcall_matmul_stats(x2d, w, tm):
    rows_pad, cinp = x2d.shape
    coutp = w.shape[1]
    nt = rows_pad // tm
    return pl.pallas_call(
        _matmul_stats_kernel,
        grid=(nt,),
        in_specs=[pl.BlockSpec((tm, cinp), lambda i: (i, 0)),
                  pl.BlockSpec((cinp, coutp), lambda i: (0, 0))],
        out_specs=[pl.BlockSpec((tm, coutp), lambda i: (i, 0)),
                   pl.BlockSpec((1, 2, coutp), lambda i: (i, 0, 0))],
        out_shape=[jax.ShapeDtypeStruct((rows_pad, coutp), jnp.bfloat16),
                   jax.ShapeDtypeStruct((nt, 2, coutp), jnp.float32)],
        compiler_params=_PARALLEL1,
    )(x2d, w)


def _pcall_bn_act(y, scale, shift, tm):
    rows_pad, cp = y.shape
    nt = rows_pad // tm
    return pl.pallas_call(
        _bn_act_kernel,
        grid=(nt,),
        in_specs=[pl.BlockSpec((tm, cp), lambda i: (i, 0)),
                  pl.BlockSpec((1, cp), lambda i: (0, 0)),
                  pl.BlockSpec((1, cp), lambda i: (0, 0))],
        out_specs=pl.BlockSpec((tm, cp), lambda i: (i, 0)),
        out_shape=jax.ShapeDtypeStruct((rows_pad, cp), jnp.bfloat16),
        compiler_params=_PARALLEL1,
    )(y, scale, shift)


def _pcall_bn_act_matmul_stats(y_prev, scale, shift, w, tm, rows_valid):
    rows_pad, cp = y_prev.shape
    cnp = w.shape[1]
    nt = rows_pad // tm
    kern = functools.partial(_bn_act_matmul_stats_kernel, tm=tm, rows_valid=rows_valid)
    return pl.pallas_call(
        kern,
        grid=(nt,),
        in_specs=[pl.BlockSpec((tm, cp), lambda i: (i, 0)),
                  pl.BlockSpec((1, cp), lambda i: (0, 0)),
                  pl.BlockSpec((1, cp), lambda i: (0, 0)),
                  pl.BlockSpec((cp, cnp), lambda i: (0, 0))],
        out_specs=[pl.BlockSpec((tm, cnp), lambda i: (i, 0)),
                   pl.BlockSpec((1, 2, cnp), lambda i: (i, 0, 0))],
        out_shape=[jax.ShapeDtypeStruct((rows_pad, cnp), jnp.bfloat16),
                   jax.ShapeDtypeStruct((nt, 2, cnp), jnp.float32)],
        compiler_params=_PARALLEL1,
    )(y_prev, scale, shift, w)


def _pcall_bn_act_add_relu(y, scale, shift, ident, tm):
    rows_pad, cp = y.shape
    nt = rows_pad // tm
    return pl.pallas_call(
        _bn_act_add_relu_kernel,
        grid=(nt,),
        in_specs=[pl.BlockSpec((tm, cp), lambda i: (i, 0)),
                  pl.BlockSpec((1, cp), lambda i: (0, 0)),
                  pl.BlockSpec((1, cp), lambda i: (0, 0)),
                  pl.BlockSpec((tm, cp), lambda i: (i, 0))],
        out_specs=pl.BlockSpec((tm, cp), lambda i: (i, 0)),
        out_shape=jax.ShapeDtypeStruct((rows_pad, cp), jnp.float32),
        compiler_params=_PARALLEL1,
    )(y, scale, shift, ident)


def _pcall_conv3x3_stats(x_phase, w9, n, stride, h_out, w_out):
    _, hpp, wpp, cinp = x_phase.shape
    coutp = w9.shape[-1]
    s2 = stride * stride
    kern = functools.partial(_conv3x3_stats_kernel, stride=stride,
                             h_out=h_out, w_out=w_out)
    return pl.pallas_call(
        kern,
        grid=(n,),
        in_specs=[pl.BlockSpec((s2, hpp, wpp, cinp), lambda i: (i, 0, 0, 0)),
                  pl.BlockSpec((9, cinp, coutp), lambda i: (0, 0, 0))],
        out_specs=[pl.BlockSpec((1, h_out * w_out, coutp), lambda i: (i, 0, 0)),
                   pl.BlockSpec((1, 2, coutp), lambda i: (i, 0, 0))],
        out_shape=[jax.ShapeDtypeStruct((n, h_out * w_out, coutp), jnp.bfloat16),
                   jax.ShapeDtypeStruct((n, 2, coutp), jnp.float32)],
        compiler_params=_PARALLEL1,
    )(x_phase, w9)


# ----------------------------- glue -----------------------------

def _stats_to_scale_shift(psums, gamma_p, beta_p, count):
    # psums: (num_tiles, 2, Cp) partial [sum, sumsq] -> per-channel BN scale/shift.
    tot = jnp.sum(psums, axis=0)
    mean = tot[0] / count
    var = jnp.maximum(tot[1] / count - mean * mean, 0.0)
    scale = gamma_p * lax.rsqrt(var + EPS)
    shift = beta_p - mean * scale
    return scale.reshape(1, -1), shift.reshape(1, -1)


def _pad_weight_1x1(w, cin_p, cout_p):
    wp = jnp.zeros((cin_p, cout_p), jnp.float32)
    wp = wp.at[:w.shape[0], :w.shape[1]].set(w)
    return wp.astype(jnp.bfloat16)


def _pad_weight_3x3(w_hwio, cin_p, cout_p):
    ci, co = w_hwio.shape[2], w_hwio.shape[3]
    wp = jnp.zeros((3, 3, cin_p, cout_p), jnp.float32)
    wp = wp.at[:, :, :ci, :co].set(w_hwio)
    return wp.reshape(9, cin_p, cout_p).astype(jnp.bfloat16)


def _pad_vec(v, cp):
    return _pad_axis(v.astype(jnp.float32), 0, cp)


def _phase_decompose(a, stride, h_out, w_out):
    # a: (N, H, W, C) bf16. Returns (N*stride*stride, Hpp, Wpp, C); plane (p, q) is the
    # zero-padded input subsampled at offsets (p, q), so tap (kh, kw) of the strided 3x3
    # conv becomes a unit-stride slice of plane (kh % s, kw % s) at (kh//s, kw//s).
    n, _, _, c = a.shape
    xp = jnp.pad(a, ((0, 0), (1, 1), (1, 1), (0, 0)))
    hpp = h_out + 2 // stride
    wpp = w_out + 2 // stride
    planes = []
    for p in range(stride):
        for q in range(stride):
            pln = xp[:, p::stride, q::stride, :][:, :hpp, :wpp, :]
            pln = jnp.pad(pln, ((0, 0), (0, hpp - pln.shape[1]),
                                (0, wpp - pln.shape[2]), (0, 0)))
            planes.append(pln)
    stacked = jnp.stack(planes, axis=1)          # (N, s*s, Hpp, Wpp, C)
    return stacked.reshape(n * stride * stride, hpp, wpp, c)


def _conv1x1_bn_lrelu(x2d, w, gamma, beta, rows_true, cin_p, cout_p):
    # x2d: (rows_true, Cin) float. Returns (rows_pad, cout_p) bf16 activation.
    tm, rows_pad = _row_plan(rows_true)
    xq = _pad_axis(x2d, 1, cin_p)
    xq = _pad_axis(xq, 0, rows_pad).astype(jnp.bfloat16)
    wp = _pad_weight_1x1(w, cin_p, cout_p)
    y, ps = _pcall_matmul_stats(xq, wp, tm)
    sc, sh = _stats_to_scale_shift(ps, _pad_vec(gamma, cout_p), _pad_vec(beta, cout_p),
                                   rows_true)
    return _pcall_bn_act(y, sc, sh, tm)


# ----------------------------- Bottleneck_BN forward -----------------------------

def bottleneck_bn(x_nchw, p, stride=1, first=False):
    # TODO(synk): BatchNorm2d running_mean/running_var momentum updates (training-state
    # buffers) are not modeled; the train-mode forward output does not depend on them.
    x = jnp.transpose(x_nchw, (0, 2, 3, 1)).astype(jnp.float32)   # NHWC
    n, h, w, cin = x.shape
    planes = p["w1"].shape[1]
    cout3 = planes * EXPANSION

    cin_p = _round_up(cin, LANE)
    c1_p = _round_up(planes, LANE)
    c3_p = _round_up(cout3, LANE)

    # conv1: 1x1, inplanes -> planes
    rows1 = n * h * w
    a1 = _conv1x1_bn_lrelu(x.reshape(rows1, cin), p["w1"], p["g1"], p["bt1"],
                           rows1, cin_p, c1_p)
    a1 = a1[:rows1].reshape(n, h, w, c1_p)

    # conv2: 3x3, planes -> planes, stride s, pad 1 (no im2col in HBM)
    h2 = (h - 1) // stride + 1
    w2 = (w - 1) // stride + 1
    x_phase = _phase_decompose(a1, stride, h2, w2)
    w2k = _pad_weight_3x3(p["w2"], c1_p, c1_p)
    y2, ps2 = _pcall_conv3x3_stats(x_phase, w2k, n, stride, h2, w2)
    rows2 = n * h2 * w2
    sc2, sh2 = _stats_to_scale_shift(ps2, _pad_vec(p["g2"], c1_p),
                                     _pad_vec(p["bt2"], c1_p), rows2)

    # fused: conv2 BN/LReLU apply + conv3 (1x1, planes -> planes*4) + BN partials
    tm2, rows2_pad = _row_plan(rows2)
    y2f = _pad_axis(y2.reshape(rows2, c1_p), 0, rows2_pad)
    w3 = _pad_weight_1x1(p["w3"], c1_p, c3_p)
    y3, ps3 = _pcall_bn_act_matmul_stats(y2f, sc2, sh2, w3, tm2, rows2)
    sc3, sh3 = _stats_to_scale_shift(ps3, _pad_vec(p["g3"], c3_p),
                                     _pad_vec(p["bt3"], c3_p), rows2)

    # identity / downsample (1x1 conv-BN-LReLU, stride s)
    if stride != 1 or first:
        xs = x[:, ::stride, ::stride, :]
        rows_d = n * xs.shape[1] * xs.shape[2]
        ident = _conv1x1_bn_lrelu(xs.reshape(rows_d, cin), p["w_ds"],
                                  p["g_ds"], p["bt_ds"], rows_d, cin_p, c3_p)
    else:
        # as in the PyTorch module, this path requires inplanes == planes*4
        ident = _pad_axis(x.reshape(rows1, cin), 1, c3_p)
        ident = _pad_axis(ident, 0, rows2_pad).astype(jnp.bfloat16)

    # conv3 BN/LReLU apply + residual add + final ReLU
    out = _pcall_bn_act_add_relu(y3, sc3, sh3, ident, tm2)
    out = out[:rows2, :cout3].reshape(n, h2, w2, cout3)
    return jnp.transpose(out, (0, 3, 1, 2))


# ----------------------------- pure-JAX reference -----------------------------

def _ref_conv_bn_lrelu(x, w_hwio, b, g, beta, stride=1, pad=0):
    y = lax.conv_general_dilated(
        x, w_hwio, window_strides=(stride, stride),
        padding=[(pad, pad), (pad, pad)],
        dimension_numbers=("NHWC", "HWIO", "NHWC"))
    y = y + b.reshape(1, 1, 1, -1)
    mean = jnp.mean(y, axis=(0, 1, 2), keepdims=True)
    var = jnp.mean((y - mean) ** 2, axis=(0, 1, 2), keepdims=True)
    yn = (y - mean) * lax.rsqrt(var + EPS) * g.reshape(1, 1, 1, -1) + beta.reshape(1, 1, 1, -1)
    return jnp.where(yn >= 0, yn, LRELU_SLOPE * yn)


def ref_bottleneck_bn(x_nchw, p, stride=1, first=False):
    x = jnp.transpose(x_nchw, (0, 2, 3, 1))
    ci, pl1 = p["w1"].shape
    out = _ref_conv_bn_lrelu(x, p["w1"].reshape(1, 1, ci, pl1), p["b1"], p["g1"], p["bt1"])
    out = _ref_conv_bn_lrelu(out, p["w2"], p["b2"], p["g2"], p["bt2"], stride=stride, pad=1)
    c2, c3 = p["w3"].shape
    out = _ref_conv_bn_lrelu(out, p["w3"].reshape(1, 1, c2, c3), p["b3"], p["g3"], p["bt3"])
    if stride != 1 or first:
        cd, c3d = p["w_ds"].shape
        identity = _ref_conv_bn_lrelu(x, p["w_ds"].reshape(1, 1, cd, c3d),
                                      p["b_ds"], p["g_ds"], p["bt_ds"], stride=stride)
    else:
        identity = x
    out = jnp.maximum(out + identity, 0.0)
    return jnp.transpose(out, (0, 3, 1, 2))


def init_params(key, inplanes, planes):
    ks = jax.random.split(key, 16)
    f32 = jnp.float32
    co3 = planes * EXPANSION
    return {
        "w1": jax.random.normal(ks[0], (inplanes, planes), f32) * 0.1,
        "b1": jax.random.normal(ks[1], (planes,), f32) * 0.1,
        "g1": 1.0 + 0.1 * jax.random.normal(ks[2], (planes,), f32),
        "bt1": 0.1 * jax.random.normal(ks[3], (planes,), f32),
        "w2": jax.random.normal(ks[4], (3, 3, planes, planes), f32) * 0.1,
        "b2": jax.random.normal(ks[5], (planes,), f32) * 0.1,
        "g2": 1.0 + 0.1 * jax.random.normal(ks[6], (planes,), f32),
        "bt2": 0.1 * jax.random.normal(ks[7], (planes,), f32),
        "w3": jax.random.normal(ks[8], (planes, co3), f32) * 0.1,
        "b3": jax.random.normal(ks[9], (co3,), f32) * 0.1,
        "g3": 1.0 + 0.1 * jax.random.normal(ks[10], (co3,), f32),
        "bt3": 0.1 * jax.random.normal(ks[11], (co3,), f32),
        "w_ds": jax.random.normal(ks[12], (inplanes, co3), f32) * 0.1,
        "b_ds": jax.random.normal(ks[13], (co3,), f32) * 0.1,
        "g_ds": 1.0 + 0.1 * jax.random.normal(ks[14], (co3,), f32),
        "bt_ds": 0.1 * jax.random.normal(ks[15], (co3,), f32),
    }


if __name__ == "__main__":
    key = jax.random.PRNGKey(0)
    kp, kx = jax.random.split(key)
    planes = 4

    fwd = jax.jit(bottleneck_bn, static_argnames=("stride", "first"))

    # Config A: stride=1, first=False -> raw-x identity path (needs inplanes == planes*4).
    inpl_a = planes * EXPANSION
    params_a = init_params(kp, inpl_a, planes)
    x_a = jax.random.normal(kx, (2, inpl_a, 16, 16), jnp.float32)
    out_a = jax.block_until_ready(fwd(x_a, params_a, stride=1, first=False))
    ref_a = ref_bottleneck_bn(x_a, params_a, stride=1, first=False)
    assert out_a.shape == ref_a.shape, (out_a.shape, ref_a.shape)
    max_a = float(jnp.max(jnp.abs(out_a - ref_a)))
    mean_a = float(jnp.mean(jnp.abs(out_a - ref_a)))
    assert max_a < 1.5e-1 and mean_a < 1.5e-2, (max_a, mean_a)

    # Config B: stride=2 -> strided 3x3 conv + downsample branch.
    inpl_b = 4
    params_b = init_params(kp, inpl_b, planes)
    x_b = jax.random.normal(kx, (2, inpl_b, 16, 16), jnp.float32)
    out_b = jax.block_until_ready(fwd(x_b, params_b, stride=2, first=False))
    ref_b = ref_bottleneck_bn(x_b, params_b, stride=2, first=False)
    assert out_b.shape == ref_b.shape, (out_b.shape, ref_b.shape)
    max_b = float(jnp.max(jnp.abs(out_b - ref_b)))
    mean_b = float(jnp.mean(jnp.abs(out_b - ref_b)))
    assert max_b < 1.5e-1 and mean_b < 1.5e-2, (max_b, mean_b)

    print("KERNEL_OK")
</pallas_src>

<mosaic_0001>
module attributes {stable_mosaic.version = 11 : i64} {
  func.func @_matmul_stats_kernel(%arg0: i32, %arg1: memref<256x128xbf16, #tpu.memory_space<vmem>>, %arg2: memref<128x128xbf16, #tpu.memory_space<vmem>>, %arg3: memref<256x128xbf16, #tpu.memory_space<vmem>>, %arg4: memref<1x2x128xf32, #tpu.memory_space<vmem>>) attributes {dimension_semantics = [#tpu.dimension_semantics<parallel>], iteration_bounds = array<i64: 2>, scalar_prefetch = 0 : i64, scratch_operands = 0 : i64, tpu.core_type = #tpu.core_type<tc>, window_params = [{transform_indices = @transform_0, window_bounds = array<i64: 256, 128>}, {pipeline_mode = #tpu.pipeline_mode<synchronous>, transform_indices = @transform_1, window_bounds = array<i64: 128, 128>}, {transform_indices = @transform_2, window_bounds = array<i64: 256, 128>}, {transform_indices = @transform_3, window_bounds = array<i64: 1, 2, 128>}]} {
    %c0 = arith.constant 0 : index
    %c0_0 = arith.constant 0 : index
    %0 = vector.load %arg1[%c0, %c0_0] : memref<256x128xbf16, #tpu.memory_space<vmem>>, vector<256x128xbf16>
    %c0_1 = arith.constant 0 : index
    %c0_2 = arith.constant 0 : index
    %1 = vector.load %arg2[%c0_1, %c0_2] : memref<128x128xbf16, #tpu.memory_space<vmem>>, vector<128x128xbf16>
    %cst = arith.constant dense<0.000000e+00> : vector<256x128xf32>
    %2 = tpu.matmul %0, %1, %cst {dimension_numbers = #tpu.dot_dimension_numbers<[1], [0], [0], [1], [0, 0, 1, 1], [], []>} : vector<256x128xbf16>, vector<128x128xbf16>, vector<256x128xf32> -> vector<256x128xf32>
    %3 = arith.truncf %2 : vector<256x128xf32> to vector<256x128xbf16>
    %c0_3 = arith.constant 0 : index
    %c0_4 = arith.constant 0 : index
    %4 = vector.load %arg3[%c0_3, %c0_4] : memref<256x128xbf16, #tpu.memory_space<vmem>>, vector<256x128xbf16>
    tpu.vector_store %arg3[%c0_3, %c0_4], %3 {strides = array<i32>} : memref<256x128xbf16, #tpu.memory_space<vmem>>, vector<256x128xbf16>,
    %cst_5 = arith.constant dense<0.000000e+00> : vector<128xf32>
    %5 = vector.multi_reduction <add>, %2, %cst_5 [0] : vector<256x128xf32> to vector<128xf32>
    %6 = vector.shape_cast %5 : vector<128xf32> to vector<1x128xf32>
    %c0_6 = arith.constant 0 : index
    %c0_7 = arith.constant 0 : index
    %c0_8 = arith.constant 0 : index
    %7 = vector.load %arg4[%c0_6, %c0_7, %c0_8] : memref<1x2x128xf32, #tpu.memory_space<vmem>>, vector<1x1x128xf32>
    %8 = vector.shape_cast %7 : vector<1x1x128xf32> to vector<1x128xf32>
    %9 = vector.shape_cast %6 : vector<1x128xf32> to vector<1x1x128xf32>
    tpu.vector_store %arg4[%c0_6, %c0_7, %c0_8], %9 {strides = array<i32>} : memref<1x2x128xf32, #tpu.memory_space<vmem>>, vector<1x1x128xf32>,
    %10 = arith.mulf %2, %2 : vector<256x128xf32>
    %cst_9 = arith.constant dense<0.000000e+00> : vector<128xf32>
    %11 = vector.multi_reduction <add>, %10, %cst_9 [0] : vector<256x128xf32> to vector<128xf32>
    %12 = vector.shape_cast %11 : vector<128xf32> to vector<1x128xf32>
    %c0_10 = arith.constant 0 : index
    %c1 = arith.constant 1 : index
    %c0_11 = arith.constant 0 : index
    %13 = vector.load %arg4[%c0_10, %c1, %c0_11] : memref<1x2x128xf32, #tpu.memory_space<vmem>>, vector<1x1x128xf32>
    %14 = vector.shape_cast %13 : vector<1x1x128xf32> to vector<1x128xf32>
    %15 = vector.shape_cast %12 : vector<1x128xf32> to vector<1x1x128xf32>
    tpu.vector_store %arg4[%c0_10, %c1, %c0_11], %15 {strides = array<i32>} : memref<1x2x128xf32, #tpu.memory_space<vmem>>, vector<1x1x128xf32>,
    return
  }
  func.func @transform_0(%arg0: i32) -> (i32, i32) {
    %c0_i32 = arith.constant 0 : i32
    %c0_i32_0 = arith.constant 0 : i32
    return %arg0, %c0_i32 : i32, i32
  }
  func.func @transform_1(%arg0: i32) -> (i32, i32) {
    %c0_i32 = arith.constant 0 : i32
    %c0_i32_0 = arith.constant 0 : i32
    %c0_i32_1 = arith.constant 0 : i32
    return %c0_i32, %c0_i32_0 : i32, i32
  }
  func.func @transform_2(%arg0: i32) -> (i32, i32) {
    %c0_i32 = arith.constant 0 : i32
    %c0_i32_0 = arith.constant 0 : i32
    return %arg0, %c0_i32 : i32, i32
  }
  func.func @transform_3(%arg0: i32) -> (i32, i32, i32) {
    %c0_i32 = arith.constant 0 : i32
    %c0_i32_0 = arith.constant 0 : i32
    %c0_i32_1 = arith.constant 0 : i32
    return %arg0, %c0_i32, %c0_i32_0 : i32, i32, i32
  }
}

module attributes {stable_mosaic.version = 11 : i64} {
  func.func @_bn_act_kernel(%arg0: i32, %arg1: memref<256x128xbf16, #tpu.memory_space<vmem>>, %arg2: memref<1x128xf32, #tpu.memory_space<vmem>>, %arg3: memref<1x128xf32, #tpu.memory_space<vmem>>, %arg4: memref<256x128xbf16, #tpu.memory_space<vmem>>) attributes {dimension_semantics = [#tpu.dimension_semantics<parallel>], iteration_bounds = array<i64: 2>, scalar_prefetch = 0 : i64, scratch_operands = 0 : i64, tpu.core_type = #tpu.core_type<tc>, window_params = [{transform_indices = @transform_0, window_bounds = array<i64: 256, 128>}, {pipeline_mode = #tpu.pipeline_mode<synchronous>, transform_indices = @transform_1, window_bounds = array<i64: 1, 128>}, {pipeline_mode = #tpu.pipeline_mode<synchronous>, transform_indices = @transform_2, window_bounds = array<i64: 1, 128>}, {transform_indices = @transform_3, window_bounds = array<i64: 256, 128>}]} {
    %c0 = arith.constant 0 : index
    %c0_0 = arith.constant 0 : index
    %0 = vector.load %arg1[%c0, %c0_0] : memref<256x128xbf16, #tpu.memory_space<vmem>>, vector<256x128xbf16>
    %1 = arith.extf %0 : vector<256x128xbf16> to vector<256x128xf32>
    %c0_1 = arith.constant 0 : index
    %c0_2 = arith.constant 0 : index
    %2 = vector.load %arg2[%c0_1, %c0_2] : memref<1x128xf32, #tpu.memory_space<vmem>>, vector<1x128xf32>
    %3 = vector.broadcast %2 : vector<1x128xf32> to vector<256x128xf32>
    %4 = arith.mulf %1, %3 : vector<256x128xf32>
    %c0_3 = arith.constant 0 : index
    %c0_4 = arith.constant 0 : index
    %5 = vector.load %arg3[%c0_3, %c0_4] : memref<1x128xf32, #tpu.memory_space<vmem>>, vector<1x128xf32>
    %6 = vector.broadcast %5 : vector<1x128xf32> to vector<256x128xf32>
    %7 = arith.addf %4, %6 : vector<256x128xf32>
    %cst = arith.constant 0.000000e+00 : f32
    %8 = vector.broadcast %cst : f32 to vector<256x128xf32>
    %9 = arith.cmpf oge, %7, %8 : vector<256x128xf32>
    %cst_5 = arith.constant 2.000000e-01 : f32
    %10 = vector.broadcast %cst_5 : f32 to vector<256x128xf32>
    %11 = arith.mulf %10, %7 : vector<256x128xf32>
    %12 = arith.select %9, %7, %11 : vector<256x128xi1>, vector<256x128xf32>
    %13 = arith.truncf %12 : vector<256x128xf32> to vector<256x128xbf16>
    %c0_6 = arith.constant 0 : index
    %c0_7 = arith.constant 0 : index
    %14 = vector.load %arg4[%c0_6, %c0_7] : memref<256x128xbf16, #tpu.memory_space<vmem>>, vector<256x128xbf16>
    tpu.vector_store %arg4[%c0_6, %c0_7], %13 {strides = array<i32>} : memref<256x128xbf16, #tpu.memory_space<vmem>>, vector<256x128xbf16>,
    return
  }
  func.func @transform_0(%arg0: i32) -> (i32, i32) {
    %c0_i32 = arith.constant 0 : i32
    %c0_i32_0 = arith.constant 0 : i32
    return %arg0, %c0_i32 : i32, i32
  }
  func.func @transform_1(%arg0: i32) -> (i32, i32) {
    %c0_i32 = arith.constant 0 : i32
    %c0_i32_0 = arith.constant 0 : i32
    %c0_i32_1 = arith.constant 0 : i32
    return %c0_i32, %c0_i32_0 : i32, i32
  }
  func.func @transform_2(%arg0: i32) -> (i32, i32) {
    %c0_i32 = arith.constant 0 : i32
    %c0_i32_0 = arith.constant 0 : i32
    %c0_i32_1 = arith.constant 0 : i32
    return %c0_i32, %c0_i32_0 : i32, i32
  }
  func.func @transform_3(%arg0: i32) -> (i32, i32) {
    %c0_i32 = arith.constant 0 : i32
    %c0_i32_0 = arith.constant 0 : i32
    return %arg0, %c0_i32 : i32, i32
  }
}

module attributes {stable_mosaic.version = 11 : i64} {
  func.func @_conv3x3_stats_kernel(%arg0: i32, %arg1: memref<1x18x18x128xbf16, #tpu.memory_space<vmem>>, %arg2: memref<9x128x128xbf16, #tpu.memory_space<vmem>>, %arg3: memref<1x256x128xbf16, #tpu.memory_space<vmem>>, %arg4: memref<1x2x128xf32, #tpu.memory_space<vmem>>) attributes {dimension_semantics = [#tpu.dimension_semantics<parallel>], iteration_bounds = array<i64: 2>, scalar_prefetch = 0 : i64, scratch_operands = 0 : i64, tpu.core_type = #tpu.core_type<tc>, window_params = [{transform_indices = @transform_0, window_bounds = array<i64: 1, 18, 18, 128>}, {pipeline_mode = #tpu.pipeline_mode<synchronous>, transform_indices = @transform_1, window_bounds = array<i64: 9, 128, 128>}, {transform_indices = @transform_2, window_bounds = array<i64: 1, 256, 128>}, {transform_indices = @transform_3, window_bounds = array<i64: 1, 2, 128>}]} {
    %c0 = arith.constant 0 : index
    %c0_0 = arith.constant 0 : index
    %c0_1 = arith.constant 0 : index
    %c0_2 = arith.constant 0 : index
    %0 = vector.load %arg1[%c0, %c0_0, %c0_1, %c0_2] : memref<1x18x18x128xbf16, #tpu.memory_space<vmem>>, vector<1x16x16x128xbf16>
    %1 = vector.shape_cast %0 : vector<1x16x16x128xbf16> to vector<16x16x128xbf16>
    %2 = vector.shape_cast %1 : vector<16x16x128xbf16> to vector<256x128xbf16>
    %c0_3 = arith.constant 0 : index
    %c0_4 = arith.constant 0 : index
    %c0_5 = arith.constant 0 : index
    %3 = vector.load %arg2[%c0_3, %c0_4, %c0_5] : memref<9x128x128xbf16, #tpu.memory_space<vmem>>, vector<1x128x128xbf16>
    %4 = vector.shape_cast %3 : vector<1x128x128xbf16> to vector<128x128xbf16>
    %cst = arith.constant dense<0.000000e+00> : vector<256x128xf32>
    %5 = tpu.matmul %2, %4, %cst {dimension_numbers = #tpu.dot_dimension_numbers<[1], [0], [0], [1], [0, 0, 1, 1], [], []>} : vector<256x128xbf16>, vector<128x128xbf16>, vector<256x128xf32> -> vector<256x128xf32>
    %c0_6 = arith.constant 0 : index
    %c0_7 = arith.constant 0 : index
    %c1 = arith.constant 1 : index
    %c0_8 = arith.constant 0 : index
    %6 = vector.load %arg1[%c0_6, %c0_7, %c1, %c0_8] : memref<1x18x18x128xbf16, #tpu.memory_space<vmem>>, vector<1x16x16x128xbf16>
    %7 = vector.shape_cast %6 : vector<1x16x16x128xbf16> to vector<16x16x128xbf16>
    %8 = vector.shape_cast %7 : vector<16x16x128xbf16> to vector<256x128xbf16>
    %c1_9 = arith.constant 1 : index
    %c0_10 = arith.constant 0 : index
    %c0_11 = arith.constant 0 : index
    %9 = vector.load %arg2[%c1_9, %c0_10, %c0_11] : memref<9x128x128xbf16, #tpu.memory_space<vmem>>, vector<1x128x128xbf16>
    %10 = vector.shape_cast %9 : vector<1x128x128xbf16> to vector<128x128xbf16>
    %cst_12 = arith.constant dense<0.000000e+00> : vector<256x128xf32>
    %11 = tpu.matmul %8, %10, %cst_12 {dimension_numbers = #tpu.dot_dimension_numbers<[1], [0], [0], [1], [0, 0, 1, 1], [], []>} : vector<256x128xbf16>, vector<128x128xbf16>, vector<256x128xf32> -> vector<256x128xf32>
    %12 = arith.addf %5, %11 : vector<256x128xf32>
    %c0_13 = arith.constant 0 : index
    %c0_14 = arith.constant 0 : index
    %c2 = arith.constant 2 : index
    %c0_15 = arith.constant 0 : index
    %13 = vector.load %arg1[%c0_13, %c0_14, %c2, %c0_15] : memref<1x18x18x128xbf16, #tpu.memory_space<vmem>>, vector<1x16x16x128xbf16>
    %14 = vector.shape_cast %13 : vector<1x16x16x128xbf16> to vector<16x16x128xbf16>
    %15 = vector.shape_cast %14 : vector<16x16x128xbf16> to vector<256x128xbf16>
    %c2_16 = arith.constant 2 : index
    %c0_17 = arith.constant 0 : index
    %c0_18 = arith.constant 0 : index
    %16 = vector.load %arg2[%c2_16, %c0_17, %c0_18] : memref<9x128x128xbf16, #tpu.memory_space<vmem>>, vector<1x128x128xbf16>
    %17 = vector.shape_cast %16 : vector<1x128x128xbf16> to vector<128x128xbf16>
    %cst_19 = arith.constant dense<0.000000e+00> : vector<256x128xf32>
    %18 = tpu.matmul %15, %17, %cst_19 {dimension_numbers = #tpu.dot_dimension_numbers<[1], [0], [0], [1], [0, 0, 1, 1], [], []>} : vector<256x128xbf16>, vector<128x128xbf16>, vector<256x128xf32> -> vector<256x128xf32>
    %19 = arith.addf %12, %18 : vector<256x128xf32>
    %c0_20 = arith.constant 0 : index
    %c1_21 = arith.constant 1 : index
    %c0_22 = arith.constant 0 : index
    %c0_23 = arith.constant 0 : index
    %20 = vector.load %arg1[%c0_20, %c1_21, %c0_22, %c0_23] : memref<1x18x18x128xbf16, #tpu.memory_space<vmem>>, vector<1x16x16x128xbf16>
    %21 = vector.shape_cast %20 : vector<1x16x16x128xbf16> to vector<16x16x128xbf16>
    %22 = vector.shape_cast %21 : vector<16x16x128xbf16> to vector<256x128xbf16>
    %c3 = arith.constant 3 : index
    %c0_24 = arith.constant 0 : index
    %c0_25 = arith.constant 0 : index
    %23 = vector.load %arg2[%c3, %c0_24, %c0_25] : memref<9x128x128xbf16, #tpu.memory_space<vmem>>, vector<1x128x128xbf16>
    %24 = vector.shape_cast %23 : vector<1x128x128xbf16> to vector<128x128xbf16>
    %cst_26 = arith.constant dense<0.000000e+00> : vector<256x128xf32>
    %25 = tpu.matmul %22, %24, %cst_26 {dimension_numbers = #tpu.dot_dimension_numbers<[1], [0], [0], [1], [0, 0, 1, 1], [], []>} : vector<256x128xbf16>, vector<128x128xbf16>, vector<256x128xf32> -> vector<256x128xf32>
    %26 = arith.addf %19, %25 : vector<256x128xf32>
    %c0_27 = arith.constant 0 : index
    %c1_28 = arith.constant 1 : index
    %c1_29 = arith.constant 1 : index
    %c0_30 = arith.constant 0 : index
    %27 = vector.load %arg1[%c0_27, %c1_28, %c1_29, %c0_30] : memref<1x18x18x128xbf16, #tpu.memory_space<vmem>>, vector<1x16x16x128xbf16>
    %28 = vector.shape_cast %27 : vector<1x16x16x128xbf16> to vector<16x16x128xbf16>
    %29 = vector.shape_cast %28 : vector<16x16x128xbf16> to vector<256x128xbf16>
    %c4 = arith.constant 4 : index
    %c0_31 = arith.constant 0 : index
    %c0_32 = arith.constant 0 : index
    %30 = vector.load %arg2[%c4, %c0_31, %c0_32] : memref<9x128x128xbf16, #tpu.memory_space<vmem>>, vector<1x128x128xbf16>
    %31 = vector.shape_cast %30 : vector<1x128x128xbf16> to vector<128x128xbf16>
    %cst_33 = arith.constant dense<0.000000e+00> : vector<256x128xf32>
    %32 = tpu.matmul %29, %31, %cst_33 {dimension_numbers = #tpu.dot_dimension_numbers<[1], [0], [0], [1], [0, 0, 1, 1], [], []>} : vector<256x128xbf16>, vector<128x128xbf16>, vector<256x128xf32> -> vector<256x128xf32>
    %33 = arith.addf %26, %32 : vector<256x128xf32>
    %c0_34 = arith.constant 0 : index
    %c1_35 = arith.constant 1 : index
    %c2_36 = arith.constant 2 : index
    %c0_37 = arith.constant 0 : index
    %34 = vector.load %arg1[%c0_34, %c1_35, %c2_36, %c0_37] : memref<1x18x18x128xbf16, #tpu.memory_space<vmem>>, vector<1x16x16x128xbf16>
    %35 = vector.shape_cast %34 : vector<1x16x16x128xbf16> to vector<16x16x128xbf16>
    %36 = vector.shape_cast %35 : vector<16x16x128xbf16> to vector<256x128xbf16>
    %c5 = arith.constant 5 : index
    %c0_38 = arith.constant 0 : index
    %c0_39 = arith.constant 0 : index
    %37 = vector.load %arg2[%c5, %c0_38, %c0_39] : memref<9x128x128xbf16, #tpu.memory_space<vmem>>, vector<1x128x128xbf16>
    %38 = vector.shape_cast %37 : vector<1x128x128xbf16> to vector<128x128xbf16>
    %cst_40 = arith.constant dense<0.000000e+00> : vector<256x128xf32>
    %39 = tpu.matmul %36, %38, %cst_40 {dimension_numbers = #tpu.dot_dimension_numbers<[1], [0], [0], [1], [0, 0, 1, 1], [], []>} : vector<256x128xbf16>, vector<128x128xbf16>, vector<256x128xf32> -> vector<256x128xf32>
    %40 = arith.addf %33, %39 : vector<256x128xf32>
    %c0_41 = arith.constant 0 : index
    %c2_42 = arith.constant 2 : index
    %c0_43 = arith.constant 0 : index
    %c0_44 = arith.constant 0 : index
    %41 = vector.load %arg1[%c0_41, %c2_42, %c0_43, %c0_44] : memref<1x18x18x128xbf16, #tpu.memory_space<vmem>>, vector<1x16x16x128xbf16>
    %42 = vector.shape_cast %41 : vector<1x16x16x128xbf16> to vector<16x16x128xbf16>
    %43 = vector.shape_cast %42 : vector<16x16x128xbf16> to vector<256x128xbf16>
    %c6 = arith.constant 6 : index
    %c0_45 = arith.constant 0 : index
    %c0_46 = arith.constant 0 : index
    %44 = vector.load %arg2[%c6, %c0_45, %c0_46] : memref<9x128x128xbf16, #tpu.memory_space<vmem>>, vector<1x128x128xbf16>
    %45 = vector.shape_cast %44 : vector<1x128x128xbf16> to vector<128x128xbf16>
    %cst_47 = arith.constant dense<0.000000e+00> : vector<256x128xf32>
    %46 = tpu.matmul %43, %45, %cst_47 {dimension_numbers = #tpu.dot_dimension_numbers<[1], [0], [0], [1], [0, 0, 1, 1], [], []>} : vector<256x128xbf16>, vector<128x128xbf16>, vector<256x128xf32> -> vector<256x128xf32>
    %47 = arith.addf %40, %46 : vector<256x128xf32>
    %c0_48 = arith.constant 0 : index
    %c2_49 = arith.constant 2 : index
    %c1_50 = arith.constant 1 : index
    %c0_51 = arith.constant 0 : index
    %48 = vector.load %arg1[%c0_48, %c2_49, %c1_50, %c0_51] : memref<1x18x18x128xbf16, #tpu.memory_space<vmem>>, vector<1x16x16x128xbf16>
    %49 = vector.shape_cast %48 : vector<1x16x16x128xbf16> to vector<16x16x128xbf16>
    %50 = vector.shape_cast %49 : vector<16x16x128xbf16> to vector<256x128xbf16>
    %c7 = arith.constant 7 : index
    %c0_52 = arith.constant 0 : index
    %c0_53 = arith.constant 0 : index
    %51 = vector.load %arg2[%c7, %c0_52, %c0_53] : memref<9x128x128xbf16, #tpu.memory_space<vmem>>, vector<1x128x128xbf16>
    %52 = vector.shape_cast %51 : vector<1x128x128xbf16> to vector<128x128xbf16>
    %cst_54 = arith.constant dense<0.000000e+00> : vector<256x128xf32>
    %53 = tpu.matmul %50, %52, %cst_54 {dimension_numbers = #tpu.dot_dimension_numbers<[1], [0], [0], [1], [0, 0, 1, 1], [], []>} : vector<256x128xbf16>, vector<128x128xbf16>, vector<256x128xf32> -> vector<256x128xf32>
    %54 = arith.addf %47, %53 : vector<256x128xf32>
    %c0_55 = arith.constant 0 : index
    %c2_56 = arith.constant 2 : index
    %c2_57 = arith.constant 2 : index
    %c0_58 = arith.constant 0 : index
    %55 = vector.load %arg1[%c0_55, %c2_56, %c2_57, %c0_58] : memref<1x18x18x128xbf16, #tpu.memory_space<vmem>>, vector<1x16x16x128xbf16>
    %56 = vector.shape_cast %55 : vector<1x16x16x128xbf16> to vector<16x16x128xbf16>
    %57 = vector.shape_cast %56 : vector<16x16x128xbf16> to vector<256x128xbf16>
    %c8 = arith.constant 8 : index
    %c0_59 = arith.constant 0 : index
    %c0_60 = arith.constant 0 : index
    %58 = vector.load %arg2[%c8, %c0_59, %c0_60] : memref<9x128x128xbf16, #tpu.memory_space<vmem>>, vector<1x128x128xbf16>
    %59 = vector.shape_cast %58 : vector<1x128x128xbf16> to vector<128x128xbf16>
    %cst_61 = arith.constant dense<0.000000e+00> : vector<256x128xf32>
    %60 = tpu.matmul %57, %59, %cst_61 {dimension_numbers = #tpu.dot_dimension_numbers<[1], [0], [0], [1], [0, 0, 1, 1], [], []>} : vector<256x128xbf16>, vector<128x128xbf16>, vector<256x128xf32> -> vector<256x128xf32>
    %61 = arith.addf %54, %60 : vector<256x128xf32>
    %62 = arith.truncf %61 : vector<256x128xf32> to vector<256x128xbf16>
    %c0_62 = arith.constant 0 : index
    %c0_63 = arith.constant 0 : index
    %c0_64 = arith.constant 0 : index
    %63 = vector.load %arg3[%c0_62, %c0_63, %c0_64] : memref<1x256x128xbf16, #tpu.memory_space<vmem>>, vector<1x256x128xbf16>
    %64 = vector.shape_cast %63 : vector<1x256x128xbf16> to vector<256x128xbf16>
    %65 = vector.shape_cast %62 : vector<256x128xbf16> to vector<1x256x128xbf16>
    tpu.vector_store %arg3[%c0_62, %c0_63, %c0_64], %65 {strides = array<i32>} : memref<1x256x128xbf16, #tpu.memory_space<vmem>>, vector<1x256x128xbf16>,
    %cst_65 = arith.constant dense<0.000000e+00> : vector<128xf32>
    %66 = vector.multi_reduction <add>, %61, %cst_65 [0] : vector<256x128xf32> to vector<128xf32>
    %67 = vector.shape_cast %66 : vector<128xf32> to vector<1x128xf32>
    %c0_66 = arith.constant 0 : index
    %c0_67 = arith.constant 0 : index
    %c0_68 = arith.constant 0 : index
    %68 = vector.load %arg4[%c0_66, %c0_67, %c0_68] : memref<1x2x128xf32, #tpu.memory_space<vmem>>, vector<1x1x128xf32>
    %69 = vector.shape_cast %68 : vector<1x1x128xf32> to vector<1x128xf32>
    %70 = vector.shape_cast %67 : vector<1x128xf32> to vector<1x1x128xf32>
    tpu.vector_store %arg4[%c0_66, %c0_67, %c0_68], %70 {strides = array<i32>} : memref<1x2x128xf32, #tpu.memory_space<vmem>>, vector<1x1x128xf32>,
    %71 = arith.mulf %61, %61 : vector<256x128xf32>
    %cst_69 = arith.constant dense<0.000000e+00> : vector<128xf32>
    %72 = vector.multi_reduction <add>, %71, %cst_69 [0] : vector<256x128xf32> to vector<128xf32>
    %73 = vector.shape_cast %72 : vector<128xf32> to vector<1x128xf32>
    %c0_70 = arith.constant 0 : index
    %c1_71 = arith.constant 1 : index
    %c0_72 = arith.constant 0 : index
    %74 = vector.load %arg4[%c0_70, %c1_71, %c0_72] : memref<1x2x128xf32, #tpu.memory_space<vmem>>, vector<1x1x128xf32>
    %75 = vector.shape_cast %74 : vector<1x1x128xf32> to vector<1x128xf32>
    %76 = vector.shape_cast %73 : vector<1x128xf32> to vector<1x1x128xf32>
    tpu.vector_store %arg4[%c0_70, %c1_71, %c0_72], %76 {strides = array<i32>} : memref<1x2x128xf32, #tpu.memory_space<vmem>>, vector<1x1x128xf32>,
    return
  }
  func.func @transform_0(%arg0: i32) -> (i32, i32, i32, i32) {
    %c0_i32 = arith.constant 0 : i32
    %c0_i32_0 = arith.constant 0 : i32
    %c0_i32_1 = arith.constant 0 : i32
    %c0_i32_2 = arith.constant 0 : i32
    return %arg0, %c0_i32, %c0_i32_0, %c0_i32_1 : i32, i32, i32, i32
  }
  func.func @transform_1(%arg0: i32) -> (i32, i32, i32) {
    %c0_i32 = arith.constant 0 : i32
    %c0_i32_0 = arith.constant 0 : i32
    %c0_i32_1 = arith.constant 0 : i32
    %c0_i32_2 = arith.constant 0 : i32
    return %c0_i32, %c0_i32_0, %c0_i32_1 : i32, i32, i32
  }
  func.func @transform_2(%arg0: i32) -> (i32, i32, i32) {
    %c0_i32 = arith.constant 0 : i32
    %c0_i32_0 = arith.constant 0 : i32
    %c0_i32_1 = arith.constant 0 : i32
    return %arg0, %c0_i32, %c0_i32_0 : i32, i32, i32
  }
  func.func @transform_3(%arg0: i32) -> (i32, i32, i32) {
    %c0_i32 = arith.constant 0 : i32
    %c0_i32_0 = arith.constant 0 : i32
    %c0_i32_1 = arith.constant 0 : i32
    return %arg0, %c0_i32, %c0_i32_0 : i32, i32, i32
  }
}

module attributes {stable_mosaic.version = 11 : i64} {
  func.func @_bn_act_matmul_stats_kernel(%arg0: i32, %arg1: memref<256x128xbf16, #tpu.memory_space<vmem>>, %arg2: memref<1x128xf32, #tpu.memory_space<vmem>>, %arg3: memref<1x128xf32, #tpu.memory_space<vmem>>, %arg4: memref<128x128xbf16, #tpu.memory_space<vmem>>, %arg5: memref<256x128xbf16, #tpu.memory_space<vmem>>, %arg6: memref<1x2x128xf32, #tpu.memory_space<vmem>>) attributes {dimension_semantics = [#tpu.dimension_semantics<parallel>], iteration_bounds = array<i64: 2>, scalar_prefetch = 0 : i64, scratch_operands = 0 : i64, tpu.core_type = #tpu.core_type<tc>, window_params = [{transform_indices = @transform_0, window_bounds = array<i64: 256, 128>}, {pipeline_mode = #tpu.pipeline_mode<synchronous>, transform_indices = @transform_1, window_bounds = array<i64: 1, 128>}, {pipeline_mode = #tpu.pipeline_mode<synchronous>, transform_indices = @transform_2, window_bounds = array<i64: 1, 128>}, {pipeline_mode = #tpu.pipeline_mode<synchronous>, transform_indices = @transform_3, window_bounds = array<i64: 128, 128>}, {transform_indices = @transform_4, window_bounds = array<i64: 256, 128>}, {transform_indices = @transform_5, window_bounds = array<i64: 1, 2, 128>}]} {
    %c0 = arith.constant 0 : index
    %c0_0 = arith.constant 0 : index
    %0 = vector.load %arg1[%c0, %c0_0] : memref<256x128xbf16, #tpu.memory_space<vmem>>, vector<256x128xbf16>
    %1 = arith.extf %0 : vector<256x128xbf16> to vector<256x128xf32>
    %c0_1 = arith.constant 0 : index
    %c0_2 = arith.constant 0 : index
    %2 = vector.load %arg2[%c0_1, %c0_2] : memref<1x128xf32, #tpu.memory_space<vmem>>, vector<1x128xf32>
    %3 = vector.broadcast %2 : vector<1x128xf32> to vector<256x128xf32>
    %4 = arith.mulf %1, %3 : vector<256x128xf32>
    %c0_3 = arith.constant 0 : index
    %c0_4 = arith.constant 0 : index
    %5 = vector.load %arg3[%c0_3, %c0_4] : memref<1x128xf32, #tpu.memory_space<vmem>>, vector<1x128xf32>
    %6 = vector.broadcast %5 : vector<1x128xf32> to vector<256x128xf32>
    %7 = arith.addf %4, %6 : vector<256x128xf32>
    %cst = arith.constant 0.000000e+00 : f32
    %8 = vector.broadcast %cst : f32 to vector<256x128xf32>
    %9 = arith.cmpf oge, %7, %8 : vector<256x128xf32>
    %cst_5 = arith.constant 2.000000e-01 : f32
    %10 = vector.broadcast %cst_5 : f32 to vector<256x128xf32>
    %11 = arith.mulf %10, %7 : vector<256x128xf32>
    %12 = arith.select %9, %7, %11 : vector<256x128xi1>, vector<256x128xf32>
    %c256_i32 = arith.constant 256 : i32
    %13 = arith.muli %arg0, %c256_i32 : i32
    %14 = tpu.iota {dimensions = array<i32: 0>} : vector<256x128xi32>
    %15 = vector.broadcast %13 : i32 to vector<256x128xi32>
    %16 = arith.addi %15, %14 : vector<256x128xi32>
    %c512_i32 = arith.constant 512 : i32
    %17 = vector.broadcast %c512_i32 : i32 to vector<256x128xi32>
    %18 = arith.cmpi slt, %16, %17 : vector<256x128xi32>
    %cst_6 = arith.constant 0.000000e+00 : f32
    %19 = vector.broadcast %cst_6 : f32 to vector<256x128xf32>
    %20 = arith.select %18, %12, %19 : vector<256x128xi1>, vector<256x128xf32>
    %21 = arith.truncf %20 : vector<256x128xf32> to vector<256x128xbf16>
    %c0_7 = arith.constant 0 : index
    %c0_8 = arith.constant 0 : index
    %22 = vector.load %arg4[%c0_7, %c0_8] : memref<128x128xbf16, #tpu.memory_space<vmem>>, vector<128x128xbf16>
    %cst_9 = arith.constant dense<0.000000e+00> : vector<256x128xf32>
    %23 = tpu.matmul %21, %22, %cst_9 {dimension_numbers = #tpu.dot_dimension_numbers<[1], [0], [0], [1], [0, 0, 1, 1], [], []>} : vector<256x128xbf16>, vector<128x128xbf16>, vector<256x128xf32> -> vector<256x128xf32>
    %24 = arith.truncf %23 : vector<256x128xf32> to vector<256x128xbf16>
    %c0_10 = arith.constant 0 : index
    %c0_11 = arith.constant 0 : index
    %25 = vector.load %arg5[%c0_10, %c0_11] : memref<256x128xbf16, #tpu.memory_space<vmem>>, vector<256x128xbf16>
    tpu.vector_store %arg5[%c0_10, %c0_11], %24 {strides = array<i32>} : memref<256x128xbf16, #tpu.memory_space<vmem>>, vector<256x128xbf16>,
    %cst_12 = arith.constant dense<0.000000e+00> : vector<128xf32>
    %26 = vector.multi_reduction <add>, %23, %cst_12 [0] : vector<256x128xf32> to vector<128xf32>
    %27 = vector.shape_cast %26 : vector<128xf32> to vector<1x128xf32>
    %c0_13 = arith.constant 0 : index
    %c0_14 = arith.constant 0 : index
    %c0_15 = arith.constant 0 : index
    %28 = vector.load %arg6[%c0_13, %c0_14, %c0_15] : memref<1x2x128xf32, #tpu.memory_space<vmem>>, vector<1x1x128xf32>
    %29 = vector.shape_cast %28 : vector<1x1x128xf32> to vector<1x128xf32>
    %30 = vector.shape_cast %27 : vector<1x128xf32> to vector<1x1x128xf32>
    tpu.vector_store %arg6[%c0_13, %c0_14, %c0_15], %30 {strides = array<i32>} : memref<1x2x128xf32, #tpu.memory_space<vmem>>, vector<1x1x128xf32>,
    %31 = arith.mulf %23, %23 : vector<256x128xf32>
    %cst_16 = arith.constant dense<0.000000e+00> : vector<128xf32>
    %32 = vector.multi_reduction <add>, %31, %cst_16 [0] : vector<256x128xf32> to vector<128xf32>
    %33 = vector.shape_cast %32 : vector<128xf32> to vector<1x128xf32>
    %c0_17 = arith.constant 0 : index
    %c1 = arith.constant 1 : index
    %c0_18 = arith.constant 0 : index
    %34 = vector.load %arg6[%c0_17, %c1, %c0_18] : memref<1x2x128xf32, #tpu.memory_space<vmem>>, vector<1x1x128xf32>
    %35 = vector.shape_cast %34 : vector<1x1x128xf32> to vector<1x128xf32>
    %36 = vector.shape_cast %33 : vector<1x128xf32> to vector<1x1x128xf32>
    tpu.vector_store %arg6[%c0_17, %c1, %c0_18], %36 {strides = array<i32>} : memref<1x2x128xf32, #tpu.memory_space<vmem>>, vector<1x1x128xf32>,
    return
  }
  func.func @transform_0(%arg0: i32) -> (i32, i32) {
    %c0_i32 = arith.constant 0 : i32
    %c0_i32_0 = arith.constant 0 : i32
    return %arg0, %c0_i32 : i32, i32
  }
  func.func @transform_1(%arg0: i32) -> (i32, i32) {
    %c0_i32 = arith.constant 0 : i32
    %c0_i32_0 = arith.constant 0 : i32
    %c0_i32_1 = arith.constant 0 : i32
    return %c0_i32, %c0_i32_0 : i32, i32
  }
  func.func @transform_2(%arg0: i32) -> (i32, i32) {
    %c0_i32 = arith.constant 0 : i32
    %c0_i32_0 = arith.constant 0 : i32
    %c0_i32_1 = arith.constant 0 : i32
    return %c0_i32, %c0_i32_0 : i32, i32
  }
  func.func @transform_3(%arg0: i32) -> (i32, i32) {
    %c0_i32 = arith.constant 0 : i32
    %c0_i32_0 = arith.constant 0 : i32
    %c0_i32_1 = arith.constant 0 : i32
    return %c0_i32, %c0_i32_0 : i32, i32
  }
  func.func @transform_4(%arg0: i32) -> (i32, i32) {
    %c0_i32 = arith.constant 0 : i32
    %c0_i32_0 = arith.constant 0 : i32
    return %arg0, %c0_i32 : i32, i32
  }
  func.func @transform_5(%arg0: i32) -> (i32, i32, i32) {
    %c0_i32 = arith.constant 0 : i32
    %c0_i32_0 = arith.constant 0 : i32
    %c0_i32_1 = arith.constant 0 : i32
    return %arg0, %c0_i32, %c0_i32_0 : i32, i32, i32
  }
}

module attributes {stable_mosaic.version = 11 : i64} {
  func.func @_bn_act_add_relu_kernel(%arg0: i32, %arg1: memref<256x128xbf16, #tpu.memory_space<vmem>>, %arg2: memref<1x128xf32, #tpu.memory_space<vmem>>, %arg3: memref<1x128xf32, #tpu.memory_space<vmem>>, %arg4: memref<256x128xbf16, #tpu.memory_space<vmem>>, %arg5: memref<256x128xf32, #tpu.memory_space<vmem>>) attributes {dimension_semantics = [#tpu.dimension_semantics<parallel>], iteration_bounds = array<i64: 2>, scalar_prefetch = 0 : i64, scratch_operands = 0 : i64, tpu.core_type = #tpu.core_type<tc>, window_params = [{transform_indices = @transform_0, window_bounds = array<i64: 256, 128>}, {pipeline_mode = #tpu.pipeline_mode<synchronous>, transform_indices = @transform_1, window_bounds = array<i64: 1, 128>}, {pipeline_mode = #tpu.pipeline_mode<synchronous>, transform_indices = @transform_2, window_bounds = array<i64: 1, 128>}, {transform_indices = @transform_3, window_bounds = array<i64: 256, 128>}, {transform_indices = @transform_4, window_bounds = array<i64: 256, 128>}]} {
    %c0 = arith.constant 0 : index
    %c0_0 = arith.constant 0 : index
    %0 = vector.load %arg1[%c0, %c0_0] : memref<256x128xbf16, #tpu.memory_space<vmem>>, vector<256x128xbf16>
    %1 = arith.extf %0 : vector<256x128xbf16> to vector<256x128xf32>
    %c0_1 = arith.constant 0 : index
    %c0_2 = arith.constant 0 : index
    %2 = vector.load %arg2[%c0_1, %c0_2] : memref<1x128xf32, #tpu.memory_space<vmem>>, vector<1x128xf32>
    %3 = vector.broadcast %2 : vector<1x128xf32> to vector<256x128xf32>
    %4 = arith.mulf %1, %3 : vector<256x128xf32>
    %c0_3 = arith.constant 0 : index
    %c0_4 = arith.constant 0 : index
    %5 = vector.load %arg3[%c0_3, %c0_4] : memref<1x128xf32, #tpu.memory_space<vmem>>, vector<1x128xf32>
    %6 = vector.broadcast %5 : vector<1x128xf32> to vector<256x128xf32>
    %7 = arith.addf %4, %6 : vector<256x128xf32>
    %cst = arith.constant 0.000000e+00 : f32
    %8 = vector.broadcast %cst : f32 to vector<256x128xf32>
    %9 = arith.cmpf oge, %7, %8 : vector<256x128xf32>
    %cst_5 = arith.constant 2.000000e-01 : f32
    %10 = vector.broadcast %cst_5 : f32 to vector<256x128xf32>
    %11 = arith.mulf %10, %7 : vector<256x128xf32>
    %12 = arith.select %9, %7, %11 : vector<256x128xi1>, vector<256x128xf32>
    %c0_6 = arith.constant 0 : index
    %c0_7 = arith.constant 0 : index
    %13 = vector.load %arg4[%c0_6, %c0_7] : memref<256x128xbf16, #tpu.memory_space<vmem>>, vector<256x128xbf16>
    %14 = arith.extf %13 : vector<256x128xbf16> to vector<256x128xf32>
    %15 = arith.addf %12, %14 : vector<256x128xf32>
    %cst_8 = arith.constant 0.000000e+00 : f32
    %16 = vector.broadcast %cst_8 : f32 to vector<256x128xf32>
    %17 = arith.maximumf %15, %16 : vector<256x128xf32>
    %c0_9 = arith.constant 0 : index
    %c0_10 = arith.constant 0 : index
    %18 = vector.load %arg5[%c0_9, %c0_10] : memref<256x128xf32, #tpu.memory_space<vmem>>, vector<256x128xf32>
    tpu.vector_store %arg5[%c0_9, %c0_10], %17 {strides = array<i32>} : memref<256x128xf32, #tpu.memory_space<vmem>>, vector<256x128xf32>,
    return
  }
  func.func @transform_0(%arg0: i32) -> (i32, i32) {
    %c0_i32 = arith.constant 0 : i32
    %c0_i32_0 = arith.constant 0 : i32
    return %arg0, %c0_i32 : i32, i32
  }
  func.func @transform_1(%arg0: i32) -> (i32, i32) {
    %c0_i32 = arith.constant 0 : i32
    %c0_i32_0 = arith.constant 0 : i32
    %c0_i32_1 = arith.constant 0 : i32
    return %c0_i32, %c0_i32_0 : i32, i32
  }
  func.func @transform_2(%arg0: i32) -> (i32, i32) {
    %c0_i32 = arith.constant 0 : i32
    %c0_i32_0 = arith.constant 0 : i32
    %c0_i32_1 = arith.constant 0 : i32
    return %c0_i32, %c0_i32_0 : i32, i32
  }
  func.func @transform_3(%arg0: i32) -> (i32, i32) {
    %c0_i32 = arith.constant 0 : i32
    %c0_i32_0 = arith.constant 0 : i32
    return %arg0, %c0_i32 : i32, i32
  }
  func.func @transform_4(%arg0: i32) -> (i32, i32) {
    %c0_i32 = arith.constant 0 : i32
    %c0_i32_0 = arith.constant 0 : i32
    return %arg0, %c0_i32 : i32, i32
  }
}

</mosaic_0001>

<llo_original>
// kernel: bottleneck_bn.6
$region0: #{bottleneck_bn.6}
  #allocation0 [shape = 'u32[]', space=smem, size = 0x4, offset = 0x4, fixed_abs, tag = 'smem constant byte address 0x4 - core index']
  #allocation1 [shape = 'u32[144,128]{1,0:T(1,128)}', space=vmem, size = 0x12000, scoped, tag = 'internal scratch']
  %s0 = inlined_call_operand.vmem [shape: bf16[512,128], index: 0, kind: input, shape index: {}]
  %s1 = inlined_call_operand.vmem [shape: f32[1,128], index: 1, kind: input, shape index: {}]
  %s2 = inlined_call_operand.vmem [shape: f32[1,128], index: 2, kind: input, shape index: {}]
  %s3 = inlined_call_operand.vmem [shape: bf16[512,128], index: 3, kind: output, shape index: {}]
  %s4 = sld [smem:[#allocation0]]
  $region45: #{bottleneck_bn.6} parent=0
    _
  %s6 = ssub.s32 1, %s4
  %s7 = scalar_select 0, %s6, %s4
  loop: start=0, step=1, limit=4
  $region2: #{bottleneck_bn.6} parent=0 // loop_pre_header
    _
  $region3: #{bottleneck_bn.6} parent=0 // loop_header
    %s9 = sphi 0, %s13
    %p10 = scmp.ge.s32.totalorder %s9, 4
    %s19 = sphi 0, %s21
    %s22 = sphi 0, %s19
    %s23 = sphi 0, %s22
    %s39 = sphi 0, %s23
    %s43 = sphi 0, %s43
    %s45 = sphi 0, %s43
    %s46 = sphi 0, %s45
    %s60 = sphi 0, %s46
    %s64 = sphi 0, %s64
    %s66 = sphi 0, %s64
    %s67 = sphi 0, %s66
    %s81 = sphi 0, %s67
    %s87 = sphi 0, %s89
    %s90 = sphi 0, %s87
    %s91 = sphi 0, %s90
    %s107 = sphi 0, %s91
  $region4: #{bottleneck_bn.6} parent=0 // loop_header_branch
    %12 = sbr.rel (%p10) target = $region8
  $region5: #{bottleneck_bn.6} parent=0 // loop_body
    %s14 = ssub.s32 %s9, 1
    %s15 = ssub.s32 %s9, 2
    %s16 = sadd.s32 %s9, 1
    %s17 = ssub.s32 %s9, %s16
    %p18 = scmp.eq.s32.totalorder %s17, 0
    %s20 = sadd.s32 %s19, 1
    %s21 = scalar_select %p18, %s19, %s20
    %p24 = pneg %p18
    %p25 = scmp.eq.s32.totalorder %s9, 1
    %p26 = por %p24, %p25
    %p27 = scmp.ne.s32.totalorder %s19, %s22
    %p28 = scmp.eq.s32.totalorder %s9, 0
    %p29 = por %p27, %p28
    %p30 = scmp.ne.s32.totalorder %s19, %s22
    %p31 = scmp.eq.s32.totalorder %s14, 1
    %p32 = por %p30, %p31
    %p33 = scmp.ne.s32.totalorder %s22, %s23
    %p34 = scmp.eq.s32.totalorder %s14, 0
    %p35 = por %p33, %p34
    %p36 = scmp.ne.s32.totalorder %s22, %s23
    %p37 = scmp.eq.s32.totalorder %s15, 1
    %p38 = por %p36, %p37
    %p40 = scmp.ne.s32.totalorder %s23, %s39
    %p41 = scmp.eq.s32.totalorder %s15, 0
    %p42 = por %p40, %p41
    %s44 = sadd.s32 %s43, 1
    %p47 = scmp.eq.s32.totalorder %s9, 1
    %p48 = scmp.ne.s32.totalorder %s43, %s45
    %p49 = scmp.eq.s32.totalorder %s9, 0
    %p50 = por %p48, %p49
    %p51 = scmp.ne.s32.totalorder %s43, %s45
    %p52 = scmp.eq.s32.totalorder %s14, 1
    %p53 = por %p51, %p52
    %p54 = scmp.ne.s32.totalorder %s45, %s46
    %p55 = scmp.eq.s32.totalorder %s14, 0
    %p56 = por %p54, %p55
    %p57 = scmp.ne.s32.totalorder %s45, %s46
    %p58 = scmp.eq.s32.totalorder %s15, 1
    %p59 = por %p57, %p58
    %p61 = scmp.ne.s32.totalorder %s46, %s60
    %p62 = scmp.eq.s32.totalorder %s15, 0
    %p63 = por %p61, %p62
    %s65 = sadd.s32 %s64, 1
    %p68 = scmp.eq.s32.totalorder %s9, 1
    %p69 = scmp.ne.s32.totalorder %s64, %s66
    %p70 = scmp.eq.s32.totalorder %s9, 0
    %p71 = por %p69, %p70
    %p72 = scmp.ne.s32.totalorder %s64, %s66
    %p73 = scmp.eq.s32.totalorder %s14, 1
    %p74 = por %p72, %p73
    %p75 = scmp.ne.s32.totalorder %s66, %s67
    %p76 = scmp.eq.s32.totalorder %s14, 0
    %p77 = por %p75, %p76
    %p78 = scmp.ne.s32.totalorder %s66, %s67
    %p79 = scmp.eq.s32.totalorder %s15, 1
    %p80 = por %p78, %p79
    %p82 = scmp.ne.s32.totalorder %s67, %s81
    %p83 = scmp.eq.s32.totalorder %s15, 0
    %p84 = por %p82, %p83
    %s85 = ssub.s32 %s9, %s16
    %p86 = scmp.eq.s32.totalorder %s85, 0
    %s88 = sadd.s32 %s87, 1
    %s89 = scalar_select %p86, %s87, %s88
    %p92 = pneg %p86
    %p93 = scmp.eq.s32.totalorder %s9, 1
    %p94 = por %p92, %p93
    %p95 = scmp.ne.s32.totalorder %s87, %s90
    %p96 = scmp.eq.s32.totalorder %s9, 0
    %p97 = por %p95, %p96
    %p98 = scmp.ne.s32.totalorder %s87, %s90
    %p99 = scmp.eq.s32.totalorder %s14, 1
    %p100 = por %p98, %p99
    %p101 = scmp.ne.s32.totalorder %s90, %s91
    %p102 = scmp.eq.s32.totalorder %s14, 0
    %p103 = por %p101, %p102
    %p104 = scmp.ne.s32.totalorder %s90, %s91
    %p105 = scmp.eq.s32.totalorder %s15, 1
    %p106 = por %p104, %p105
    %p108 = scmp.ne.s32.totalorder %s91, %s107
    %p109 = scmp.eq.s32.totalorder %s15, 0
    %p110 = por %p108, %p109
    %p111 = scmp.le.s32.totalorder 1, %s9
    %p112 = scmp.lt.s32.totalorder %s9, 3
    %p113 = pnand %p111, %p112
    %p114 = pneg %p113
    // Predicated region
    $region9: #{bottleneck_bn.6} parent=5 // pred_check
      _
    $region10: #{bottleneck_bn.6} parent=5 // pred_check_branch
      %116 = sbr.rel (%p113) target = $region12
    $region11: #{bottleneck_bn.6} parent=5 // pred_region
      %s117 = ssub.s32 %s9, 1
      // Predicated region
      $region13: #{bottleneck_bn.6} parent=11 // pred_check
        %p118 = pneg %p56
      $region14: #{bottleneck_bn.6} parent=11 // pred_check_branch
        %120 = sbr.rel (%p118) target = $region16
      $region15: #{bottleneck_bn.6} parent=11 // pred_region
        _
      $region16: #{bottleneck_bn.6} parent=11 // pred_fallthru
        _
      // Predicated region
      $region17: #{bottleneck_bn.6} parent=11 // pred_check
        %p121 = pneg %p77
      $region18: #{bottleneck_bn.6} parent=11 // pred_check_branch
        %123 = sbr.rel (%p121) target = $region20
      $region19: #{bottleneck_bn.6} parent=11 // pred_region
        _
      $region20: #{bottleneck_bn.6} parent=11 // pred_fallthru
        _
    $region12: #{bottleneck_bn.6} parent=5 // pred_fallthru
      _
    %p124 = scmp.lt.s32.totalorder %s9, 2
    // Predicated region
    $region21: #{bottleneck_bn.6} parent=5 // pred_check
      %p125 = pneg %p124
    $region22: #{bottleneck_bn.6} parent=5 // pred_check_branch
      %127 = sbr.rel (%p125) target = $region24
    $region23: #{bottleneck_bn.6} parent=5 // pred_region
      // Predicated region
      $region25: #{bottleneck_bn.6} parent=23 // pred_check
        %p128 = pneg %p29
      $region26: #{bottleneck_bn.6} parent=23 // pred_check_branch
        %130 = sbr.rel (%p128) target = $region28
      $region27: #{bottleneck_bn.6} parent=23 // pred_region
        %s131 = smul.u32 32, %s9
        %p132 = scmp.lt.s32.totalorder %s131, 63
        %s133 = scalar_select %p132, %s131, 63
        %s134 = smul.addr %s133, 4
        %s135 = scalar_lea.vmem %s0, %s134
        %s136 = smul.u32 32, %s9
      $region28: #{bottleneck_bn.6} parent=23 // pred_fallthru
        _
    $region24: #{bottleneck_bn.6} parent=5 // pred_fallthru
      _
    %p137 = scmp.le.s32.totalorder 1, %s9
    %p138 = scmp.lt.s32.totalorder %s9, 3
    %p139 = pnand %p137, %p138
    %p140 = pneg %p139
    // Predicated region
    $region29: #{bottleneck_bn.6} parent=5 // pred_check
      _
    $region30: #{bottleneck_bn.6} parent=5 // pred_check_branch
      %142 = sbr.rel (%p139) target = $region32
    $region31: #{bottleneck_bn.6} parent=5 // pred_region
      %s143 = ssub.s32 %s9, 1
      %s144 = smul.u32 32, %s14
      %p145 = scmp.lt.s32.totalorder %s144, 63
      %s146 = scalar_select %p145, %s144, 63
      %s147 = smul.addr %s146, 4
      %s148 = scalar_lea.vmem %s0, %s147
      %p149 = pneg %p35
      %p150 = pneg %p32
      %p151 = pneg %p56
      %p152 = pneg %p53
      %p153 = pneg %p77
      %p154 = pneg %p74
      %p155 = pneg %p103
      %p156 = pneg %p100
      %s157 = smul.u32 32, %s14
      %p158 = scmp.lt.s32.totalorder %s157, 63
      %s159 = scalar_select %p158, %s157, 63
      %s160 = smul.addr %s159, 4
      %s161 = scalar_lea.vmem %s3, %s160
      %s162 = smul.u32 32, %s14
      %p163 = scmp.lt.s32.totalorder %s162, 63
      %s164 = scalar_select %p163, %s162, 63
      %s165 = smul.addr %s164, 4
      %s166 = scalar_lea.vmem %s0, %s165
      %s167 = smul.u32 32, %s14
      %s168 = smul.u32 32, %s14
      %p169 = scmp.lt.s32.totalorder %s168, 63
      %s170 = scalar_select %p169, %s168, 63
      %s171 = smul.addr %s170, 4
      %s172 = scalar_lea.vmem %s3, %s171
      %s173 = smul.u32 32, %s14
      %v174 = vld [vmem:[%s166] sm:$0xf]
      %v175 = vld [vmem:[%s166 + $0x4] sm:$0xf]
      %v176 = vld [vmem:[%s166 + $0x8] sm:$0xf]
      %v177 = vld [vmem:[%s166 + $0xc] sm:$0xf]
      %v178 = vld [vmem:[%s166 + $0x10] sm:$0xf]
      %v179 = vld [vmem:[%s166 + $0x14] sm:$0xf]
      %v180 = vld [vmem:[%s166 + $0x18] sm:$0xf]
      %v181 = vld [vmem:[%s166 + $0x1c] sm:$0xf]
      %v182 = vld [vmem:[%s166 + $0x20] sm:$0xf]
      %v183 = vld [vmem:[%s166 + $0x24] sm:$0xf]
      %v184 = vld [vmem:[%s166 + $0x28] sm:$0xf]
      %v185 = vld [vmem:[%s166 + $0x2c] sm:$0xf]
      %v186 = vld [vmem:[%s166 + $0x30] sm:$0xf]
      %v187 = vld [vmem:[%s166 + $0x34] sm:$0xf]
      %v188 = vld [vmem:[%s166 + $0x38] sm:$0xf]
      %v189 = vld [vmem:[%s166 + $0x3c] sm:$0xf]
      %v190 = vld [vmem:[%s166 + $0x40] sm:$0xf]
      %v191 = vld [vmem:[%s166 + $0x44] sm:$0xf]
      %v192 = vld [vmem:[%s166 + $0x48] sm:$0xf]
      %v193 = vld [vmem:[%s166 + $0x4c] sm:$0xf]
      %v194 = vld [vmem:[%s166 + $0x50] sm:$0xf]
      %v195 = vld [vmem:[%s166 + $0x54] sm:$0xf]
      %v196 = vld [vmem:[%s166 + $0x58] sm:$0xf]
      %v197 = vld [vmem:[%s166 + $0x5c] sm:$0xf]
      %v198 = vld [vmem:[%s166 + $0x60] sm:$0xf]
      %v199 = vld [vmem:[%s166 + $0x64] sm:$0xf]
      %v200 = vld [vmem:[%s166 + $0x68] sm:$0xf]
      %v201 = vld [vmem:[%s166 + $0x6c] sm:$0xf]
      %v202 = vld [vmem:[%s166 + $0x70] sm:$0xf]
      %v203 = vld [vmem:[%s166 + $0x74] sm:$0xf]
      %v204 = vld [vmem:[%s166 + $0x78] sm:$0xf]
      %v205 = vld [vmem:[%s166 + $0x7c] sm:$0xf]
      %v206 = vunpack.c.l.bf16 %v174
      %v207 = vunpack.c.l.bf16 %v175
      %v208 = vunpack.c.l.bf16 %v176
      %v209 = vunpack.c.l.bf16 %v177
      %v210 = vunpack.c.l.bf16 %v178
      %v211 = vunpack.c.l.bf16 %v179
      %v212 = vunpack.c.l.bf16 %v180
      %v213 = vunpack.c.l.bf16 %v181
      %v214 = vunpack.c.l.bf16 %v182
      %v215 = vunpack.c.l.bf16 %v183
      %v216 = vunpack.c.l.bf16 %v184
      %v217 = vunpack.c.l.bf16 %v185
      %v218 = vunpack.c.l.bf16 %v186
      %v219 = vunpack.c.l.bf16 %v187
      %v220 = vunpack.c.l.bf16 %v188
      %v221 = vunpack.c.l.bf16 %v189
      %v222 = vunpack.c.l.bf16 %v190
      %v223 = vunpack.c.l.bf16 %v191
      %v224 = vunpack.c.l.bf16 %v192
      %v225 = vunpack.c.l.bf16 %v193
      %v226 = vunpack.c.l.bf16 %v194
      %v227 = vunpack.c.l.bf16 %v195
      %v228 = vunpack.c.l.bf16 %v196
      %v229 = vunpack.c.l.bf16 %v197
      %v230 = vunpack.c.l.bf16 %v198
      %v231 = vunpack.c.l.bf16 %v199
      %v232 = vunpack.c.l.bf16 %v200
      %v233 = vunpack.c.l.bf16 %v201
      %v234 = vunpack.c.l.bf16 %v202
      %v235 = vunpack.c.l.bf16 %v203
      %v236 = vunpack.c.l.bf16 %v204
      %v237 = vunpack.c.l.bf16 %v205
      %v238 = vld [vmem:[%s1] sm:$0x1]
      %v240 = vlaneseq
      %v241 = vshrl.u32 %v240, 7
      %v242 = vsub.s32 0, %v241
      %v243 = vrot.slane %v238, %v242
      %v245 = vmul.f32 %v206, %v243
      %v246 = vmul.f32 %v207, %v243
      %v247 = vmul.f32 %v208, %v243
      %v248 = vmul.f32 %v209, %v243
      %v249 = vmul.f32 %v210, %v243
      %v250 = vmul.f32 %v211, %v243
      %v251 = vmul.f32 %v212, %v243
      %v252 = vmul.f32 %v213, %v243
      %v253 = vmul.f32 %v214, %v243
      %v254 = vmul.f32 %v215, %v243
      %v255 = vmul.f32 %v216, %v243
      %v256 = vmul.f32 %v217, %v243
      %v257 = vmul.f32 %v218, %v243
      %v258 = vmul.f32 %v219, %v243
      %v259 = vmul.f32 %v220, %v243
      %v260 = vmul.f32 %v221, %v243
      %v261 = vmul.f32 %v222, %v243
      %v262 = vmul.f32 %v223, %v243
      %v263 = vmul.f32 %v224, %v243
      %v264 = vmul.f32 %v225, %v243
      %v265 = vmul.f32 %v226, %v243
      %v266 = vmul.f32 %v227, %v243
      %v267 = vmul.f32 %v228, %v243
      %v268 = vmul.f32 %v229, %v243
      %v269 = vmul.f32 %v230, %v243
      %v270 = vmul.f32 %v231, %v243
      %v271 = vmul.f32 %v232, %v243
      %v272 = vmul.f32 %v233, %v243
      %v273 = vmul.f32 %v234, %v243
      %v274 = vmul.f32 %v235, %v243
      %v275 = vmul.f32 %v236, %v243
      %v276 = vmul.f32 %v237, %v243
      %v277 = vld [vmem:[%s2] sm:$0x1]
      %v279 = vlaneseq
      %v280 = vshrl.u32 %v279, 7
      %v281 = vsub.s32 0, %v280
      %v282 = vrot.slane %v277, %v281
      %v284 = vadd.f32 %v245, %v282
      %v285 = vadd.f32 %v246, %v282
      %v286 = vadd.f32 %v247, %v282
      %v287 = vadd.f32 %v248, %v282
      %v288 = vadd.f32 %v249, %v282
      %v289 = vadd.f32 %v250, %v282
      %v290 = vadd.f32 %v251, %v282
      %v291 = vadd.f32 %v252, %v282
      %v292 = vadd.f32 %v253, %v282
      %v293 = vadd.f32 %v254, %v282
      %v294 = vadd.f32 %v255, %v282
      %v295 = vadd.f32 %v256, %v282
      %v296 = vadd.f32 %v257, %v282
      %v297 = vadd.f32 %v258, %v282
      %v298 = vadd.f32 %v259, %v282
      %v299 = vadd.f32 %v260, %v282
      %v300 = vadd.f32 %v261, %v282
      %v301 = vadd.f32 %v262, %v282
      %v302 = vadd.f32 %v263, %v282
      %v303 = vadd.f32 %v264, %v282
      %v304 = vadd.f32 %v265, %v282
      %v305 = vadd.f32 %v266, %v282
      %v306 = vadd.f32 %v267, %v282
      %v307 = vadd.f32 %v268, %v282
      %v308 = vadd.f32 %v269, %v282
      %v309 = vadd.f32 %v270, %v282
      %v310 = vadd.f32 %v271, %v282
      %v311 = vadd.f32 %v272, %v282
      %v312 = vadd.f32 %v273, %v282
      %v313 = vadd.f32 %v274, %v282
      %v314 = vadd.f32 %v275, %v282
      %v315 = vadd.f32 %v276, %v282
      %vm316 = vcmp.ge.f32.partialorder %v284, 0.0
      %vm317 = vcmp.ge.f32.partialorder %v285, 0.0
      %vm318 = vcmp.ge.f32.partialorder %v286, 0.0
      %vm319 = vcmp.ge.f32.partialorder %v287, 0.0
      %vm320 = vcmp.ge.f32.partialorder %v288, 0.0
      %vm321 = vcmp.ge.f32.partialorder %v289, 0.0
      %vm322 = vcmp.ge.f32.partialorder %v290, 0.0
      %vm323 = vcmp.ge.f32.partialorder %v291, 0.0
      %vm324 = vcmp.ge.f32.partialorder %v292, 0.0
      %vm325 = vcmp.ge.f32.partialorder %v293, 0.0
      %vm326 = vcmp.ge.f32.partialorder %v294, 0.0
      %vm327 = vcmp.ge.f32.partialorder %v295, 0.0
      %vm328 = vcmp.ge.f32.partialorder %v296, 0.0
      %vm329 = vcmp.ge.f32.partialorder %v297, 0.0
      %vm330 = vcmp.ge.f32.partialorder %v298, 0.0
      %vm331 = vcmp.ge.f32.partialorder %v299, 0.0
      %vm332 = vcmp.ge.f32.partialorder %v300, 0.0
      %vm333 = vcmp.ge.f32.partialorder %v301, 0.0
      %vm334 = vcmp.ge.f32.partialorder %v302, 0.0
      %vm335 = vcmp.ge.f32.partialorder %v303, 0.0
      %vm336 = vcmp.ge.f32.partialorder %v304, 0.0
      %vm337 = vcmp.ge.f32.partialorder %v305, 0.0
      %vm338 = vcmp.ge.f32.partialorder %v306, 0.0
      %vm339 = vcmp.ge.f32.partialorder %v307, 0.0
      %vm340 = vcmp.ge.f32.partialorder %v308, 0.0
      %vm341 = vcmp.ge.f32.partialorder %v309, 0.0
      %vm342 = vcmp.ge.f32.partialorder %v310, 0.0
      %vm343 = vcmp.ge.f32.partialorder %v311, 0.0
      %vm344 = vcmp.ge.f32.partialorder %v312, 0.0
      %vm345 = vcmp.ge.f32.partialorder %v313, 0.0
      %vm346 = vcmp.ge.f32.partialorder %v314, 0.0
      %vm347 = vcmp.ge.f32.partialorder %v315, 0.0
      %v348 = vmul.f32 %v284, 0.2
      %v349 = vmul.f32 %v285, 0.2
      %v350 = vmul.f32 %v286, 0.2
      %v351 = vmul.f32 %v287, 0.2
      %v352 = vmul.f32 %v288, 0.2
      %v353 = vmul.f32 %v289, 0.2
      %v354 = vmul.f32 %v290, 0.2
      %v355 = vmul.f32 %v291, 0.2
      %v356 = vmul.f32 %v292, 0.2
      %v357 = vmul.f32 %v293, 0.2
      %v358 = vmul.f32 %v294, 0.2
      %v359 = vmul.f32 %v295, 0.2
      %v360 = vmul.f32 %v296, 0.2
      %v361 = vmul.f32 %v297, 0.2
      %v362 = vmul.f32 %v298, 0.2
      %v363 = vmul.f32 %v299, 0.2
      %v364 = vmul.f32 %v300, 0.2
      %v365 = vmul.f32 %v301, 0.2
      %v366 = vmul.f32 %v302, 0.2
      %v367 = vmul.f32 %v303, 0.2
      %v368 = vmul.f32 %v304, 0.2
      %v369 = vmul.f32 %v305, 0.2
      %v370 = vmul.f32 %v306, 0.2
      %v371 = vmul.f32 %v307, 0.2
      %v372 = vmul.f32 %v308, 0.2
      %v373 = vmul.f32 %v309, 0.2
      %v374 = vmul.f32 %v310, 0.2
      %v375 = vmul.f32 %v311, 0.2
      %v376 = vmul.f32 %v312, 0.2
      %v377 = vmul.f32 %v313, 0.2
      %v378 = vmul.f32 %v314, 0.2
      %v379 = vmul.f32 %v315, 0.2
      %v380 = vsel %vm316, %v284, %v348
      %v381 = vsel %vm317, %v285, %v349
      %v382 = vsel %vm318, %v286, %v350
      %v383 = vsel %vm319, %v287, %v351
      %v384 = vsel %vm320, %v288, %v352
      %v385 = vsel %vm321, %v289, %v353
      %v386 = vsel %vm322, %v290, %v354
      %v387 = vsel %vm323, %v291, %v355
      %v388 = vsel %vm324, %v292, %v356
      %v389 = vsel %vm325, %v293, %v357
      %v390 = vsel %vm326, %v294, %v358
      %v391 = vsel %vm327, %v295, %v359
      %v392 = vsel %vm328, %v296, %v360
      %v393 = vsel %vm329, %v297, %v361
      %v394 = vsel %vm330, %v298, %v362
      %v395 = vsel %vm331, %v299, %v363
      %v396 = vsel %vm332, %v300, %v364
      %v397 = vsel %vm333, %v301, %v365
      %v398 = vsel %vm334, %v302, %v366
      %v399 = vsel %vm335, %v303, %v367
      %v400 = vsel %vm336, %v304, %v368
      %v401 = vsel %vm337, %v305, %v369
      %v402 = vsel %vm338, %v306, %v370
      %v403 = vsel %vm339, %v307, %v371
      %v404 = vsel %vm340, %v308, %v372
      %v405 = vsel %vm341, %v309, %v373
      %v406 = vsel %vm342, %v310, %v374
      %v407 = vsel %vm343, %v311, %v375
      %v408 = vsel %vm344, %v312, %v376
      %v409 = vsel %vm345, %v313, %v377
      %v410 = vsel %vm346, %v314, %v378
      %v411 = vsel %vm347, %v315, %v379
      %v412 = vpack.c.bf16 %v381, %v380
      %v413 = vpack.c.bf16 %v383, %v382
      %v414 = vpack.c.bf16 %v385, %v384
      %v415 = vpack.c.bf16 %v387, %v386
      %v416 = vpack.c.bf16 %v389, %v388
      %v417 = vpack.c.bf16 %v391, %v390
      %v418 = vpack.c.bf16 %v393, %v392
      %v419 = vpack.c.bf16 %v395, %v394
      %v420 = vpack.c.bf16 %v397, %v396
      %v421 = vpack.c.bf16 %v399, %v398
      %v422 = vpack.c.bf16 %v401, %v400
      %v423 = vpack.c.bf16 %v403, %v402
      %v424 = vpack.c.bf16 %v405, %v404
      %v425 = vpack.c.bf16 %v407, %v406
      %v426 = vpack.c.bf16 %v409, %v408
      %v427 = vpack.c.bf16 %v411, %v410
      %v444 = vunpack.c.l.b16 %v412
      %v445 = vunpack.c.h.b16 %v412
      %v446 = vunpack.c.l.b16 %v413
      %v447 = vunpack.c.h.b16 %v413
      %v448 = vunpack.c.l.b16 %v414
      %v449 = vunpack.c.h.b16 %v414
      %v450 = vunpack.c.l.b16 %v415
      %v451 = vunpack.c.h.b16 %v415
      %v452 = vunpack.c.l.b16 %v416
      %v453 = vunpack.c.h.b16 %v416
      %v454 = vunpack.c.l.b16 %v417
      %v455 = vunpack.c.h.b16 %v417
      %v456 = vunpack.c.l.b16 %v418
      %v457 = vunpack.c.h.b16 %v418
      %v458 = vunpack.c.l.b16 %v419
      %v459 = vunpack.c.h.b16 %v419
      %v460 = vunpack.c.l.b16 %v420
      %v461 = vunpack.c.h.b16 %v420
      %v462 = vunpack.c.l.b16 %v421
      %v463 = vunpack.c.h.b16 %v421
      %v464 = vunpack.c.l.b16 %v422
      %v465 = vunpack.c.h.b16 %v422
      %v466 = vunpack.c.l.b16 %v423
      %v467 = vunpack.c.h.b16 %v423
      %v468 = vunpack.c.l.b16 %v424
      %v469 = vunpack.c.h.b16 %v424
      %v470 = vunpack.c.l.b16 %v425
      %v471 = vunpack.c.h.b16 %v425
      %v472 = vunpack.c.l.b16 %v426
      %v473 = vunpack.c.h.b16 %v426
      %v474 = vunpack.c.l.b16 %v427
      %v475 = vunpack.c.h.b16 %v427
      %v476 = vpack.c.b16 %v444, %v444
      %v477 = vpack.c.b16 %v445, %v445
      %v478 = vpack.c.b16 %v446, %v446
      %v479 = vpack.c.b16 %v447, %v447
      %v480 = vpack.c.b16 %v448, %v448
      %v481 = vpack.c.b16 %v449, %v449
      %v482 = vpack.c.b16 %v450, %v450
      %v483 = vpack.c.b16 %v451, %v451
      %v484 = vpack.c.b16 %v452, %v452
      %v485 = vpack.c.b16 %v453, %v453
      %v486 = vpack.c.b16 %v454, %v454
      %v487 = vpack.c.b16 %v455, %v455
      %v488 = vpack.c.b16 %v456, %v456
      %v489 = vpack.c.b16 %v457, %v457
      %v490 = vpack.c.b16 %v458, %v458
      %v491 = vpack.c.b16 %v459, %v459
      %v492 = vpack.c.b16 %v460, %v460
      %v493 = vpack.c.b16 %v461, %v461
      %v494 = vpack.c.b16 %v462, %v462
      %v495 = vpack.c.b16 %v463, %v463
      %v496 = vpack.c.b16 %v464, %v464
      %v497 = vpack.c.b16 %v465, %v465
      %v498 = vpack.c.b16 %v466, %v466
      %v499 = vpack.c.b16 %v467, %v467
      %v500 = vpack.c.b16 %v468, %v468
      %v501 = vpack.c.b16 %v469, %v469
      %v502 = vpack.c.b16 %v470, %v470
      %v503 = vpack.c.b16 %v471, %v471
      %v504 = vpack.c.b16 %v472, %v472
      %v505 = vpack.c.b16 %v473, %v473
      %v506 = vpack.c.b16 %v474, %v474
      %v507 = vpack.c.b16 %v475, %v475
      %540 = vst [vmem:[%s172] sm:$0xf] %v476
      %541 = vst [vmem:[%s172 + $0x4] sm:$0xf] %v477
      %542 = vst [vmem:[%s172 + $0x8] sm:$0xf] %v478
      %543 = vst [vmem:[%s172 + $0xc] sm:$0xf] %v479
      %544 = vst [vmem:[%s172 + $0x10] sm:$0xf] %v480
      %545 = vst [vmem:[%s172 + $0x14] sm:$0xf] %v481
      %546 = vst [vmem:[%s172 + $0x18] sm:$0xf] %v482
      %547 = vst [vmem:[%s172 + $0x1c] sm:$0xf] %v483
      %548 = vst [vmem:[%s172 + $0x20] sm:$0xf] %v484
      %549 = vst [vmem:[%s172 + $0x24] sm:$0xf] %v485
      %550 = vst [vmem:[%s172 + $0x28] sm:$0xf] %v486
      %551 = vst [vmem:[%s172 + $0x2c] sm:$0xf] %v487
      %552 = vst [vmem:[%s172 + $0x30] sm:$0xf] %v488
      %553 = vst [vmem:[%s172 + $0x34] sm:$0xf] %v489
      %554 = vst [vmem:[%s172 + $0x38] sm:$0xf] %v490
      %555 = vst [vmem:[%s172 + $0x3c] sm:$0xf] %v491
      %556 = vst [vmem:[%s172 + $0x40] sm:$0xf] %v492
      %557 = vst [vmem:[%s172 + $0x44] sm:$0xf] %v493
      %558 = vst [vmem:[%s172 + $0x48] sm:$0xf] %v494
      %559 = vst [vmem:[%s172 + $0x4c] sm:$0xf] %v495
      %560 = vst [vmem:[%s172 + $0x50] sm:$0xf] %v496
      %561 = vst [vmem:[%s172 + $0x54] sm:$0xf] %v497
      %562 = vst [vmem:[%s172 + $0x58] sm:$0xf] %v498
      %563 = vst [vmem:[%s172 + $0x5c] sm:$0xf] %v499
      %564 = vst [vmem:[%s172 + $0x60] sm:$0xf] %v500
      %565 = vst [vmem:[%s172 + $0x64] sm:$0xf] %v501
      %566 = vst [vmem:[%s172 + $0x68] sm:$0xf] %v502
      %567 = vst [vmem:[%s172 + $0x6c] sm:$0xf] %v503
      %568 = vst [vmem:[%s172 + $0x70] sm:$0xf] %v504
      %569 = vst [vmem:[%s172 + $0x74] sm:$0xf] %v505
      %570 = vst [vmem:[%s172 + $0x78] sm:$0xf] %v506
      %571 = vst [vmem:[%s172 + $0x7c] sm:$0xf] %v507
      %s572 = smul.u32 32, %s14
      %p573 = scmp.lt.s32.totalorder %s572, 63
      %s574 = scalar_select %p573, %s572, 63
      %s575 = smul.addr %s574, 4
      %s576 = scalar_lea.vmem %s3, %s575
      // Predicated region
      $region33: #{bottleneck_bn.6} parent=31 // pred_check
        %p577 = pneg %p100
      $region34: #{bottleneck_bn.6} parent=31 // pred_check_branch
        %579 = sbr.rel (%p577) target = $region36
      $region35: #{bottleneck_bn.6} parent=31 // pred_region
        %s580 = smul.u32 32, %s14
      $region36: #{bottleneck_bn.6} parent=31 // pred_fallthru
        _
    $region32: #{bottleneck_bn.6} parent=5 // pred_fallthru
      _
    %p581 = scmp.le.s32.totalorder 2, %s9
    // Predicated region
    $region37: #{bottleneck_bn.6} parent=5 // pred_check
      %p582 = pneg %p581
    $region38: #{bottleneck_bn.6} parent=5 // pred_check_branch
      %584 = sbr.rel (%p582) target = $region40
    $region39: #{bottleneck_bn.6} parent=5 // pred_region
      %s585 = ssub.s32 %s9, 2
      // Predicated region
      $region41: #{bottleneck_bn.6} parent=39 // pred_check
        %p586 = pneg %p106
      $region42: #{bottleneck_bn.6} parent=39 // pred_check_branch
        %588 = sbr.rel (%p586) target = $region44
      $region43: #{bottleneck_bn.6} parent=39 // pred_region
        %s589 = smul.u32 32, %s15
        %p590 = scmp.lt.s32.totalorder %s589, 63
        %s591 = scalar_select %p590, %s589, 63
        %s592 = smul.addr %s591, 4
        %s593 = scalar_lea.vmem %s3, %s592
      $region44: #{bottleneck_bn.6} parent=39 // pred_fallthru
        _
    $region40: #{bottleneck_bn.6} parent=5 // pred_fallthru
      _
  $region6: #{bottleneck_bn.6} parent=0 // loop_footer
    %s13 = sadd.s32 1, %s9
  $region7: #{bottleneck_bn.6} parent=0 // loop_footer_branch
    %8 = sbr.rel target = $region3
  $region8: #{bottleneck_bn.6} parent=0 // loop_exit
    _

// kernel: bottleneck_bn.5
$region0: #{bottleneck_bn.5}
  #allocation0 [shape = 'u32[]', space=smem, size = 0x4, offset = 0x4, fixed_abs, tag = 'smem constant byte address 0x4 - core index']
  #allocation1 [shape = 'u32[144,128]{1,0:T(1,128)}', space=vmem, size = 0x12000, scoped, tag = 'internal scratch']
  %s0 = inlined_call_operand.vmem [shape: bf16[512,128], index: 0, kind: input, shape index: {}]
  %s1 = inlined_call_operand.vmem [shape: bf16[128,128], index: 1, kind: input, shape index: {}]
  %s2 = inlined_call_operand.vmem [shape: bf16[512,128], index: 2, kind: output, shape index: {0}]
  %s3 = inlined_call_operand.vmem [shape: f32[2,2,128], index: 3, kind: output, shape index: {1}]
  %4 = xla_tuple %s2, %s3
  %s5 = sld [smem:[#allocation0]]
  $region49: #{bottleneck_bn.5} parent=0
    _
  %s7 = ssub.s32 1, %s5
  %s8 = scalar_select 0, %s7, %s5
  loop: start=0, step=1, limit=4
  $region2: #{bottleneck_bn.5} parent=0 // loop_pre_header
    _
  $region3: #{bottleneck_bn.5} parent=0 // loop_header
    %s10 = sphi 0, %s14
    %p11 = scmp.ge.s32.totalorder %s10, 4
    %s20 = sphi 0, %s22
    %s23 = sphi 0, %s20
    %s24 = sphi 0, %s23
    %s40 = sphi 0, %s24
    %s44 = sphi 0, %s44
    %s46 = sphi 0, %s44
    %s47 = sphi 0, %s46
    %s61 = sphi 0, %s47
    %s67 = sphi 0, %s69
    %s70 = sphi 0, %s67
    %s71 = sphi 0, %s70
    %s87 = sphi 0, %s71
    %s93 = sphi 0, %s95
    %s96 = sphi 0, %s93
    %s97 = sphi 0, %s96
    %s113 = sphi 0, %s97
  $region4: #{bottleneck_bn.5} parent=0 // loop_header_branch
    %13 = sbr.rel (%p11) target = $region8
  $region5: #{bottleneck_bn.5} parent=0 // loop_body
    %s15 = ssub.s32 %s10, 1
    %s16 = ssub.s32 %s10, 2
    %s17 = sadd.s32 %s10, 1
    %s18 = ssub.s32 %s10, %s17
    %p19 = scmp.eq.s32.totalorder %s18, 0
    %s21 = sadd.s32 %s20, 1
    %s22 = scalar_select %p19, %s20, %s21
    %p25 = pneg %p19
    %p26 = scmp.eq.s32.totalorder %s10, 1
    %p27 = por %p25, %p26
    %p28 = scmp.ne.s32.totalorder %s20, %s23
    %p29 = scmp.eq.s32.totalorder %s10, 0
    %p30 = por %p28, %p29
    %p31 = scmp.ne.s32.totalorder %s20, %s23
    %p32 = scmp.eq.s32.totalorder %s15, 1
    %p33 = por %p31, %p32
    %p34 = scmp.ne.s32.totalorder %s23, %s24
    %p35 = scmp.eq.s32.totalorder %s15, 0
    %p36 = por %p34, %p35
    %p37 = scmp.ne.s32.totalorder %s23, %s24
    %p38 = scmp.eq.s32.totalorder %s16, 1
    %p39 = por %p37, %p38
    %p41 = scmp.ne.s32.totalorder %s24, %s40
    %p42 = scmp.eq.s32.totalorder %s16, 0
    %p43 = por %p41, %p42
    %s45 = sadd.s32 %s44, 1
    %p48 = scmp.eq.s32.totalorder %s10, 1
    %p49 = scmp.ne.s32.totalorder %s44, %s46
    %p50 = scmp.eq.s32.totalorder %s10, 0
    %p51 = por %p49, %p50
    %p52 = scmp.ne.s32.totalorder %s44, %s46
    %p53 = scmp.eq.s32.totalorder %s15, 1
    %p54 = por %p52, %p53
    %p55 = scmp.ne.s32.totalorder %s46, %s47
    %p56 = scmp.eq.s32.totalorder %s15, 0
    %p57 = por %p55, %p56
    %p58 = scmp.ne.s32.totalorder %s46, %s47
    %p59 = scmp.eq.s32.totalorder %s16, 1
    %p60 = por %p58, %p59
    %p62 = scmp.ne.s32.totalorder %s47, %s61
    %p63 = scmp.eq.s32.totalorder %s16, 0
    %p64 = por %p62, %p63
    %s65 = ssub.s32 %s10, %s17
    %p66 = scmp.eq.s32.totalorder %s65, 0
    %s68 = sadd.s32 %s67, 1
    %s69 = scalar_select %p66, %s67, %s68
    %p72 = pneg %p66
    %p73 = scmp.eq.s32.totalorder %s10, 1
    %p74 = por %p72, %p73
    %p75 = scmp.ne.s32.totalorder %s67, %s70
    %p76 = scmp.eq.s32.totalorder %s10, 0
    %p77 = por %p75, %p76
    %p78 = scmp.ne.s32.totalorder %s67, %s70
    %p79 = scmp.eq.s32.totalorder %s15, 1
    %p80 = por %p78, %p79
    %p81 = scmp.ne.s32.totalorder %s70, %s71
    %p82 = scmp.eq.s32.totalorder %s15, 0
    %p83 = por %p81, %p82
    %p84 = scmp.ne.s32.totalorder %s70, %s71
    %p85 = scmp.eq.s32.totalorder %s16, 1
    %p86 = por %p84, %p85
    %p88 = scmp.ne.s32.totalorder %s71, %s87
    %p89 = scmp.eq.s32.totalorder %s16, 0
    %p90 = por %p88, %p89
    %s91 = ssub.s32 %s10, %s17
    %p92 = scmp.eq.s32.totalorder %s91, 0
    %s94 = sadd.s32 %s93, 1
    %s95 = scalar_select %p92, %s93, %s94
    %p98 = pneg %p92
    %p99 = scmp.eq.s32.totalorder %s10, 1
    %p100 = por %p98, %p99
    %p101 = scmp.ne.s32.totalorder %s93, %s96
    %p102 = scmp.eq.s32.totalorder %s10, 0
    %p103 = por %p101, %p102
    %p104 = scmp.ne.s32.totalorder %s93, %s96
    %p105 = scmp.eq.s32.totalorder %s15, 1
    %p106 = por %p104, %p105
    %p107 = scmp.ne.s32.totalorder %s96, %s97
    %p108 = scmp.eq.s32.totalorder %s15, 0
    %p109 = por %p107, %p108
    %p110 = scmp.ne.s32.totalorder %s96, %s97
    %p111 = scmp.eq.s32.totalorder %s16, 1
    %p112 = por %p110, %p111
    %p114 = scmp.ne.s32.totalorder %s97, %s113
    %p115 = scmp.eq.s32.totalorder %s16, 0
    %p116 = por %p114, %p115
    %p117 = scmp.le.s32.totalorder 1, %s10
    %p118 = scmp.lt.s32.totalorder %s10, 3
    %p119 = pnand %p117, %p118
    %p120 = pneg %p119
    // Predicated region
    $region9: #{bottleneck_bn.5} parent=5 // pred_check
      _
    $region10: #{bottleneck_bn.5} parent=5 // pred_check_branch
      %122 = sbr.rel (%p119) target = $region12
    $region11: #{bottleneck_bn.5} parent=5 // pred_region
      %s123 = ssub.s32 %s10, 1
      // Predicated region
      $region13: #{bottleneck_bn.5} parent=11 // pred_check
        %p124 = pneg %p57
      $region14: #{bottleneck_bn.5} parent=11 // pred_check_branch
        %126 = sbr.rel (%p124) target = $region16
      $region15: #{bottleneck_bn.5} parent=11 // pred_region
        _
      $region16: #{bottleneck_bn.5} parent=11 // pred_fallthru
        _
    $region12: #{bottleneck_bn.5} parent=5 // pred_fallthru
      _
    %p127 = scmp.lt.s32.totalorder %s10, 2
    // Predicated region
    $region17: #{bottleneck_bn.5} parent=5 // pred_check
      %p128 = pneg %p127
    $region18: #{bottleneck_bn.5} parent=5 // pred_check_branch
      %130 = sbr.rel (%p128) target = $region20
    $region19: #{bottleneck_bn.5} parent=5 // pred_region
      // Predicated region
      $region21: #{bottleneck_bn.5} parent=19 // pred_check
        %p131 = pneg %p30
      $region22: #{bottleneck_bn.5} parent=19 // pred_check_branch
        %133 = sbr.rel (%p131) target = $region24
      $region23: #{bottleneck_bn.5} parent=19 // pred_region
        %s134 = smul.u32 32, %s10
        %p135 = scmp.lt.s32.totalorder %s134, 63
        %s136 = scalar_select %p135, %s134, 63
        %s137 = smul.addr %s136, 4
        %s138 = scalar_lea.vmem %s0, %s137
        %s139 = smul.u32 32, %s10
      $region24: #{bottleneck_bn.5} parent=19 // pred_fallthru
        _
    $region20: #{bottleneck_bn.5} parent=5 // pred_fallthru
      _
    %p140 = scmp.le.s32.totalorder 1, %s10
    %p141 = scmp.lt.s32.totalorder %s10, 3
    %p142 = pnand %p140, %p141
    %p143 = pneg %p142
    // Predicated region
    $region25: #{bottleneck_bn.5} parent=5 // pred_check
      _
    $region26: #{bottleneck_bn.5} parent=5 // pred_check_branch
      %145 = sbr.rel (%p142) target = $region28
    $region27: #{bottleneck_bn.5} parent=5 // pred_region
      %s146 = ssub.s32 %s10, 1
      %s147 = smul.u32 32, %s15
      %p148 = scmp.lt.s32.totalorder %s147, 63
      %s149 = scalar_select %p148, %s147, 63
      %s150 = smul.addr %s149, 4
      %s151 = scalar_lea.vmem %s0, %s150
      %p152 = pneg %p36
      %p153 = pneg %p33
      %p154 = pneg %p57
      %p155 = pneg %p54
      %p156 = pneg %p83
      %p157 = pneg %p80
      %s158 = smul.u32 32, %s15
      %p159 = scmp.lt.s32.totalorder %s158, 63
      %s160 = scalar_select %p159, %s158, 63
      %s161 = smul.addr %s160, 4
      %s162 = scalar_lea.vmem %s2, %s161
      %p163 = pneg %p109
      %p164 = pneg %p106
      %p165 = scmp.lt.s32.totalorder %s15, 1
      %s166 = scalar_select %p165, %s15, 1
      %s167 = smul.addr %s166, 2
      %s168 = scalar_lea.vmem %s3, %s167
      %s169 = smul.u32 32, %s15
      %p170 = scmp.lt.s32.totalorder %s169, 63
      %s171 = scalar_select %p170, %s169, 63
      %s172 = smul.addr %s171, 4
      %s173 = scalar_lea.vmem %s0, %s172
      %s174 = smul.u32 32, %s15
      %s175 = smul.u32 32, %s15
      %p176 = scmp.lt.s32.totalorder %s175, 63
      %s177 = scalar_select %p176, %s175, 63
      %s178 = smul.addr %s177, 4
      %s179 = scalar_lea.vmem %s2, %s178
      %s180 = smul.u32 32, %s15
      %p181 = scmp.lt.s32.totalorder %s15, 1
      %s182 = scalar_select %p181, %s15, 1
      %s183 = smul.addr %s182, 2
      %s184 = scalar_lea.vmem %s3, %s183
      %v186 = vld [vmem:[%s173] sm:$0xf]
      %v187 = vld [vmem:[%s173 + $0x4] sm:$0xf]
      %v188 = vld [vmem:[%s173 + $0x8] sm:$0xf]
      %v189 = vld [vmem:[%s173 + $0xc] sm:$0xf]
      %v190 = vld [vmem:[%s173 + $0x10] sm:$0xf]
      %v191 = vld [vmem:[%s173 + $0x14] sm:$0xf]
      %v192 = vld [vmem:[%s173 + $0x18] sm:$0xf]
      %v193 = vld [vmem:[%s173 + $0x1c] sm:$0xf]
      %v194 = vld [vmem:[%s173 + $0x20] sm:$0xf]
      %v195 = vld [vmem:[%s173 + $0x24] sm:$0xf]
      %v196 = vld [vmem:[%s173 + $0x28] sm:$0xf]
      %v197 = vld [vmem:[%s173 + $0x2c] sm:$0xf]
      %v198 = vld [vmem:[%s173 + $0x30] sm:$0xf]
      %v199 = vld [vmem:[%s173 + $0x34] sm:$0xf]
      %v200 = vld [vmem:[%s173 + $0x38] sm:$0xf]
      %v201 = vld [vmem:[%s173 + $0x3c] sm:$0xf]
      %v202 = vld [vmem:[%s173 + $0x40] sm:$0xf]
      %v203 = vld [vmem:[%s173 + $0x44] sm:$0xf]
      %v204 = vld [vmem:[%s173 + $0x48] sm:$0xf]
      %v205 = vld [vmem:[%s173 + $0x4c] sm:$0xf]
      %v206 = vld [vmem:[%s173 + $0x50] sm:$0xf]
      %v207 = vld [vmem:[%s173 + $0x54] sm:$0xf]
      %v208 = vld [vmem:[%s173 + $0x58] sm:$0xf]
      %v209 = vld [vmem:[%s173 + $0x5c] sm:$0xf]
      %v210 = vld [vmem:[%s173 + $0x60] sm:$0xf]
      %v211 = vld [vmem:[%s173 + $0x64] sm:$0xf]
      %v212 = vld [vmem:[%s173 + $0x68] sm:$0xf]
      %v213 = vld [vmem:[%s173 + $0x6c] sm:$0xf]
      %v214 = vld [vmem:[%s173 + $0x70] sm:$0xf]
      %v215 = vld [vmem:[%s173 + $0x74] sm:$0xf]
      %v216 = vld [vmem:[%s173 + $0x78] sm:$0xf]
      %v217 = vld [vmem:[%s173 + $0x7c] sm:$0xf]
      %v218 = vld [vmem:[%s1] sm:$0xf]
      %v219 = vld [vmem:[%s1 + $0x4] sm:$0xf]
      %v220 = vld [vmem:[%s1 + $0x8] sm:$0xf]
      %v221 = vld [vmem:[%s1 + $0xc] sm:$0xf]
      %v222 = vld [vmem:[%s1 + $0x10] sm:$0xf]
      %v223 = vld [vmem:[%s1 + $0x14] sm:$0xf]
      %v224 = vld [vmem:[%s1 + $0x18] sm:$0xf]
      %v225 = vld [vmem:[%s1 + $0x1c] sm:$0xf]
      %v226 = vld [vmem:[%s1 + $0x20] sm:$0xf]
      %v227 = vld [vmem:[%s1 + $0x24] sm:$0xf]
      %v228 = vld [vmem:[%s1 + $0x28] sm:$0xf]
      %v229 = vld [vmem:[%s1 + $0x2c] sm:$0xf]
      %v230 = vld [vmem:[%s1 + $0x30] sm:$0xf]
      %v231 = vld [vmem:[%s1 + $0x34] sm:$0xf]
      %v232 = vld [vmem:[%s1 + $0x38] sm:$0xf]
      %v233 = vld [vmem:[%s1 + $0x3c] sm:$0xf]
      %v266 = vunpack.c.l.b16 %v186
      %v267 = vunpack.c.l.b16 %v187
      %v268 = vunpack.c.l.b16 %v188
      %v269 = vunpack.c.l.b16 %v189
      %v270 = vunpack.c.l.b16 %v190
      %v271 = vunpack.c.l.b16 %v191
      %v272 = vunpack.c.l.b16 %v192
      %v273 = vunpack.c.l.b16 %v193
      %v274 = vunpack.c.l.b16 %v194
      %v275 = vunpack.c.l.b16 %v195
      %v276 = vunpack.c.l.b16 %v196
      %v277 = vunpack.c.l.b16 %v197
      %v278 = vunpack.c.l.b16 %v198
      %v279 = vunpack.c.l.b16 %v199
      %v280 = vunpack.c.l.b16 %v200
      %v281 = vunpack.c.l.b16 %v201
      %v282 = vunpack.c.l.b16 %v202
      %v283 = vunpack.c.l.b16 %v203
      %v284 = vunpack.c.l.b16 %v204
      %v285 = vunpack.c.l.b16 %v205
      %v286 = vunpack.c.l.b16 %v206
      %v287 = vunpack.c.l.b16 %v207
      %v288 = vunpack.c.l.b16 %v208
      %v289 = vunpack.c.l.b16 %v209
      %v290 = vunpack.c.l.b16 %v210
      %v291 = vunpack.c.l.b16 %v211
      %v292 = vunpack.c.l.b16 %v212
      %v293 = vunpack.c.l.b16 %v213
      %v294 = vunpack.c.l.b16 %v214
      %v295 = vunpack.c.l.b16 %v215
      %v296 = vunpack.c.l.b16 %v216
      %v297 = vunpack.c.l.b16 %v217
      %v298 = vpack.c.b16 %v267, %v266
      %v299 = vpack.c.b16 %v269, %v268
      %v300 = vpack.c.b16 %v271, %v270
      %v301 = vpack.c.b16 %v273, %v272
      %v302 = vpack.c.b16 %v275, %v274
      %v303 = vpack.c.b16 %v277, %v276
      %v304 = vpack.c.b16 %v279, %v278
      %v305 = vpack.c.b16 %v281, %v280
      %v306 = vpack.c.b16 %v283, %v282
      %v307 = vpack.c.b16 %v285, %v284
      %v308 = vpack.c.b16 %v287, %v286
      %v309 = vpack.c.b16 %v289, %v288
      %v310 = vpack.c.b16 %v291, %v290
      %v311 = vpack.c.b16 %v293, %v292
      %v312 = vpack.c.b16 %v295, %v294
      %v313 = vpack.c.b16 %v297, %v296
      %v346 = vunpack.c.l.b16 %v218
      %v347 = vunpack.c.l.b16 %v219
      %v348 = vunpack.c.l.b16 %v220
      %v349 = vunpack.c.l.b16 %v221
      %v350 = vunpack.c.l.b16 %v222
      %v351 = vunpack.c.l.b16 %v223
      %v352 = vunpack.c.l.b16 %v224
      %v353 = vunpack.c.l.b16 %v225
      %v354 = vunpack.c.l.b16 %v226
      %v355 = vunpack.c.l.b16 %v227
      %v356 = vunpack.c.l.b16 %v228
      %v357 = vunpack.c.l.b16 %v229
      %v358 = vunpack.c.l.b16 %v230
      %v359 = vunpack.c.l.b16 %v231
      %v360 = vunpack.c.l.b16 %v232
      %v361 = vunpack.c.l.b16 %v233
      %v362 = vpack.c.b16 %v347, %v346
      %v363 = vpack.c.b16 %v349, %v348
      %v364 = vpack.c.b16 %v351, %v350
      %v365 = vpack.c.b16 %v353, %v352
      %v366 = vpack.c.b16 %v355, %v354
      %v367 = vpack.c.b16 %v357, %v356
      %v368 = vpack.c.b16 %v359, %v358
      %v369 = vpack.c.b16 %v361, %v360
      %378 = vmatprep.subr.bf16.mxu0 0
      %379 = vmatpush1.bf16.msra.mxu0 %v369
      %380 = vmatprep.subr.bf16.mxu0 0
      %381 = vmatpush1.bf16.msra.mxu0 %v368
      %382 = vmatprep.subr.bf16.mxu0 0
      %383 = vmatpush1.bf16.msra.mxu0 %v367
      %384 = vmatprep.subr.bf16.mxu0 0
      %385 = vmatpush1.bf16.msra.mxu0 %v366
      %386 = vmatprep.subr.bf16.mxu0 0
      %387 = vmatpush1.bf16.msra.mxu0 %v365
      %388 = vmatprep.subr.bf16.mxu0 0
      %389 = vmatpush1.bf16.msra.mxu0 %v364
      %390 = vmatprep.subr.bf16.mxu0 0
      %391 = vmatpush1.bf16.msra.mxu0 %v363
      %392 = vmatprep.subr.bf16.mxu0 0
      %393 = vmatpush1.bf16.msra.mxu0 %v362
      %394 = vmatprep.subr.bf16.mxu0 0
      %395 = vmatpush2.bf16.msra.mxu0 0
      %396 = vmatprep.subr.bf16.mxu0 0
      %397 = vmatpush2.bf16.msra.mxu0 0
      %398 = vmatprep.subr.bf16.mxu0 0
      %399 = vmatpush2.bf16.msra.mxu0 0
      %400 = vmatprep.subr.bf16.mxu0 0
      %401 = vmatpush2.bf16.msra.mxu0 0
      %402 = vmatprep.subr.bf16.mxu0 0
      %403 = vmatpush2.bf16.msra.mxu0 0
      %404 = vmatprep.subr.bf16.mxu0 0
      %405 = vmatpush2.bf16.msra.mxu0 0
      %406 = vmatprep.subr.bf16.mxu0 0
      %407 = vmatpush2.bf16.msra.mxu0 0
      %408 = vmatprep.subr.bf16.mxu0 0
      %409 = vmatpush2.bf16.msra.mxu0 0
      %410 = vmatprep.mubr.bf16.mxu0 0
      %411 = vmatmul.mubr.bf16.gmra.mxu0 %v298
      %v412 = vpop.f32.mrf.mxu0
      %v413 = vadd.f32 0.0, %v412
      %v414 = vpop.f32.mrf.mxu0
      %v415 = vpop.f32.mrf.mxu0
      %v416 = vadd.f32 0.0, %v415
      %v417 = vpop.f32.mrf.mxu0
      %418 = vmatprep.mubr.bf16.mxu0 0
      %419 = vmatmul.mubr.bf16.gmra.mxu0 %v299
      %v420 = vpop.f32.mrf.mxu0
      %v421 = vadd.f32 0.0, %v420
      %v422 = vpop.f32.mrf.mxu0
      %v423 = vpop.f32.mrf.mxu0
      %v424 = vadd.f32 0.0, %v423
      %v425 = vpop.f32.mrf.mxu0
      %426 = vmatprep.mubr.bf16.mxu0 0
      %427 = vmatmul.mubr.bf16.gmra.mxu0 %v300
      %v428 = vpop.f32.mrf.mxu0
      %v429 = vadd.f32 0.0, %v428
      %v430 = vpop.f32.mrf.mxu0
      %v431 = vpop.f32.mrf.mxu0
      %v432 = vadd.f32 0.0, %v431
      %v433 = vpop.f32.mrf.mxu0
      %434 = vmatprep.mubr.bf16.mxu0 0
      %435 = vmatmul.mubr.bf16.gmra.mxu0 %v301
      %v436 = vpop.f32.mrf.mxu0
      %v437 = vadd.f32 0.0, %v436
      %v438 = vpop.f32.mrf.mxu0
      %v439 = vpop.f32.mrf.mxu0
      %v440 = vadd.f32 0.0, %v439
      %v441 = vpop.f32.mrf.mxu0
      %442 = vmatprep.mubr.bf16.mxu0 0
      %443 = vmatmul.mubr.bf16.gmra.mxu0 %v302
      %v444 = vpop.f32.mrf.mxu0
      %v445 = vadd.f32 0.0, %v444
      %v446 = vpop.f32.mrf.mxu0
      %v447 = vpop.f32.mrf.mxu0
      %v448 = vadd.f32 0.0, %v447
      %v449 = vpop.f32.mrf.mxu0
      %450 = vmatprep.mubr.bf16.mxu0 0
      %451 = vmatmul.mubr.bf16.gmra.mxu0 %v303
      %v452 = vpop.f32.mrf.mxu0
      %v453 = vadd.f32 0.0, %v452
      %v454 = vpop.f32.mrf.mxu0
      %v455 = vpop.f32.mrf.mxu0
      %v456 = vadd.f32 0.0, %v455
      %v457 = vpop.f32.mrf.mxu0
      %458 = vmatprep.mubr.bf16.mxu0 0
      %459 = vmatmul.mubr.bf16.gmra.mxu0 %v304
      %v460 = vpop.f32.mrf.mxu0
      %v461 = vadd.f32 0.0, %v460
      %v462 = vpop.f32.mrf.mxu0
      %v463 = vpop.f32.mrf.mxu0
      %v464 = vadd.f32 0.0, %v463
      %v465 = vpop.f32.mrf.mxu0
      %466 = vmatprep.mubr.bf16.mxu0 0
      %467 = vmatmul.mubr.bf16.gmra.mxu0 %v305
      %v468 = vpop.f32.mrf.mxu0
      %v469 = vadd.f32 0.0, %v468
      %v470 = vpop.f32.mrf.mxu0
      %v471 = vpop.f32.mrf.mxu0
      %v472 = vadd.f32 0.0, %v471
      %v473 = vpop.f32.mrf.mxu0
      %474 = vmatprep.mubr.bf16.mxu0 0
      %475 = vmatmul.mubr.bf16.gmra.mxu0 %v306
      %v476 = vpop.f32.mrf.mxu0
      %v477 = vadd.f32 0.0, %v476
      %v478 = vpop.f32.mrf.mxu0
      %v479 = vpop.f32.mrf.mxu0
      %v480 = vadd.f32 0.0, %v479
      %v481 = vpop.f32.mrf.mxu0
      %482 = vmatprep.mubr.bf16.mxu0 0
      %483 = vmatmul.mubr.bf16.gmra.mxu0 %v307
      %v484 = vpop.f32.mrf.mxu0
      %v485 = vadd.f32 0.0, %v484
      %v486 = vpop.f32.mrf.mxu0
      %v487 = vpop.f32.mrf.mxu0
      %v488 = vadd.f32 0.0, %v487
      %v489 = vpop.f32.mrf.mxu0
      %490 = vmatprep.mubr.bf16.mxu0 0
      %491 = vmatmul.mubr.bf16.gmra.mxu0 %v308
      %v492 = vpop.f32.mrf.mxu0
      %v493 = vadd.f32 0.0, %v492
      %v494 = vpop.f32.mrf.mxu0
      %v495 = vpop.f32.mrf.mxu0
      %v496 = vadd.f32 0.0, %v495
      %v497 = vpop.f32.mrf.mxu0
      %498 = vmatprep.mubr.bf16.mxu0 0
      %499 = vmatmul.mubr.bf16.gmra.mxu0 %v309
      %v500 = vpop.f32.mrf.mxu0
      %v501 = vadd.f32 0.0, %v500
      %v502 = vpop.f32.mrf.mxu0
      %v503 = vpop.f32.mrf.mxu0
      %v504 = vadd.f32 0.0, %v503
      %v505 = vpop.f32.mrf.mxu0
      %506 = vmatprep.mubr.bf16.mxu0 0
      %507 = vmatmul.mubr.bf16.gmra.mxu0 %v310
      %v508 = vpop.f32.mrf.mxu0
      %v509 = vadd.f32 0.0, %v508
      %v510 = vpop.f32.mrf.mxu0
      %v511 = vpop.f32.mrf.mxu0
      %v512 = vadd.f32 0.0, %v511
      %v513 = vpop.f32.mrf.mxu0
      %514 = vmatprep.mubr.bf16.mxu0 0
      %515 = vmatmul.mubr.bf16.gmra.mxu0 %v311
      %v516 = vpop.f32.mrf.mxu0
      %v517 = vadd.f32 0.0, %v516
      %v518 = vpop.f32.mrf.mxu0
      %v519 = vpop.f32.mrf.mxu0
      %v520 = vadd.f32 0.0, %v519
      %v521 = vpop.f32.mrf.mxu0
      %522 = vmatprep.mubr.bf16.mxu0 0
      %523 = vmatmul.mubr.bf16.gmra.mxu0 %v312
      %v524 = vpop.f32.mrf.mxu0
      %v525 = vadd.f32 0.0, %v524
      %v526 = vpop.f32.mrf.mxu0
      %v527 = vpop.f32.mrf.mxu0
      %v528 = vadd.f32 0.0, %v527
      %v529 = vpop.f32.mrf.mxu0
      %530 = vmatprep.mubr.bf16.mxu0 0
      %531 = vmatmul.mubr.bf16.gmra.mxu0 %v313
      %v532 = vpop.f32.mrf.mxu0
      %v533 = vadd.f32 0.0, %v532
      %v534 = vpop.f32.mrf.mxu0
      %v535 = vpop.f32.mrf.mxu0
      %v536 = vadd.f32 0.0, %v535
      %v537 = vpop.f32.mrf.mxu0
      %538 = vdwg.mxu0
      %v539 = vpack.c.bf16 %v416, %v413
      %v540 = vpack.c.bf16 %v424, %v421
      %v541 = vpack.c.bf16 %v432, %v429
      %v542 = vpack.c.bf16 %v440, %v437
      %v543 = vpack.c.bf16 %v448, %v445
      %v544 = vpack.c.bf16 %v456, %v453
      %v545 = vpack.c.bf16 %v464, %v461
      %v546 = vpack.c.bf16 %v472, %v469
      %v547 = vpack.c.bf16 %v480, %v477
      %v548 = vpack.c.bf16 %v488, %v485
      %v549 = vpack.c.bf16 %v496, %v493
      %v550 = vpack.c.bf16 %v504, %v501
      %v551 = vpack.c.bf16 %v512, %v509
      %v552 = vpack.c.bf16 %v520, %v517
      %v553 = vpack.c.bf16 %v528, %v525
      %v554 = vpack.c.bf16 %v536, %v533
      %v571 = vunpack.c.l.b16 %v539
      %v572 = vunpack.c.h.b16 %v539
      %v573 = vunpack.c.l.b16 %v540
      %v574 = vunpack.c.h.b16 %v540
      %v575 = vunpack.c.l.b16 %v541
      %v576 = vunpack.c.h.b16 %v541
      %v577 = vunpack.c.l.b16 %v542
      %v578 = vunpack.c.h.b16 %v542
      %v579 = vunpack.c.l.b16 %v543
      %v580 = vunpack.c.h.b16 %v543
      %v581 = vunpack.c.l.b16 %v544
      %v582 = vunpack.c.h.b16 %v544
      %v583 = vunpack.c.l.b16 %v545
      %v584 = vunpack.c.h.b16 %v545
      %v585 = vunpack.c.l.b16 %v546
      %v586 = vunpack.c.h.b16 %v546
      %v587 = vunpack.c.l.b16 %v547
      %v588 = vunpack.c.h.b16 %v547
      %v589 = vunpack.c.l.b16 %v548
      %v590 = vunpack.c.h.b16 %v548
      %v591 = vunpack.c.l.b16 %v549
      %v592 = vunpack.c.h.b16 %v549
      %v593 = vunpack.c.l.b16 %v550
      %v594 = vunpack.c.h.b16 %v550
      %v595 = vunpack.c.l.b16 %v551
      %v596 = vunpack.c.h.b16 %v551
      %v597 = vunpack.c.l.b16 %v552
      %v598 = vunpack.c.h.b16 %v552
      %v599 = vunpack.c.l.b16 %v553
      %v600 = vunpack.c.h.b16 %v553
      %v601 = vunpack.c.l.b16 %v554
      %v602 = vunpack.c.h.b16 %v554
      %v603 = vpack.c.b16 %v571, %v571
      %v604 = vpack.c.b16 %v572, %v572
      %v605 = vpack.c.b16 %v573, %v573
      %v606 = vpack.c.b16 %v574, %v574
      %v607 = vpack.c.b16 %v575, %v575
      %v608 = vpack.c.b16 %v576, %v576
      %v609 = vpack.c.b16 %v577, %v577
      %v610 = vpack.c.b16 %v578, %v578
      %v611 = vpack.c.b16 %v579, %v579
      %v612 = vpack.c.b16 %v580, %v580
      %v613 = vpack.c.b16 %v581, %v581
      %v614 = vpack.c.b16 %v582, %v582
      %v615 = vpack.c.b16 %v583, %v583
      %v616 = vpack.c.b16 %v584, %v584
      %v617 = vpack.c.b16 %v585, %v585
      %v618 = vpack.c.b16 %v586, %v586
      %v619 = vpack.c.b16 %v587, %v587
      %v620 = vpack.c.b16 %v588, %v588
      %v621 = vpack.c.b16 %v589, %v589
      %v622 = vpack.c.b16 %v590, %v590
      %v623 = vpack.c.b16 %v591, %v591
      %v624 = vpack.c.b16 %v592, %v592
      %v625 = vpack.c.b16 %v593, %v593
      %v626 = vpack.c.b16 %v594, %v594
      %v627 = vpack.c.b16 %v595, %v595
      %v628 = vpack.c.b16 %v596, %v596
      %v629 = vpack.c.b16 %v597, %v597
      %v630 = vpack.c.b16 %v598, %v598
      %v631 = vpack.c.b16 %v599, %v599
      %v632 = vpack.c.b16 %v600, %v600
      %v633 = vpack.c.b16 %v601, %v601
      %v634 = vpack.c.b16 %v602, %v602
      %667 = vst [vmem:[%s179] sm:$0xf] %v603
      %668 = vst [vmem:[%s179 + $0x4] sm:$0xf] %v604
      %669 = vst [vmem:[%s179 + $0x8] sm:$0xf] %v605
      %670 = vst [vmem:[%s179 + $0xc] sm:$0xf] %v606
      %671 = vst [vmem:[%s179 + $0x10] sm:$0xf] %v607
      %672 = vst [vmem:[%s179 + $0x14] sm:$0xf] %v608
      %673 = vst [vmem:[%s179 + $0x18] sm:$0xf] %v609
      %674 = vst [vmem:[%s179 + $0x1c] sm:$0xf] %v610
      %675 = vst [vmem:[%s179 + $0x20] sm:$0xf] %v611
      %676 = vst [vmem:[%s179 + $0x24] sm:$0xf] %v612
      %677 = vst [vmem:[%s179 + $0x28] sm:$0xf] %v613
      %678 = vst [vmem:[%s179 + $0x2c] sm:$0xf] %v614
      %679 = vst [vmem:[%s179 + $0x30] sm:$0xf] %v615
      %680 = vst [vmem:[%s179 + $0x34] sm:$0xf] %v616
      %681 = vst [vmem:[%s179 + $0x38] sm:$0xf] %v617
      %682 = vst [vmem:[%s179 + $0x3c] sm:$0xf] %v618
      %683 = vst [vmem:[%s179 + $0x40] sm:$0xf] %v619
      %684 = vst [vmem:[%s179 + $0x44] sm:$0xf] %v620
      %685 = vst [vmem:[%s179 + $0x48] sm:$0xf] %v621
      %686 = vst [vmem:[%s179 + $0x4c] sm:$0xf] %v622
      %687 = vst [vmem:[%s179 + $0x50] sm:$0xf] %v623
      %688 = vst [vmem:[%s179 + $0x54] sm:$0xf] %v624
      %689 = vst [vmem:[%s179 + $0x58] sm:$0xf] %v625
      %690 = vst [vmem:[%s179 + $0x5c] sm:$0xf] %v626
      %691 = vst [vmem:[%s179 + $0x60] sm:$0xf] %v627
      %692 = vst [vmem:[%s179 + $0x64] sm:$0xf] %v628
      %693 = vst [vmem:[%s179 + $0x68] sm:$0xf] %v629
      %694 = vst [vmem:[%s179 + $0x6c] sm:$0xf] %v630
      %695 = vst [vmem:[%s179 + $0x70] sm:$0xf] %v631
      %696 = vst [vmem:[%s179 + $0x74] sm:$0xf] %v632
      %697 = vst [vmem:[%s179 + $0x78] sm:$0xf] %v633
      %698 = vst [vmem:[%s179 + $0x7c] sm:$0xf] %v634
      %v699 = vadd.f32 %v413, %v416
      %v700 = vadd.f32 %v699, %v421
      %v701 = vadd.f32 %v700, %v424
      %v702 = vadd.f32 %v701, %v429
      %v703 = vadd.f32 %v702, %v432
      %v704 = vadd.f32 %v703, %v437
      %v705 = vadd.f32 %v704, %v440
      %v706 = vadd.f32 %v705, %v445
      %v707 = vadd.f32 %v706, %v448
      %v708 = vadd.f32 %v707, %v453
      %v709 = vadd.f32 %v708, %v456
      %v710 = vadd.f32 %v709, %v461
      %v711 = vadd.f32 %v710, %v464
      %v712 = vadd.f32 %v711, %v469
      %v713 = vadd.f32 %v712, %v472
      %v714 = vadd.f32 %v713, %v477
      %v715 = vadd.f32 %v714, %v480
      %v716 = vadd.f32 %v715, %v485
      %v717 = vadd.f32 %v716, %v488
      %v718 = vadd.f32 %v717, %v493
      %v719 = vadd.f32 %v718, %v496
      %v720 = vadd.f32 %v719, %v501
      %v721 = vadd.f32 %v720, %v504
      %v722 = vadd.f32 %v721, %v509
      %v723 = vadd.f32 %v722, %v512
      %v724 = vadd.f32 %v723, %v517
      %v725 = vadd.f32 %v724, %v520
      %v726 = vadd.f32 %v725, %v525
      %v727 = vadd.f32 %v726, %v528
      %v728 = vadd.f32 %v727, %v533
      %v729 = vadd.f32 %v728, %v536
      %v730 = vrot.slane %v729, 4
      %v731 = vadd.f32 %v729, %v730
      %v732 = vrot.slane %v731, 2
      %v733 = vadd.f32 %v731, %v732
      %v734 = vrot.slane %v733, 1
      %v735 = vadd.f32 %v733, %v734
      %736 = vst [vmem:[%s184] sm:$0x1] %v735
      %v737 = vmul.f32 %v413, %v413
      %v738 = vmul.f32 %v416, %v416
      %v739 = vmul.f32 %v421, %v421
      %v740 = vmul.f32 %v424, %v424
      %v741 = vmul.f32 %v429, %v429
      %v742 = vmul.f32 %v432, %v432
      %v743 = vmul.f32 %v437, %v437
      %v744 = vmul.f32 %v440, %v440
      %v745 = vmul.f32 %v445, %v445
      %v746 = vmul.f32 %v448, %v448
      %v747 = vmul.f32 %v453, %v453
      %v748 = vmul.f32 %v456, %v456
      %v749 = vmul.f32 %v461, %v461
      %v750 = vmul.f32 %v464, %v464
      %v751 = vmul.f32 %v469, %v469
      %v752 = vmul.f32 %v472, %v472
      %v753 = vmul.f32 %v477, %v477
      %v754 = vmul.f32 %v480, %v480
      %v755 = vmul.f32 %v485, %v485
      %v756 = vmul.f32 %v488, %v488
      %v757 = vmul.f32 %v493, %v493
      %v758 = vmul.f32 %v496, %v496
      %v759 = vmul.f32 %v501, %v501
      %v760 = vmul.f32 %v504, %v504
      %v761 = vmul.f32 %v509, %v509
      %v762 = vmul.f32 %v512, %v512
      %v763 = vmul.f32 %v517, %v517
      %v764 = vmul.f32 %v520, %v520
      %v765 = vmul.f32 %v525, %v525
      %v766 = vmul.f32 %v528, %v528
      %v767 = vmul.f32 %v533, %v533
      %v768 = vmul.f32 %v536, %v536
      %v769 = vadd.f32 %v737, %v738
      %v770 = vadd.f32 %v769, %v739
      %v771 = vadd.f32 %v770, %v740
      %v772 = vadd.f32 %v771, %v741
      %v773 = vadd.f32 %v772, %v742
      %v774 = vadd.f32 %v773, %v743
      %v775 = vadd.f32 %v774, %v744
      %v776 = vadd.f32 %v775, %v745
      %v777 = vadd.f32 %v776, %v746
      %v778 = vadd.f32 %v777, %v747
      %v779 = vadd.f32 %v778, %v748
      %v780 = vadd.f32 %v779, %v749
      %v781 = vadd.f32 %v780, %v750
      %v782 = vadd.f32 %v781, %v751
      %v783 = vadd.f32 %v782, %v752
      %v784 = vadd.f32 %v783, %v753
      %v785 = vadd.f32 %v784, %v754
      %v786 = vadd.f32 %v785, %v755
      %v787 = vadd.f32 %v786, %v756
      %v788 = vadd.f32 %v787, %v757
      %v789 = vadd.f32 %v788, %v758
      %v790 = vadd.f32 %v789, %v759
      %v791 = vadd.f32 %v790, %v760
      %v792 = vadd.f32 %v791, %v761
      %v793 = vadd.f32 %v792, %v762
      %v794 = vadd.f32 %v793, %v763
      %v795 = vadd.f32 %v794, %v764
      %v796 = vadd.f32 %v795, %v765
      %v797 = vadd.f32 %v796, %v766
      %v798 = vadd.f32 %v797, %v767
      %v799 = vadd.f32 %v798, %v768
      %v800 = vrot.slane %v799, 4
      %v801 = vadd.f32 %v799, %v800
      %v802 = vrot.slane %v801, 2
      %v803 = vadd.f32 %v801, %v802
      %v804 = vrot.slane %v803, 1
      %v805 = vadd.f32 %v803, %v804
      %806 = vst [vmem:[%s184 + $0x1] sm:$0x1] %v805
      %s807 = smul.u32 32, %s15
      %p808 = scmp.lt.s32.totalorder %s807, 63
      %s809 = scalar_select %p808, %s807, 63
      %s810 = smul.addr %s809, 4
      %s811 = scalar_lea.vmem %s2, %s810
      %p812 = scmp.lt.s32.totalorder %s15, 1
      %s813 = scalar_select %p812, %s15, 1
      %s814 = smul.addr %s813, 2
      %s815 = scalar_lea.vmem %s3, %s814
      // Predicated region
      $region29: #{bottleneck_bn.5} parent=27 // pred_check
        %p816 = pneg %p80
      $region30: #{bottleneck_bn.5} parent=27 // pred_check_branch
        %818 = sbr.rel (%p816) target = $region32
      $region31: #{bottleneck_bn.5} parent=27 // pred_region
        %s819 = smul.u32 32, %s15
      $region32: #{bottleneck_bn.5} parent=27 // pred_fallthru
        _
      // Predicated region
      $region33: #{bottleneck_bn.5} parent=27 // pred_check
        %p820 = pneg %p106
      $region34: #{bottleneck_bn.5} parent=27 // pred_check_branch
        %822 = sbr.rel (%p820) target = $region36
      $region35: #{bottleneck_bn.5} parent=27 // pred_region
        _
      $region36: #{bottleneck_bn.5} parent=27 // pred_fallthru
        _
    $region28: #{bottleneck_bn.5} parent=5 // pred_fallthru
      _
    %p823 = scmp.le.s32.totalorder 2, %s10
    // Predicated region
    $region37: #{bottleneck_bn.5} parent=5 // pred_check
      %p824 = pneg %p823
    $region38: #{bottleneck_bn.5} parent=5 // pred_check_branch
      %826 = sbr.rel (%p824) target = $region40
    $region39: #{bottleneck_bn.5} parent=5 // pred_region
      %s827 = ssub.s32 %s10, 2
      // Predicated region
      $region41: #{bottleneck_bn.5} parent=39 // pred_check
        %p828 = pneg %p86
      $region42: #{bottleneck_bn.5} parent=39 // pred_check_branch
        %830 = sbr.rel (%p828) target = $region44
      $region43: #{bottleneck_bn.5} parent=39 // pred_region
        %s831 = smul.u32 32, %s16
        %p832 = scmp.lt.s32.totalorder %s831, 63
        %s833 = scalar_select %p832, %s831, 63
        %s834 = smul.addr %s833, 4
        %s835 = scalar_lea.vmem %s2, %s834
      $region44: #{bottleneck_bn.5} parent=39 // pred_fallthru
        _
      // Predicated region
      $region45: #{bottleneck_bn.5} parent=39 // pred_check
        %p836 = pneg %p112
      $region46: #{bottleneck_bn.5} parent=39 // pred_check_branch
        %838 = sbr.rel (%p836) target = $region48
      $region47: #{bottleneck_bn.5} parent=39 // pred_region
        %p839 = scmp.lt.s32.totalorder %s16, 1
        %s840 = scalar_select %p839, %s16, 1
        %s841 = smul.addr %s840, 2
        %s842 = scalar_lea.vmem %s3, %s841
      $region48: #{bottleneck_bn.5} parent=39 // pred_fallthru
        _
    $region40: #{bottleneck_bn.5} parent=5 // pred_fallthru
      _
  $region6: #{bottleneck_bn.5} parent=0 // loop_footer
    %s14 = sadd.s32 1, %s10
  $region7: #{bottleneck_bn.5} parent=0 // loop_footer_branch
    %9 = sbr.rel target = $region3
  $region8: #{bottleneck_bn.5} parent=0 // loop_exit
    _

// kernel: bottleneck_bn.9
$region0: #{bottleneck_bn.9}
  #allocation0 [shape = 'u32[]', space=smem, size = 0x4, offset = 0x4, fixed_abs, tag = 'smem constant byte address 0x4 - core index']
  #allocation1 [shape = 'u32[144,128]{1,0:T(1,128)}', space=vmem, size = 0x12000, scoped, tag = 'internal scratch']
  %s0 = inlined_call_operand.vmem [shape: bf16[512,128], index: 0, kind: input, shape index: {}]
  %s1 = inlined_call_operand.vmem [shape: f32[1,128], index: 1, kind: input, shape index: {}]
  %s2 = inlined_call_operand.vmem [shape: f32[1,128], index: 2, kind: input, shape index: {}]
  %s3 = inlined_call_operand.vmem [shape: bf16[512,128], index: 3, kind: input, shape index: {}]
  %s4 = inlined_call_operand.vmem [shape: f32[512,128], index: 4, kind: output, shape index: {}]
  %s5 = sld [smem:[#allocation0]]
  $region49: #{bottleneck_bn.9} parent=0
    _
  %s7 = ssub.s32 1, %s5
  %s8 = scalar_select 0, %s7, %s5
  loop: start=0, step=1, limit=4
  $region2: #{bottleneck_bn.9} parent=0 // loop_pre_header
    _
  $region3: #{bottleneck_bn.9} parent=0 // loop_header
    %s10 = sphi 0, %s14
    %p11 = scmp.ge.s32.totalorder %s10, 4
    %s20 = sphi 0, %s22
    %s23 = sphi 0, %s20
    %s24 = sphi 0, %s23
    %s40 = sphi 0, %s24
    %s44 = sphi 0, %s44
    %s46 = sphi 0, %s44
    %s47 = sphi 0, %s46
    %s61 = sphi 0, %s47
    %s65 = sphi 0, %s65
    %s67 = sphi 0, %s65
    %s68 = sphi 0, %s67
    %s82 = sphi 0, %s68
    %s88 = sphi 0, %s90
    %s91 = sphi 0, %s88
    %s92 = sphi 0, %s91
    %s108 = sphi 0, %s92
    %s114 = sphi 0, %s116
    %s117 = sphi 0, %s114
    %s118 = sphi 0, %s117
    %s134 = sphi 0, %s118
  $region4: #{bottleneck_bn.9} parent=0 // loop_header_branch
    %13 = sbr.rel (%p11) target = $region8
  $region5: #{bottleneck_bn.9} parent=0 // loop_body
    %s15 = ssub.s32 %s10, 1
    %s16 = ssub.s32 %s10, 2
    %s17 = sadd.s32 %s10, 1
    %s18 = ssub.s32 %s10, %s17
    %p19 = scmp.eq.s32.totalorder %s18, 0
    %s21 = sadd.s32 %s20, 1
    %s22 = scalar_select %p19, %s20, %s21
    %p25 = pneg %p19
    %p26 = scmp.eq.s32.totalorder %s10, 1
    %p27 = por %p25, %p26
    %p28 = scmp.ne.s32.totalorder %s20, %s23
    %p29 = scmp.eq.s32.totalorder %s10, 0
    %p30 = por %p28, %p29
    %p31 = scmp.ne.s32.totalorder %s20, %s23
    %p32 = scmp.eq.s32.totalorder %s15, 1
    %p33 = por %p31, %p32
    %p34 = scmp.ne.s32.totalorder %s23, %s24
    %p35 = scmp.eq.s32.totalorder %s15, 0
    %p36 = por %p34, %p35
    %p37 = scmp.ne.s32.totalorder %s23, %s24
    %p38 = scmp.eq.s32.totalorder %s16, 1
    %p39 = por %p37, %p38
    %p41 = scmp.ne.s32.totalorder %s24, %s40
    %p42 = scmp.eq.s32.totalorder %s16, 0
    %p43 = por %p41, %p42
    %s45 = sadd.s32 %s44, 1
    %p48 = scmp.eq.s32.totalorder %s10, 1
    %p49 = scmp.ne.s32.totalorder %s44, %s46
    %p50 = scmp.eq.s32.totalorder %s10, 0
    %p51 = por %p49, %p50
    %p52 = scmp.ne.s32.totalorder %s44, %s46
    %p53 = scmp.eq.s32.totalorder %s15, 1
    %p54 = por %p52, %p53
    %p55 = scmp.ne.s32.totalorder %s46, %s47
    %p56 = scmp.eq.s32.totalorder %s15, 0
    %p57 = por %p55, %p56
    %p58 = scmp.ne.s32.totalorder %s46, %s47
    %p59 = scmp.eq.s32.totalorder %s16, 1
    %p60 = por %p58, %p59
    %p62 = scmp.ne.s32.totalorder %s47, %s61
    %p63 = scmp.eq.s32.totalorder %s16, 0
    %p64 = por %p62, %p63
    %s66 = sadd.s32 %s65, 1
    %p69 = scmp.eq.s32.totalorder %s10, 1
    %p70 = scmp.ne.s32.totalorder %s65, %s67
    %p71 = scmp.eq.s32.totalorder %s10, 0
    %p72 = por %p70, %p71
    %p73 = scmp.ne.s32.totalorder %s65, %s67
    %p74 = scmp.eq.s32.totalorder %s15, 1
    %p75 = por %p73, %p74
    %p76 = scmp.ne.s32.totalorder %s67, %s68
    %p77 = scmp.eq.s32.totalorder %s15, 0
    %p78 = por %p76, %p77
    %p79 = scmp.ne.s32.totalorder %s67, %s68
    %p80 = scmp.eq.s32.totalorder %s16, 1
    %p81 = por %p79, %p80
    %p83 = scmp.ne.s32.totalorder %s68, %s82
    %p84 = scmp.eq.s32.totalorder %s16, 0
    %p85 = por %p83, %p84
    %s86 = ssub.s32 %s10, %s17
    %p87 = scmp.eq.s32.totalorder %s86, 0
    %s89 = sadd.s32 %s88, 1
    %s90 = scalar_select %p87, %s88, %s89
    %p93 = pneg %p87
    %p94 = scmp.eq.s32.totalorder %s10, 1
    %p95 = por %p93, %p94
    %p96 = scmp.ne.s32.totalorder %s88, %s91
    %p97 = scmp.eq.s32.totalorder %s10, 0
    %p98 = por %p96, %p97
    %p99 = scmp.ne.s32.totalorder %s88, %s91
    %p100 = scmp.eq.s32.totalorder %s15, 1
    %p101 = por %p99, %p100
    %p102 = scmp.ne.s32.totalorder %s91, %s92
    %p103 = scmp.eq.s32.totalorder %s15, 0
    %p104 = por %p102, %p103
    %p105 = scmp.ne.s32.totalorder %s91, %s92
    %p106 = scmp.eq.s32.totalorder %s16, 1
    %p107 = por %p105, %p106
    %p109 = scmp.ne.s32.totalorder %s92, %s108
    %p110 = scmp.eq.s32.totalorder %s16, 0
    %p111 = por %p109, %p110
    %s112 = ssub.s32 %s10, %s17
    %p113 = scmp.eq.s32.totalorder %s112, 0
    %s115 = sadd.s32 %s114, 1
    %s116 = scalar_select %p113, %s114, %s115
    %p119 = pneg %p113
    %p120 = scmp.eq.s32.totalorder %s10, 1
    %p121 = por %p119, %p120
    %p122 = scmp.ne.s32.totalorder %s114, %s117
    %p123 = scmp.eq.s32.totalorder %s10, 0
    %p124 = por %p122, %p123
    %p125 = scmp.ne.s32.totalorder %s114, %s117
    %p126 = scmp.eq.s32.totalorder %s15, 1
    %p127 = por %p125, %p126
    %p128 = scmp.ne.s32.totalorder %s117, %s118
    %p129 = scmp.eq.s32.totalorder %s15, 0
    %p130 = por %p128, %p129
    %p131 = scmp.ne.s32.totalorder %s117, %s118
    %p132 = scmp.eq.s32.totalorder %s16, 1
    %p133 = por %p131, %p132
    %p135 = scmp.ne.s32.totalorder %s118, %s134
    %p136 = scmp.eq.s32.totalorder %s16, 0
    %p137 = por %p135, %p136
    %p138 = scmp.le.s32.totalorder 1, %s10
    %p139 = scmp.lt.s32.totalorder %s10, 3
    %p140 = pnand %p138, %p139
    %p141 = pneg %p140
    // Predicated region
    $region9: #{bottleneck_bn.9} parent=5 // pred_check
      _
    $region10: #{bottleneck_bn.9} parent=5 // pred_check_branch
      %143 = sbr.rel (%p140) target = $region12
    $region11: #{bottleneck_bn.9} parent=5 // pred_region
      %s144 = ssub.s32 %s10, 1
      // Predicated region
      $region13: #{bottleneck_bn.9} parent=11 // pred_check
        %p145 = pneg %p57
      $region14: #{bottleneck_bn.9} parent=11 // pred_check_branch
        %147 = sbr.rel (%p145) target = $region16
      $region15: #{bottleneck_bn.9} parent=11 // pred_region
        _
      $region16: #{bottleneck_bn.9} parent=11 // pred_fallthru
        _
      // Predicated region
      $region17: #{bottleneck_bn.9} parent=11 // pred_check
        %p148 = pneg %p78
      $region18: #{bottleneck_bn.9} parent=11 // pred_check_branch
        %150 = sbr.rel (%p148) target = $region20
      $region19: #{bottleneck_bn.9} parent=11 // pred_region
        _
      $region20: #{bottleneck_bn.9} parent=11 // pred_fallthru
        _
    $region12: #{bottleneck_bn.9} parent=5 // pred_fallthru
      _
    %p151 = scmp.lt.s32.totalorder %s10, 2
    // Predicated region
    $region21: #{bottleneck_bn.9} parent=5 // pred_check
      %p152 = pneg %p151
    $region22: #{bottleneck_bn.9} parent=5 // pred_check_branch
      %154 = sbr.rel (%p152) target = $region24
    $region23: #{bottleneck_bn.9} parent=5 // pred_region
      // Predicated region
      $region25: #{bottleneck_bn.9} parent=23 // pred_check
        %p155 = pneg %p30
      $region26: #{bottleneck_bn.9} parent=23 // pred_check_branch
        %157 = sbr.rel (%p155) target = $region28
      $region27: #{bottleneck_bn.9} parent=23 // pred_region
        %s158 = smul.u32 32, %s10
        %p159 = scmp.lt.s32.totalorder %s158, 63
        %s160 = scalar_select %p159, %s158, 63
        %s161 = smul.addr %s160, 4
        %s162 = scalar_lea.vmem %s0, %s161
        %s163 = smul.u32 32, %s10
      $region28: #{bottleneck_bn.9} parent=23 // pred_fallthru
        _
      // Predicated region
      $region29: #{bottleneck_bn.9} parent=23 // pred_check
        %p164 = pneg %p98
      $region30: #{bottleneck_bn.9} parent=23 // pred_check_branch
        %166 = sbr.rel (%p164) target = $region32
      $region31: #{bottleneck_bn.9} parent=23 // pred_region
        %s167 = smul.u32 32, %s10
        %p168 = scmp.lt.s32.totalorder %s167, 63
        %s169 = scalar_select %p168, %s167, 63
        %s170 = smul.addr %s169, 4
        %s171 = scalar_lea.vmem %s3, %s170
        %s172 = smul.u32 32, %s10
      $region32: #{bottleneck_bn.9} parent=23 // pred_fallthru
        _
    $region24: #{bottleneck_bn.9} parent=5 // pred_fallthru
      _
    %p173 = scmp.le.s32.totalorder 1, %s10
    %p174 = scmp.lt.s32.totalorder %s10, 3
    %p175 = pnand %p173, %p174
    %p176 = pneg %p175
    // Predicated region
    $region33: #{bottleneck_bn.9} parent=5 // pred_check
      _
    $region34: #{bottleneck_bn.9} parent=5 // pred_check_branch
      %178 = sbr.rel (%p175) target = $region36
    $region35: #{bottleneck_bn.9} parent=5 // pred_region
      %s179 = ssub.s32 %s10, 1
      %s180 = smul.u32 32, %s15
      %p181 = scmp.lt.s32.totalorder %s180, 63
      %s182 = scalar_select %p181, %s180, 63
      %s183 = smul.addr %s182, 4
      %s184 = scalar_lea.vmem %s0, %s183
      %p185 = pneg %p36
      %p186 = pneg %p33
      %p187 = pneg %p57
      %p188 = pneg %p54
      %p189 = pneg %p78
      %p190 = pneg %p75
      %s191 = smul.u32 32, %s15
      %p192 = scmp.lt.s32.totalorder %s191, 63
      %s193 = scalar_select %p192, %s191, 63
      %s194 = smul.addr %s193, 4
      %s195 = scalar_lea.vmem %s3, %s194
      %p196 = pneg %p104
      %p197 = pneg %p101
      %p198 = pneg %p130
      %p199 = pneg %p127
      %s200 = smul.u32 32, %s15
      %p201 = scmp.lt.s32.totalorder %s200, 63
      %s202 = scalar_select %p201, %s200, 63
      %s203 = smul.addr %s202, 8
      %s204 = scalar_lea.vmem %s4, %s203
      %s205 = smul.u32 32, %s15
      %p206 = scmp.lt.s32.totalorder %s205, 63
      %s207 = scalar_select %p206, %s205, 63
      %s208 = smul.addr %s207, 4
      %s209 = scalar_lea.vmem %s0, %s208
      %s210 = smul.u32 32, %s15
      %s211 = smul.u32 32, %s15
      %p212 = scmp.lt.s32.totalorder %s211, 63
      %s213 = scalar_select %p212, %s211, 63
      %s214 = smul.addr %s213, 4
      %s215 = scalar_lea.vmem %s3, %s214
      %s216 = smul.u32 32, %s15
      %s217 = smul.u32 32, %s15
      %p218 = scmp.lt.s32.totalorder %s217, 63
      %s219 = scalar_select %p218, %s217, 63
      %s220 = smul.addr %s219, 8
      %s221 = scalar_lea.vmem %s4, %s220
      %s222 = smul.u32 32, %s15
      %v223 = vld [vmem:[%s209] sm:$0xf]
      %v224 = vld [vmem:[%s209 + $0x4] sm:$0xf]
      %v225 = vld [vmem:[%s209 + $0x8] sm:$0xf]
      %v226 = vld [vmem:[%s209 + $0xc] sm:$0xf]
      %v227 = vld [vmem:[%s209 + $0x10] sm:$0xf]
      %v228 = vld [vmem:[%s209 + $0x14] sm:$0xf]
      %v229 = vld [vmem:[%s209 + $0x18] sm:$0xf]
      %v230 = vld [vmem:[%s209 + $0x1c] sm:$0xf]
      %v231 = vld [vmem:[%s209 + $0x20] sm:$0xf]
      %v232 = vld [vmem:[%s209 + $0x24] sm:$0xf]
      %v233 = vld [vmem:[%s209 + $0x28] sm:$0xf]
      %v234 = vld [vmem:[%s209 + $0x2c] sm:$0xf]
      %v235 = vld [vmem:[%s209 + $0x30] sm:$0xf]
      %v236 = vld [vmem:[%s209 + $0x34] sm:$0xf]
      %v237 = vld [vmem:[%s209 + $0x38] sm:$0xf]
      %v238 = vld [vmem:[%s209 + $0x3c] sm:$0xf]
      %v239 = vld [vmem:[%s209 + $0x40] sm:$0xf]
      %v240 = vld [vmem:[%s209 + $0x44] sm:$0xf]
      %v241 = vld [vmem:[%s209 + $0x48] sm:$0xf]
      %v242 = vld [vmem:[%s209 + $0x4c] sm:$0xf]
      %v243 = vld [vmem:[%s209 + $0x50] sm:$0xf]
      %v244 = vld [vmem:[%s209 + $0x54] sm:$0xf]
      %v245 = vld [vmem:[%s209 + $0x58] sm:$0xf]
      %v246 = vld [vmem:[%s209 + $0x5c] sm:$0xf]
      %v247 = vld [vmem:[%s209 + $0x60] sm:$0xf]
      %v248 = vld [vmem:[%s209 + $0x64] sm:$0xf]
      %v249 = vld [vmem:[%s209 + $0x68] sm:$0xf]
      %v250 = vld [vmem:[%s209 + $0x6c] sm:$0xf]
      %v251 = vld [vmem:[%s209 + $0x70] sm:$0xf]
      %v252 = vld [vmem:[%s209 + $0x74] sm:$0xf]
      %v253 = vld [vmem:[%s209 + $0x78] sm:$0xf]
      %v254 = vld [vmem:[%s209 + $0x7c] sm:$0xf]
      %v255 = vunpack.c.l.bf16 %v223
      %v256 = vunpack.c.l.bf16 %v224
      %v257 = vunpack.c.l.bf16 %v225
      %v258 = vunpack.c.l.bf16 %v226
      %v259 = vunpack.c.l.bf16 %v227
      %v260 = vunpack.c.l.bf16 %v228
      %v261 = vunpack.c.l.bf16 %v229
      %v262 = vunpack.c.l.bf16 %v230
      %v263 = vunpack.c.l.bf16 %v231
      %v264 = vunpack.c.l.bf16 %v232
      %v265 = vunpack.c.l.bf16 %v233
      %v266 = vunpack.c.l.bf16 %v234
      %v267 = vunpack.c.l.bf16 %v235
      %v268 = vunpack.c.l.bf16 %v236
      %v269 = vunpack.c.l.bf16 %v237
      %v270 = vunpack.c.l.bf16 %v238
      %v271 = vunpack.c.l.bf16 %v239
      %v272 = vunpack.c.l.bf16 %v240
      %v273 = vunpack.c.l.bf16 %v241
      %v274 = vunpack.c.l.bf16 %v242
      %v275 = vunpack.c.l.bf16 %v243
      %v276 = vunpack.c.l.bf16 %v244
      %v277 = vunpack.c.l.bf16 %v245
      %v278 = vunpack.c.l.bf16 %v246
      %v279 = vunpack.c.l.bf16 %v247
      %v280 = vunpack.c.l.bf16 %v248
      %v281 = vunpack.c.l.bf16 %v249
      %v282 = vunpack.c.l.bf16 %v250
      %v283 = vunpack.c.l.bf16 %v251
      %v284 = vunpack.c.l.bf16 %v252
      %v285 = vunpack.c.l.bf16 %v253
      %v286 = vunpack.c.l.bf16 %v254
      %v287 = vld [vmem:[%s1] sm:$0x1]
      %v289 = vlaneseq
      %v290 = vshrl.u32 %v289, 7
      %v291 = vsub.s32 0, %v290
      %v292 = vrot.slane %v287, %v291
      %v294 = vmul.f32 %v255, %v292
      %v295 = vmul.f32 %v256, %v292
      %v296 = vmul.f32 %v257, %v292
      %v297 = vmul.f32 %v258, %v292
      %v298 = vmul.f32 %v259, %v292
      %v299 = vmul.f32 %v260, %v292
      %v300 = vmul.f32 %v261, %v292
      %v301 = vmul.f32 %v262, %v292
      %v302 = vmul.f32 %v263, %v292
      %v303 = vmul.f32 %v264, %v292
      %v304 = vmul.f32 %v265, %v292
      %v305 = vmul.f32 %v266, %v292
      %v306 = vmul.f32 %v267, %v292
      %v307 = vmul.f32 %v268, %v292
      %v308 = vmul.f32 %v269, %v292
      %v309 = vmul.f32 %v270, %v292
      %v310 = vmul.f32 %v271, %v292
      %v311 = vmul.f32 %v272, %v292
      %v312 = vmul.f32 %v273, %v292
      %v313 = vmul.f32 %v274, %v292
      %v314 = vmul.f32 %v275, %v292
      %v315 = vmul.f32 %v276, %v292
      %v316 = vmul.f32 %v277, %v292
      %v317 = vmul.f32 %v278, %v292
      %v318 = vmul.f32 %v279, %v292
      %v319 = vmul.f32 %v280, %v292
      %v320 = vmul.f32 %v281, %v292
      %v321 = vmul.f32 %v282, %v292
      %v322 = vmul.f32 %v283, %v292
      %v323 = vmul.f32 %v284, %v292
      %v324 = vmul.f32 %v285, %v292
      %v325 = vmul.f32 %v286, %v292
      %v326 = vld [vmem:[%s2] sm:$0x1]
      %v328 = vlaneseq
      %v329 = vshrl.u32 %v328, 7
      %v330 = vsub.s32 0, %v329
      %v331 = vrot.slane %v326, %v330
      %v333 = vadd.f32 %v294, %v331
      %v334 = vadd.f32 %v295, %v331
      %v335 = vadd.f32 %v296, %v331
      %v336 = vadd.f32 %v297, %v331
      %v337 = vadd.f32 %v298, %v331
      %v338 = vadd.f32 %v299, %v331
      %v339 = vadd.f32 %v300, %v331
      %v340 = vadd.f32 %v301, %v331
      %v341 = vadd.f32 %v302, %v331
      %v342 = vadd.f32 %v303, %v331
      %v343 = vadd.f32 %v304, %v331
      %v344 = vadd.f32 %v305, %v331
      %v345 = vadd.f32 %v306, %v331
      %v346 = vadd.f32 %v307, %v331
      %v347 = vadd.f32 %v308, %v331
      %v348 = vadd.f32 %v309, %v331
      %v349 = vadd.f32 %v310, %v331
      %v350 = vadd.f32 %v311, %v331
      %v351 = vadd.f32 %v312, %v331
      %v352 = vadd.f32 %v313, %v331
      %v353 = vadd.f32 %v314, %v331
      %v354 = vadd.f32 %v315, %v331
      %v355 = vadd.f32 %v316, %v331
      %v356 = vadd.f32 %v317, %v331
      %v357 = vadd.f32 %v318, %v331
      %v358 = vadd.f32 %v319, %v331
      %v359 = vadd.f32 %v320, %v331
      %v360 = vadd.f32 %v321, %v331
      %v361 = vadd.f32 %v322, %v331
      %v362 = vadd.f32 %v323, %v331
      %v363 = vadd.f32 %v324, %v331
      %v364 = vadd.f32 %v325, %v331
      %vm365 = vcmp.ge.f32.partialorder %v333, 0.0
      %vm366 = vcmp.ge.f32.partialorder %v334, 0.0
      %vm367 = vcmp.ge.f32.partialorder %v335, 0.0
      %vm368 = vcmp.ge.f32.partialorder %v336, 0.0
      %vm369 = vcmp.ge.f32.partialorder %v337, 0.0
      %vm370 = vcmp.ge.f32.partialorder %v338, 0.0
      %vm371 = vcmp.ge.f32.partialorder %v339, 0.0
      %vm372 = vcmp.ge.f32.partialorder %v340, 0.0
      %vm373 = vcmp.ge.f32.partialorder %v341, 0.0
      %vm374 = vcmp.ge.f32.partialorder %v342, 0.0
      %vm375 = vcmp.ge.f32.partialorder %v343, 0.0
      %vm376 = vcmp.ge.f32.partialorder %v344, 0.0
      %vm377 = vcmp.ge.f32.partialorder %v345, 0.0
      %vm378 = vcmp.ge.f32.partialorder %v346, 0.0
      %vm379 = vcmp.ge.f32.partialorder %v347, 0.0
      %vm380 = vcmp.ge.f32.partialorder %v348, 0.0
      %vm381 = vcmp.ge.f32.partialorder %v349, 0.0
      %vm382 = vcmp.ge.f32.partialorder %v350, 0.0
      %vm383 = vcmp.ge.f32.partialorder %v351, 0.0
      %vm384 = vcmp.ge.f32.partialorder %v352, 0.0
      %vm385 = vcmp.ge.f32.partialorder %v353, 0.0
      %vm386 = vcmp.ge.f32.partialorder %v354, 0.0
      %vm387 = vcmp.ge.f32.partialorder %v355, 0.0
      %vm388 = vcmp.ge.f32.partialorder %v356, 0.0
      %vm389 = vcmp.ge.f32.partialorder %v357, 0.0
      %vm390 = vcmp.ge.f32.partialorder %v358, 0.0
      %vm391 = vcmp.ge.f32.partialorder %v359, 0.0
      %vm392 = vcmp.ge.f32.partialorder %v360, 0.0
      %vm393 = vcmp.ge.f32.partialorder %v361, 0.0
      %vm394 = vcmp.ge.f32.partialorder %v362, 0.0
      %vm395 = vcmp.ge.f32.partialorder %v363, 0.0
      %vm396 = vcmp.ge.f32.partialorder %v364, 0.0
      %v397 = vmul.f32 %v333, 0.2
      %v398 = vmul.f32 %v334, 0.2
      %v399 = vmul.f32 %v335, 0.2
      %v400 = vmul.f32 %v336, 0.2
      %v401 = vmul.f32 %v337, 0.2
      %v402 = vmul.f32 %v338, 0.2
      %v403 = vmul.f32 %v339, 0.2
      %v404 = vmul.f32 %v340, 0.2
      %v405 = vmul.f32 %v341, 0.2
      %v406 = vmul.f32 %v342, 0.2
      %v407 = vmul.f32 %v343, 0.2
      %v408 = vmul.f32 %v344, 0.2
      %v409 = vmul.f32 %v345, 0.2
      %v410 = vmul.f32 %v346, 0.2
      %v411 = vmul.f32 %v347, 0.2
      %v412 = vmul.f32 %v348, 0.2
      %v413 = vmul.f32 %v349, 0.2
      %v414 = vmul.f32 %v350, 0.2
      %v415 = vmul.f32 %v351, 0.2
      %v416 = vmul.f32 %v352, 0.2
      %v417 = vmul.f32 %v353, 0.2
      %v418 = vmul.f32 %v354, 0.2
      %v419 = vmul.f32 %v355, 0.2
      %v420 = vmul.f32 %v356, 0.2
      %v421 = vmul.f32 %v357, 0.2
      %v422 = vmul.f32 %v358, 0.2
      %v423 = vmul.f32 %v359, 0.2
      %v424 = vmul.f32 %v360, 0.2
      %v425 = vmul.f32 %v361, 0.2
      %v426 = vmul.f32 %v362, 0.2
      %v427 = vmul.f32 %v363, 0.2
      %v428 = vmul.f32 %v364, 0.2
      %v429 = vsel %vm365, %v333, %v397
      %v430 = vsel %vm366, %v334, %v398
      %v431 = vsel %vm367, %v335, %v399
      %v432 = vsel %vm368, %v336, %v400
      %v433 = vsel %vm369, %v337, %v401
      %v434 = vsel %vm370, %v338, %v402
      %v435 = vsel %vm371, %v339, %v403
      %v436 = vsel %vm372, %v340, %v404
      %v437 = vsel %vm373, %v341, %v405
      %v438 = vsel %vm374, %v342, %v406
      %v439 = vsel %vm375, %v343, %v407
      %v440 = vsel %vm376, %v344, %v408
      %v441 = vsel %vm377, %v345, %v409
      %v442 = vsel %vm378, %v346, %v410
      %v443 = vsel %vm379, %v347, %v411
      %v444 = vsel %vm380, %v348, %v412
      %v445 = vsel %vm381, %v349, %v413
      %v446 = vsel %vm382, %v350, %v414
      %v447 = vsel %vm383, %v351, %v415
      %v448 = vsel %vm384, %v352, %v416
      %v449 = vsel %vm385, %v353, %v417
      %v450 = vsel %vm386, %v354, %v418
      %v451 = vsel %vm387, %v355, %v419
      %v452 = vsel %vm388, %v356, %v420
      %v453 = vsel %vm389, %v357, %v421
      %v454 = vsel %vm390, %v358, %v422
      %v455 = vsel %vm391, %v359, %v423
      %v456 = vsel %vm392, %v360, %v424
      %v457 = vsel %vm393, %v361, %v425
      %v458 = vsel %vm394, %v362, %v426
      %v459 = vsel %vm395, %v363, %v427
      %v460 = vsel %vm396, %v364, %v428
      %v461 = vld [vmem:[%s215] sm:$0xf]
      %v462 = vld [vmem:[%s215 + $0x4] sm:$0xf]
      %v463 = vld [vmem:[%s215 + $0x8] sm:$0xf]
      %v464 = vld [vmem:[%s215 + $0xc] sm:$0xf]
      %v465 = vld [vmem:[%s215 + $0x10] sm:$0xf]
      %v466 = vld [vmem:[%s215 + $0x14] sm:$0xf]
      %v467 = vld [vmem:[%s215 + $0x18] sm:$0xf]
      %v468 = vld [vmem:[%s215 + $0x1c] sm:$0xf]
      %v469 = vld [vmem:[%s215 + $0x20] sm:$0xf]
      %v470 = vld [vmem:[%s215 + $0x24] sm:$0xf]
      %v471 = vld [vmem:[%s215 + $0x28] sm:$0xf]
      %v472 = vld [vmem:[%s215 + $0x2c] sm:$0xf]
      %v473 = vld [vmem:[%s215 + $0x30] sm:$0xf]
      %v474 = vld [vmem:[%s215 + $0x34] sm:$0xf]
      %v475 = vld [vmem:[%s215 + $0x38] sm:$0xf]
      %v476 = vld [vmem:[%s215 + $0x3c] sm:$0xf]
      %v477 = vld [vmem:[%s215 + $0x40] sm:$0xf]
      %v478 = vld [vmem:[%s215 + $0x44] sm:$0xf]
      %v479 = vld [vmem:[%s215 + $0x48] sm:$0xf]
      %v480 = vld [vmem:[%s215 + $0x4c] sm:$0xf]
      %v481 = vld [vmem:[%s215 + $0x50] sm:$0xf]
      %v482 = vld [vmem:[%s215 + $0x54] sm:$0xf]
      %v483 = vld [vmem:[%s215 + $0x58] sm:$0xf]
      %v484 = vld [vmem:[%s215 + $0x5c] sm:$0xf]
      %v485 = vld [vmem:[%s215 + $0x60] sm:$0xf]
      %v486 = vld [vmem:[%s215 + $0x64] sm:$0xf]
      %v487 = vld [vmem:[%s215 + $0x68] sm:$0xf]
      %v488 = vld [vmem:[%s215 + $0x6c] sm:$0xf]
      %v489 = vld [vmem:[%s215 + $0x70] sm:$0xf]
      %v490 = vld [vmem:[%s215 + $0x74] sm:$0xf]
      %v491 = vld [vmem:[%s215 + $0x78] sm:$0xf]
      %v492 = vld [vmem:[%s215 + $0x7c] sm:$0xf]
      %v493 = vunpack.c.l.bf16 %v461
      %v494 = vunpack.c.l.bf16 %v462
      %v495 = vunpack.c.l.bf16 %v463
      %v496 = vunpack.c.l.bf16 %v464
      %v497 = vunpack.c.l.bf16 %v465
      %v498 = vunpack.c.l.bf16 %v466
      %v499 = vunpack.c.l.bf16 %v467
      %v500 = vunpack.c.l.bf16 %v468
      %v501 = vunpack.c.l.bf16 %v469
      %v502 = vunpack.c.l.bf16 %v470
      %v503 = vunpack.c.l.bf16 %v471
      %v504 = vunpack.c.l.bf16 %v472
      %v505 = vunpack.c.l.bf16 %v473
      %v506 = vunpack.c.l.bf16 %v474
      %v507 = vunpack.c.l.bf16 %v475
      %v508 = vunpack.c.l.bf16 %v476
      %v509 = vunpack.c.l.bf16 %v477
      %v510 = vunpack.c.l.bf16 %v478
      %v511 = vunpack.c.l.bf16 %v479
      %v512 = vunpack.c.l.bf16 %v480
      %v513 = vunpack.c.l.bf16 %v481
      %v514 = vunpack.c.l.bf16 %v482
      %v515 = vunpack.c.l.bf16 %v483
      %v516 = vunpack.c.l.bf16 %v484
      %v517 = vunpack.c.l.bf16 %v485
      %v518 = vunpack.c.l.bf16 %v486
      %v519 = vunpack.c.l.bf16 %v487
      %v520 = vunpack.c.l.bf16 %v488
      %v521 = vunpack.c.l.bf16 %v489
      %v522 = vunpack.c.l.bf16 %v490
      %v523 = vunpack.c.l.bf16 %v491
      %v524 = vunpack.c.l.bf16 %v492
      %v525 = vadd.f32 %v429, %v493
      %v526 = vadd.f32 %v430, %v494
      %v527 = vadd.f32 %v431, %v495
      %v528 = vadd.f32 %v432, %v496
      %v529 = vadd.f32 %v433, %v497
      %v530 = vadd.f32 %v434, %v498
      %v531 = vadd.f32 %v435, %v499
      %v532 = vadd.f32 %v436, %v500
      %v533 = vadd.f32 %v437, %v501
      %v534 = vadd.f32 %v438, %v502
      %v535 = vadd.f32 %v439, %v503
      %v536 = vadd.f32 %v440, %v504
      %v537 = vadd.f32 %v441, %v505
      %v538 = vadd.f32 %v442, %v506
      %v539 = vadd.f32 %v443, %v507
      %v540 = vadd.f32 %v444, %v508
      %v541 = vadd.f32 %v445, %v509
      %v542 = vadd.f32 %v446, %v510
      %v543 = vadd.f32 %v447, %v511
      %v544 = vadd.f32 %v448, %v512
      %v545 = vadd.f32 %v449, %v513
      %v546 = vadd.f32 %v450, %v514
      %v547 = vadd.f32 %v451, %v515
      %v548 = vadd.f32 %v452, %v516
      %v549 = vadd.f32 %v453, %v517
      %v550 = vadd.f32 %v454, %v518
      %v551 = vadd.f32 %v455, %v519
      %v552 = vadd.f32 %v456, %v520
      %v553 = vadd.f32 %v457, %v521
      %v554 = vadd.f32 %v458, %v522
      %v555 = vadd.f32 %v459, %v523
      %v556 = vadd.f32 %v460, %v524
      %v557 = vmax.f32 %v525, 0.0
      %v558 = vmax.f32 %v526, 0.0
      %v559 = vmax.f32 %v527, 0.0
      %v560 = vmax.f32 %v528, 0.0
      %v561 = vmax.f32 %v529, 0.0
      %v562 = vmax.f32 %v530, 0.0
      %v563 = vmax.f32 %v531, 0.0
      %v564 = vmax.f32 %v532, 0.0
      %v565 = vmax.f32 %v533, 0.0
      %v566 = vmax.f32 %v534, 0.0
      %v567 = vmax.f32 %v535, 0.0
      %v568 = vmax.f32 %v536, 0.0
      %v569 = vmax.f32 %v537, 0.0
      %v570 = vmax.f32 %v538, 0.0
      %v571 = vmax.f32 %v539, 0.0
      %v572 = vmax.f32 %v540, 0.0
      %v573 = vmax.f32 %v541, 0.0
      %v574 = vmax.f32 %v542, 0.0
      %v575 = vmax.f32 %v543, 0.0
      %v576 = vmax.f32 %v544, 0.0
      %v577 = vmax.f32 %v545, 0.0
      %v578 = vmax.f32 %v546, 0.0
      %v579 = vmax.f32 %v547, 0.0
      %v580 = vmax.f32 %v548, 0.0
      %v581 = vmax.f32 %v549, 0.0
      %v582 = vmax.f32 %v550, 0.0
      %v583 = vmax.f32 %v551, 0.0
      %v584 = vmax.f32 %v552, 0.0
      %v585 = vmax.f32 %v553, 0.0
      %v586 = vmax.f32 %v554, 0.0
      %v587 = vmax.f32 %v555, 0.0
      %v588 = vmax.f32 %v556, 0.0
      %589 = vst [vmem:[%s221] sm:$0xff] %v557
      %590 = vst [vmem:[%s221 + $0x8] sm:$0xff] %v558
      %591 = vst [vmem:[%s221 + $0x10] sm:$0xff] %v559
      %592 = vst [vmem:[%s221 + $0x18] sm:$0xff] %v560
      %593 = vst [vmem:[%s221 + $0x20] sm:$0xff] %v561
      %594 = vst [vmem:[%s221 + $0x28] sm:$0xff] %v562
      %595 = vst [vmem:[%s221 + $0x30] sm:$0xff] %v563
      %596 = vst [vmem:[%s221 + $0x38] sm:$0xff] %v564
      %597 = vst [vmem:[%s221 + $0x40] sm:$0xff] %v565
      %598 = vst [vmem:[%s221 + $0x48] sm:$0xff] %v566
      %599 = vst [vmem:[%s221 + $0x50] sm:$0xff] %v567
      %600 = vst [vmem:[%s221 + $0x58] sm:$0xff] %v568
      %601 = vst [vmem:[%s221 + $0x60] sm:$0xff] %v569
      %602 = vst [vmem:[%s221 + $0x68] sm:$0xff] %v570
      %603 = vst [vmem:[%s221 + $0x70] sm:$0xff] %v571
      %604 = vst [vmem:[%s221 + $0x78] sm:$0xff] %v572
      %605 = vst [vmem:[%s221 + $0x80] sm:$0xff] %v573
      %606 = vst [vmem:[%s221 + $0x88] sm:$0xff] %v574
      %607 = vst [vmem:[%s221 + $0x90] sm:$0xff] %v575
      %608 = vst [vmem:[%s221 + $0x98] sm:$0xff] %v576
      %609 = vst [vmem:[%s221 + $0xa0] sm:$0xff] %v577
      %610 = vst [vmem:[%s221 + $0xa8] sm:$0xff] %v578
      %611 = vst [vmem:[%s221 + $0xb0] sm:$0xff] %v579
      %612 = vst [vmem:[%s221 + $0xb8] sm:$0xff] %v580
      %613 = vst [vmem:[%s221 + $0xc0] sm:$0xff] %v581
      %614 = vst [vmem:[%s221 + $0xc8] sm:$0xff] %v582
      %615 = vst [vmem:[%s221 + $0xd0] sm:$0xff] %v583
      %616 = vst [vmem:[%s221 + $0xd8] sm:$0xff] %v584
      %617 = vst [vmem:[%s221 + $0xe0] sm:$0xff] %v585
      %618 = vst [vmem:[%s221 + $0xe8] sm:$0xff] %v586
      %619 = vst [vmem:[%s221 + $0xf0] sm:$0xff] %v587
      %620 = vst [vmem:[%s221 + $0xf8] sm:$0xff] %v588
      %s621 = smul.u32 32, %s15
      %p622 = scmp.lt.s32.totalorder %s621, 63
      %s623 = scalar_select %p622, %s621, 63
      %s624 = smul.addr %s623, 8
      %s625 = scalar_lea.vmem %s4, %s624
      // Predicated region
      $region37: #{bottleneck_bn.9} parent=35 // pred_check
        %p626 = pneg %p127
      $region38: #{bottleneck_bn.9} parent=35 // pred_check_branch
        %628 = sbr.rel (%p626) target = $region40
      $region39: #{bottleneck_bn.9} parent=35 // pred_region
        %s629 = smul.u32 32, %s15
      $region40: #{bottleneck_bn.9} parent=35 // pred_fallthru
        _
    $region36: #{bottleneck_bn.9} parent=5 // pred_fallthru
      _
    %p630 = scmp.le.s32.totalorder 2, %s10
    // Predicated region
    $region41: #{bottleneck_bn.9} parent=5 // pred_check
      %p631 = pneg %p630
    $region42: #{bottleneck_bn.9} parent=5 // pred_check_branch
      %633 = sbr.rel (%p631) target = $region44
    $region43: #{bottleneck_bn.9} parent=5 // pred_region
      %s634 = ssub.s32 %s10, 2
      // Predicated region
      $region45: #{bottleneck_bn.9} parent=43 // pred_check
        %p635 = pneg %p133
      $region46: #{bottleneck_bn.9} parent=43 // pred_check_branch
        %637 = sbr.rel (%p635) target = $region48
      $region47: #{bottleneck_bn.9} parent=43 // pred_region
        %s638 = smul.u32 32, %s16
        %p639 = scmp.lt.s32.totalorder %s638, 63
        %s640 = scalar_select %p639, %s638, 63
        %s641 = smul.addr %s640, 8
        %s642 = scalar_lea.vmem %s4, %s641
      $region48: #{bottleneck_bn.9} parent=43 // pred_fallthru
        _
    $region44: #{bottleneck_bn.9} parent=5 // pred_fallthru
      _
  $region6: #{bottleneck_bn.9} parent=0 // loop_footer
    %s14 = sadd.s32 1, %s10
  $region7: #{bottleneck_bn.9} parent=0 // loop_footer_branch
    %9 = sbr.rel target = $region3
  $region8: #{bottleneck_bn.9} parent=0 // loop_exit
    _

// kernel: bottleneck_bn.8
$region0: #{bottleneck_bn.8}
  #allocation0 [shape = 'u32[]', space=smem, size = 0x4, offset = 0x4, fixed_abs, tag = 'smem constant byte address 0x4 - core index']
  #allocation1 [shape = 'u32[144,128]{1,0:T(1,128)}', space=vmem, size = 0x12000, scoped, tag = 'internal scratch']
  %s0 = inlined_call_operand.vmem [shape: bf16[512,128], index: 0, kind: input, shape index: {}]
  %s1 = inlined_call_operand.vmem [shape: f32[1,128], index: 1, kind: input, shape index: {}]
  %s2 = inlined_call_operand.vmem [shape: f32[1,128], index: 2, kind: input, shape index: {}]
  %s3 = inlined_call_operand.vmem [shape: bf16[128,128], index: 3, kind: input, shape index: {}]
  %s4 = inlined_call_operand.vmem [shape: bf16[512,128], index: 4, kind: output, shape index: {0}]
  %s5 = inlined_call_operand.vmem [shape: f32[2,2,128], index: 5, kind: output, shape index: {1}]
  %6 = xla_tuple %s4, %s5
  %s7 = sld [smem:[#allocation0]]
  $region57: #{bottleneck_bn.8} parent=0
    _
  %s9 = ssub.s32 1, %s7
  %s10 = scalar_select 0, %s9, %s7
  loop: start=0, step=1, limit=4
  $region2: #{bottleneck_bn.8} parent=0 // loop_pre_header
    _
  $region3: #{bottleneck_bn.8} parent=0 // loop_header
    %s12 = sphi 0, %s16
    %p13 = scmp.ge.s32.totalorder %s12, 4
    %s22 = sphi 0, %s24
    %s25 = sphi 0, %s22
    %s26 = sphi 0, %s25
    %s42 = sphi 0, %s26
    %s46 = sphi 0, %s46
    %s48 = sphi 0, %s46
    %s49 = sphi 0, %s48
    %s63 = sphi 0, %s49
    %s67 = sphi 0, %s67
    %s69 = sphi 0, %s67
    %s70 = sphi 0, %s69
    %s84 = sphi 0, %s70
    %s88 = sphi 0, %s88
    %s90 = sphi 0, %s88
    %s91 = sphi 0, %s90
    %s105 = sphi 0, %s91
    %s111 = sphi 0, %s113
    %s114 = sphi 0, %s111
    %s115 = sphi 0, %s114
    %s131 = sphi 0, %s115
    %s137 = sphi 0, %s139
    %s140 = sphi 0, %s137
    %s141 = sphi 0, %s140
    %s157 = sphi 0, %s141
  $region4: #{bottleneck_bn.8} parent=0 // loop_header_branch
    %15 = sbr.rel (%p13) target = $region8
  $region5: #{bottleneck_bn.8} parent=0 // loop_body
    %s17 = ssub.s32 %s12, 1
    %s18 = ssub.s32 %s12, 2
    %s19 = sadd.s32 %s12, 1
    %s20 = ssub.s32 %s12, %s19
    %p21 = scmp.eq.s32.totalorder %s20, 0
    %s23 = sadd.s32 %s22, 1
    %s24 = scalar_select %p21, %s22, %s23
    %p27 = pneg %p21
    %p28 = scmp.eq.s32.totalorder %s12, 1
    %p29 = por %p27, %p28
    %p30 = scmp.ne.s32.totalorder %s22, %s25
    %p31 = scmp.eq.s32.totalorder %s12, 0
    %p32 = por %p30, %p31
    %p33 = scmp.ne.s32.totalorder %s22, %s25
    %p34 = scmp.eq.s32.totalorder %s17, 1
    %p35 = por %p33, %p34
    %p36 = scmp.ne.s32.totalorder %s25, %s26
    %p37 = scmp.eq.s32.totalorder %s17, 0
    %p38 = por %p36, %p37
    %p39 = scmp.ne.s32.totalorder %s25, %s26
    %p40 = scmp.eq.s32.totalorder %s18, 1
    %p41 = por %p39, %p40
    %p43 = scmp.ne.s32.totalorder %s26, %s42
    %p44 = scmp.eq.s32.totalorder %s18, 0
    %p45 = por %p43, %p44
    %s47 = sadd.s32 %s46, 1
    %p50 = scmp.eq.s32.totalorder %s12, 1
    %p51 = scmp.ne.s32.totalorder %s46, %s48
    %p52 = scmp.eq.s32.totalorder %s12, 0
    %p53 = por %p51, %p52
    %p54 = scmp.ne.s32.totalorder %s46, %s48
    %p55 = scmp.eq.s32.totalorder %s17, 1
    %p56 = por %p54, %p55
    %p57 = scmp.ne.s32.totalorder %s48, %s49
    %p58 = scmp.eq.s32.totalorder %s17, 0
    %p59 = por %p57, %p58
    %p60 = scmp.ne.s32.totalorder %s48, %s49
    %p61 = scmp.eq.s32.totalorder %s18, 1
    %p62 = por %p60, %p61
    %p64 = scmp.ne.s32.totalorder %s49, %s63
    %p65 = scmp.eq.s32.totalorder %s18, 0
    %p66 = por %p64, %p65
    %s68 = sadd.s32 %s67, 1
    %p71 = scmp.eq.s32.totalorder %s12, 1
    %p72 = scmp.ne.s32.totalorder %s67, %s69
    %p73 = scmp.eq.s32.totalorder %s12, 0
    %p74 = por %p72, %p73
    %p75 = scmp.ne.s32.totalorder %s67, %s69
    %p76 = scmp.eq.s32.totalorder %s17, 1
    %p77 = por %p75, %p76
    %p78 = scmp.ne.s32.totalorder %s69, %s70
    %p79 = scmp.eq.s32.totalorder %s17, 0
    %p80 = por %p78, %p79
    %p81 = scmp.ne.s32.totalorder %s69, %s70
    %p82 = scmp.eq.s32.totalorder %s18, 1
    %p83 = por %p81, %p82
    %p85 = scmp.ne.s32.totalorder %s70, %s84
    %p86 = scmp.eq.s32.totalorder %s18, 0
    %p87 = por %p85, %p86
    %s89 = sadd.s32 %s88, 1
    %p92 = scmp.eq.s32.totalorder %s12, 1
    %p93 = scmp.ne.s32.totalorder %s88, %s90
    %p94 = scmp.eq.s32.totalorder %s12, 0
    %p95 = por %p93, %p94
    %p96 = scmp.ne.s32.totalorder %s88, %s90
    %p97 = scmp.eq.s32.totalorder %s17, 1
    %p98 = por %p96, %p97
    %p99 = scmp.ne.s32.totalorder %s90, %s91
    %p100 = scmp.eq.s32.totalorder %s17, 0
    %p101 = por %p99, %p100
    %p102 = scmp.ne.s32.totalorder %s90, %s91
    %p103 = scmp.eq.s32.totalorder %s18, 1
    %p104 = por %p102, %p103
    %p106 = scmp.ne.s32.totalorder %s91, %s105
    %p107 = scmp.eq.s32.totalorder %s18, 0
    %p108 = por %p106, %p107
    %s109 = ssub.s32 %s12, %s19
    %p110 = scmp.eq.s32.totalorder %s109, 0
    %s112 = sadd.s32 %s111, 1
    %s113 = scalar_select %p110, %s111, %s112
    %p116 = pneg %p110
    %p117 = scmp.eq.s32.totalorder %s12, 1
    %p118 = por %p116, %p117
    %p119 = scmp.ne.s32.totalorder %s111, %s114
    %p120 = scmp.eq.s32.totalorder %s12, 0
    %p121 = por %p119, %p120
    %p122 = scmp.ne.s32.totalorder %s111, %s114
    %p123 = scmp.eq.s32.totalorder %s17, 1
    %p124 = por %p122, %p123
    %p125 = scmp.ne.s32.totalorder %s114, %s115
    %p126 = scmp.eq.s32.totalorder %s17, 0
    %p127 = por %p125, %p126
    %p128 = scmp.ne.s32.totalorder %s114, %s115
    %p129 = scmp.eq.s32.totalorder %s18, 1
    %p130 = por %p128, %p129
    %p132 = scmp.ne.s32.totalorder %s115, %s131
    %p133 = scmp.eq.s32.totalorder %s18, 0
    %p134 = por %p132, %p133
    %s135 = ssub.s32 %s12, %s19
    %p136 = scmp.eq.s32.totalorder %s135, 0
    %s138 = sadd.s32 %s137, 1
    %s139 = scalar_select %p136, %s137, %s138
    %p142 = pneg %p136
    %p143 = scmp.eq.s32.totalorder %s12, 1
    %p144 = por %p142, %p143
    %p145 = scmp.ne.s32.totalorder %s137, %s140
    %p146 = scmp.eq.s32.totalorder %s12, 0
    %p147 = por %p145, %p146
    %p148 = scmp.ne.s32.totalorder %s137, %s140
    %p149 = scmp.eq.s32.totalorder %s17, 1
    %p150 = por %p148, %p149
    %p151 = scmp.ne.s32.totalorder %s140, %s141
    %p152 = scmp.eq.s32.totalorder %s17, 0
    %p153 = por %p151, %p152
    %p154 = scmp.ne.s32.totalorder %s140, %s141
    %p155 = scmp.eq.s32.totalorder %s18, 1
    %p156 = por %p154, %p155
    %p158 = scmp.ne.s32.totalorder %s141, %s157
    %p159 = scmp.eq.s32.totalorder %s18, 0
    %p160 = por %p158, %p159
    %p161 = scmp.le.s32.totalorder 1, %s12
    %p162 = scmp.lt.s32.totalorder %s12, 3
    %p163 = pnand %p161, %p162
    %p164 = pneg %p163
    // Predicated region
    $region9: #{bottleneck_bn.8} parent=5 // pred_check
      _
    $region10: #{bottleneck_bn.8} parent=5 // pred_check_branch
      %166 = sbr.rel (%p163) target = $region12
    $region11: #{bottleneck_bn.8} parent=5 // pred_region
      %s167 = ssub.s32 %s12, 1
      // Predicated region
      $region13: #{bottleneck_bn.8} parent=11 // pred_check
        %p168 = pneg %p59
      $region14: #{bottleneck_bn.8} parent=11 // pred_check_branch
        %170 = sbr.rel (%p168) target = $region16
      $region15: #{bottleneck_bn.8} parent=11 // pred_region
        _
      $region16: #{bottleneck_bn.8} parent=11 // pred_fallthru
        _
      // Predicated region
      $region17: #{bottleneck_bn.8} parent=11 // pred_check
        %p171 = pneg %p80
      $region18: #{bottleneck_bn.8} parent=11 // pred_check_branch
        %173 = sbr.rel (%p171) target = $region20
      $region19: #{bottleneck_bn.8} parent=11 // pred_region
        _
      $region20: #{bottleneck_bn.8} parent=11 // pred_fallthru
        _
      // Predicated region
      $region21: #{bottleneck_bn.8} parent=11 // pred_check
        %p174 = pneg %p101
      $region22: #{bottleneck_bn.8} parent=11 // pred_check_branch
        %176 = sbr.rel (%p174) target = $region24
      $region23: #{bottleneck_bn.8} parent=11 // pred_region
        _
      $region24: #{bottleneck_bn.8} parent=11 // pred_fallthru
        _
    $region12: #{bottleneck_bn.8} parent=5 // pred_fallthru
      _
    %p177 = scmp.lt.s32.totalorder %s12, 2
    // Predicated region
    $region25: #{bottleneck_bn.8} parent=5 // pred_check
      %p178 = pneg %p177
    $region26: #{bottleneck_bn.8} parent=5 // pred_check_branch
      %180 = sbr.rel (%p178) target = $region28
    $region27: #{bottleneck_bn.8} parent=5 // pred_region
      // Predicated region
      $region29: #{bottleneck_bn.8} parent=27 // pred_check
        %p181 = pneg %p32
      $region30: #{bottleneck_bn.8} parent=27 // pred_check_branch
        %183 = sbr.rel (%p181) target = $region32
      $region31: #{bottleneck_bn.8} parent=27 // pred_region
        %s184 = smul.u32 32, %s12
        %p185 = scmp.lt.s32.totalorder %s184, 63
        %s186 = scalar_select %p185, %s184, 63
        %s187 = smul.addr %s186, 4
        %s188 = scalar_lea.vmem %s0, %s187
        %s189 = smul.u32 32, %s12
      $region32: #{bottleneck_bn.8} parent=27 // pred_fallthru
        _
    $region28: #{bottleneck_bn.8} parent=5 // pred_fallthru
      _
    %p190 = scmp.le.s32.totalorder 1, %s12
    %p191 = scmp.lt.s32.totalorder %s12, 3
    %p192 = pnand %p190, %p191
    %p193 = pneg %p192
    // Predicated region
    $region33: #{bottleneck_bn.8} parent=5 // pred_check
      _
    $region34: #{bottleneck_bn.8} parent=5 // pred_check_branch
      %195 = sbr.rel (%p192) target = $region36
    $region35: #{bottleneck_bn.8} parent=5 // pred_region
      %s196 = ssub.s32 %s12, 1
      %s197 = smul.u32 32, %s17
      %p198 = scmp.lt.s32.totalorder %s197, 63
      %s199 = scalar_select %p198, %s197, 63
      %s200 = smul.addr %s199, 4
      %s201 = scalar_lea.vmem %s0, %s200
      %p202 = pneg %p38
      %p203 = pneg %p35
      %p204 = pneg %p59
      %p205 = pneg %p56
      %p206 = pneg %p80
      %p207 = pneg %p77
      %p208 = pneg %p101
      %p209 = pneg %p98
      %p210 = pneg %p127
      %p211 = pneg %p124
      %s212 = smul.u32 32, %s17
      %p213 = scmp.lt.s32.totalorder %s212, 63
      %s214 = scalar_select %p213, %s212, 63
      %s215 = smul.addr %s214, 4
      %s216 = scalar_lea.vmem %s4, %s215
      %p217 = pneg %p153
      %p218 = pneg %p150
      %p219 = scmp.lt.s32.totalorder %s17, 1
      %s220 = scalar_select %p219, %s17, 1
      %s221 = smul.addr %s220, 2
      %s222 = scalar_lea.vmem %s5, %s221
      %s223 = smul.u32 32, %s17
      %p224 = scmp.lt.s32.totalorder %s223, 63
      %s225 = scalar_select %p224, %s223, 63
      %s226 = smul.addr %s225, 4
      %s227 = scalar_lea.vmem %s0, %s226
      %s228 = smul.u32 32, %s17
      %s229 = smul.u32 32, %s17
      %p230 = scmp.lt.s32.totalorder %s229, 63
      %s231 = scalar_select %p230, %s229, 63
      %s232 = smul.addr %s231, 4
      %s233 = scalar_lea.vmem %s4, %s232
      %s234 = smul.u32 32, %s17
      %p235 = scmp.lt.s32.totalorder %s17, 1
      %s236 = scalar_select %p235, %s17, 1
      %s237 = smul.addr %s236, 2
      %s238 = scalar_lea.vmem %s5, %s237
      %v240 = vld [vmem:[%s227] sm:$0xf]
      %v241 = vld [vmem:[%s227 + $0x4] sm:$0xf]
      %v242 = vld [vmem:[%s227 + $0x8] sm:$0xf]
      %v243 = vld [vmem:[%s227 + $0xc] sm:$0xf]
      %v244 = vld [vmem:[%s227 + $0x10] sm:$0xf]
      %v245 = vld [vmem:[%s227 + $0x14] sm:$0xf]
      %v246 = vld [vmem:[%s227 + $0x18] sm:$0xf]
      %v247 = vld [vmem:[%s227 + $0x1c] sm:$0xf]
      %v248 = vld [vmem:[%s227 + $0x20] sm:$0xf]
      %v249 = vld [vmem:[%s227 + $0x24] sm:$0xf]
      %v250 = vld [vmem:[%s227 + $0x28] sm:$0xf]
      %v251 = vld [vmem:[%s227 + $0x2c] sm:$0xf]
      %v252 = vld [vmem:[%s227 + $0x30] sm:$0xf]
      %v253 = vld [vmem:[%s227 + $0x34] sm:$0xf]
      %v254 = vld [vmem:[%s227 + $0x38] sm:$0xf]
      %v255 = vld [vmem:[%s227 + $0x3c] sm:$0xf]
      %v256 = vld [vmem:[%s227 + $0x40] sm:$0xf]
      %v257 = vld [vmem:[%s227 + $0x44] sm:$0xf]
      %v258 = vld [vmem:[%s227 + $0x48] sm:$0xf]
      %v259 = vld [vmem:[%s227 + $0x4c] sm:$0xf]
      %v260 = vld [vmem:[%s227 + $0x50] sm:$0xf]
      %v261 = vld [vmem:[%s227 + $0x54] sm:$0xf]
      %v262 = vld [vmem:[%s227 + $0x58] sm:$0xf]
      %v263 = vld [vmem:[%s227 + $0x5c] sm:$0xf]
      %v264 = vld [vmem:[%s227 + $0x60] sm:$0xf]
      %v265 = vld [vmem:[%s227 + $0x64] sm:$0xf]
      %v266 = vld [vmem:[%s227 + $0x68] sm:$0xf]
      %v267 = vld [vmem:[%s227 + $0x6c] sm:$0xf]
      %v268 = vld [vmem:[%s227 + $0x70] sm:$0xf]
      %v269 = vld [vmem:[%s227 + $0x74] sm:$0xf]
      %v270 = vld [vmem:[%s227 + $0x78] sm:$0xf]
      %v271 = vld [vmem:[%s227 + $0x7c] sm:$0xf]
      %v272 = vunpack.c.l.bf16 %v240
      %v273 = vunpack.c.l.bf16 %v241
      %v274 = vunpack.c.l.bf16 %v242
      %v275 = vunpack.c.l.bf16 %v243
      %v276 = vunpack.c.l.bf16 %v244
      %v277 = vunpack.c.l.bf16 %v245
      %v278 = vunpack.c.l.bf16 %v246
      %v279 = vunpack.c.l.bf16 %v247
      %v280 = vunpack.c.l.bf16 %v248
      %v281 = vunpack.c.l.bf16 %v249
      %v282 = vunpack.c.l.bf16 %v250
      %v283 = vunpack.c.l.bf16 %v251
      %v284 = vunpack.c.l.bf16 %v252
      %v285 = vunpack.c.l.bf16 %v253
      %v286 = vunpack.c.l.bf16 %v254
      %v287 = vunpack.c.l.bf16 %v255
      %v288 = vunpack.c.l.bf16 %v256
      %v289 = vunpack.c.l.bf16 %v257
      %v290 = vunpack.c.l.bf16 %v258
      %v291 = vunpack.c.l.bf16 %v259
      %v292 = vunpack.c.l.bf16 %v260
      %v293 = vunpack.c.l.bf16 %v261
      %v294 = vunpack.c.l.bf16 %v262
      %v295 = vunpack.c.l.bf16 %v263
      %v296 = vunpack.c.l.bf16 %v264
      %v297 = vunpack.c.l.bf16 %v265
      %v298 = vunpack.c.l.bf16 %v266
      %v299 = vunpack.c.l.bf16 %v267
      %v300 = vunpack.c.l.bf16 %v268
      %v301 = vunpack.c.l.bf16 %v269
      %v302 = vunpack.c.l.bf16 %v270
      %v303 = vunpack.c.l.bf16 %v271
      %v304 = vld [vmem:[%s1] sm:$0x1]
      %v306 = vlaneseq
      %v307 = vshrl.u32 %v306, 7
      %v308 = vsub.s32 0, %v307
      %v309 = vrot.slane %v304, %v308
      %v311 = vmul.f32 %v272, %v309
      %v312 = vmul.f32 %v273, %v309
      %v313 = vmul.f32 %v274, %v309
      %v314 = vmul.f32 %v275, %v309
      %v315 = vmul.f32 %v276, %v309
      %v316 = vmul.f32 %v277, %v309
      %v317 = vmul.f32 %v278, %v309
      %v318 = vmul.f32 %v279, %v309
      %v319 = vmul.f32 %v280, %v309
      %v320 = vmul.f32 %v281, %v309
      %v321 = vmul.f32 %v282, %v309
      %v322 = vmul.f32 %v283, %v309
      %v323 = vmul.f32 %v284, %v309
      %v324 = vmul.f32 %v285, %v309
      %v325 = vmul.f32 %v286, %v309
      %v326 = vmul.f32 %v287, %v309
      %v327 = vmul.f32 %v288, %v309
      %v328 = vmul.f32 %v289, %v309
      %v329 = vmul.f32 %v290, %v309
      %v330 = vmul.f32 %v291, %v309
      %v331 = vmul.f32 %v292, %v309
      %v332 = vmul.f32 %v293, %v309
      %v333 = vmul.f32 %v294, %v309
      %v334 = vmul.f32 %v295, %v309
      %v335 = vmul.f32 %v296, %v309
      %v336 = vmul.f32 %v297, %v309
      %v337 = vmul.f32 %v298, %v309
      %v338 = vmul.f32 %v299, %v309
      %v339 = vmul.f32 %v300, %v309
      %v340 = vmul.f32 %v301, %v309
      %v341 = vmul.f32 %v302, %v309
      %v342 = vmul.f32 %v303, %v309
      %v343 = vld [vmem:[%s2] sm:$0x1]
      %v345 = vlaneseq
      %v346 = vshrl.u32 %v345, 7
      %v347 = vsub.s32 0, %v346
      %v348 = vrot.slane %v343, %v347
      %v350 = vadd.f32 %v311, %v348
      %v351 = vadd.f32 %v312, %v348
      %v352 = vadd.f32 %v313, %v348
      %v353 = vadd.f32 %v314, %v348
      %v354 = vadd.f32 %v315, %v348
      %v355 = vadd.f32 %v316, %v348
      %v356 = vadd.f32 %v317, %v348
      %v357 = vadd.f32 %v318, %v348
      %v358 = vadd.f32 %v319, %v348
      %v359 = vadd.f32 %v320, %v348
      %v360 = vadd.f32 %v321, %v348
      %v361 = vadd.f32 %v322, %v348
      %v362 = vadd.f32 %v323, %v348
      %v363 = vadd.f32 %v324, %v348
      %v364 = vadd.f32 %v325, %v348
      %v365 = vadd.f32 %v326, %v348
      %v366 = vadd.f32 %v327, %v348
      %v367 = vadd.f32 %v328, %v348
      %v368 = vadd.f32 %v329, %v348
      %v369 = vadd.f32 %v330, %v348
      %v370 = vadd.f32 %v331, %v348
      %v371 = vadd.f32 %v332, %v348
      %v372 = vadd.f32 %v333, %v348
      %v373 = vadd.f32 %v334, %v348
      %v374 = vadd.f32 %v335, %v348
      %v375 = vadd.f32 %v336, %v348
      %v376 = vadd.f32 %v337, %v348
      %v377 = vadd.f32 %v338, %v348
      %v378 = vadd.f32 %v339, %v348
      %v379 = vadd.f32 %v340, %v348
      %v380 = vadd.f32 %v341, %v348
      %v381 = vadd.f32 %v342, %v348
      %vm382 = vcmp.ge.f32.partialorder %v350, 0.0
      %vm383 = vcmp.ge.f32.partialorder %v351, 0.0
      %vm384 = vcmp.ge.f32.partialorder %v352, 0.0
      %vm385 = vcmp.ge.f32.partialorder %v353, 0.0
      %vm386 = vcmp.ge.f32.partialorder %v354, 0.0
      %vm387 = vcmp.ge.f32.partialorder %v355, 0.0
      %vm388 = vcmp.ge.f32.partialorder %v356, 0.0
      %vm389 = vcmp.ge.f32.partialorder %v357, 0.0
      %vm390 = vcmp.ge.f32.partialorder %v358, 0.0
      %vm391 = vcmp.ge.f32.partialorder %v359, 0.0
      %vm392 = vcmp.ge.f32.partialorder %v360, 0.0
      %vm393 = vcmp.ge.f32.partialorder %v361, 0.0
      %vm394 = vcmp.ge.f32.partialorder %v362, 0.0
      %vm395 = vcmp.ge.f32.partialorder %v363, 0.0
      %vm396 = vcmp.ge.f32.partialorder %v364, 0.0
      %vm397 = vcmp.ge.f32.partialorder %v365, 0.0
      %vm398 = vcmp.ge.f32.partialorder %v366, 0.0
      %vm399 = vcmp.ge.f32.partialorder %v367, 0.0
      %vm400 = vcmp.ge.f32.partialorder %v368, 0.0
      %vm401 = vcmp.ge.f32.partialorder %v369, 0.0
      %vm402 = vcmp.ge.f32.partialorder %v370, 0.0
      %vm403 = vcmp.ge.f32.partialorder %v371, 0.0
      %vm404 = vcmp.ge.f32.partialorder %v372, 0.0
      %vm405 = vcmp.ge.f32.partialorder %v373, 0.0
      %vm406 = vcmp.ge.f32.partialorder %v374, 0.0
      %vm407 = vcmp.ge.f32.partialorder %v375, 0.0
      %vm408 = vcmp.ge.f32.partialorder %v376, 0.0
      %vm409 = vcmp.ge.f32.partialorder %v377, 0.0
      %vm410 = vcmp.ge.f32.partialorder %v378, 0.0
      %vm411 = vcmp.ge.f32.partialorder %v379, 0.0
      %vm412 = vcmp.ge.f32.partialorder %v380, 0.0
      %vm413 = vcmp.ge.f32.partialorder %v381, 0.0
      %v414 = vmul.f32 %v350, 0.2
      %v415 = vmul.f32 %v351, 0.2
      %v416 = vmul.f32 %v352, 0.2
      %v417 = vmul.f32 %v353, 0.2
      %v418 = vmul.f32 %v354, 0.2
      %v419 = vmul.f32 %v355, 0.2
      %v420 = vmul.f32 %v356, 0.2
      %v421 = vmul.f32 %v357, 0.2
      %v422 = vmul.f32 %v358, 0.2
      %v423 = vmul.f32 %v359, 0.2
      %v424 = vmul.f32 %v360, 0.2
      %v425 = vmul.f32 %v361, 0.2
      %v426 = vmul.f32 %v362, 0.2
      %v427 = vmul.f32 %v363, 0.2
      %v428 = vmul.f32 %v364, 0.2
      %v429 = vmul.f32 %v365, 0.2
      %v430 = vmul.f32 %v366, 0.2
      %v431 = vmul.f32 %v367, 0.2
      %v432 = vmul.f32 %v368, 0.2
      %v433 = vmul.f32 %v369, 0.2
      %v434 = vmul.f32 %v370, 0.2
      %v435 = vmul.f32 %v371, 0.2
      %v436 = vmul.f32 %v372, 0.2
      %v437 = vmul.f32 %v373, 0.2
      %v438 = vmul.f32 %v374, 0.2
      %v439 = vmul.f32 %v375, 0.2
      %v440 = vmul.f32 %v376, 0.2
      %v441 = vmul.f32 %v377, 0.2
      %v442 = vmul.f32 %v378, 0.2
      %v443 = vmul.f32 %v379, 0.2
      %v444 = vmul.f32 %v380, 0.2
      %v445 = vmul.f32 %v381, 0.2
      %v446 = vsel %vm382, %v350, %v414
      %v447 = vsel %vm383, %v351, %v415
      %v448 = vsel %vm384, %v352, %v416
      %v449 = vsel %vm385, %v353, %v417
      %v450 = vsel %vm386, %v354, %v418
      %v451 = vsel %vm387, %v355, %v419
      %v452 = vsel %vm388, %v356, %v420
      %v453 = vsel %vm389, %v357, %v421
      %v454 = vsel %vm390, %v358, %v422
      %v455 = vsel %vm391, %v359, %v423
      %v456 = vsel %vm392, %v360, %v424
      %v457 = vsel %vm393, %v361, %v425
      %v458 = vsel %vm394, %v362, %v426
      %v459 = vsel %vm395, %v363, %v427
      %v460 = vsel %vm396, %v364, %v428
      %v461 = vsel %vm397, %v365, %v429
      %v462 = vsel %vm398, %v366, %v430
      %v463 = vsel %vm399, %v367, %v431
      %v464 = vsel %vm400, %v368, %v432
      %v465 = vsel %vm401, %v369, %v433
      %v466 = vsel %vm402, %v370, %v434
      %v467 = vsel %vm403, %v371, %v435
      %v468 = vsel %vm404, %v372, %v436
      %v469 = vsel %vm405, %v373, %v437
      %v470 = vsel %vm406, %v374, %v438
      %v471 = vsel %vm407, %v375, %v439
      %v472 = vsel %vm408, %v376, %v440
      %v473 = vsel %vm409, %v377, %v441
      %v474 = vsel %vm410, %v378, %v442
      %v475 = vsel %vm411, %v379, %v443
      %v476 = vsel %vm412, %v380, %v444
      %v477 = vsel %vm413, %v381, %v445
      %s478 = smul.u32 %s17, 256
      %v479 = vlaneseq
      %v480 = vshrl.u32 %v479, 7
      %v481 = vadd.s32 %v480, 8
      %v482 = vadd.s32 %v480, 16
      %v483 = vadd.s32 %v480, 24
      %v484 = vadd.s32 %v480, 32
      %v485 = vadd.s32 %v480, 40
      %v486 = vadd.s32 %v480, 48
      %v487 = vadd.s32 %v480, 56
      %v488 = vadd.s32 %v480, 64
      %v489 = vadd.s32 %v480, 72
      %v490 = vadd.s32 %v480, 80
      %v491 = vadd.s32 %v480, 88
      %v492 = vadd.s32 %v480, 96
      %v493 = vadd.s32 %v480, 104
      %v494 = vadd.s32 %v480, 112
      %v495 = vadd.s32 %v480, 120
      %v496 = vadd.s32 %v480, 128
      %v497 = vadd.s32 %v480, 136
      %v498 = vadd.s32 %v480, 144
      %v499 = vadd.s32 %v480, 152
      %v500 = vadd.s32 %v480, 160
      %v501 = vadd.s32 %v480, 168
      %v502 = vadd.s32 %v480, 176
      %v503 = vadd.s32 %v480, 184
      %v504 = vadd.s32 %v480, 192
      %v505 = vadd.s32 %v480, 200
      %v506 = vadd.s32 %v480, 208
      %v507 = vadd.s32 %v480, 216
      %v508 = vadd.s32 %v480, 224
      %v509 = vadd.s32 %v480, 232
      %v510 = vadd.s32 %v480, 240
      %v511 = vadd.s32 %v480, 248
      %v512 = vstv %s478
      %v513 = vadd.s32 %v512, %v480
      %v514 = vadd.s32 %v512, %v481
      %v515 = vadd.s32 %v512, %v482
      %v516 = vadd.s32 %v512, %v483
      %v517 = vadd.s32 %v512, %v484
      %v518 = vadd.s32 %v512, %v485
      %v519 = vadd.s32 %v512, %v486
      %v520 = vadd.s32 %v512, %v487
      %v521 = vadd.s32 %v512, %v488
      %v522 = vadd.s32 %v512, %v489
      %v523 = vadd.s32 %v512, %v490
      %v524 = vadd.s32 %v512, %v491
      %v525 = vadd.s32 %v512, %v492
      %v526 = vadd.s32 %v512, %v493
      %v527 = vadd.s32 %v512, %v494
      %v528 = vadd.s32 %v512, %v495
      %v529 = vadd.s32 %v512, %v496
      %v530 = vadd.s32 %v512, %v497
      %v531 = vadd.s32 %v512, %v498
      %v532 = vadd.s32 %v512, %v499
      %v533 = vadd.s32 %v512, %v500
      %v534 = vadd.s32 %v512, %v501
      %v535 = vadd.s32 %v512, %v502
      %v536 = vadd.s32 %v512, %v503
      %v537 = vadd.s32 %v512, %v504
      %v538 = vadd.s32 %v512, %v505
      %v539 = vadd.s32 %v512, %v506
      %v540 = vadd.s32 %v512, %v507
      %v541 = vadd.s32 %v512, %v508
      %v542 = vadd.s32 %v512, %v509
      %v543 = vadd.s32 %v512, %v510
      %v544 = vadd.s32 %v512, %v511
      %vm545 = vcmp.lt.s32.totalorder %v513, 512
      %vm546 = vcmp.lt.s32.totalorder %v514, 512
      %vm547 = vcmp.lt.s32.totalorder %v515, 512
      %vm548 = vcmp.lt.s32.totalorder %v516, 512
      %vm549 = vcmp.lt.s32.totalorder %v517, 512
      %vm550 = vcmp.lt.s32.totalorder %v518, 512
      %vm551 = vcmp.lt.s32.totalorder %v519, 512
      %vm552 = vcmp.lt.s32.totalorder %v520, 512
      %vm553 = vcmp.lt.s32.totalorder %v521, 512
      %vm554 = vcmp.lt.s32.totalorder %v522, 512
      %vm555 = vcmp.lt.s32.totalorder %v523, 512
      %vm556 = vcmp.lt.s32.totalorder %v524, 512
      %vm557 = vcmp.lt.s32.totalorder %v525, 512
      %vm558 = vcmp.lt.s32.totalorder %v526, 512
      %vm559 = vcmp.lt.s32.totalorder %v527, 512
      %vm560 = vcmp.lt.s32.totalorder %v528, 512
      %vm561 = vcmp.lt.s32.totalorder %v529, 512
      %vm562 = vcmp.lt.s32.totalorder %v530, 512
      %vm563 = vcmp.lt.s32.totalorder %v531, 512
      %vm564 = vcmp.lt.s32.totalorder %v532, 512
      %vm565 = vcmp.lt.s32.totalorder %v533, 512
      %vm566 = vcmp.lt.s32.totalorder %v534, 512
      %vm567 = vcmp.lt.s32.totalorder %v535, 512
      %vm568 = vcmp.lt.s32.totalorder %v536, 512
      %vm569 = vcmp.lt.s32.totalorder %v537, 512
      %vm570 = vcmp.lt.s32.totalorder %v538, 512
      %vm571 = vcmp.lt.s32.totalorder %v539, 512
      %vm572 = vcmp.lt.s32.totalorder %v540, 512
      %vm573 = vcmp.lt.s32.totalorder %v541, 512
      %vm574 = vcmp.lt.s32.totalorder %v542, 512
      %vm575 = vcmp.lt.s32.totalorder %v543, 512
      %vm576 = vcmp.lt.s32.totalorder %v544, 512
      %v577 = vsel %vm545, %v446, 0.0
      %v578 = vsel %vm546, %v447, 0.0
      %v579 = vsel %vm547, %v448, 0.0
      %v580 = vsel %vm548, %v449, 0.0
      %v581 = vsel %vm549, %v450, 0.0
      %v582 = vsel %vm550, %v451, 0.0
      %v583 = vsel %vm551, %v452, 0.0
      %v584 = vsel %vm552, %v453, 0.0
      %v585 = vsel %vm553, %v454, 0.0
      %v586 = vsel %vm554, %v455, 0.0
      %v587 = vsel %vm555, %v456, 0.0
      %v588 = vsel %vm556, %v457, 0.0
      %v589 = vsel %vm557, %v458, 0.0
      %v590 = vsel %vm558, %v459, 0.0
      %v591 = vsel %vm559, %v460, 0.0
      %v592 = vsel %vm560, %v461, 0.0
      %v593 = vsel %vm561, %v462, 0.0
      %v594 = vsel %vm562, %v463, 0.0
      %v595 = vsel %vm563, %v464, 0.0
      %v596 = vsel %vm564, %v465, 0.0
      %v597 = vsel %vm565, %v466, 0.0
      %v598 = vsel %vm566, %v467, 0.0
      %v599 = vsel %vm567, %v468, 0.0
      %v600 = vsel %vm568, %v469, 0.0
      %v601 = vsel %vm569, %v470, 0.0
      %v602 = vsel %vm570, %v471, 0.0
      %v603 = vsel %vm571, %v472, 0.0
      %v604 = vsel %vm572, %v473, 0.0
      %v605 = vsel %vm573, %v474, 0.0
      %v606 = vsel %vm574, %v475, 0.0
      %v607 = vsel %vm575, %v476, 0.0
      %v608 = vsel %vm576, %v477, 0.0
      %v609 = vpack.c.bf16 %v578, %v577
      %v610 = vpack.c.bf16 %v580, %v579
      %v611 = vpack.c.bf16 %v582, %v581
      %v612 = vpack.c.bf16 %v584, %v583
      %v613 = vpack.c.bf16 %v586, %v585
      %v614 = vpack.c.bf16 %v588, %v587
      %v615 = vpack.c.bf16 %v590, %v589
      %v616 = vpack.c.bf16 %v592, %v591
      %v617 = vpack.c.bf16 %v594, %v593
      %v618 = vpack.c.bf16 %v596, %v595
      %v619 = vpack.c.bf16 %v598, %v597
      %v620 = vpack.c.bf16 %v600, %v599
      %v621 = vpack.c.bf16 %v602, %v601
      %v622 = vpack.c.bf16 %v604, %v603
      %v623 = vpack.c.bf16 %v606, %v605
      %v624 = vpack.c.bf16 %v608, %v607
      %v625 = vld [vmem:[%s3] sm:$0xf]
      %v626 = vld [vmem:[%s3 + $0x4] sm:$0xf]
      %v627 = vld [vmem:[%s3 + $0x8] sm:$0xf]
      %v628 = vld [vmem:[%s3 + $0xc] sm:$0xf]
      %v629 = vld [vmem:[%s3 + $0x10] sm:$0xf]
      %v630 = vld [vmem:[%s3 + $0x14] sm:$0xf]
      %v631 = vld [vmem:[%s3 + $0x18] sm:$0xf]
      %v632 = vld [vmem:[%s3 + $0x1c] sm:$0xf]
      %v633 = vld [vmem:[%s3 + $0x20] sm:$0xf]
      %v634 = vld [vmem:[%s3 + $0x24] sm:$0xf]
      %v635 = vld [vmem:[%s3 + $0x28] sm:$0xf]
      %v636 = vld [vmem:[%s3 + $0x2c] sm:$0xf]
      %v637 = vld [vmem:[%s3 + $0x30] sm:$0xf]
      %v638 = vld [vmem:[%s3 + $0x34] sm:$0xf]
      %v639 = vld [vmem:[%s3 + $0x38] sm:$0xf]
      %v640 = vld [vmem:[%s3 + $0x3c] sm:$0xf]
      %v657 = vunpack.c.l.b16 %v625
      %v658 = vunpack.c.l.b16 %v626
      %v659 = vunpack.c.l.b16 %v627
      %v660 = vunpack.c.l.b16 %v628
      %v661 = vunpack.c.l.b16 %v629
      %v662 = vunpack.c.l.b16 %v630
      %v663 = vunpack.c.l.b16 %v631
      %v664 = vunpack.c.l.b16 %v632
      %v665 = vunpack.c.l.b16 %v633
      %v666 = vunpack.c.l.b16 %v634
      %v667 = vunpack.c.l.b16 %v635
      %v668 = vunpack.c.l.b16 %v636
      %v669 = vunpack.c.l.b16 %v637
      %v670 = vunpack.c.l.b16 %v638
      %v671 = vunpack.c.l.b16 %v639
      %v672 = vunpack.c.l.b16 %v640
      %v673 = vpack.c.b16 %v658, %v657
      %v674 = vpack.c.b16 %v660, %v659
      %v675 = vpack.c.b16 %v662, %v661
      %v676 = vpack.c.b16 %v664, %v663
      %v677 = vpack.c.b16 %v666, %v665
      %v678 = vpack.c.b16 %v668, %v667
      %v679 = vpack.c.b16 %v670, %v669
      %v680 = vpack.c.b16 %v672, %v671
      %689 = vmatprep.subr.bf16.mxu0 0
      %690 = vmatpush1.bf16.msra.mxu0 %v680
      %691 = vmatprep.subr.bf16.mxu0 0
      %692 = vmatpush1.bf16.msra.mxu0 %v679
      %693 = vmatprep.subr.bf16.mxu0 0
      %694 = vmatpush1.bf16.msra.mxu0 %v678
      %695 = vmatprep.subr.bf16.mxu0 0
      %696 = vmatpush1.bf16.msra.mxu0 %v677
      %697 = vmatprep.subr.bf16.mxu0 0
      %698 = vmatpush1.bf16.msra.mxu0 %v676
      %699 = vmatprep.subr.bf16.mxu0 0
      %700 = vmatpush1.bf16.msra.mxu0 %v675
      %701 = vmatprep.subr.bf16.mxu0 0
      %702 = vmatpush1.bf16.msra.mxu0 %v674
      %703 = vmatprep.subr.bf16.mxu0 0
      %704 = vmatpush1.bf16.msra.mxu0 %v673
      %705 = vmatprep.subr.bf16.mxu0 0
      %706 = vmatpush2.bf16.msra.mxu0 0
      %707 = vmatprep.subr.bf16.mxu0 0
      %708 = vmatpush2.bf16.msra.mxu0 0
      %709 = vmatprep.subr.bf16.mxu0 0
      %710 = vmatpush2.bf16.msra.mxu0 0
      %711 = vmatprep.subr.bf16.mxu0 0
      %712 = vmatpush2.bf16.msra.mxu0 0
      %713 = vmatprep.subr.bf16.mxu0 0
      %714 = vmatpush2.bf16.msra.mxu0 0
      %715 = vmatprep.subr.bf16.mxu0 0
      %716 = vmatpush2.bf16.msra.mxu0 0
      %717 = vmatprep.subr.bf16.mxu0 0
      %718 = vmatpush2.bf16.msra.mxu0 0
      %719 = vmatprep.subr.bf16.mxu0 0
      %720 = vmatpush2.bf16.msra.mxu0 0
      %721 = vmatprep.mubr.bf16.mxu0 0
      %722 = vmatmul.mubr.bf16.gmra.mxu0 %v609
      %v723 = vpop.f32.mrf.mxu0
      %v724 = vadd.f32 0.0, %v723
      %v725 = vpop.f32.mrf.mxu0
      %v726 = vpop.f32.mrf.mxu0
      %v727 = vadd.f32 0.0, %v726
      %v728 = vpop.f32.mrf.mxu0
      %729 = vmatprep.mubr.bf16.mxu0 0
      %730 = vmatmul.mubr.bf16.gmra.mxu0 %v610
      %v731 = vpop.f32.mrf.mxu0
      %v732 = vadd.f32 0.0, %v731
      %v733 = vpop.f32.mrf.mxu0
      %v734 = vpop.f32.mrf.mxu0
      %v735 = vadd.f32 0.0, %v734
      %v736 = vpop.f32.mrf.mxu0
      %737 = vmatprep.mubr.bf16.mxu0 0
      %738 = vmatmul.mubr.bf16.gmra.mxu0 %v611
      %v739 = vpop.f32.mrf.mxu0
      %v740 = vadd.f32 0.0, %v739
      %v741 = vpop.f32.mrf.mxu0
      %v742 = vpop.f32.mrf.mxu0
      %v743 = vadd.f32 0.0, %v742
      %v744 = vpop.f32.mrf.mxu0
      %745 = vmatprep.mubr.bf16.mxu0 0
      %746 = vmatmul.mubr.bf16.gmra.mxu0 %v612
      %v747 = vpop.f32.mrf.mxu0
      %v748 = vadd.f32 0.0, %v747
      %v749 = vpop.f32.mrf.mxu0
      %v750 = vpop.f32.mrf.mxu0
      %v751 = vadd.f32 0.0, %v750
      %v752 = vpop.f32.mrf.mxu0
      %753 = vmatprep.mubr.bf16.mxu0 0
      %754 = vmatmul.mubr.bf16.gmra.mxu0 %v613
      %v755 = vpop.f32.mrf.mxu0
      %v756 = vadd.f32 0.0, %v755
      %v757 = vpop.f32.mrf.mxu0
      %v758 = vpop.f32.mrf.mxu0
      %v759 = vadd.f32 0.0, %v758
      %v760 = vpop.f32.mrf.mxu0
      %761 = vmatprep.mubr.bf16.mxu0 0
      %762 = vmatmul.mubr.bf16.gmra.mxu0 %v614
      %v763 = vpop.f32.mrf.mxu0
      %v764 = vadd.f32 0.0, %v763
      %v765 = vpop.f32.mrf.mxu0
      %v766 = vpop.f32.mrf.mxu0
      %v767 = vadd.f32 0.0, %v766
      %v768 = vpop.f32.mrf.mxu0
      %769 = vmatprep.mubr.bf16.mxu0 0
      %770 = vmatmul.mubr.bf16.gmra.mxu0 %v615
      %v771 = vpop.f32.mrf.mxu0
      %v772 = vadd.f32 0.0, %v771
      %v773 = vpop.f32.mrf.mxu0
      %v774 = vpop.f32.mrf.mxu0
      %v775 = vadd.f32 0.0, %v774
      %v776 = vpop.f32.mrf.mxu0
      %777 = vmatprep.mubr.bf16.mxu0 0
      %778 = vmatmul.mubr.bf16.gmra.mxu0 %v616
      %v779 = vpop.f32.mrf.mxu0
      %v780 = vadd.f32 0.0, %v779
      %v781 = vpop.f32.mrf.mxu0
      %v782 = vpop.f32.mrf.mxu0
      %v783 = vadd.f32 0.0, %v782
      %v784 = vpop.f32.mrf.mxu0
      %785 = vmatprep.mubr.bf16.mxu0 0
      %786 = vmatmul.mubr.bf16.gmra.mxu0 %v617
      %v787 = vpop.f32.mrf.mxu0
      %v788 = vadd.f32 0.0, %v787
      %v789 = vpop.f32.mrf.mxu0
      %v790 = vpop.f32.mrf.mxu0
      %v791 = vadd.f32 0.0, %v790
      %v792 = vpop.f32.mrf.mxu0
      %793 = vmatprep.mubr.bf16.mxu0 0
      %794 = vmatmul.mubr.bf16.gmra.mxu0 %v618
      %v795 = vpop.f32.mrf.mxu0
      %v796 = vadd.f32 0.0, %v795
      %v797 = vpop.f32.mrf.mxu0
      %v798 = vpop.f32.mrf.mxu0
      %v799 = vadd.f32 0.0, %v798
      %v800 = vpop.f32.mrf.mxu0
      %801 = vmatprep.mubr.bf16.mxu0 0
      %802 = vmatmul.mubr.bf16.gmra.mxu0 %v619
      %v803 = vpop.f32.mrf.mxu0
      %v804 = vadd.f32 0.0, %v803
      %v805 = vpop.f32.mrf.mxu0
      %v806 = vpop.f32.mrf.mxu0
      %v807 = vadd.f32 0.0, %v806
      %v808 = vpop.f32.mrf.mxu0
      %809 = vmatprep.mubr.bf16.mxu0 0
      %810 = vmatmul.mubr.bf16.gmra.mxu0 %v620
      %v811 = vpop.f32.mrf.mxu0
      %v812 = vadd.f32 0.0, %v811
      %v813 = vpop.f32.mrf.mxu0
      %v814 = vpop.f32.mrf.mxu0
      %v815 = vadd.f32 0.0, %v814
      %v816 = vpop.f32.mrf.mxu0
      %817 = vmatprep.mubr.bf16.mxu0 0
      %818 = vmatmul.mubr.bf16.gmra.mxu0 %v621
      %v819 = vpop.f32.mrf.mxu0
      %v820 = vadd.f32 0.0, %v819
      %v821 = vpop.f32.mrf.mxu0
      %v822 = vpop.f32.mrf.mxu0
      %v823 = vadd.f32 0.0, %v822
      %v824 = vpop.f32.mrf.mxu0
      %825 = vmatprep.mubr.bf16.mxu0 0
      %826 = vmatmul.mubr.bf16.gmra.mxu0 %v622
      %v827 = vpop.f32.mrf.mxu0
      %v828 = vadd.f32 0.0, %v827
      %v829 = vpop.f32.mrf.mxu0
      %v830 = vpop.f32.mrf.mxu0
      %v831 = vadd.f32 0.0, %v830
      %v832 = vpop.f32.mrf.mxu0
      %833 = vmatprep.mubr.bf16.mxu0 0
      %834 = vmatmul.mubr.bf16.gmra.mxu0 %v623
      %v835 = vpop.f32.mrf.mxu0
      %v836 = vadd.f32 0.0, %v835
      %v837 = vpop.f32.mrf.mxu0
      %v838 = vpop.f32.mrf.mxu0
      %v839 = vadd.f32 0.0, %v838
      %v840 = vpop.f32.mrf.mxu0
      %841 = vmatprep.mubr.bf16.mxu0 0
      %842 = vmatmul.mubr.bf16.gmra.mxu0 %v624
      %v843 = vpop.f32.mrf.mxu0
      %v844 = vadd.f32 0.0, %v843
      %v845 = vpop.f32.mrf.mxu0
      %v846 = vpop.f32.mrf.mxu0
      %v847 = vadd.f32 0.0, %v846
      %v848 = vpop.f32.mrf.mxu0
      %849 = vdwg.mxu0
      %v850 = vpack.c.bf16 %v727, %v724
      %v851 = vpack.c.bf16 %v735, %v732
      %v852 = vpack.c.bf16 %v743, %v740
      %v853 = vpack.c.bf16 %v751, %v748
      %v854 = vpack.c.bf16 %v759, %v756
      %v855 = vpack.c.bf16 %v767, %v764
      %v856 = vpack.c.bf16 %v775, %v772
      %v857 = vpack.c.bf16 %v783, %v780
      %v858 = vpack.c.bf16 %v791, %v788
      %v859 = vpack.c.bf16 %v799, %v796
      %v860 = vpack.c.bf16 %v807, %v804
      %v861 = vpack.c.bf16 %v815, %v812
      %v862 = vpack.c.bf16 %v823, %v820
      %v863 = vpack.c.bf16 %v831, %v828
      %v864 = vpack.c.bf16 %v839, %v836
      %v865 = vpack.c.bf16 %v847, %v844
      %v882 = vunpack.c.l.b16 %v850
      %v883 = vunpack.c.h.b16 %v850
      %v884 = vunpack.c.l.b16 %v851
      %v885 = vunpack.c.h.b16 %v851
      %v886 = vunpack.c.l.b16 %v852
      %v887 = vunpack.c.h.b16 %v852
      %v888 = vunpack.c.l.b16 %v853
      %v889 = vunpack.c.h.b16 %v853
      %v890 = vunpack.c.l.b16 %v854
      %v891 = vunpack.c.h.b16 %v854
      %v892 = vunpack.c.l.b16 %v855
      %v893 = vunpack.c.h.b16 %v855
      %v894 = vunpack.c.l.b16 %v856
      %v895 = vunpack.c.h.b16 %v856
      %v896 = vunpack.c.l.b16 %v857
      %v897 = vunpack.c.h.b16 %v857
      %v898 = vunpack.c.l.b16 %v858
      %v899 = vunpack.c.h.b16 %v858
      %v900 = vunpack.c.l.b16 %v859
      %v901 = vunpack.c.h.b16 %v859
      %v902 = vunpack.c.l.b16 %v860
      %v903 = vunpack.c.h.b16 %v860
      %v904 = vunpack.c.l.b16 %v861
      %v905 = vunpack.c.h.b16 %v861
      %v906 = vunpack.c.l.b16 %v862
      %v907 = vunpack.c.h.b16 %v862
      %v908 = vunpack.c.l.b16 %v863
      %v909 = vunpack.c.h.b16 %v863
      %v910 = vunpack.c.l.b16 %v864
      %v911 = vunpack.c.h.b16 %v864
      %v912 = vunpack.c.l.b16 %v865
      %v913 = vunpack.c.h.b16 %v865
      %v914 = vpack.c.b16 %v882, %v882
      %v915 = vpack.c.b16 %v883, %v883
      %v916 = vpack.c.b16 %v884, %v884
      %v917 = vpack.c.b16 %v885, %v885
      %v918 = vpack.c.b16 %v886, %v886
      %v919 = vpack.c.b16 %v887, %v887
      %v920 = vpack.c.b16 %v888, %v888
      %v921 = vpack.c.b16 %v889, %v889
      %v922 = vpack.c.b16 %v890, %v890
      %v923 = vpack.c.b16 %v891, %v891
      %v924 = vpack.c.b16 %v892, %v892
      %v925 = vpack.c.b16 %v893, %v893
      %v926 = vpack.c.b16 %v894, %v894
      %v927 = vpack.c.b16 %v895, %v895
      %v928 = vpack.c.b16 %v896, %v896
      %v929 = vpack.c.b16 %v897, %v897
      %v930 = vpack.c.b16 %v898, %v898
      %v931 = vpack.c.b16 %v899, %v899
      %v932 = vpack.c.b16 %v900, %v900
      %v933 = vpack.c.b16 %v901, %v901
      %v934 = vpack.c.b16 %v902, %v902
      %v935 = vpack.c.b16 %v903, %v903
      %v936 = vpack.c.b16 %v904, %v904
      %v937 = vpack.c.b16 %v905, %v905
      %v938 = vpack.c.b16 %v906, %v906
      %v939 = vpack.c.b16 %v907, %v907
      %v940 = vpack.c.b16 %v908, %v908
      %v941 = vpack.c.b16 %v909, %v909
      %v942 = vpack.c.b16 %v910, %v910
      %v943 = vpack.c.b16 %v911, %v911
      %v944 = vpack.c.b16 %v912, %v912
      %v945 = vpack.c.b16 %v913, %v913
      %978 = vst [vmem:[%s233] sm:$0xf] %v914
      %979 = vst [vmem:[%s233 + $0x4] sm:$0xf] %v915
      %980 = vst [vmem:[%s233 + $0x8] sm:$0xf] %v916
      %981 = vst [vmem:[%s233 + $0xc] sm:$0xf] %v917
      %982 = vst [vmem:[%s233 + $0x10] sm:$0xf] %v918
      %983 = vst [vmem:[%s233 + $0x14] sm:$0xf] %v919
      %984 = vst [vmem:[%s233 + $0x18] sm:$0xf] %v920
      %985 = vst [vmem:[%s233 + $0x1c] sm:$0xf] %v921
      %986 = vst [vmem:[%s233 + $0x20] sm:$0xf] %v922
      %987 = vst [vmem:[%s233 + $0x24] sm:$0xf] %v923
      %988 = vst [vmem:[%s233 + $0x28] sm:$0xf] %v924
      %989 = vst [vmem:[%s233 + $0x2c] sm:$0xf] %v925
      %990 = vst [vmem:[%s233 + $0x30] sm:$0xf] %v926
      %991 = vst [vmem:[%s233 + $0x34] sm:$0xf] %v927
      %992 = vst [vmem:[%s233 + $0x38] sm:$0xf] %v928
      %993 = vst [vmem:[%s233 + $0x3c] sm:$0xf] %v929
      %994 = vst [vmem:[%s233 + $0x40] sm:$0xf] %v930
      %995 = vst [vmem:[%s233 + $0x44] sm:$0xf] %v931
      %996 = vst [vmem:[%s233 + $0x48] sm:$0xf] %v932
      %997 = vst [vmem:[%s233 + $0x4c] sm:$0xf] %v933
      %998 = vst [vmem:[%s233 + $0x50] sm:$0xf] %v934
      %999 = vst [vmem:[%s233 + $0x54] sm:$0xf] %v935
      %1000 = vst [vmem:[%s233 + $0x58] sm:$0xf] %v936
      %1001 = vst [vmem:[%s233 + $0x5c] sm:$0xf] %v937
      %1002 = vst [vmem:[%s233 + $0x60] sm:$0xf] %v938
      %1003 = vst [vmem:[%s233 + $0x64] sm:$0xf] %v939
      %1004 = vst [vmem:[%s233 + $0x68] sm:$0xf] %v940
      %1005 = vst [vmem:[%s233 + $0x6c] sm:$0xf] %v941
      %1006 = vst [vmem:[%s233 + $0x70] sm:$0xf] %v942
      %1007 = vst [vmem:[%s233 + $0x74] sm:$0xf] %v943
      %1008 = vst [vmem:[%s233 + $0x78] sm:$0xf] %v944
      %1009 = vst [vmem:[%s233 + $0x7c] sm:$0xf] %v945
      %v1010 = vadd.f32 %v724, %v727
      %v1011 = vadd.f32 %v1010, %v732
      %v1012 = vadd.f32 %v1011, %v735
      %v1013 = vadd.f32 %v1012, %v740
      %v1014 = vadd.f32 %v1013, %v743
      %v1015 = vadd.f32 %v1014, %v748
      %v1016 = vadd.f32 %v1015, %v751
      %v1017 = vadd.f32 %v1016, %v756
      %v1018 = vadd.f32 %v1017, %v759
      %v1019 = vadd.f32 %v1018, %v764
      %v1020 = vadd.f32 %v1019, %v767
      %v1021 = vadd.f32 %v1020, %v772
      %v1022 = vadd.f32 %v1021, %v775
      %v1023 = vadd.f32 %v1022, %v780
      %v1024 = vadd.f32 %v1023, %v783
      %v1025 = vadd.f32 %v1024, %v788
      %v1026 = vadd.f32 %v1025, %v791
      %v1027 = vadd.f32 %v1026, %v796
      %v1028 = vadd.f32 %v1027, %v799
      %v1029 = vadd.f32 %v1028, %v804
      %v1030 = vadd.f32 %v1029, %v807
      %v1031 = vadd.f32 %v1030, %v812
      %v1032 = vadd.f32 %v1031, %v815
      %v1033 = vadd.f32 %v1032, %v820
      %v1034 = vadd.f32 %v1033, %v823
      %v1035 = vadd.f32 %v1034, %v828
      %v1036 = vadd.f32 %v1035, %v831
      %v1037 = vadd.f32 %v1036, %v836
      %v1038 = vadd.f32 %v1037, %v839
      %v1039 = vadd.f32 %v1038, %v844
      %v1040 = vadd.f32 %v1039, %v847
      %v1041 = vrot.slane %v1040, 4
      %v1042 = vadd.f32 %v1040, %v1041
      %v1043 = vrot.slane %v1042, 2
      %v1044 = vadd.f32 %v1042, %v1043
      %v1045 = vrot.slane %v1044, 1
      %v1046 = vadd.f32 %v1044, %v1045
      %1047 = vst [vmem:[%s238] sm:$0x1] %v1046
      %v1048 = vmul.f32 %v724, %v724
      %v1049 = vmul.f32 %v727, %v727
      %v1050 = vmul.f32 %v732, %v732
      %v1051 = vmul.f32 %v735, %v735
      %v1052 = vmul.f32 %v740, %v740
      %v1053 = vmul.f32 %v743, %v743
      %v1054 = vmul.f32 %v748, %v748
      %v1055 = vmul.f32 %v751, %v751
      %v1056 = vmul.f32 %v756, %v756
      %v1057 = vmul.f32 %v759, %v759
      %v1058 = vmul.f32 %v764, %v764
      %v1059 = vmul.f32 %v767, %v767
      %v1060 = vmul.f32 %v772, %v772
      %v1061 = vmul.f32 %v775, %v775
      %v1062 = vmul.f32 %v780, %v780
      %v1063 = vmul.f32 %v783, %v783
      %v1064 = vmul.f32 %v788, %v788
      %v1065 = vmul.f32 %v791, %v791
      %v1066 = vmul.f32 %v796, %v796
      %v1067 = vmul.f32 %v799, %v799
      %v1068 = vmul.f32 %v804, %v804
      %v1069 = vmul.f32 %v807, %v807
      %v1070 = vmul.f32 %v812, %v812
      %v1071 = vmul.f32 %v815, %v815
      %v1072 = vmul.f32 %v820, %v820
      %v1073 = vmul.f32 %v823, %v823
      %v1074 = vmul.f32 %v828, %v828
      %v1075 = vmul.f32 %v831, %v831
      %v1076 = vmul.f32 %v836, %v836
      %v1077 = vmul.f32 %v839, %v839
      %v1078 = vmul.f32 %v844, %v844
      %v1079 = vmul.f32 %v847, %v847
      %v1080 = vadd.f32 %v1048, %v1049
      %v1081 = vadd.f32 %v1080, %v1050
      %v1082 = vadd.f32 %v1081, %v1051
      %v1083 = vadd.f32 %v1082, %v1052
      %v1084 = vadd.f32 %v1083, %v1053
      %v1085 = vadd.f32 %v1084, %v1054
      %v1086 = vadd.f32 %v1085, %v1055
      %v1087 = vadd.f32 %v1086, %v1056
      %v1088 = vadd.f32 %v1087, %v1057
      %v1089 = vadd.f32 %v1088, %v1058
      %v1090 = vadd.f32 %v1089, %v1059
      %v1091 = vadd.f32 %v1090, %v1060
      %v1092 = vadd.f32 %v1091, %v1061
      %v1093 = vadd.f32 %v1092, %v1062
      %v1094 = vadd.f32 %v1093, %v1063
      %v1095 = vadd.f32 %v1094, %v1064
      %v1096 = vadd.f32 %v1095, %v1065
      %v1097 = vadd.f32 %v1096, %v1066
      %v1098 = vadd.f32 %v1097, %v1067
      %v1099 = vadd.f32 %v1098, %v1068
      %v1100 = vadd.f32 %v1099, %v1069
      %v1101 = vadd.f32 %v1100, %v1070
      %v1102 = vadd.f32 %v1101, %v1071
      %v1103 = vadd.f32 %v1102, %v1072
      %v1104 = vadd.f32 %v1103, %v1073
      %v1105 = vadd.f32 %v1104, %v1074
      %v1106 = vadd.f32 %v1105, %v1075
      %v1107 = vadd.f32 %v1106, %v1076
      %v1108 = vadd.f32 %v1107, %v1077
      %v1109 = vadd.f32 %v1108, %v1078
      %v1110 = vadd.f32 %v1109, %v1079
      %v1111 = vrot.slane %v1110, 4
      %v1112 = vadd.f32 %v1110, %v1111
      %v1113 = vrot.slane %v1112, 2
      %v1114 = vadd.f32 %v1112, %v1113
      %v1115 = vrot.slane %v1114, 1
      %v1116 = vadd.f32 %v1114, %v1115
      %1117 = vst [vmem:[%s238 + $0x1] sm:$0x1] %v1116
      %s1118 = smul.u32 32, %s17
      %p1119 = scmp.lt.s32.totalorder %s1118, 63
      %s1120 = scalar_select %p1119, %s1118, 63
      %s1121 = smul.addr %s1120, 4
      %s1122 = scalar_lea.vmem %s4, %s1121
      %p1123 = scmp.lt.s32.totalorder %s17, 1
      %s1124 = scalar_select %p1123, %s17, 1
      %s1125 = smul.addr %s1124, 2
      %s1126 = scalar_lea.vmem %s5, %s1125
      // Predicated region
      $region37: #{bottleneck_bn.8} parent=35 // pred_check
        %p1127 = pneg %p124
      $region38: #{bottleneck_bn.8} parent=35 // pred_check_branch
        %1129 = sbr.rel (%p1127) target = $region40
      $region39: #{bottleneck_bn.8} parent=35 // pred_region
        %s1130 = smul.u32 32, %s17
      $region40: #{bottleneck_bn.8} parent=35 // pred_fallthru
        _
      // Predicated region
      $region41: #{bottleneck_bn.8} parent=35 // pred_check
        %p1131 = pneg %p150
      $region42: #{bottleneck_bn.8} parent=35 // pred_check_branch
        %1133 = sbr.rel (%p1131) target = $region44
      $region43: #{bottleneck_bn.8} parent=35 // pred_region
        _
      $region44: #{bottleneck_bn.8} parent=35 // pred_fallthru
        _
    $region36: #{bottleneck_bn.8} parent=5 // pred_fallthru
      _
    %p1134 = scmp.le.s32.totalorder 2, %s12
    // Predicated region
    $region45: #{bottleneck_bn.8} parent=5 // pred_check
      %p1135 = pneg %p1134
    $region46: #{bottleneck_bn.8} parent=5 // pred_check_branch
      %1137 = sbr.rel (%p1135) target = $region48
    $region47: #{bottleneck_bn.8} parent=5 // pred_region
      %s1138 = ssub.s32 %s12, 2
      // Predicated region
      $region49: #{bottleneck_bn.8} parent=47 // pred_check
        %p1139 = pneg %p130
      $region50: #{bottleneck_bn.8} parent=47 // pred_check_branch
        %1141 = sbr.rel (%p1139) target = $region52
      $region51: #{bottleneck_bn.8} parent=47 // pred_region
        %s1142 = smul.u32 32, %s18
        %p1143 = scmp.lt.s32.totalorder %s1142, 63
        %s1144 = scalar_select %p1143, %s1142, 63
        %s1145 = smul.addr %s1144, 4
        %s1146 = scalar_lea.vmem %s4, %s1145
      $region52: #{bottleneck_bn.8} parent=47 // pred_fallthru
        _
      // Predicated region
      $region53: #{bottleneck_bn.8} parent=47 // pred_check
        %p1147 = pneg %p156
      $region54: #{bottleneck_bn.8} parent=47 // pred_check_branch
        %1149 = sbr.rel (%p1147) target = $region56
      $region55: #{bottleneck_bn.8} parent=47 // pred_region
        %p1150 = scmp.lt.s32.totalorder %s18, 1
        %s1151 = scalar_select %p1150, %s18, 1
        %s1152 = smul.addr %s1151, 2
        %s1153 = scalar_lea.vmem %s5, %s1152
      $region56: #{bottleneck_bn.8} parent=47 // pred_fallthru
        _
    $region48: #{bottleneck_bn.8} parent=5 // pred_fallthru
      _
  $region6: #{bottleneck_bn.8} parent=0 // loop_footer
    %s16 = sadd.s32 1, %s12
  $region7: #{bottleneck_bn.8} parent=0 // loop_footer_branch
    %11 = sbr.rel target = $region3
  $region8: #{bottleneck_bn.8} parent=0 // loop_exit
    _

// kernel: bottleneck_bn.7
$region0: #{bottleneck_bn.7}
  #allocation0 [shape = 'u32[]', space=smem, size = 0x4, offset = 0x4, fixed_abs, tag = 'smem constant byte address 0x4 - core index']
  #allocation1 [shape = 'u32[144,128]{1,0:T(1,128)}', space=vmem, size = 0x12000, scoped, tag = 'internal scratch']
  %s0 = inlined_call_operand.vmem [shape: bf16[2,18,18,128], index: 0, kind: input, shape index: {}]
  %s1 = inlined_call_operand.vmem [shape: bf16[9,128,128], index: 1, kind: input, shape index: {}]
  %s2 = inlined_call_operand.vmem [shape: bf16[2,256,128], index: 2, kind: output, shape index: {0}]
  %s3 = inlined_call_operand.vmem [shape: f32[2,2,128], index: 3, kind: output, shape index: {1}]
  %4 = xla_tuple %s2, %s3
  %s5 = sld [smem:[#allocation0]]
  $region49: #{bottleneck_bn.7} parent=0
    _
  %s7 = ssub.s32 1, %s5
  %s8 = scalar_select 0, %s7, %s5
  loop: start=0, step=1, limit=4
  $region2: #{bottleneck_bn.7} parent=0 // loop_pre_header
    _
  $region3: #{bottleneck_bn.7} parent=0 // loop_header
    %s10 = sphi 0, %s14
    %p11 = scmp.ge.s32.totalorder %s10, 4
    %s20 = sphi 0, %s22
    %s23 = sphi 0, %s20
    %s24 = sphi 0, %s23
    %s40 = sphi 0, %s24
    %s44 = sphi 0, %s44
    %s46 = sphi 0, %s44
    %s47 = sphi 0, %s46
    %s61 = sphi 0, %s47
    %s67 = sphi 0, %s69
    %s70 = sphi 0, %s67
    %s71 = sphi 0, %s70
    %s87 = sphi 0, %s71
    %s93 = sphi 0, %s95
    %s96 = sphi 0, %s93
    %s97 = sphi 0, %s96
    %s113 = sphi 0, %s97
  $region4: #{bottleneck_bn.7} parent=0 // loop_header_branch
    %13 = sbr.rel (%p11) target = $region8
  $region5: #{bottleneck_bn.7} parent=0 // loop_body
    %s15 = ssub.s32 %s10, 1
    %s16 = ssub.s32 %s10, 2
    %s17 = sadd.s32 %s10, 1
    %s18 = ssub.s32 %s10, %s17
    %p19 = scmp.eq.s32.totalorder %s18, 0
    %s21 = sadd.s32 %s20, 1
    %s22 = scalar_select %p19, %s20, %s21
    %p25 = pneg %p19
    %p26 = scmp.eq.s32.totalorder %s10, 1
    %p27 = por %p25, %p26
    %p28 = scmp.ne.s32.totalorder %s20, %s23
    %p29 = scmp.eq.s32.totalorder %s10, 0
    %p30 = por %p28, %p29
    %p31 = scmp.ne.s32.totalorder %s20, %s23
    %p32 = scmp.eq.s32.totalorder %s15, 1
    %p33 = por %p31, %p32
    %p34 = scmp.ne.s32.totalorder %s23, %s24
    %p35 = scmp.eq.s32.totalorder %s15, 0
    %p36 = por %p34, %p35
    %p37 = scmp.ne.s32.totalorder %s23, %s24
    %p38 = scmp.eq.s32.totalorder %s16, 1
    %p39 = por %p37, %p38
    %p41 = scmp.ne.s32.totalorder %s24, %s40
    %p42 = scmp.eq.s32.totalorder %s16, 0
    %p43 = por %p41, %p42
    %s45 = sadd.s32 %s44, 1
    %p48 = scmp.eq.s32.totalorder %s10, 1
    %p49 = scmp.ne.s32.totalorder %s44, %s46
    %p50 = scmp.eq.s32.totalorder %s10, 0
    %p51 = por %p49, %p50
    %p52 = scmp.ne.s32.totalorder %s44, %s46
    %p53 = scmp.eq.s32.totalorder %s15, 1
    %p54 = por %p52, %p53
    %p55 = scmp.ne.s32.totalorder %s46, %s47
    %p56 = scmp.eq.s32.totalorder %s15, 0
    %p57 = por %p55, %p56
    %p58 = scmp.ne.s32.totalorder %s46, %s47
    %p59 = scmp.eq.s32.totalorder %s16, 1
    %p60 = por %p58, %p59
    %p62 = scmp.ne.s32.totalorder %s47, %s61
    %p63 = scmp.eq.s32.totalorder %s16, 0
    %p64 = por %p62, %p63
    %s65 = ssub.s32 %s10, %s17
    %p66 = scmp.eq.s32.totalorder %s65, 0
    %s68 = sadd.s32 %s67, 1
    %s69 = scalar_select %p66, %s67, %s68
    %p72 = pneg %p66
    %p73 = scmp.eq.s32.totalorder %s10, 1
    %p74 = por %p72, %p73
    %p75 = scmp.ne.s32.totalorder %s67, %s70
    %p76 = scmp.eq.s32.totalorder %s10, 0
    %p77 = por %p75, %p76
    %p78 = scmp.ne.s32.totalorder %s67, %s70
    %p79 = scmp.eq.s32.totalorder %s15, 1
    %p80 = por %p78, %p79
    %p81 = scmp.ne.s32.totalorder %s70, %s71
    %p82 = scmp.eq.s32.totalorder %s15, 0
    %p83 = por %p81, %p82
    %p84 = scmp.ne.s32.totalorder %s70, %s71
    %p85 = scmp.eq.s32.totalorder %s16, 1
    %p86 = por %p84, %p85
    %p88 = scmp.ne.s32.totalorder %s71, %s87
    %p89 = scmp.eq.s32.totalorder %s16, 0
    %p90 = por %p88, %p89
    %s91 = ssub.s32 %s10, %s17
    %p92 = scmp.eq.s32.totalorder %s91, 0
    %s94 = sadd.s32 %s93, 1
    %s95 = scalar_select %p92, %s93, %s94
    %p98 = pneg %p92
    %p99 = scmp.eq.s32.totalorder %s10, 1
    %p100 = por %p98, %p99
    %p101 = scmp.ne.s32.totalorder %s93, %s96
    %p102 = scmp.eq.s32.totalorder %s10, 0
    %p103 = por %p101, %p102
    %p104 = scmp.ne.s32.totalorder %s93, %s96
    %p105 = scmp.eq.s32.totalorder %s15, 1
    %p106 = por %p104, %p105
    %p107 = scmp.ne.s32.totalorder %s96, %s97
    %p108 = scmp.eq.s32.totalorder %s15, 0
    %p109 = por %p107, %p108
    %p110 = scmp.ne.s32.totalorder %s96, %s97
    %p111 = scmp.eq.s32.totalorder %s16, 1
    %p112 = por %p110, %p111
    %p114 = scmp.ne.s32.totalorder %s97, %s113
    %p115 = scmp.eq.s32.totalorder %s16, 0
    %p116 = por %p114, %p115
    %p117 = scmp.le.s32.totalorder 1, %s10
    %p118 = scmp.lt.s32.totalorder %s10, 3
    %p119 = pnand %p117, %p118
    %p120 = pneg %p119
    // Predicated region
    $region9: #{bottleneck_bn.7} parent=5 // pred_check
      _
    $region10: #{bottleneck_bn.7} parent=5 // pred_check_branch
      %122 = sbr.rel (%p119) target = $region12
    $region11: #{bottleneck_bn.7} parent=5 // pred_region
      %s123 = ssub.s32 %s10, 1
      // Predicated region
      $region13: #{bottleneck_bn.7} parent=11 // pred_check
        %p124 = pneg %p57
      $region14: #{bottleneck_bn.7} parent=11 // pred_check_branch
        %126 = sbr.rel (%p124) target = $region16
      $region15: #{bottleneck_bn.7} parent=11 // pred_region
        _
      $region16: #{bottleneck_bn.7} parent=11 // pred_fallthru
        _
    $region12: #{bottleneck_bn.7} parent=5 // pred_fallthru
      _
    %p127 = scmp.lt.s32.totalorder %s10, 2
    // Predicated region
    $region17: #{bottleneck_bn.7} parent=5 // pred_check
      %p128 = pneg %p127
    $region18: #{bottleneck_bn.7} parent=5 // pred_check_branch
      %130 = sbr.rel (%p128) target = $region20
    $region19: #{bottleneck_bn.7} parent=5 // pred_region
      // Predicated region
      $region21: #{bottleneck_bn.7} parent=19 // pred_check
        %p131 = pneg %p30
      $region22: #{bottleneck_bn.7} parent=19 // pred_check_branch
        %133 = sbr.rel (%p131) target = $region24
      $region23: #{bottleneck_bn.7} parent=19 // pred_region
        %p134 = scmp.lt.s32.totalorder %s10, 1
        %s135 = scalar_select %p134, %s10, 1
        %s136 = smul.addr %s135, 54
        %s137 = smul.addr %s136, 4
        %s138 = scalar_lea.vmem %s0, %s137
      $region24: #{bottleneck_bn.7} parent=19 // pred_fallthru
        _
    $region20: #{bottleneck_bn.7} parent=5 // pred_fallthru
      _
    %p139 = scmp.le.s32.totalorder 1, %s10
    %p140 = scmp.lt.s32.totalorder %s10, 3
    %p141 = pnand %p139, %p140
    %p142 = pneg %p141
    // Predicated region
    $region25: #{bottleneck_bn.7} parent=5 // pred_check
      _
    $region26: #{bottleneck_bn.7} parent=5 // pred_check_branch
      %144 = sbr.rel (%p141) target = $region28
    $region27: #{bottleneck_bn.7} parent=5 // pred_region
      %s145 = ssub.s32 %s10, 1
      %p146 = scmp.lt.s32.totalorder %s15, 1
      %s147 = scalar_select %p146, %s15, 1
      %s148 = smul.addr %s147, 54
      %s149 = smul.addr %s148, 4
      %s150 = scalar_lea.vmem %s0, %s149
      %p151 = pneg %p36
      %p152 = pneg %p33
      %p153 = pneg %p57
      %p154 = pneg %p54
      %p155 = pneg %p83
      %p156 = pneg %p80
      %p157 = scmp.lt.s32.totalorder %s15, 1
      %s158 = scalar_select %p157, %s15, 1
      %s159 = smul.addr %s158, 32
      %s160 = smul.addr %s159, 4
      %s161 = scalar_lea.vmem %s2, %s160
      %p162 = pneg %p109
      %p163 = pneg %p106
      %p164 = scmp.lt.s32.totalorder %s15, 1
      %s165 = scalar_select %p164, %s15, 1
      %s166 = smul.addr %s165, 2
      %s167 = scalar_lea.vmem %s3, %s166
      %p168 = scmp.lt.s32.totalorder %s15, 1
      %s169 = scalar_select %p168, %s15, 1
      %s170 = smul.addr %s169, 54
      %s171 = smul.addr %s170, 4
      %s172 = scalar_lea.vmem %s0, %s171
      %p173 = scmp.lt.s32.totalorder %s15, 1
      %s174 = scalar_select %p173, %s15, 1
      %s175 = smul.addr %s174, 32
      %s176 = smul.addr %s175, 4
      %s177 = scalar_lea.vmem %s2, %s176
      %p178 = scmp.lt.s32.totalorder %s15, 1
      %s179 = scalar_select %p178, %s15, 1
      %s180 = smul.addr %s179, 2
      %s181 = scalar_lea.vmem %s3, %s180
      %v183 = vld [vmem:[%s172] sm:$0xf]
      %v184 = vld [vmem:[%s172 + $0x4] sm:$0xf]
      %v185 = vld [vmem:[%s172 + $0xc] sm:$0xf]
      %v186 = vld [vmem:[%s172 + $0x10] sm:$0xf]
      %v187 = vld [vmem:[%s172 + $0x18] sm:$0xf]
      %v188 = vld [vmem:[%s172 + $0x1c] sm:$0xf]
      %v189 = vld [vmem:[%s172 + $0x24] sm:$0xf]
      %v190 = vld [vmem:[%s172 + $0x28] sm:$0xf]
      %v191 = vld [vmem:[%s172 + $0x30] sm:$0xf]
      %v192 = vld [vmem:[%s172 + $0x34] sm:$0xf]
      %v193 = vld [vmem:[%s172 + $0x3c] sm:$0xf]
      %v194 = vld [vmem:[%s172 + $0x40] sm:$0xf]
      %v195 = vld [vmem:[%s172 + $0x48] sm:$0xf]
      %v196 = vld [vmem:[%s172 + $0x4c] sm:$0xf]
      %v197 = vld [vmem:[%s172 + $0x54] sm:$0xf]
      %v198 = vld [vmem:[%s172 + $0x58] sm:$0xf]
      %v199 = vld [vmem:[%s172 + $0x60] sm:$0xf]
      %v200 = vld [vmem:[%s172 + $0x64] sm:$0xf]
      %v201 = vld [vmem:[%s172 + $0x6c] sm:$0xf]
      %v202 = vld [vmem:[%s172 + $0x70] sm:$0xf]
      %v203 = vld [vmem:[%s172 + $0x78] sm:$0xf]
      %v204 = vld [vmem:[%s172 + $0x7c] sm:$0xf]
      %v205 = vld [vmem:[%s172 + $0x84] sm:$0xf]
      %v206 = vld [vmem:[%s172 + $0x88] sm:$0xf]
      %v207 = vld [vmem:[%s172 + $0x90] sm:$0xf]
      %v208 = vld [vmem:[%s172 + $0x94] sm:$0xf]
      %v209 = vld [vmem:[%s172 + $0x9c] sm:$0xf]
      %v210 = vld [vmem:[%s172 + $0xa0] sm:$0xf]
      %v211 = vld [vmem:[%s172 + $0xa8] sm:$0xf]
      %v212 = vld [vmem:[%s172 + $0xac] sm:$0xf]
      %v213 = vld [vmem:[%s172 + $0xb4] sm:$0xf]
      %v214 = vld [vmem:[%s172 + $0xb8] sm:$0xf]
      %v215 = vld [vmem:[%s1] sm:$0xf]
      %v216 = vld [vmem:[%s1 + $0x4] sm:$0xf]
      %v217 = vld [vmem:[%s1 + $0x8] sm:$0xf]
      %v218 = vld [vmem:[%s1 + $0xc] sm:$0xf]
      %v219 = vld [vmem:[%s1 + $0x10] sm:$0xf]
      %v220 = vld [vmem:[%s1 + $0x14] sm:$0xf]
      %v221 = vld [vmem:[%s1 + $0x18] sm:$0xf]
      %v222 = vld [vmem:[%s1 + $0x1c] sm:$0xf]
      %v223 = vld [vmem:[%s1 + $0x20] sm:$0xf]
      %v224 = vld [vmem:[%s1 + $0x24] sm:$0xf]
      %v225 = vld [vmem:[%s1 + $0x28] sm:$0xf]
      %v226 = vld [vmem:[%s1 + $0x2c] sm:$0xf]
      %v227 = vld [vmem:[%s1 + $0x30] sm:$0xf]
      %v228 = vld [vmem:[%s1 + $0x34] sm:$0xf]
      %v229 = vld [vmem:[%s1 + $0x38] sm:$0xf]
      %v230 = vld [vmem:[%s1 + $0x3c] sm:$0xf]
      %v231 = vld [vmem:[%s172 + $0x8] sm:$0x1]
      %v232 = vld [vmem:[%s172 + $0x14] sm:$0x1]
      %v233 = vld [vmem:[%s172 + $0x20] sm:$0x1]
      %v234 = vld [vmem:[%s172 + $0x2c] sm:$0x1]
      %v235 = vld [vmem:[%s172 + $0x38] sm:$0x1]
      %v236 = vld [vmem:[%s172 + $0x44] sm:$0x1]
      %v237 = vld [vmem:[%s172 + $0x50] sm:$0x1]
      %v238 = vld [vmem:[%s172 + $0x5c] sm:$0x1]
      %v239 = vld [vmem:[%s172 + $0x68] sm:$0x1]
      %v240 = vld [vmem:[%s172 + $0x74] sm:$0x1]
      %v241 = vld [vmem:[%s172 + $0x80] sm:$0x1]
      %v242 = vld [vmem:[%s172 + $0x8c] sm:$0x1]
      %v243 = vld [vmem:[%s172 + $0x98] sm:$0x1]
      %v244 = vld [vmem:[%s172 + $0xa4] sm:$0x1]
      %v245 = vld [vmem:[%s172 + $0xb0] sm:$0x1]
      %v246 = vld [vmem:[%s172 + $0xbc] sm:$0x1]
      %vm247 = vsmask.f32 3328
      %vm248 = vsmask.f32 7440
      %vm249 = vmor %vm247, %vm248
      %v251 = vshrl.u32 %v183, 16
      %v253 = vrot.slane %v251, 4
      %v254 = vshll.u32 %v183, 16
      %v256 = vrot.slane %v254, 5
      %v257 = vor.u32 %v253, %v256
      %v258 = vrot.slane %v257, 4
      %v260 = vshll.u32 %v184, 16
      %v262 = vrot.slane %v260, 5
      %v263 = vsel %vm249, %v258, %v262
      %v264 = vshrl.u32 %v184, 16
      %v266 = vrot.slane %v264, 4
      %v267 = vor.u32 %v266, %v262
      %v268 = vrot.slane %v267, 4
      %v270 = vshll.u32 %v231, 16
      %v272 = vrot.slane %v270, 5
      %v273 = vsel %vm249, %v268, %v272
      %v275 = vshrl.u32 %v185, 16
      %v277 = vrot.slane %v275, 4
      %v278 = vshll.u32 %v185, 16
      %v280 = vrot.slane %v278, 5
      %v281 = vor.u32 %v277, %v280
      %v282 = vrot.slane %v281, 4
      %v284 = vshll.u32 %v186, 16
      %v286 = vrot.slane %v284, 5
      %v287 = vsel %vm249, %v282, %v286
      %v288 = vshrl.u32 %v186, 16
      %v290 = vrot.slane %v288, 4
      %v291 = vor.u32 %v290, %v286
      %v292 = vrot.slane %v291, 4
      %v294 = vshll.u32 %v232, 16
      %v296 = vrot.slane %v294, 5
      %v297 = vsel %vm249, %v292, %v296
      %v299 = vshrl.u32 %v187, 16
      %v301 = vrot.slane %v299, 4
      %v302 = vshll.u32 %v187, 16
      %v304 = vrot.slane %v302, 5
      %v305 = vor.u32 %v301, %v304
      %v306 = vrot.slane %v305, 4
      %v308 = vshll.u32 %v188, 16
      %v310 = vrot.slane %v308, 5
      %v311 = vsel %vm249, %v306, %v310
      %v312 = vshrl.u32 %v188, 16
      %v314 = vrot.slane %v312, 4
      %v315 = vor.u32 %v314, %v310
      %v316 = vrot.slane %v315, 4
      %v318 = vshll.u32 %v233, 16
      %v320 = vrot.slane %v318, 5
      %v321 = vsel %vm249, %v316, %v320
      %v323 = vshrl.u32 %v189, 16
      %v325 = vrot.slane %v323, 4
      %v326 = vshll.u32 %v189, 16
      %v328 = vrot.slane %v326, 5
      %v329 = vor.u32 %v325, %v328
      %v330 = vrot.slane %v329, 4
      %v332 = vshll.u32 %v190, 16
      %v334 = vrot.slane %v332, 5
      %v335 = vsel %vm249, %v330, %v334
      %v336 = vshrl.u32 %v190, 16
      %v338 = vrot.slane %v336, 4
      %v339 = vor.u32 %v338, %v334
      %v340 = vrot.slane %v339, 4
      %v342 = vshll.u32 %v234, 16
      %v344 = vrot.slane %v342, 5
      %v345 = vsel %vm249, %v340, %v344
      %v347 = vshrl.u32 %v191, 16
      %v349 = vrot.slane %v347, 4
      %v350 = vshll.u32 %v191, 16
      %v352 = vrot.slane %v350, 5
      %v353 = vor.u32 %v349, %v352
      %v354 = vrot.slane %v353, 4
      %v356 = vshll.u32 %v192, 16
      %v358 = vrot.slane %v356, 5
      %v359 = vsel %vm249, %v354, %v358
      %v360 = vshrl.u32 %v192, 16
      %v362 = vrot.slane %v360, 4
      %v363 = vor.u32 %v362, %v358
      %v364 = vrot.slane %v363, 4
      %v366 = vshll.u32 %v235, 16
      %v368 = vrot.slane %v366, 5
      %v369 = vsel %vm249, %v364, %v368
      %v371 = vshrl.u32 %v193, 16
      %v373 = vrot.slane %v371, 4
      %v374 = vshll.u32 %v193, 16
      %v376 = vrot.slane %v374, 5
      %v377 = vor.u32 %v373, %v376
      %v378 = vrot.slane %v377, 4
      %v380 = vshll.u32 %v194, 16
      %v382 = vrot.slane %v380, 5
      %v383 = vsel %vm249, %v378, %v382
      %v384 = vshrl.u32 %v194, 16
      %v386 = vrot.slane %v384, 4
      %v387 = vor.u32 %v386, %v382
      %v388 = vrot.slane %v387, 4
      %v390 = vshll.u32 %v236, 16
      %v392 = vrot.slane %v390, 5
      %v393 = vsel %vm249, %v388, %v392
      %v395 = vshrl.u32 %v195, 16
      %v397 = vrot.slane %v395, 4
      %v398 = vshll.u32 %v195, 16
      %v400 = vrot.slane %v398, 5
      %v401 = vor.u32 %v397, %v400
      %v402 = vrot.slane %v401, 4
      %v404 = vshll.u32 %v196, 16
      %v406 = vrot.slane %v404, 5
      %v407 = vsel %vm249, %v402, %v406
      %v408 = vshrl.u32 %v196, 16
      %v410 = vrot.slane %v408, 4
      %v411 = vor.u32 %v410, %v406
      %v412 = vrot.slane %v411, 4
      %v414 = vshll.u32 %v237, 16
      %v416 = vrot.slane %v414, 5
      %v417 = vsel %vm249, %v412, %v416
      %v419 = vshrl.u32 %v197, 16
      %v421 = vrot.slane %v419, 4
      %v422 = vshll.u32 %v197, 16
      %v424 = vrot.slane %v422, 5
      %v425 = vor.u32 %v421, %v424
      %v426 = vrot.slane %v425, 4
      %v428 = vshll.u32 %v198, 16
      %v430 = vrot.slane %v428, 5
      %v431 = vsel %vm249, %v426, %v430
      %v432 = vshrl.u32 %v198, 16
      %v434 = vrot.slane %v432, 4
      %v435 = vor.u32 %v434, %v430
      %v436 = vrot.slane %v435, 4
      %v438 = vshll.u32 %v238, 16
      %v440 = vrot.slane %v438, 5
      %v441 = vsel %vm249, %v436, %v440
      %v443 = vshrl.u32 %v199, 16
      %v445 = vrot.slane %v443, 4
      %v446 = vshll.u32 %v199, 16
      %v448 = vrot.slane %v446, 5
      %v449 = vor.u32 %v445, %v448
      %v450 = vrot.slane %v449, 4
      %v452 = vshll.u32 %v200, 16
      %v454 = vrot.slane %v452, 5
      %v455 = vsel %vm249, %v450, %v454
      %v456 = vshrl.u32 %v200, 16
      %v458 = vrot.slane %v456, 4
      %v459 = vor.u32 %v458, %v454
      %v460 = vrot.slane %v459, 4
      %v462 = vshll.u32 %v239, 16
      %v464 = vrot.slane %v462, 5
      %v465 = vsel %vm249, %v460, %v464
      %v467 = vshrl.u32 %v201, 16
      %v469 = vrot.slane %v467, 4
      %v470 = vshll.u32 %v201, 16
      %v472 = vrot.slane %v470, 5
      %v473 = vor.u32 %v469, %v472
      %v474 = vrot.slane %v473, 4
      %v476 = vshll.u32 %v202, 16
      %v478 = vrot.slane %v476, 5
      %v479 = vsel %vm249, %v474, %v478
      %v480 = vshrl.u32 %v202, 16
      %v482 = vrot.slane %v480, 4
      %v483 = vor.u32 %v482, %v478
      %v484 = vrot.slane %v483, 4
      %v486 = vshll.u32 %v240, 16
      %v488 = vrot.slane %v486, 5
      %v489 = vsel %vm249, %v484, %v488
      %v491 = vshrl.u32 %v203, 16
      %v493 = vrot.slane %v491, 4
      %v494 = vshll.u32 %v203, 16
      %v496 = vrot.slane %v494, 5
      %v497 = vor.u32 %v493, %v496
      %v498 = vrot.slane %v497, 4
      %v500 = vshll.u32 %v204, 16
      %v502 = vrot.slane %v500, 5
      %v503 = vsel %vm249, %v498, %v502
      %v504 = vshrl.u32 %v204, 16
      %v506 = vrot.slane %v504, 4
      %v507 = vor.u32 %v506, %v502
      %v508 = vrot.slane %v507, 4
      %v510 = vshll.u32 %v241, 16
      %v512 = vrot.slane %v510, 5
      %v513 = vsel %vm249, %v508, %v512
      %v515 = vshrl.u32 %v205, 16
      %v517 = vrot.slane %v515, 4
      %v518 = vshll.u32 %v205, 16
      %v520 = vrot.slane %v518, 5
      %v521 = vor.u32 %v517, %v520
      %v522 = vrot.slane %v521, 4
      %v524 = vshll.u32 %v206, 16
      %v526 = vrot.slane %v524, 5
      %v527 = vsel %vm249, %v522, %v526
      %v528 = vshrl.u32 %v206, 16
      %v530 = vrot.slane %v528, 4
      %v531 = vor.u32 %v530, %v526
      %v532 = vrot.slane %v531, 4
      %v534 = vshll.u32 %v242, 16
      %v536 = vrot.slane %v534, 5
      %v537 = vsel %vm249, %v532, %v536
      %v539 = vshrl.u32 %v207, 16
      %v541 = vrot.slane %v539, 4
      %v542 = vshll.u32 %v207, 16
      %v544 = vrot.slane %v542, 5
      %v545 = vor.u32 %v541, %v544
      %v546 = vrot.slane %v545, 4
      %v548 = vshll.u32 %v208, 16
      %v550 = vrot.slane %v548, 5
      %v551 = vsel %vm249, %v546, %v550
      %v552 = vshrl.u32 %v208, 16
      %v554 = vrot.slane %v552, 4
      %v555 = vor.u32 %v554, %v550
      %v556 = vrot.slane %v555, 4
      %v558 = vshll.u32 %v243, 16
      %v560 = vrot.slane %v558, 5
      %v561 = vsel %vm249, %v556, %v560
      %v563 = vshrl.u32 %v209, 16
      %v565 = vrot.slane %v563, 4
      %v566 = vshll.u32 %v209, 16
      %v568 = vrot.slane %v566, 5
      %v569 = vor.u32 %v565, %v568
      %v570 = vrot.slane %v569, 4
      %v572 = vshll.u32 %v210, 16
      %v574 = vrot.slane %v572, 5
      %v575 = vsel %vm249, %v570, %v574
      %v576 = vshrl.u32 %v210, 16
      %v578 = vrot.slane %v576, 4
      %v579 = vor.u32 %v578, %v574
      %v580 = vrot.slane %v579, 4
      %v582 = vshll.u32 %v244, 16
      %v584 = vrot.slane %v582, 5
      %v585 = vsel %vm249, %v580, %v584
      %v587 = vshrl.u32 %v211, 16
      %v589 = vrot.slane %v587, 4
      %v590 = vshll.u32 %v211, 16
      %v592 = vrot.slane %v590, 5
      %v593 = vor.u32 %v589, %v592
      %v594 = vrot.slane %v593, 4
      %v596 = vshll.u32 %v212, 16
      %v598 = vrot.slane %v596, 5
      %v599 = vsel %vm249, %v594, %v598
      %v600 = vshrl.u32 %v212, 16
      %v602 = vrot.slane %v600, 4
      %v603 = vor.u32 %v602, %v598
      %v604 = vrot.slane %v603, 4
      %v606 = vshll.u32 %v245, 16
      %v608 = vrot.slane %v606, 5
      %v609 = vsel %vm249, %v604, %v608
      %v611 = vshrl.u32 %v213, 16
      %v613 = vrot.slane %v611, 4
      %v614 = vshll.u32 %v213, 16
      %v616 = vrot.slane %v614, 5
      %v617 = vor.u32 %v613, %v616
      %v618 = vrot.slane %v617, 4
      %v620 = vshll.u32 %v214, 16
      %v622 = vrot.slane %v620, 5
      %v623 = vsel %vm249, %v618, %v622
      %v624 = vshrl.u32 %v214, 16
      %v626 = vrot.slane %v624, 4
      %v627 = vor.u32 %v626, %v622
      %v628 = vrot.slane %v627, 4
      %v630 = vshll.u32 %v246, 16
      %v632 = vrot.slane %v630, 5
      %v633 = vsel %vm249, %v628, %v632
      %s634 = scalar_lea.vmem %s1, 64
      %v635 = vld [vmem:[%s634] sm:$0xf]
      %v636 = vld [vmem:[%s634 + $0x4] sm:$0xf]
      %v637 = vld [vmem:[%s634 + $0x8] sm:$0xf]
      %v638 = vld [vmem:[%s634 + $0xc] sm:$0xf]
      %v639 = vld [vmem:[%s634 + $0x10] sm:$0xf]
      %v640 = vld [vmem:[%s634 + $0x14] sm:$0xf]
      %v641 = vld [vmem:[%s634 + $0x18] sm:$0xf]
      %v642 = vld [vmem:[%s634 + $0x1c] sm:$0xf]
      %v643 = vld [vmem:[%s634 + $0x20] sm:$0xf]
      %v644 = vld [vmem:[%s634 + $0x24] sm:$0xf]
      %v645 = vld [vmem:[%s634 + $0x28] sm:$0xf]
      %v646 = vld [vmem:[%s634 + $0x2c] sm:$0xf]
      %v647 = vld [vmem:[%s634 + $0x30] sm:$0xf]
      %v648 = vld [vmem:[%s634 + $0x34] sm:$0xf]
      %v649 = vld [vmem:[%s634 + $0x38] sm:$0xf]
      %v650 = vld [vmem:[%s634 + $0x3c] sm:$0xf]
      %v651 = vunpack.c.l.b16 %v263
      %v652 = vunpack.c.l.b16 %v273
      %v653 = vunpack.c.l.b16 %v287
      %v654 = vunpack.c.l.b16 %v297
      %v655 = vunpack.c.l.b16 %v311
      %v656 = vunpack.c.l.b16 %v321
      %v657 = vunpack.c.l.b16 %v335
      %v658 = vunpack.c.l.b16 %v345
      %v659 = vunpack.c.l.b16 %v359
      %v660 = vunpack.c.l.b16 %v369
      %v661 = vunpack.c.l.b16 %v383
      %v662 = vunpack.c.l.b16 %v393
      %v663 = vunpack.c.l.b16 %v407
      %v664 = vunpack.c.l.b16 %v417
      %v665 = vunpack.c.l.b16 %v431
      %v666 = vunpack.c.l.b16 %v441
      %v667 = vunpack.c.l.b16 %v455
      %v668 = vunpack.c.l.b16 %v465
      %v669 = vunpack.c.l.b16 %v479
      %v670 = vunpack.c.l.b16 %v489
      %v671 = vunpack.c.l.b16 %v503
      %v672 = vunpack.c.l.b16 %v513
      %v673 = vunpack.c.l.b16 %v527
      %v674 = vunpack.c.l.b16 %v537
      %v675 = vunpack.c.l.b16 %v551
      %v676 = vunpack.c.l.b16 %v561
      %v677 = vunpack.c.l.b16 %v575
      %v678 = vunpack.c.l.b16 %v585
      %v679 = vunpack.c.l.b16 %v599
      %v680 = vunpack.c.l.b16 %v609
      %v681 = vunpack.c.l.b16 %v623
      %v682 = vunpack.c.l.b16 %v633
      %v683 = vpack.c.b16 %v652, %v651
      %v684 = vpack.c.b16 %v654, %v653
      %v685 = vpack.c.b16 %v656, %v655
      %v686 = vpack.c.b16 %v658, %v657
      %v687 = vpack.c.b16 %v660, %v659
      %v688 = vpack.c.b16 %v662, %v661
      %v689 = vpack.c.b16 %v664, %v663
      %v690 = vpack.c.b16 %v666, %v665
      %v691 = vpack.c.b16 %v668, %v667
      %v692 = vpack.c.b16 %v670, %v669
      %v693 = vpack.c.b16 %v672, %v671
      %v694 = vpack.c.b16 %v674, %v673
      %v695 = vpack.c.b16 %v676, %v675
      %v696 = vpack.c.b16 %v678, %v677
      %v697 = vpack.c.b16 %v680, %v679
      %v698 = vpack.c.b16 %v682, %v681
      %v731 = vunpack.c.l.b16 %v635
      %v732 = vunpack.c.l.b16 %v636
      %v733 = vunpack.c.l.b16 %v637
      %v734 = vunpack.c.l.b16 %v638
      %v735 = vunpack.c.l.b16 %v639
      %v736 = vunpack.c.l.b16 %v640
      %v737 = vunpack.c.l.b16 %v641
      %v738 = vunpack.c.l.b16 %v642
      %v739 = vunpack.c.l.b16 %v643
      %v740 = vunpack.c.l.b16 %v644
      %v741 = vunpack.c.l.b16 %v645
      %v742 = vunpack.c.l.b16 %v646
      %v743 = vunpack.c.l.b16 %v647
      %v744 = vunpack.c.l.b16 %v648
      %v745 = vunpack.c.l.b16 %v649
      %v746 = vunpack.c.l.b16 %v650
      %v747 = vpack.c.b16 %v732, %v731
      %v748 = vpack.c.b16 %v734, %v733
      %v749 = vpack.c.b16 %v736, %v735
      %v750 = vpack.c.b16 %v738, %v737
      %v751 = vpack.c.b16 %v740, %v739
      %v752 = vpack.c.b16 %v742, %v741
      %v753 = vpack.c.b16 %v744, %v743
      %v754 = vpack.c.b16 %v746, %v745
      %763 = vmatprep.subr.bf16.mxu0 0
      %764 = vmatpush1.bf16.msra.mxu0 %v754
      %765 = vmatprep.subr.bf16.mxu0 0
      %766 = vmatpush1.bf16.msra.mxu0 %v753
      %767 = vmatprep.subr.bf16.mxu0 0
      %768 = vmatpush1.bf16.msra.mxu0 %v752
      %769 = vmatprep.subr.bf16.mxu0 0
      %770 = vmatpush1.bf16.msra.mxu0 %v751
      %771 = vmatprep.subr.bf16.mxu0 0
      %772 = vmatpush1.bf16.msra.mxu0 %v750
      %773 = vmatprep.subr.bf16.mxu0 0
      %774 = vmatpush1.bf16.msra.mxu0 %v749
      %775 = vmatprep.subr.bf16.mxu0 0
      %776 = vmatpush1.bf16.msra.mxu0 %v748
      %777 = vmatprep.subr.bf16.mxu0 0
      %778 = vmatpush1.bf16.msra.mxu0 %v747
      %779 = vmatprep.subr.bf16.mxu0 0
      %780 = vmatpush2.bf16.msra.mxu0 0
      %781 = vmatprep.subr.bf16.mxu0 0
      %782 = vmatpush2.bf16.msra.mxu0 0
      %783 = vmatprep.subr.bf16.mxu0 0
      %784 = vmatpush2.bf16.msra.mxu0 0
      %785 = vmatprep.subr.bf16.mxu0 0
      %786 = vmatpush2.bf16.msra.mxu0 0
      %787 = vmatprep.subr.bf16.mxu0 0
      %788 = vmatpush2.bf16.msra.mxu0 0
      %789 = vmatprep.subr.bf16.mxu0 0
      %790 = vmatpush2.bf16.msra.mxu0 0
      %791 = vmatprep.subr.bf16.mxu0 0
      %792 = vmatpush2.bf16.msra.mxu0 0
      %793 = vmatprep.subr.bf16.mxu0 0
      %794 = vmatpush2.bf16.msra.mxu0 0
      %795 = vmatprep.mubr.bf16.mxu0 0
      %796 = vmatmul.mubr.bf16.gmra.mxu0 %v683
      %v797 = vpop.f32.mrf.mxu0
      %v798 = vadd.f32 0.0, %v797
      %v799 = vpop.f32.mrf.mxu0
      %v800 = vpop.f32.mrf.mxu0
      %v801 = vadd.f32 0.0, %v800
      %v802 = vpop.f32.mrf.mxu0
      %803 = vmatprep.mubr.bf16.mxu0 0
      %804 = vmatmul.mubr.bf16.gmra.mxu0 %v684
      %v805 = vpop.f32.mrf.mxu0
      %v806 = vadd.f32 0.0, %v805
      %v807 = vpop.f32.mrf.mxu0
      %v808 = vpop.f32.mrf.mxu0
      %v809 = vadd.f32 0.0, %v808
      %v810 = vpop.f32.mrf.mxu0
      %811 = vmatprep.mubr.bf16.mxu0 0
      %812 = vmatmul.mubr.bf16.gmra.mxu0 %v685
      %v813 = vpop.f32.mrf.mxu0
      %v814 = vadd.f32 0.0, %v813
      %v815 = vpop.f32.mrf.mxu0
      %v816 = vpop.f32.mrf.mxu0
      %v817 = vadd.f32 0.0, %v816
      %v818 = vpop.f32.mrf.mxu0
      %819 = vmatprep.mubr.bf16.mxu0 0
      %820 = vmatmul.mubr.bf16.gmra.mxu0 %v686
      %v821 = vpop.f32.mrf.mxu0
      %v822 = vadd.f32 0.0, %v821
      %v823 = vpop.f32.mrf.mxu0
      %v824 = vpop.f32.mrf.mxu0
      %v825 = vadd.f32 0.0, %v824
      %v826 = vpop.f32.mrf.mxu0
      %827 = vmatprep.mubr.bf16.mxu0 0
      %828 = vmatmul.mubr.bf16.gmra.mxu0 %v687
      %v829 = vpop.f32.mrf.mxu0
      %v830 = vadd.f32 0.0, %v829
      %v831 = vpop.f32.mrf.mxu0
      %v832 = vpop.f32.mrf.mxu0
      %v833 = vadd.f32 0.0, %v832
      %v834 = vpop.f32.mrf.mxu0
      %835 = vmatprep.mubr.bf16.mxu0 0
      %836 = vmatmul.mubr.bf16.gmra.mxu0 %v688
      %v837 = vpop.f32.mrf.mxu0
      %v838 = vadd.f32 0.0, %v837
      %v839 = vpop.f32.mrf.mxu0
      %v840 = vpop.f32.mrf.mxu0
      %v841 = vadd.f32 0.0, %v840
      %v842 = vpop.f32.mrf.mxu0
      %843 = vmatprep.mubr.bf16.mxu0 0
      %844 = vmatmul.mubr.bf16.gmra.mxu0 %v689
      %v845 = vpop.f32.mrf.mxu0
      %v846 = vadd.f32 0.0, %v845
      %v847 = vpop.f32.mrf.mxu0
      %v848 = vpop.f32.mrf.mxu0
      %v849 = vadd.f32 0.0, %v848
      %v850 = vpop.f32.mrf.mxu0
      %851 = vmatprep.mubr.bf16.mxu0 0
      %852 = vmatmul.mubr.bf16.gmra.mxu0 %v690
      %v853 = vpop.f32.mrf.mxu0
      %v854 = vadd.f32 0.0, %v853
      %v855 = vpop.f32.mrf.mxu0
      %v856 = vpop.f32.mrf.mxu0
      %v857 = vadd.f32 0.0, %v856
      %v858 = vpop.f32.mrf.mxu0
      %859 = vmatprep.mubr.bf16.mxu0 0
      %860 = vmatmul.mubr.bf16.gmra.mxu0 %v691
      %v861 = vpop.f32.mrf.mxu0
      %v862 = vadd.f32 0.0, %v861
      %v863 = vpop.f32.mrf.mxu0
      %v864 = vpop.f32.mrf.mxu0
      %v865 = vadd.f32 0.0, %v864
      %v866 = vpop.f32.mrf.mxu0
      %867 = vmatprep.mubr.bf16.mxu0 0
      %868 = vmatmul.mubr.bf16.gmra.mxu0 %v692
      %v869 = vpop.f32.mrf.mxu0
      %v870 = vadd.f32 0.0, %v869
      %v871 = vpop.f32.mrf.mxu0
      %v872 = vpop.f32.mrf.mxu0
      %v873 = vadd.f32 0.0, %v872
      %v874 = vpop.f32.mrf.mxu0
      %875 = vmatprep.mubr.bf16.mxu0 0
      %876 = vmatmul.mubr.bf16.gmra.mxu0 %v693
      %v877 = vpop.f32.mrf.mxu0
      %v878 = vadd.f32 0.0, %v877
      %v879 = vpop.f32.mrf.mxu0
      %v880 = vpop.f32.mrf.mxu0
      %v881 = vadd.f32 0.0, %v880
      %v882 = vpop.f32.mrf.mxu0
      %883 = vmatprep.mubr.bf16.mxu0 0
      %884 = vmatmul.mubr.bf16.gmra.mxu0 %v694
      %v885 = vpop.f32.mrf.mxu0
      %v886 = vadd.f32 0.0, %v885
      %v887 = vpop.f32.mrf.mxu0
      %v888 = vpop.f32.mrf.mxu0
      %v889 = vadd.f32 0.0, %v888
      %v890 = vpop.f32.mrf.mxu0
      %891 = vmatprep.mubr.bf16.mxu0 0
      %892 = vmatmul.mubr.bf16.gmra.mxu0 %v695
      %v893 = vpop.f32.mrf.mxu0
      %v894 = vadd.f32 0.0, %v893
      %v895 = vpop.f32.mrf.mxu0
      %v896 = vpop.f32.mrf.mxu0
      %v897 = vadd.f32 0.0, %v896
      %v898 = vpop.f32.mrf.mxu0
      %899 = vmatprep.mubr.bf16.mxu0 0
      %900 = vmatmul.mubr.bf16.gmra.mxu0 %v696
      %v901 = vpop.f32.mrf.mxu0
      %v902 = vadd.f32 0.0, %v901
      %v903 = vpop.f32.mrf.mxu0
      %v904 = vpop.f32.mrf.mxu0
      %v905 = vadd.f32 0.0, %v904
      %v906 = vpop.f32.mrf.mxu0
      %907 = vmatprep.mubr.bf16.mxu0 0
      %908 = vmatmul.mubr.bf16.gmra.mxu0 %v697
      %v909 = vpop.f32.mrf.mxu0
      %v910 = vadd.f32 0.0, %v909
      %v911 = vpop.f32.mrf.mxu0
      %v912 = vpop.f32.mrf.mxu0
      %v913 = vadd.f32 0.0, %v912
      %v914 = vpop.f32.mrf.mxu0
      %915 = vmatprep.mubr.bf16.mxu0 0
      %916 = vmatmul.mubr.bf16.gmra.mxu0 %v698
      %v917 = vpop.f32.mrf.mxu0
      %v918 = vadd.f32 0.0, %v917
      %v919 = vpop.f32.mrf.mxu0
      %v920 = vpop.f32.mrf.mxu0
      %v921 = vadd.f32 0.0, %v920
      %v922 = vpop.f32.mrf.mxu0
      %923 = vdwg.mxu0
      %v956 = vunpack.c.l.b16 %v183
      %v957 = vunpack.c.l.b16 %v184
      %v958 = vunpack.c.l.b16 %v185
      %v959 = vunpack.c.l.b16 %v186
      %v960 = vunpack.c.l.b16 %v187
      %v961 = vunpack.c.l.b16 %v188
      %v962 = vunpack.c.l.b16 %v189
      %v963 = vunpack.c.l.b16 %v190
      %v964 = vunpack.c.l.b16 %v191
      %v965 = vunpack.c.l.b16 %v192
      %v966 = vunpack.c.l.b16 %v193
      %v967 = vunpack.c.l.b16 %v194
      %v968 = vunpack.c.l.b16 %v195
      %v969 = vunpack.c.l.b16 %v196
      %v970 = vunpack.c.l.b16 %v197
      %v971 = vunpack.c.l.b16 %v198
      %v972 = vunpack.c.l.b16 %v199
      %v973 = vunpack.c.l.b16 %v200
      %v974 = vunpack.c.l.b16 %v201
      %v975 = vunpack.c.l.b16 %v202
      %v976 = vunpack.c.l.b16 %v203
      %v977 = vunpack.c.l.b16 %v204
      %v978 = vunpack.c.l.b16 %v205
      %v979 = vunpack.c.l.b16 %v206
      %v980 = vunpack.c.l.b16 %v207
      %v981 = vunpack.c.l.b16 %v208
      %v982 = vunpack.c.l.b16 %v209
      %v983 = vunpack.c.l.b16 %v210
      %v984 = vunpack.c.l.b16 %v211
      %v985 = vunpack.c.l.b16 %v212
      %v986 = vunpack.c.l.b16 %v213
      %v987 = vunpack.c.l.b16 %v214
      %v988 = vpack.c.b16 %v957, %v956
      %v989 = vpack.c.b16 %v959, %v958
      %v990 = vpack.c.b16 %v961, %v960
      %v991 = vpack.c.b16 %v963, %v962
      %v992 = vpack.c.b16 %v965, %v964
      %v993 = vpack.c.b16 %v967, %v966
      %v994 = vpack.c.b16 %v969, %v968
      %v995 = vpack.c.b16 %v971, %v970
      %v996 = vpack.c.b16 %v973, %v972
      %v997 = vpack.c.b16 %v975, %v974
      %v998 = vpack.c.b16 %v977, %v976
      %v999 = vpack.c.b16 %v979, %v978
      %v1000 = vpack.c.b16 %v981, %v980
      %v1001 = vpack.c.b16 %v983, %v982
      %v1002 = vpack.c.b16 %v985, %v984
      %v1003 = vpack.c.b16 %v987, %v986
      %v1036 = vunpack.c.l.b16 %v215
      %v1037 = vunpack.c.l.b16 %v216
      %v1038 = vunpack.c.l.b16 %v217
      %v1039 = vunpack.c.l.b16 %v218
      %v1040 = vunpack.c.l.b16 %v219
      %v1041 = vunpack.c.l.b16 %v220
      %v1042 = vunpack.c.l.b16 %v221
      %v1043 = vunpack.c.l.b16 %v222
      %v1044 = vunpack.c.l.b16 %v223
      %v1045 = vunpack.c.l.b16 %v224
      %v1046 = vunpack.c.l.b16 %v225
      %v1047 = vunpack.c.l.b16 %v226
      %v1048 = vunpack.c.l.b16 %v227
      %v1049 = vunpack.c.l.b16 %v228
      %v1050 = vunpack.c.l.b16 %v229
      %v1051 = vunpack.c.l.b16 %v230
      %v1052 = vpack.c.b16 %v1037, %v1036
      %v1053 = vpack.c.b16 %v1039, %v1038
      %v1054 = vpack.c.b16 %v1041, %v1040
      %v1055 = vpack.c.b16 %v1043, %v1042
      %v1056 = vpack.c.b16 %v1045, %v1044
      %v1057 = vpack.c.b16 %v1047, %v1046
      %v1058 = vpack.c.b16 %v1049, %v1048
      %v1059 = vpack.c.b16 %v1051, %v1050
      %1068 = vmatprep.subr.bf16.mxu0 0
      %1069 = vmatpush1.bf16.msra.mxu0 %v1059
      %1070 = vmatprep.subr.bf16.mxu0 0
      %1071 = vmatpush1.bf16.msra.mxu0 %v1058
      %1072 = vmatprep.subr.bf16.mxu0 0
      %1073 = vmatpush1.bf16.msra.mxu0 %v1057
      %1074 = vmatprep.subr.bf16.mxu0 0
      %1075 = vmatpush1.bf16.msra.mxu0 %v1056
      %1076 = vmatprep.subr.bf16.mxu0 0
      %1077 = vmatpush1.bf16.msra.mxu0 %v1055
      %1078 = vmatprep.subr.bf16.mxu0 0
      %1079 = vmatpush1.bf16.msra.mxu0 %v1054
      %1080 = vmatprep.subr.bf16.mxu0 0
      %1081 = vmatpush1.bf16.msra.mxu0 %v1053
      %1082 = vmatprep.subr.bf16.mxu0 0
      %1083 = vmatpush1.bf16.msra.mxu0 %v1052
      %1084 = vmatprep.subr.bf16.mxu0 0
      %1085 = vmatpush2.bf16.msra.mxu0 0
      %1086 = vmatprep.subr.bf16.mxu0 0
      %1087 = vmatpush2.bf16.msra.mxu0 0
      %1088 = vmatprep.subr.bf16.mxu0 0
      %1089 = vmatpush2.bf16.msra.mxu0 0
      %1090 = vmatprep.subr.bf16.mxu0 0
      %1091 = vmatpush2.bf16.msra.mxu0 0
      %1092 = vmatprep.subr.bf16.mxu0 0
      %1093 = vmatpush2.bf16.msra.mxu0 0
      %1094 = vmatprep.subr.bf16.mxu0 0
      %1095 = vmatpush2.bf16.msra.mxu0 0
      %1096 = vmatprep.subr.bf16.mxu0 0
      %1097 = vmatpush2.bf16.msra.mxu0 0
      %1098 = vmatprep.subr.bf16.mxu0 0
      %1099 = vmatpush2.bf16.msra.mxu0 0
      %1100 = vmatprep.mubr.bf16.mxu0 0
      %1101 = vmatmul.mubr.bf16.gmra.mxu0 %v988
      %v1102 = vpop.f32.mrf.mxu0
      %v1103 = vadd.f32 %v798, %v1102
      %v1104 = vpop.f32.mrf.mxu0
      %v1105 = vpop.f32.mrf.mxu0
      %v1106 = vadd.f32 %v801, %v1105
      %v1107 = vpop.f32.mrf.mxu0
      %1108 = vmatprep.mubr.bf16.mxu0 0
      %1109 = vmatmul.mubr.bf16.gmra.mxu0 %v989
      %v1110 = vpop.f32.mrf.mxu0
      %v1111 = vadd.f32 %v806, %v1110
      %v1112 = vpop.f32.mrf.mxu0
      %v1113 = vpop.f32.mrf.mxu0
      %v1114 = vadd.f32 %v809, %v1113
      %v1115 = vpop.f32.mrf.mxu0
      %1116 = vmatprep.mubr.bf16.mxu0 0
      %1117 = vmatmul.mubr.bf16.gmra.mxu0 %v990
      %v1118 = vpop.f32.mrf.mxu0
      %v1119 = vadd.f32 %v814, %v1118
      %v1120 = vpop.f32.mrf.mxu0
      %v1121 = vpop.f32.mrf.mxu0
      %v1122 = vadd.f32 %v817, %v1121
      %v1123 = vpop.f32.mrf.mxu0
      %1124 = vmatprep.mubr.bf16.mxu0 0
      %1125 = vmatmul.mubr.bf16.gmra.mxu0 %v991
      %v1126 = vpop.f32.mrf.mxu0
      %v1127 = vadd.f32 %v822, %v1126
      %v1128 = vpop.f32.mrf.mxu0
      %v1129 = vpop.f32.mrf.mxu0
      %v1130 = vadd.f32 %v825, %v1129
      %v1131 = vpop.f32.mrf.mxu0
      %1132 = vmatprep.mubr.bf16.mxu0 0
      %1133 = vmatmul.mubr.bf16.gmra.mxu0 %v992
      %v1134 = vpop.f32.mrf.mxu0
      %v1135 = vadd.f32 %v830, %v1134
      %v1136 = vpop.f32.mrf.mxu0
      %v1137 = vpop.f32.mrf.mxu0
      %v1138 = vadd.f32 %v833, %v1137
      %v1139 = vpop.f32.mrf.mxu0
      %1140 = vmatprep.mubr.bf16.mxu0 0
      %1141 = vmatmul.mubr.bf16.gmra.mxu0 %v993
      %v1142 = vpop.f32.mrf.mxu0
      %v1143 = vadd.f32 %v838, %v1142
      %v1144 = vpop.f32.mrf.mxu0
      %v1145 = vpop.f32.mrf.mxu0
      %v1146 = vadd.f32 %v841, %v1145
      %v1147 = vpop.f32.mrf.mxu0
      %1148 = vmatprep.mubr.bf16.mxu0 0
      %1149 = vmatmul.mubr.bf16.gmra.mxu0 %v994
      %v1150 = vpop.f32.mrf.mxu0
      %v1151 = vadd.f32 %v846, %v1150
      %v1152 = vpop.f32.mrf.mxu0
      %v1153 = vpop.f32.mrf.mxu0
      %v1154 = vadd.f32 %v849, %v1153
      %v1155 = vpop.f32.mrf.mxu0
      %1156 = vmatprep.mubr.bf16.mxu0 0
      %1157 = vmatmul.mubr.bf16.gmra.mxu0 %v995
      %v1158 = vpop.f32.mrf.mxu0
      %v1159 = vadd.f32 %v854, %v1158
      %v1160 = vpop.f32.mrf.mxu0
      %v1161 = vpop.f32.mrf.mxu0
      %v1162 = vadd.f32 %v857, %v1161
      %v1163 = vpop.f32.mrf.mxu0
      %1164 = vmatprep.mubr.bf16.mxu0 0
      %1165 = vmatmul.mubr.bf16.gmra.mxu0 %v996
      %v1166 = vpop.f32.mrf.mxu0
      %v1167 = vadd.f32 %v862, %v1166
      %v1168 = vpop.f32.mrf.mxu0
      %v1169 = vpop.f32.mrf.mxu0
      %v1170 = vadd.f32 %v865, %v1169
      %v1171 = vpop.f32.mrf.mxu0
      %1172 = vmatprep.mubr.bf16.mxu0 0
      %1173 = vmatmul.mubr.bf16.gmra.mxu0 %v997
      %v1174 = vpop.f32.mrf.mxu0
      %v1175 = vadd.f32 %v870, %v1174
      %v1176 = vpop.f32.mrf.mxu0
      %v1177 = vpop.f32.mrf.mxu0
      %v1178 = vadd.f32 %v873, %v1177
      %v1179 = vpop.f32.mrf.mxu0
      %1180 = vmatprep.mubr.bf16.mxu0 0
      %1181 = vmatmul.mubr.bf16.gmra.mxu0 %v998
      %v1182 = vpop.f32.mrf.mxu0
      %v1183 = vadd.f32 %v878, %v1182
      %v1184 = vpop.f32.mrf.mxu0
      %v1185 = vpop.f32.mrf.mxu0
      %v1186 = vadd.f32 %v881, %v1185
      %v1187 = vpop.f32.mrf.mxu0
      %1188 = vmatprep.mubr.bf16.mxu0 0
      %1189 = vmatmul.mubr.bf16.gmra.mxu0 %v999
      %v1190 = vpop.f32.mrf.mxu0
      %v1191 = vadd.f32 %v886, %v1190
      %v1192 = vpop.f32.mrf.mxu0
      %v1193 = vpop.f32.mrf.mxu0
      %v1194 = vadd.f32 %v889, %v1193
      %v1195 = vpop.f32.mrf.mxu0
      %1196 = vmatprep.mubr.bf16.mxu0 0
      %1197 = vmatmul.mubr.bf16.gmra.mxu0 %v1000
      %v1198 = vpop.f32.mrf.mxu0
      %v1199 = vadd.f32 %v894, %v1198
      %v1200 = vpop.f32.mrf.mxu0
      %v1201 = vpop.f32.mrf.mxu0
      %v1202 = vadd.f32 %v897, %v1201
      %v1203 = vpop.f32.mrf.mxu0
      %1204 = vmatprep.mubr.bf16.mxu0 0
      %1205 = vmatmul.mubr.bf16.gmra.mxu0 %v1001
      %v1206 = vpop.f32.mrf.mxu0
      %v1207 = vadd.f32 %v902, %v1206
      %v1208 = vpop.f32.mrf.mxu0
      %v1209 = vpop.f32.mrf.mxu0
      %v1210 = vadd.f32 %v905, %v1209
      %v1211 = vpop.f32.mrf.mxu0
      %1212 = vmatprep.mubr.bf16.mxu0 0
      %1213 = vmatmul.mubr.bf16.gmra.mxu0 %v1002
      %v1214 = vpop.f32.mrf.mxu0
      %v1215 = vadd.f32 %v910, %v1214
      %v1216 = vpop.f32.mrf.mxu0
      %v1217 = vpop.f32.mrf.mxu0
      %v1218 = vadd.f32 %v913, %v1217
      %v1219 = vpop.f32.mrf.mxu0
      %1220 = vmatprep.mubr.bf16.mxu0 0
      %1221 = vmatmul.mubr.bf16.gmra.mxu0 %v1003
      %v1222 = vpop.f32.mrf.mxu0
      %v1223 = vadd.f32 %v918, %v1222
      %v1224 = vpop.f32.mrf.mxu0
      %v1225 = vpop.f32.mrf.mxu0
      %v1226 = vadd.f32 %v921, %v1225
      %v1227 = vpop.f32.mrf.mxu0
      %1228 = vdwg.mxu0
      %v1229 = vld [vmem:[%s172] sm:$0xe]
      %v1230 = vld [vmem:[%s172 + $0xc] sm:$0xe]
      %v1231 = vld [vmem:[%s172 + $0x18] sm:$0xe]
      %v1232 = vld [vmem:[%s172 + $0x24] sm:$0xe]
      %v1233 = vld [vmem:[%s172 + $0x30] sm:$0xe]
      %v1234 = vld [vmem:[%s172 + $0x3c] sm:$0xe]
      %v1235 = vld [vmem:[%s172 + $0x48] sm:$0xe]
      %v1236 = vld [vmem:[%s172 + $0x54] sm:$0xe]
      %v1237 = vld [vmem:[%s172 + $0x60] sm:$0xe]
      %v1238 = vld [vmem:[%s172 + $0x6c] sm:$0xe]
      %v1239 = vld [vmem:[%s172 + $0x78] sm:$0xe]
      %v1240 = vld [vmem:[%s172 + $0x84] sm:$0xe]
      %v1241 = vld [vmem:[%s172 + $0x90] sm:$0xe]
      %v1242 = vld [vmem:[%s172 + $0x9c] sm:$0xe]
      %v1243 = vld [vmem:[%s172 + $0xa8] sm:$0xe]
      %v1244 = vld [vmem:[%s172 + $0xb4] sm:$0xe]
      %vm1277 = vcmask 1042432
      %vm1278 = vcmask 1046532
      %vm1279 = vmor %vm1277, %vm1278
      %v1280 = vrot.slane %v1229, 5
      %v1281 = vrot.slane %v1280, 4
      %v1282 = vrot.slane %v184, 5
      %v1283 = vsel %vm1279, %v1281, %v1282
      %v1284 = vrot.slane %v1282, 4
      %v1285 = vrot.slane %v231, 5
      %v1286 = vsel %vm1279, %v1284, %v1285
      %v1287 = vrot.slane %v1230, 5
      %v1288 = vrot.slane %v1287, 4
      %v1289 = vrot.slane %v186, 5
      %v1290 = vsel %vm1279, %v1288, %v1289
      %v1291 = vrot.slane %v1289, 4
      %v1292 = vrot.slane %v232, 5
      %v1293 = vsel %vm1279, %v1291, %v1292
      %v1294 = vrot.slane %v1231, 5
      %v1295 = vrot.slane %v1294, 4
      %v1296 = vrot.slane %v188, 5
      %v1297 = vsel %vm1279, %v1295, %v1296
      %v1298 = vrot.slane %v1296, 4
      %v1299 = vrot.slane %v233, 5
      %v1300 = vsel %vm1279, %v1298, %v1299
      %v1301 = vrot.slane %v1232, 5
      %v1302 = vrot.slane %v1301, 4
      %v1303 = vrot.slane %v190, 5
      %v1304 = vsel %vm1279, %v1302, %v1303
      %v1305 = vrot.slane %v1303, 4
      %v1306 = vrot.slane %v234, 5
      %v1307 = vsel %vm1279, %v1305, %v1306
      %v1308 = vrot.slane %v1233, 5
      %v1309 = vrot.slane %v1308, 4
      %v1310 = vrot.slane %v192, 5
      %v1311 = vsel %vm1279, %v1309, %v1310
      %v1312 = vrot.slane %v1310, 4
      %v1313 = vrot.slane %v235, 5
      %v1314 = vsel %vm1279, %v1312, %v1313
      %v1315 = vrot.slane %v1234, 5
      %v1316 = vrot.slane %v1315, 4
      %v1317 = vrot.slane %v194, 5
      %v1318 = vsel %vm1279, %v1316, %v1317
      %v1319 = vrot.slane %v1317, 4
      %v1320 = vrot.slane %v236, 5
      %v1321 = vsel %vm1279, %v1319, %v1320
      %v1322 = vrot.slane %v1235, 5
      %v1323 = vrot.slane %v1322, 4
      %v1324 = vrot.slane %v196, 5
      %v1325 = vsel %vm1279, %v1323, %v1324
      %v1326 = vrot.slane %v1324, 4
      %v1327 = vrot.slane %v237, 5
      %v1328 = vsel %vm1279, %v1326, %v1327
      %v1329 = vrot.slane %v1236, 5
      %v1330 = vrot.slane %v1329, 4
      %v1331 = vrot.slane %v198, 5
      %v1332 = vsel %vm1279, %v1330, %v1331
      %v1333 = vrot.slane %v1331, 4
      %v1334 = vrot.slane %v238, 5
      %v1335 = vsel %vm1279, %v1333, %v1334
      %v1336 = vrot.slane %v1237, 5
      %v1337 = vrot.slane %v1336, 4
      %v1338 = vrot.slane %v200, 5
      %v1339 = vsel %vm1279, %v1337, %v1338
      %v1340 = vrot.slane %v1338, 4
      %v1341 = vrot.slane %v239, 5
      %v1342 = vsel %vm1279, %v1340, %v1341
      %v1343 = vrot.slane %v1238, 5
      %v1344 = vrot.slane %v1343, 4
      %v1345 = vrot.slane %v202, 5
      %v1346 = vsel %vm1279, %v1344, %v1345
      %v1347 = vrot.slane %v1345, 4
      %v1348 = vrot.slane %v240, 5
      %v1349 = vsel %vm1279, %v1347, %v1348
      %v1350 = vrot.slane %v1239, 5
      %v1351 = vrot.slane %v1350, 4
      %v1352 = vrot.slane %v204, 5
      %v1353 = vsel %vm1279, %v1351, %v1352
      %v1354 = vrot.slane %v1352, 4
      %v1355 = vrot.slane %v241, 5
      %v1356 = vsel %vm1279, %v1354, %v1355
      %v1357 = vrot.slane %v1240, 5
      %v1358 = vrot.slane %v1357, 4
      %v1359 = vrot.slane %v206, 5
      %v1360 = vsel %vm1279, %v1358, %v1359
      %v1361 = vrot.slane %v1359, 4
      %v1362 = vrot.slane %v242, 5
      %v1363 = vsel %vm1279, %v1361, %v1362
      %v1364 = vrot.slane %v1241, 5
      %v1365 = vrot.slane %v1364, 4
      %v1366 = vrot.slane %v208, 5
      %v1367 = vsel %vm1279, %v1365, %v1366
      %v1368 = vrot.slane %v1366, 4
      %v1369 = vrot.slane %v243, 5
      %v1370 = vsel %vm1279, %v1368, %v1369
      %v1371 = vrot.slane %v1242, 5
      %v1372 = vrot.slane %v1371, 4
      %v1373 = vrot.slane %v210, 5
      %v1374 = vsel %vm1279, %v1372, %v1373
      %v1375 = vrot.slane %v1373, 4
      %v1376 = vrot.slane %v244, 5
      %v1377 = vsel %vm1279, %v1375, %v1376
      %v1378 = vrot.slane %v1243, 5
      %v1379 = vrot.slane %v1378, 4
      %v1380 = vrot.slane %v212, 5
      %v1381 = vsel %vm1279, %v1379, %v1380
      %v1382 = vrot.slane %v1380, 4
      %v1383 = vrot.slane %v245, 5
      %v1384 = vsel %vm1279, %v1382, %v1383
      %v1385 = vrot.slane %v1244, 5
      %v1386 = vrot.slane %v1385, 4
      %v1387 = vrot.slane %v214, 5
      %v1388 = vsel %vm1279, %v1386, %v1387
      %v1389 = vrot.slane %v1387, 4
      %v1390 = vrot.slane %v246, 5
      %v1391 = vsel %vm1279, %v1389, %v1390
      %s1392 = scalar_lea.vmem %s1, 128
      %v1393 = vld [vmem:[%s1392] sm:$0xf]
      %v1394 = vld [vmem:[%s1392 + $0x4] sm:$0xf]
      %v1395 = vld [vmem:[%s1392 + $0x8] sm:$0xf]
      %v1396 = vld [vmem:[%s1392 + $0xc] sm:$0xf]
      %v1397 = vld [vmem:[%s1392 + $0x10] sm:$0xf]
      %v1398 = vld [vmem:[%s1392 + $0x14] sm:$0xf]
      %v1399 = vld [vmem:[%s1392 + $0x18] sm:$0xf]
      %v1400 = vld [vmem:[%s1392 + $0x1c] sm:$0xf]
      %v1401 = vld [vmem:[%s1392 + $0x20] sm:$0xf]
      %v1402 = vld [vmem:[%s1392 + $0x24] sm:$0xf]
      %v1403 = vld [vmem:[%s1392 + $0x28] sm:$0xf]
      %v1404 = vld [vmem:[%s1392 + $0x2c] sm:$0xf]
      %v1405 = vld [vmem:[%s1392 + $0x30] sm:$0xf]
      %v1406 = vld [vmem:[%s1392 + $0x34] sm:$0xf]
      %v1407 = vld [vmem:[%s1392 + $0x38] sm:$0xf]
      %v1408 = vld [vmem:[%s1392 + $0x3c] sm:$0xf]
      %v1409 = vunpack.c.l.b16 %v1283
      %v1410 = vunpack.c.l.b16 %v1286
      %v1411 = vunpack.c.l.b16 %v1290
      %v1412 = vunpack.c.l.b16 %v1293
      %v1413 = vunpack.c.l.b16 %v1297
      %v1414 = vunpack.c.l.b16 %v1300
      %v1415 = vunpack.c.l.b16 %v1304
      %v1416 = vunpack.c.l.b16 %v1307
      %v1417 = vunpack.c.l.b16 %v1311
      %v1418 = vunpack.c.l.b16 %v1314
      %v1419 = vunpack.c.l.b16 %v1318
      %v1420 = vunpack.c.l.b16 %v1321
      %v1421 = vunpack.c.l.b16 %v1325
      %v1422 = vunpack.c.l.b16 %v1328
      %v1423 = vunpack.c.l.b16 %v1332
      %v1424 = vunpack.c.l.b16 %v1335
      %v1425 = vunpack.c.l.b16 %v1339
      %v1426 = vunpack.c.l.b16 %v1342
      %v1427 = vunpack.c.l.b16 %v1346
      %v1428 = vunpack.c.l.b16 %v1349
      %v1429 = vunpack.c.l.b16 %v1353
      %v1430 = vunpack.c.l.b16 %v1356
      %v1431 = vunpack.c.l.b16 %v1360
      %v1432 = vunpack.c.l.b16 %v1363
      %v1433 = vunpack.c.l.b16 %v1367
      %v1434 = vunpack.c.l.b16 %v1370
      %v1435 = vunpack.c.l.b16 %v1374
      %v1436 = vunpack.c.l.b16 %v1377
      %v1437 = vunpack.c.l.b16 %v1381
      %v1438 = vunpack.c.l.b16 %v1384
      %v1439 = vunpack.c.l.b16 %v1388
      %v1440 = vunpack.c.l.b16 %v1391
      %v1441 = vpack.c.b16 %v1410, %v1409
      %v1442 = vpack.c.b16 %v1412, %v1411
      %v1443 = vpack.c.b16 %v1414, %v1413
      %v1444 = vpack.c.b16 %v1416, %v1415
      %v1445 = vpack.c.b16 %v1418, %v1417
      %v1446 = vpack.c.b16 %v1420, %v1419
      %v1447 = vpack.c.b16 %v1422, %v1421
      %v1448 = vpack.c.b16 %v1424, %v1423
      %v1449 = vpack.c.b16 %v1426, %v1425
      %v1450 = vpack.c.b16 %v1428, %v1427
      %v1451 = vpack.c.b16 %v1430, %v1429
      %v1452 = vpack.c.b16 %v1432, %v1431
      %v1453 = vpack.c.b16 %v1434, %v1433
      %v1454 = vpack.c.b16 %v1436, %v1435
      %v1455 = vpack.c.b16 %v1438, %v1437
      %v1456 = vpack.c.b16 %v1440, %v1439
      %v1489 = vunpack.c.l.b16 %v1393
      %v1490 = vunpack.c.l.b16 %v1394
      %v1491 = vunpack.c.l.b16 %v1395
      %v1492 = vunpack.c.l.b16 %v1396
      %v1493 = vunpack.c.l.b16 %v1397
      %v1494 = vunpack.c.l.b16 %v1398
      %v1495 = vunpack.c.l.b16 %v1399
      %v1496 = vunpack.c.l.b16 %v1400
      %v1497 = vunpack.c.l.b16 %v1401
      %v1498 = vunpack.c.l.b16 %v1402
      %v1499 = vunpack.c.l.b16 %v1403
      %v1500 = vunpack.c.l.b16 %v1404
      %v1501 = vunpack.c.l.b16 %v1405
      %v1502 = vunpack.c.l.b16 %v1406
      %v1503 = vunpack.c.l.b16 %v1407
      %v1504 = vunpack.c.l.b16 %v1408
      %v1505 = vpack.c.b16 %v1490, %v1489
      %v1506 = vpack.c.b16 %v1492, %v1491
      %v1507 = vpack.c.b16 %v1494, %v1493
      %v1508 = vpack.c.b16 %v1496, %v1495
      %v1509 = vpack.c.b16 %v1498, %v1497
      %v1510 = vpack.c.b16 %v1500, %v1499
      %v1511 = vpack.c.b16 %v1502, %v1501
      %v1512 = vpack.c.b16 %v1504, %v1503
      %1521 = vmatprep.subr.bf16.mxu0 0
      %1522 = vmatpush1.bf16.msra.mxu0 %v1512
      %1523 = vmatprep.subr.bf16.mxu0 0
      %1524 = vmatpush1.bf16.msra.mxu0 %v1511
      %1525 = vmatprep.subr.bf16.mxu0 0
      %1526 = vmatpush1.bf16.msra.mxu0 %v1510
      %1527 = vmatprep.subr.bf16.mxu0 0
      %1528 = vmatpush1.bf16.msra.mxu0 %v1509
      %1529 = vmatprep.subr.bf16.mxu0 0
      %1530 = vmatpush1.bf16.msra.mxu0 %v1508
      %1531 = vmatprep.subr.bf16.mxu0 0
      %1532 = vmatpush1.bf16.msra.mxu0 %v1507
      %1533 = vmatprep.subr.bf16.mxu0 0
      %1534 = vmatpush1.bf16.msra.mxu0 %v1506
      %1535 = vmatprep.subr.bf16.mxu0 0
      %1536 = vmatpush1.bf16.msra.mxu0 %v1505
      %1537 = vmatprep.subr.bf16.mxu0 0
      %1538 = vmatpush2.bf16.msra.mxu0 0
      %1539 = vmatprep.subr.bf16.mxu0 0
      %1540 = vmatpush2.bf16.msra.mxu0 0
      %1541 = vmatprep.subr.bf16.mxu0 0
      %1542 = vmatpush2.bf16.msra.mxu0 0
      %1543 = vmatprep.subr.bf16.mxu0 0
      %1544 = vmatpush2.bf16.msra.mxu0 0
      %1545 = vmatprep.subr.bf16.mxu0 0
      %1546 = vmatpush2.bf16.msra.mxu0 0
      %1547 = vmatprep.subr.bf16.mxu0 0
      %1548 = vmatpush2.bf16.msra.mxu0 0
      %1549 = vmatprep.subr.bf16.mxu0 0
      %1550 = vmatpush2.bf16.msra.mxu0 0
      %1551 = vmatprep.subr.bf16.mxu0 0
      %1552 = vmatpush2.bf16.msra.mxu0 0
      %1553 = vmatprep.mubr.bf16.mxu0 0
      %1554 = vmatmul.mubr.bf16.gmra.mxu0 %v1441
      %v1555 = vpop.f32.mrf.mxu0
      %v1556 = vadd.f32 0.0, %v1555
      %v1557 = vpop.f32.mrf.mxu0
      %v1558 = vpop.f32.mrf.mxu0
      %v1559 = vadd.f32 0.0, %v1558
      %v1560 = vpop.f32.mrf.mxu0
      %1561 = vmatprep.mubr.bf16.mxu0 0
      %1562 = vmatmul.mubr.bf16.gmra.mxu0 %v1442
      %v1563 = vpop.f32.mrf.mxu0
      %v1564 = vadd.f32 0.0, %v1563
      %v1565 = vpop.f32.mrf.mxu0
      %v1566 = vpop.f32.mrf.mxu0
      %v1567 = vadd.f32 0.0, %v1566
      %v1568 = vpop.f32.mrf.mxu0
      %1569 = vmatprep.mubr.bf16.mxu0 0
      %1570 = vmatmul.mubr.bf16.gmra.mxu0 %v1443
      %v1571 = vpop.f32.mrf.mxu0
      %v1572 = vadd.f32 0.0, %v1571
      %v1573 = vpop.f32.mrf.mxu0
      %v1574 = vpop.f32.mrf.mxu0
      %v1575 = vadd.f32 0.0, %v1574
      %v1576 = vpop.f32.mrf.mxu0
      %1577 = vmatprep.mubr.bf16.mxu0 0
      %1578 = vmatmul.mubr.bf16.gmra.mxu0 %v1444
      %v1579 = vpop.f32.mrf.mxu0
      %v1580 = vadd.f32 0.0, %v1579
      %v1581 = vpop.f32.mrf.mxu0
      %v1582 = vpop.f32.mrf.mxu0
      %v1583 = vadd.f32 0.0, %v1582
      %v1584 = vpop.f32.mrf.mxu0
      %1585 = vmatprep.mubr.bf16.mxu0 0
      %1586 = vmatmul.mubr.bf16.gmra.mxu0 %v1445
      %v1587 = vpop.f32.mrf.mxu0
      %v1588 = vadd.f32 0.0, %v1587
      %v1589 = vpop.f32.mrf.mxu0
      %v1590 = vpop.f32.mrf.mxu0
      %v1591 = vadd.f32 0.0, %v1590
      %v1592 = vpop.f32.mrf.mxu0
      %1593 = vmatprep.mubr.bf16.mxu0 0
      %1594 = vmatmul.mubr.bf16.gmra.mxu0 %v1446
      %v1595 = vpop.f32.mrf.mxu0
      %v1596 = vadd.f32 0.0, %v1595
      %v1597 = vpop.f32.mrf.mxu0
      %v1598 = vpop.f32.mrf.mxu0
      %v1599 = vadd.f32 0.0, %v1598
      %v1600 = vpop.f32.mrf.mxu0
      %1601 = vmatprep.mubr.bf16.mxu0 0
      %1602 = vmatmul.mubr.bf16.gmra.mxu0 %v1447
      %v1603 = vpop.f32.mrf.mxu0
      %v1604 = vadd.f32 0.0, %v1603
      %v1605 = vpop.f32.mrf.mxu0
      %v1606 = vpop.f32.mrf.mxu0
      %v1607 = vadd.f32 0.0, %v1606
      %v1608 = vpop.f32.mrf.mxu0
      %1609 = vmatprep.mubr.bf16.mxu0 0
      %1610 = vmatmul.mubr.bf16.gmra.mxu0 %v1448
      %v1611 = vpop.f32.mrf.mxu0
      %v1612 = vadd.f32 0.0, %v1611
      %v1613 = vpop.f32.mrf.mxu0
      %v1614 = vpop.f32.mrf.mxu0
      %v1615 = vadd.f32 0.0, %v1614
      %v1616 = vpop.f32.mrf.mxu0
      %1617 = vmatprep.mubr.bf16.mxu0 0
      %1618 = vmatmul.mubr.bf16.gmra.mxu0 %v1449
      %v1619 = vpop.f32.mrf.mxu0
      %v1620 = vadd.f32 0.0, %v1619
      %v1621 = vpop.f32.mrf.mxu0
      %v1622 = vpop.f32.mrf.mxu0
      %v1623 = vadd.f32 0.0, %v1622
      %v1624 = vpop.f32.mrf.mxu0
      %1625 = vmatprep.mubr.bf16.mxu0 0
      %1626 = vmatmul.mubr.bf16.gmra.mxu0 %v1450
      %v1627 = vpop.f32.mrf.mxu0
      %v1628 = vadd.f32 0.0, %v1627
      %v1629 = vpop.f32.mrf.mxu0
      %v1630 = vpop.f32.mrf.mxu0
      %v1631 = vadd.f32 0.0, %v1630
      %v1632 = vpop.f32.mrf.mxu0
      %1633 = vmatprep.mubr.bf16.mxu0 0
      %1634 = vmatmul.mubr.bf16.gmra.mxu0 %v1451
      %v1635 = vpop.f32.mrf.mxu0
      %v1636 = vadd.f32 0.0, %v1635
      %v1637 = vpop.f32.mrf.mxu0
      %v1638 = vpop.f32.mrf.mxu0
      %v1639 = vadd.f32 0.0, %v1638
      %v1640 = vpop.f32.mrf.mxu0
      %1641 = vmatprep.mubr.bf16.mxu0 0
      %1642 = vmatmul.mubr.bf16.gmra.mxu0 %v1452
      %v1643 = vpop.f32.mrf.mxu0
      %v1644 = vadd.f32 0.0, %v1643
      %v1645 = vpop.f32.mrf.mxu0
      %v1646 = vpop.f32.mrf.mxu0
      %v1647 = vadd.f32 0.0, %v1646
      %v1648 = vpop.f32.mrf.mxu0
      %1649 = vmatprep.mubr.bf16.mxu0 0
      %1650 = vmatmul.mubr.bf16.gmra.mxu0 %v1453
      %v1651 = vpop.f32.mrf.mxu0
      %v1652 = vadd.f32 0.0, %v1651
      %v1653 = vpop.f32.mrf.mxu0
      %v1654 = vpop.f32.mrf.mxu0
      %v1655 = vadd.f32 0.0, %v1654
      %v1656 = vpop.f32.mrf.mxu0
      %1657 = vmatprep.mubr.bf16.mxu0 0
      %1658 = vmatmul.mubr.bf16.gmra.mxu0 %v1454
      %v1659 = vpop.f32.mrf.mxu0
      %v1660 = vadd.f32 0.0, %v1659
      %v1661 = vpop.f32.mrf.mxu0
      %v1662 = vpop.f32.mrf.mxu0
      %v1663 = vadd.f32 0.0, %v1662
      %v1664 = vpop.f32.mrf.mxu0
      %1665 = vmatprep.mubr.bf16.mxu0 0
      %1666 = vmatmul.mubr.bf16.gmra.mxu0 %v1455
      %v1667 = vpop.f32.mrf.mxu0
      %v1668 = vadd.f32 0.0, %v1667
      %v1669 = vpop.f32.mrf.mxu0
      %v1670 = vpop.f32.mrf.mxu0
      %v1671 = vadd.f32 0.0, %v1670
      %v1672 = vpop.f32.mrf.mxu0
      %1673 = vmatprep.mubr.bf16.mxu0 0
      %1674 = vmatmul.mubr.bf16.gmra.mxu0 %v1456
      %v1675 = vpop.f32.mrf.mxu0
      %v1676 = vadd.f32 0.0, %v1675
      %v1677 = vpop.f32.mrf.mxu0
      %v1678 = vpop.f32.mrf.mxu0
      %v1679 = vadd.f32 0.0, %v1678
      %v1680 = vpop.f32.mrf.mxu0
      %1681 = vdwg.mxu0
      %v1682 = vadd.f32 %v1103, %v1556
      %v1683 = vadd.f32 %v1106, %v1559
      %v1684 = vadd.f32 %v1111, %v1564
      %v1685 = vadd.f32 %v1114, %v1567
      %v1686 = vadd.f32 %v1119, %v1572
      %v1687 = vadd.f32 %v1122, %v1575
      %v1688 = vadd.f32 %v1127, %v1580
      %v1689 = vadd.f32 %v1130, %v1583
      %v1690 = vadd.f32 %v1135, %v1588
      %v1691 = vadd.f32 %v1138, %v1591
      %v1692 = vadd.f32 %v1143, %v1596
      %v1693 = vadd.f32 %v1146, %v1599
      %v1694 = vadd.f32 %v1151, %v1604
      %v1695 = vadd.f32 %v1154, %v1607
      %v1696 = vadd.f32 %v1159, %v1612
      %v1697 = vadd.f32 %v1162, %v1615
      %v1698 = vadd.f32 %v1167, %v1620
      %v1699 = vadd.f32 %v1170, %v1623
      %v1700 = vadd.f32 %v1175, %v1628
      %v1701 = vadd.f32 %v1178, %v1631
      %v1702 = vadd.f32 %v1183, %v1636
      %v1703 = vadd.f32 %v1186, %v1639
      %v1704 = vadd.f32 %v1191, %v1644
      %v1705 = vadd.f32 %v1194, %v1647
      %v1706 = vadd.f32 %v1199, %v1652
      %v1707 = vadd.f32 %v1202, %v1655
      %v1708 = vadd.f32 %v1207, %v1660
      %v1709 = vadd.f32 %v1210, %v1663
      %v1710 = vadd.f32 %v1215, %v1668
      %v1711 = vadd.f32 %v1218, %v1671
      %v1712 = vadd.f32 %v1223, %v1676
      %v1713 = vadd.f32 %v1226, %v1679
      %s1714 = scalar_lea.vmem %s172, 12
      %v1715 = vld [vmem:[%s1714] sm:$0xf]
      %v1716 = vld [vmem:[%s1714 + $0x4] sm:$0xf]
      %v1717 = vld [vmem:[%s1714 + $0xc] sm:$0xf]
      %v1718 = vld [vmem:[%s1714 + $0x10] sm:$0xf]
      %v1719 = vld [vmem:[%s1714 + $0x18] sm:$0xf]
      %v1720 = vld [vmem:[%s1714 + $0x1c] sm:$0xf]
      %v1721 = vld [vmem:[%s1714 + $0x24] sm:$0xf]
      %v1722 = vld [vmem:[%s1714 + $0x28] sm:$0xf]
      %v1723 = vld [vmem:[%s1714 + $0x30] sm:$0xf]
      %v1724 = vld [vmem:[%s1714 + $0x34] sm:$0xf]
      %v1725 = vld [vmem:[%s1714 + $0x3c] sm:$0xf]
      %v1726 = vld [vmem:[%s1714 + $0x40] sm:$0xf]
      %v1727 = vld [vmem:[%s1714 + $0x48] sm:$0xf]
      %v1728 = vld [vmem:[%s1714 + $0x4c] sm:$0xf]
      %v1729 = vld [vmem:[%s1714 + $0x54] sm:$0xf]
      %v1730 = vld [vmem:[%s1714 + $0x58] sm:$0xf]
      %v1731 = vld [vmem:[%s1714 + $0x60] sm:$0xf]
      %v1732 = vld [vmem:[%s1714 + $0x64] sm:$0xf]
      %v1733 = vld [vmem:[%s1714 + $0x6c] sm:$0xf]
      %v1734 = vld [vmem:[%s1714 + $0x70] sm:$0xf]
      %v1735 = vld [vmem:[%s1714 + $0x78] sm:$0xf]
      %v1736 = vld [vmem:[%s1714 + $0x7c] sm:$0xf]
      %v1737 = vld [vmem:[%s1714 + $0x84] sm:$0xf]
      %v1738 = vld [vmem:[%s1714 + $0x88] sm:$0xf]
      %v1739 = vld [vmem:[%s1714 + $0x90] sm:$0xf]
      %v1740 = vld [vmem:[%s1714 + $0x94] sm:$0xf]
      %v1741 = vld [vmem:[%s1714 + $0x9c] sm:$0xf]
      %v1742 = vld [vmem:[%s1714 + $0xa0] sm:$0xf]
      %v1743 = vld [vmem:[%s1714 + $0xa8] sm:$0xf]
      %v1744 = vld [vmem:[%s1714 + $0xac] sm:$0xf]
      %v1745 = vld [vmem:[%s1714 + $0xb4] sm:$0xf]
      %v1746 = vld [vmem:[%s1714 + $0xb8] sm:$0xf]
      %s1747 = scalar_lea.vmem %s1, 192
      %v1748 = vld [vmem:[%s1747] sm:$0xf]
      %v1749 = vld [vmem:[%s1747 + $0x4] sm:$0xf]
      %v1750 = vld [vmem:[%s1747 + $0x8] sm:$0xf]
      %v1751 = vld [vmem:[%s1747 + $0xc] sm:$0xf]
      %v1752 = vld [vmem:[%s1747 + $0x10] sm:$0xf]
      %v1753 = vld [vmem:[%s1747 + $0x14] sm:$0xf]
      %v1754 = vld [vmem:[%s1747 + $0x18] sm:$0xf]
      %v1755 = vld [vmem:[%s1747 + $0x1c] sm:$0xf]
      %v1756 = vld [vmem:[%s1747 + $0x20] sm:$0xf]
      %v1757 = vld [vmem:[%s1747 + $0x24] sm:$0xf]
      %v1758 = vld [vmem:[%s1747 + $0x28] sm:$0xf]
      %v1759 = vld [vmem:[%s1747 + $0x2c] sm:$0xf]
      %v1760 = vld [vmem:[%s1747 + $0x30] sm:$0xf]
      %v1761 = vld [vmem:[%s1747 + $0x34] sm:$0xf]
      %v1762 = vld [vmem:[%s1747 + $0x38] sm:$0xf]
      %v1763 = vld [vmem:[%s1747 + $0x3c] sm:$0xf]
      %v1796 = vunpack.c.l.b16 %v1715
      %v1797 = vunpack.c.l.b16 %v1716
      %v1798 = vunpack.c.l.b16 %v1717
      %v1799 = vunpack.c.l.b16 %v1718
      %v1800 = vunpack.c.l.b16 %v1719
      %v1801 = vunpack.c.l.b16 %v1720
      %v1802 = vunpack.c.l.b16 %v1721
      %v1803 = vunpack.c.l.b16 %v1722
      %v1804 = vunpack.c.l.b16 %v1723
      %v1805 = vunpack.c.l.b16 %v1724
      %v1806 = vunpack.c.l.b16 %v1725
      %v1807 = vunpack.c.l.b16 %v1726
      %v1808 = vunpack.c.l.b16 %v1727
      %v1809 = vunpack.c.l.b16 %v1728
      %v1810 = vunpack.c.l.b16 %v1729
      %v1811 = vunpack.c.l.b16 %v1730
      %v1812 = vunpack.c.l.b16 %v1731
      %v1813 = vunpack.c.l.b16 %v1732
      %v1814 = vunpack.c.l.b16 %v1733
      %v1815 = vunpack.c.l.b16 %v1734
      %v1816 = vunpack.c.l.b16 %v1735
      %v1817 = vunpack.c.l.b16 %v1736
      %v1818 = vunpack.c.l.b16 %v1737
      %v1819 = vunpack.c.l.b16 %v1738
      %v1820 = vunpack.c.l.b16 %v1739
      %v1821 = vunpack.c.l.b16 %v1740
      %v1822 = vunpack.c.l.b16 %v1741
      %v1823 = vunpack.c.l.b16 %v1742
      %v1824 = vunpack.c.l.b16 %v1743
      %v1825 = vunpack.c.l.b16 %v1744
      %v1826 = vunpack.c.l.b16 %v1745
      %v1827 = vunpack.c.l.b16 %v1746
      %v1828 = vpack.c.b16 %v1797, %v1796
      %v1829 = vpack.c.b16 %v1799, %v1798
      %v1830 = vpack.c.b16 %v1801, %v1800
      %v1831 = vpack.c.b16 %v1803, %v1802
      %v1832 = vpack.c.b16 %v1805, %v1804
      %v1833 = vpack.c.b16 %v1807, %v1806
      %v1834 = vpack.c.b16 %v1809, %v1808
      %v1835 = vpack.c.b16 %v1811, %v1810
      %v1836 = vpack.c.b16 %v1813, %v1812
      %v1837 = vpack.c.b16 %v1815, %v1814
      %v1838 = vpack.c.b16 %v1817, %v1816
      %v1839 = vpack.c.b16 %v1819, %v1818
      %v1840 = vpack.c.b16 %v1821, %v1820
      %v1841 = vpack.c.b16 %v1823, %v1822
      %v1842 = vpack.c.b16 %v1825, %v1824
      %v1843 = vpack.c.b16 %v1827, %v1826
      %v1876 = vunpack.c.l.b16 %v1748
      %v1877 = vunpack.c.l.b16 %v1749
      %v1878 = vunpack.c.l.b16 %v1750
      %v1879 = vunpack.c.l.b16 %v1751
      %v1880 = vunpack.c.l.b16 %v1752
      %v1881 = vunpack.c.l.b16 %v1753
      %v1882 = vunpack.c.l.b16 %v1754
      %v1883 = vunpack.c.l.b16 %v1755
      %v1884 = vunpack.c.l.b16 %v1756
      %v1885 = vunpack.c.l.b16 %v1757
      %v1886 = vunpack.c.l.b16 %v1758
      %v1887 = vunpack.c.l.b16 %v1759
      %v1888 = vunpack.c.l.b16 %v1760
      %v1889 = vunpack.c.l.b16 %v1761
      %v1890 = vunpack.c.l.b16 %v1762
      %v1891 = vunpack.c.l.b16 %v1763
      %v1892 = vpack.c.b16 %v1877, %v1876
      %v1893 = vpack.c.b16 %v1879, %v1878
      %v1894 = vpack.c.b16 %v1881, %v1880
      %v1895 = vpack.c.b16 %v1883, %v1882
      %v1896 = vpack.c.b16 %v1885, %v1884
      %v1897 = vpack.c.b16 %v1887, %v1886
      %v1898 = vpack.c.b16 %v1889, %v1888
      %v1899 = vpack.c.b16 %v1891, %v1890
      %1908 = vmatprep.subr.bf16.mxu0 0
      %1909 = vmatpush1.bf16.msra.mxu0 %v1899
      %1910 = vmatprep.subr.bf16.mxu0 0
      %1911 = vmatpush1.bf16.msra.mxu0 %v1898
      %1912 = vmatprep.subr.bf16.mxu0 0
      %1913 = vmatpush1.bf16.msra.mxu0 %v1897
      %1914 = vmatprep.subr.bf16.mxu0 0
      %1915 = vmatpush1.bf16.msra.mxu0 %v1896
      %1916 = vmatprep.subr.bf16.mxu0 0
      %1917 = vmatpush1.bf16.msra.mxu0 %v1895
      %1918 = vmatprep.subr.bf16.mxu0 0
      %1919 = vmatpush1.bf16.msra.mxu0 %v1894
      %1920 = vmatprep.subr.bf16.mxu0 0
      %1921 = vmatpush1.bf16.msra.mxu0 %v1893
      %1922 = vmatprep.subr.bf16.mxu0 0
      %1923 = vmatpush1.bf16.msra.mxu0 %v1892
      %1924 = vmatprep.subr.bf16.mxu0 0
      %1925 = vmatpush2.bf16.msra.mxu0 0
      %1926 = vmatprep.subr.bf16.mxu0 0
      %1927 = vmatpush2.bf16.msra.mxu0 0
      %1928 = vmatprep.subr.bf16.mxu0 0
      %1929 = vmatpush2.bf16.msra.mxu0 0
      %1930 = vmatprep.subr.bf16.mxu0 0
      %1931 = vmatpush2.bf16.msra.mxu0 0
      %1932 = vmatprep.subr.bf16.mxu0 0
      %1933 = vmatpush2.bf16.msra.mxu0 0
      %1934 = vmatprep.subr.bf16.mxu0 0
      %1935 = vmatpush2.bf16.msra.mxu0 0
      %1936 = vmatprep.subr.bf16.mxu0 0
      %1937 = vmatpush2.bf16.msra.mxu0 0
      %1938 = vmatprep.subr.bf16.mxu0 0
      %1939 = vmatpush2.bf16.msra.mxu0 0
      %1940 = vmatprep.mubr.bf16.mxu0 0
      %1941 = vmatmul.mubr.bf16.gmra.mxu0 %v1828
      %v1942 = vpop.f32.mrf.mxu0
      %v1943 = vadd.f32 0.0, %v1942
      %v1944 = vpop.f32.mrf.mxu0
      %v1945 = vpop.f32.mrf.mxu0
      %v1946 = vadd.f32 0.0, %v1945
      %v1947 = vpop.f32.mrf.mxu0
      %1948 = vmatprep.mubr.bf16.mxu0 0
      %1949 = vmatmul.mubr.bf16.gmra.mxu0 %v1829
      %v1950 = vpop.f32.mrf.mxu0
      %v1951 = vadd.f32 0.0, %v1950
      %v1952 = vpop.f32.mrf.mxu0
      %v1953 = vpop.f32.mrf.mxu0
      %v1954 = vadd.f32 0.0, %v1953
      %v1955 = vpop.f32.mrf.mxu0
      %1956 = vmatprep.mubr.bf16.mxu0 0
      %1957 = vmatmul.mubr.bf16.gmra.mxu0 %v1830
      %v1958 = vpop.f32.mrf.mxu0
      %v1959 = vadd.f32 0.0, %v1958
      %v1960 = vpop.f32.mrf.mxu0
      %v1961 = vpop.f32.mrf.mxu0
      %v1962 = vadd.f32 0.0, %v1961
      %v1963 = vpop.f32.mrf.mxu0
      %1964 = vmatprep.mubr.bf16.mxu0 0
      %1965 = vmatmul.mubr.bf16.gmra.mxu0 %v1831
      %v1966 = vpop.f32.mrf.mxu0
      %v1967 = vadd.f32 0.0, %v1966
      %v1968 = vpop.f32.mrf.mxu0
      %v1969 = vpop.f32.mrf.mxu0
      %v1970 = vadd.f32 0.0, %v1969
      %v1971 = vpop.f32.mrf.mxu0
      %1972 = vmatprep.mubr.bf16.mxu0 0
      %1973 = vmatmul.mubr.bf16.gmra.mxu0 %v1832
      %v1974 = vpop.f32.mrf.mxu0
      %v1975 = vadd.f32 0.0, %v1974
      %v1976 = vpop.f32.mrf.mxu0
      %v1977 = vpop.f32.mrf.mxu0
      %v1978 = vadd.f32 0.0, %v1977
      %v1979 = vpop.f32.mrf.mxu0
      %1980 = vmatprep.mubr.bf16.mxu0 0
      %1981 = vmatmul.mubr.bf16.gmra.mxu0 %v1833
      %v1982 = vpop.f32.mrf.mxu0
      %v1983 = vadd.f32 0.0, %v1982
      %v1984 = vpop.f32.mrf.mxu0
      %v1985 = vpop.f32.mrf.mxu0
      %v1986 = vadd.f32 0.0, %v1985
      %v1987 = vpop.f32.mrf.mxu0
      %1988 = vmatprep.mubr.bf16.mxu0 0
      %1989 = vmatmul.mubr.bf16.gmra.mxu0 %v1834
      %v1990 = vpop.f32.mrf.mxu0
      %v1991 = vadd.f32 0.0, %v1990
      %v1992 = vpop.f32.mrf.mxu0
      %v1993 = vpop.f32.mrf.mxu0
      %v1994 = vadd.f32 0.0, %v1993
      %v1995 = vpop.f32.mrf.mxu0
      %1996 = vmatprep.mubr.bf16.mxu0 0
      %1997 = vmatmul.mubr.bf16.gmra.mxu0 %v1835
      %v1998 = vpop.f32.mrf.mxu0
      %v1999 = vadd.f32 0.0, %v1998
      %v2000 = vpop.f32.mrf.mxu0
      %v2001 = vpop.f32.mrf.mxu0
      %v2002 = vadd.f32 0.0, %v2001
      %v2003 = vpop.f32.mrf.mxu0
      %2004 = vmatprep.mubr.bf16.mxu0 0
      %2005 = vmatmul.mubr.bf16.gmra.mxu0 %v1836
      %v2006 = vpop.f32.mrf.mxu0
      %v2007 = vadd.f32 0.0, %v2006
      %v2008 = vpop.f32.mrf.mxu0
      %v2009 = vpop.f32.mrf.mxu0
      %v2010 = vadd.f32 0.0, %v2009
      %v2011 = vpop.f32.mrf.mxu0
      %2012 = vmatprep.mubr.bf16.mxu0 0
      %2013 = vmatmul.mubr.bf16.gmra.mxu0 %v1837
      %v2014 = vpop.f32.mrf.mxu0
      %v2015 = vadd.f32 0.0, %v2014
      %v2016 = vpop.f32.mrf.mxu0
      %v2017 = vpop.f32.mrf.mxu0
      %v2018 = vadd.f32 0.0, %v2017
      %v2019 = vpop.f32.mrf.mxu0
      %2020 = vmatprep.mubr.bf16.mxu0 0
      %2021 = vmatmul.mubr.bf16.gmra.mxu0 %v1838
      %v2022 = vpop.f32.mrf.mxu0
      %v2023 = vadd.f32 0.0, %v2022
      %v2024 = vpop.f32.mrf.mxu0
      %v2025 = vpop.f32.mrf.mxu0
      %v2026 = vadd.f32 0.0, %v2025
      %v2027 = vpop.f32.mrf.mxu0
      %2028 = vmatprep.mubr.bf16.mxu0 0
      %2029 = vmatmul.mubr.bf16.gmra.mxu0 %v1839
      %v2030 = vpop.f32.mrf.mxu0
      %v2031 = vadd.f32 0.0, %v2030
      %v2032 = vpop.f32.mrf.mxu0
      %v2033 = vpop.f32.mrf.mxu0
      %v2034 = vadd.f32 0.0, %v2033
      %v2035 = vpop.f32.mrf.mxu0
      %2036 = vmatprep.mubr.bf16.mxu0 0
      %2037 = vmatmul.mubr.bf16.gmra.mxu0 %v1840
      %v2038 = vpop.f32.mrf.mxu0
      %v2039 = vadd.f32 0.0, %v2038
      %v2040 = vpop.f32.mrf.mxu0
      %v2041 = vpop.f32.mrf.mxu0
      %v2042 = vadd.f32 0.0, %v2041
      %v2043 = vpop.f32.mrf.mxu0
      %2044 = vmatprep.mubr.bf16.mxu0 0
      %2045 = vmatmul.mubr.bf16.gmra.mxu0 %v1841
      %v2046 = vpop.f32.mrf.mxu0
      %v2047 = vadd.f32 0.0, %v2046
      %v2048 = vpop.f32.mrf.mxu0
      %v2049 = vpop.f32.mrf.mxu0
      %v2050 = vadd.f32 0.0, %v2049
      %v2051 = vpop.f32.mrf.mxu0
      %2052 = vmatprep.mubr.bf16.mxu0 0
      %2053 = vmatmul.mubr.bf16.gmra.mxu0 %v1842
      %v2054 = vpop.f32.mrf.mxu0
      %v2055 = vadd.f32 0.0, %v2054
      %v2056 = vpop.f32.mrf.mxu0
      %v2057 = vpop.f32.mrf.mxu0
      %v2058 = vadd.f32 0.0, %v2057
      %v2059 = vpop.f32.mrf.mxu0
      %2060 = vmatprep.mubr.bf16.mxu0 0
      %2061 = vmatmul.mubr.bf16.gmra.mxu0 %v1843
      %v2062 = vpop.f32.mrf.mxu0
      %v2063 = vadd.f32 0.0, %v2062
      %v2064 = vpop.f32.mrf.mxu0
      %v2065 = vpop.f32.mrf.mxu0
      %v2066 = vadd.f32 0.0, %v2065
      %v2067 = vpop.f32.mrf.mxu0
      %2068 = vdwg.mxu0
      %v2069 = vadd.f32 %v1682, %v1943
      %v2070 = vadd.f32 %v1683, %v1946
      %v2071 = vadd.f32 %v1684, %v1951
      %v2072 = vadd.f32 %v1685, %v1954
      %v2073 = vadd.f32 %v1686, %v1959
      %v2074 = vadd.f32 %v1687, %v1962
      %v2075 = vadd.f32 %v1688, %v1967
      %v2076 = vadd.f32 %v1689, %v1970
      %v2077 = vadd.f32 %v1690, %v1975
      %v2078 = vadd.f32 %v1691, %v1978
      %v2079 = vadd.f32 %v1692, %v1983
      %v2080 = vadd.f32 %v1693, %v1986
      %v2081 = vadd.f32 %v1694, %v1991
      %v2082 = vadd.f32 %v1695, %v1994
      %v2083 = vadd.f32 %v1696, %v1999
      %v2084 = vadd.f32 %v1697, %v2002
      %v2085 = vadd.f32 %v1698, %v2007
      %v2086 = vadd.f32 %v1699, %v2010
      %v2087 = vadd.f32 %v1700, %v2015
      %v2088 = vadd.f32 %v1701, %v2018
      %v2089 = vadd.f32 %v1702, %v2023
      %v2090 = vadd.f32 %v1703, %v2026
      %v2091 = vadd.f32 %v1704, %v2031
      %v2092 = vadd.f32 %v1705, %v2034
      %v2093 = vadd.f32 %v1706, %v2039
      %v2094 = vadd.f32 %v1707, %v2042
      %v2095 = vadd.f32 %v1708, %v2047
      %v2096 = vadd.f32 %v1709, %v2050
      %v2097 = vadd.f32 %v1710, %v2055
      %v2098 = vadd.f32 %v1711, %v2058
      %v2099 = vadd.f32 %v1712, %v2063
      %v2100 = vadd.f32 %v1713, %v2066
      %v2101 = vld [vmem:[%s1714] sm:$0xf]
      %v2102 = vld [vmem:[%s1714 + $0x4] sm:$0xf]
      %v2103 = vld [vmem:[%s1714 + $0x8] sm:$0x1]
      %v2104 = vld [vmem:[%s1714 + $0xc] sm:$0xf]
      %v2105 = vld [vmem:[%s1714 + $0x10] sm:$0xf]
      %v2106 = vld [vmem:[%s1714 + $0x14] sm:$0x1]
      %v2107 = vld [vmem:[%s1714 + $0x18] sm:$0xf]
      %v2108 = vld [vmem:[%s1714 + $0x1c] sm:$0xf]
      %v2109 = vld [vmem:[%s1714 + $0x20] sm:$0x1]
      %v2110 = vld [vmem:[%s1714 + $0x24] sm:$0xf]
      %v2111 = vld [vmem:[%s1714 + $0x28] sm:$0xf]
      %v2112 = vld [vmem:[%s1714 + $0x2c] sm:$0x1]
      %v2113 = vld [vmem:[%s1714 + $0x30] sm:$0xf]
      %v2114 = vld [vmem:[%s1714 + $0x34] sm:$0xf]
      %v2115 = vld [vmem:[%s1714 + $0x38] sm:$0x1]
      %v2116 = vld [vmem:[%s1714 + $0x3c] sm:$0xf]
      %v2117 = vld [vmem:[%s1714 + $0x40] sm:$0xf]
      %v2118 = vld [vmem:[%s1714 + $0x44] sm:$0x1]
      %v2119 = vld [vmem:[%s1714 + $0x48] sm:$0xf]
      %v2120 = vld [vmem:[%s1714 + $0x4c] sm:$0xf]
      %v2121 = vld [vmem:[%s1714 + $0x50] sm:$0x1]
      %v2122 = vld [vmem:[%s1714 + $0x54] sm:$0xf]
      %v2123 = vld [vmem:[%s1714 + $0x58] sm:$0xf]
      %v2124 = vld [vmem:[%s1714 + $0x5c] sm:$0x1]
      %v2125 = vld [vmem:[%s1714 + $0x60] sm:$0xf]
      %v2126 = vld [vmem:[%s1714 + $0x64] sm:$0xf]
      %v2127 = vld [vmem:[%s1714 + $0x68] sm:$0x1]
      %v2128 = vld [vmem:[%s1714 + $0x6c] sm:$0xf]
      %v2129 = vld [vmem:[%s1714 + $0x70] sm:$0xf]
      %v2130 = vld [vmem:[%s1714 + $0x74] sm:$0x1]
      %v2131 = vld [vmem:[%s1714 + $0x78] sm:$0xf]
      %v2132 = vld [vmem:[%s1714 + $0x7c] sm:$0xf]
      %v2133 = vld [vmem:[%s1714 + $0x80] sm:$0x1]
      %v2134 = vld [vmem:[%s1714 + $0x84] sm:$0xf]
      %v2135 = vld [vmem:[%s1714 + $0x88] sm:$0xf]
      %v2136 = vld [vmem:[%s1714 + $0x8c] sm:$0x1]
      %v2137 = vld [vmem:[%s1714 + $0x90] sm:$0xf]
      %v2138 = vld [vmem:[%s1714 + $0x94] sm:$0xf]
      %v2139 = vld [vmem:[%s1714 + $0x98] sm:$0x1]
      %v2140 = vld [vmem:[%s1714 + $0x9c] sm:$0xf]
      %v2141 = vld [vmem:[%s1714 + $0xa0] sm:$0xf]
      %v2142 = vld [vmem:[%s1714 + $0xa4] sm:$0x1]
      %v2143 = vld [vmem:[%s1714 + $0xa8] sm:$0xf]
      %v2144 = vld [vmem:[%s1714 + $0xac] sm:$0xf]
      %v2145 = vld [vmem:[%s1714 + $0xb0] sm:$0x1]
      %v2146 = vld [vmem:[%s1714 + $0xb4] sm:$0xf]
      %v2147 = vld [vmem:[%s1714 + $0xb8] sm:$0xf]
      %v2148 = vld [vmem:[%s1714 + $0xbc] sm:$0x1]
      %v2150 = vshrl.u32 %v2101, 16
      %v2152 = vrot.slane %v2150, 4
      %v2153 = vshll.u32 %v2101, 16
      %v2155 = vrot.slane %v2153, 5
      %v2156 = vor.u32 %v2152, %v2155
      %v2157 = vrot.slane %v2156, 4
      %v2159 = vshll.u32 %v2102, 16
      %v2161 = vrot.slane %v2159, 5
      %v2162 = vsel %vm249, %v2157, %v2161
      %v2163 = vshrl.u32 %v2102, 16
      %v2165 = vrot.slane %v2163, 4
      %v2166 = vor.u32 %v2165, %v2161
      %v2167 = vrot.slane %v2166, 4
      %v2169 = vshll.u32 %v2103, 16
      %v2171 = vrot.slane %v2169, 5
      %v2172 = vsel %vm249, %v2167, %v2171
      %v2174 = vshrl.u32 %v2104, 16
      %v2176 = vrot.slane %v2174, 4
      %v2177 = vshll.u32 %v2104, 16
      %v2179 = vrot.slane %v2177, 5
      %v2180 = vor.u32 %v2176, %v2179
      %v2181 = vrot.slane %v2180, 4
      %v2183 = vshll.u32 %v2105, 16
      %v2185 = vrot.slane %v2183, 5
      %v2186 = vsel %vm249, %v2181, %v2185
      %v2187 = vshrl.u32 %v2105, 16
      %v2189 = vrot.slane %v2187, 4
      %v2190 = vor.u32 %v2189, %v2185
      %v2191 = vrot.slane %v2190, 4
      %v2193 = vshll.u32 %v2106, 16
      %v2195 = vrot.slane %v2193, 5
      %v2196 = vsel %vm249, %v2191, %v2195
      %v2198 = vshrl.u32 %v2107, 16
      %v2200 = vrot.slane %v2198, 4
      %v2201 = vshll.u32 %v2107, 16
      %v2203 = vrot.slane %v2201, 5
      %v2204 = vor.u32 %v2200, %v2203
      %v2205 = vrot.slane %v2204, 4
      %v2207 = vshll.u32 %v2108, 16
      %v2209 = vrot.slane %v2207, 5
      %v2210 = vsel %vm249, %v2205, %v2209
      %v2211 = vshrl.u32 %v2108, 16
      %v2213 = vrot.slane %v2211, 4
      %v2214 = vor.u32 %v2213, %v2209
      %v2215 = vrot.slane %v2214, 4
      %v2217 = vshll.u32 %v2109, 16
      %v2219 = vrot.slane %v2217, 5
      %v2220 = vsel %vm249, %v2215, %v2219
      %v2222 = vshrl.u32 %v2110, 16
      %v2224 = vrot.slane %v2222, 4
      %v2225 = vshll.u32 %v2110, 16
      %v2227 = vrot.slane %v2225, 5
      %v2228 = vor.u32 %v2224, %v2227
      %v2229 = vrot.slane %v2228, 4
      %v2231 = vshll.u32 %v2111, 16
      %v2233 = vrot.slane %v2231, 5
      %v2234 = vsel %vm249, %v2229, %v2233
      %v2235 = vshrl.u32 %v2111, 16
      %v2237 = vrot.slane %v2235, 4
      %v2238 = vor.u32 %v2237, %v2233
      %v2239 = vrot.slane %v2238, 4
      %v2241 = vshll.u32 %v2112, 16
      %v2243 = vrot.slane %v2241, 5
      %v2244 = vsel %vm249, %v2239, %v2243
      %v2246 = vshrl.u32 %v2113, 16
      %v2248 = vrot.slane %v2246, 4
      %v2249 = vshll.u32 %v2113, 16
      %v2251 = vrot.slane %v2249, 5
      %v2252 = vor.u32 %v2248, %v2251
      %v2253 = vrot.slane %v2252, 4
      %v2255 = vshll.u32 %v2114, 16
      %v2257 = vrot.slane %v2255, 5
      %v2258 = vsel %vm249, %v2253, %v2257
      %v2259 = vshrl.u32 %v2114, 16
      %v2261 = vrot.slane %v2259, 4
      %v2262 = vor.u32 %v2261, %v2257
      %v2263 = vrot.slane %v2262, 4
      %v2265 = vshll.u32 %v2115, 16
      %v2267 = vrot.slane %v2265, 5
      %v2268 = vsel %vm249, %v2263, %v2267
      %v2270 = vshrl.u32 %v2116, 16
      %v2272 = vrot.slane %v2270, 4
      %v2273 = vshll.u32 %v2116, 16
      %v2275 = vrot.slane %v2273, 5
      %v2276 = vor.u32 %v2272, %v2275
      %v2277 = vrot.slane %v2276, 4
      %v2279 = vshll.u32 %v2117, 16
      %v2281 = vrot.slane %v2279, 5
      %v2282 = vsel %vm249, %v2277, %v2281
      %v2283 = vshrl.u32 %v2117, 16
      %v2285 = vrot.slane %v2283, 4
      %v2286 = vor.u32 %v2285, %v2281
      %v2287 = vrot.slane %v2286, 4
      %v2289 = vshll.u32 %v2118, 16
      %v2291 = vrot.slane %v2289, 5
      %v2292 = vsel %vm249, %v2287, %v2291
      %v2294 = vshrl.u32 %v2119, 16
      %v2296 = vrot.slane %v2294, 4
      %v2297 = vshll.u32 %v2119, 16
      %v2299 = vrot.slane %v2297, 5
      %v2300 = vor.u32 %v2296, %v2299
      %v2301 = vrot.slane %v2300, 4
      %v2303 = vshll.u32 %v2120, 16
      %v2305 = vrot.slane %v2303, 5
      %v2306 = vsel %vm249, %v2301, %v2305
      %v2307 = vshrl.u32 %v2120, 16
      %v2309 = vrot.slane %v2307, 4
      %v2310 = vor.u32 %v2309, %v2305
      %v2311 = vrot.slane %v2310, 4
      %v2313 = vshll.u32 %v2121, 16
      %v2315 = vrot.slane %v2313, 5
      %v2316 = vsel %vm249, %v2311, %v2315
      %v2318 = vshrl.u32 %v2122, 16
      %v2320 = vrot.slane %v2318, 4
      %v2321 = vshll.u32 %v2122, 16
      %v2323 = vrot.slane %v2321, 5
      %v2324 = vor.u32 %v2320, %v2323
      %v2325 = vrot.slane %v2324, 4
      %v2327 = vshll.u32 %v2123, 16
      %v2329 = vrot.slane %v2327, 5
      %v2330 = vsel %vm249, %v2325, %v2329
      %v2331 = vshrl.u32 %v2123, 16
      %v2333 = vrot.slane %v2331, 4
      %v2334 = vor.u32 %v2333, %v2329
      %v2335 = vrot.slane %v2334, 4
      %v2337 = vshll.u32 %v2124, 16
      %v2339 = vrot.slane %v2337, 5
      %v2340 = vsel %vm249, %v2335, %v2339
      %v2342 = vshrl.u32 %v2125, 16
      %v2344 = vrot.slane %v2342, 4
      %v2345 = vshll.u32 %v2125, 16
      %v2347 = vrot.slane %v2345, 5
      %v2348 = vor.u32 %v2344, %v2347
      %v2349 = vrot.slane %v2348, 4
      %v2351 = vshll.u32 %v2126, 16
      %v2353 = vrot.slane %v2351, 5
      %v2354 = vsel %vm249, %v2349, %v2353
      %v2355 = vshrl.u32 %v2126, 16
      %v2357 = vrot.slane %v2355, 4
      %v2358 = vor.u32 %v2357, %v2353
      %v2359 = vrot.slane %v2358, 4
      %v2361 = vshll.u32 %v2127, 16
      %v2363 = vrot.slane %v2361, 5
      %v2364 = vsel %vm249, %v2359, %v2363
      %v2366 = vshrl.u32 %v2128, 16
      %v2368 = vrot.slane %v2366, 4
      %v2369 = vshll.u32 %v2128, 16
      %v2371 = vrot.slane %v2369, 5
      %v2372 = vor.u32 %v2368, %v2371
      %v2373 = vrot.slane %v2372, 4
      %v2375 = vshll.u32 %v2129, 16
      %v2377 = vrot.slane %v2375, 5
      %v2378 = vsel %vm249, %v2373, %v2377
      %v2379 = vshrl.u32 %v2129, 16
      %v2381 = vrot.slane %v2379, 4
      %v2382 = vor.u32 %v2381, %v2377
      %v2383 = vrot.slane %v2382, 4
      %v2385 = vshll.u32 %v2130, 16
      %v2387 = vrot.slane %v2385, 5
      %v2388 = vsel %vm249, %v2383, %v2387
      %v2390 = vshrl.u32 %v2131, 16
      %v2392 = vrot.slane %v2390, 4
      %v2393 = vshll.u32 %v2131, 16
      %v2395 = vrot.slane %v2393, 5
      %v2396 = vor.u32 %v2392, %v2395
      %v2397 = vrot.slane %v2396, 4
      %v2399 = vshll.u32 %v2132, 16
      %v2401 = vrot.slane %v2399, 5
      %v2402 = vsel %vm249, %v2397, %v2401
      %v2403 = vshrl.u32 %v2132, 16
      %v2405 = vrot.slane %v2403, 4
      %v2406 = vor.u32 %v2405, %v2401
      %v2407 = vrot.slane %v2406, 4
      %v2409 = vshll.u32 %v2133, 16
      %v2411 = vrot.slane %v2409, 5
      %v2412 = vsel %vm249, %v2407, %v2411
      %v2414 = vshrl.u32 %v2134, 16
      %v2416 = vrot.slane %v2414, 4
      %v2417 = vshll.u32 %v2134, 16
      %v2419 = vrot.slane %v2417, 5
      %v2420 = vor.u32 %v2416, %v2419
      %v2421 = vrot.slane %v2420, 4
      %v2423 = vshll.u32 %v2135, 16
      %v2425 = vrot.slane %v2423, 5
      %v2426 = vsel %vm249, %v2421, %v2425
      %v2427 = vshrl.u32 %v2135, 16
      %v2429 = vrot.slane %v2427, 4
      %v2430 = vor.u32 %v2429, %v2425
      %v2431 = vrot.slane %v2430, 4
      %v2433 = vshll.u32 %v2136, 16
      %v2435 = vrot.slane %v2433, 5
      %v2436 = vsel %vm249, %v2431, %v2435
      %v2438 = vshrl.u32 %v2137, 16
      %v2440 = vrot.slane %v2438, 4
      %v2441 = vshll.u32 %v2137, 16
      %v2443 = vrot.slane %v2441, 5
      %v2444 = vor.u32 %v2440, %v2443
      %v2445 = vrot.slane %v2444, 4
      %v2447 = vshll.u32 %v2138, 16
      %v2449 = vrot.slane %v2447, 5
      %v2450 = vsel %vm249, %v2445, %v2449
      %v2451 = vshrl.u32 %v2138, 16
      %v2453 = vrot.slane %v2451, 4
      %v2454 = vor.u32 %v2453, %v2449
      %v2455 = vrot.slane %v2454, 4
      %v2457 = vshll.u32 %v2139, 16
      %v2459 = vrot.slane %v2457, 5
      %v2460 = vsel %vm249, %v2455, %v2459
      %v2462 = vshrl.u32 %v2140, 16
      %v2464 = vrot.slane %v2462, 4
      %v2465 = vshll.u32 %v2140, 16
      %v2467 = vrot.slane %v2465, 5
      %v2468 = vor.u32 %v2464, %v2467
      %v2469 = vrot.slane %v2468, 4
      %v2471 = vshll.u32 %v2141, 16
      %v2473 = vrot.slane %v2471, 5
      %v2474 = vsel %vm249, %v2469, %v2473
      %v2475 = vshrl.u32 %v2141, 16
      %v2477 = vrot.slane %v2475, 4
      %v2478 = vor.u32 %v2477, %v2473
      %v2479 = vrot.slane %v2478, 4
      %v2481 = vshll.u32 %v2142, 16
      %v2483 = vrot.slane %v2481, 5
      %v2484 = vsel %vm249, %v2479, %v2483
      %v2486 = vshrl.u32 %v2143, 16
      %v2488 = vrot.slane %v2486, 4
      %v2489 = vshll.u32 %v2143, 16
      %v2491 = vrot.slane %v2489, 5
      %v2492 = vor.u32 %v2488, %v2491
      %v2493 = vrot.slane %v2492, 4
      %v2495 = vshll.u32 %v2144, 16
      %v2497 = vrot.slane %v2495, 5
      %v2498 = vsel %vm249, %v2493, %v2497
      %v2499 = vshrl.u32 %v2144, 16
      %v2501 = vrot.slane %v2499, 4
      %v2502 = vor.u32 %v2501, %v2497
      %v2503 = vrot.slane %v2502, 4
      %v2505 = vshll.u32 %v2145, 16
      %v2507 = vrot.slane %v2505, 5
      %v2508 = vsel %vm249, %v2503, %v2507
      %v2510 = vshrl.u32 %v2146, 16
      %v2512 = vrot.slane %v2510, 4
      %v2513 = vshll.u32 %v2146, 16
      %v2515 = vrot.slane %v2513, 5
      %v2516 = vor.u32 %v2512, %v2515
      %v2517 = vrot.slane %v2516, 4
      %v2519 = vshll.u32 %v2147, 16
      %v2521 = vrot.slane %v2519, 5
      %v2522 = vsel %vm249, %v2517, %v2521
      %v2523 = vshrl.u32 %v2147, 16
      %v2525 = vrot.slane %v2523, 4
      %v2526 = vor.u32 %v2525, %v2521
      %v2527 = vrot.slane %v2526, 4
      %v2529 = vshll.u32 %v2148, 16
      %v2531 = vrot.slane %v2529, 5
      %v2532 = vsel %vm249, %v2527, %v2531
      %s2533 = scalar_lea.vmem %s1, 256
      %v2534 = vld [vmem:[%s2533] sm:$0xf]
      %v2535 = vld [vmem:[%s2533 + $0x4] sm:$0xf]
      %v2536 = vld [vmem:[%s2533 + $0x8] sm:$0xf]
      %v2537 = vld [vmem:[%s2533 + $0xc] sm:$0xf]
      %v2538 = vld [vmem:[%s2533 + $0x10] sm:$0xf]
      %v2539 = vld [vmem:[%s2533 + $0x14] sm:$0xf]
      %v2540 = vld [vmem:[%s2533 + $0x18] sm:$0xf]
      %v2541 = vld [vmem:[%s2533 + $0x1c] sm:$0xf]
      %v2542 = vld [vmem:[%s2533 + $0x20] sm:$0xf]
      %v2543 = vld [vmem:[%s2533 + $0x24] sm:$0xf]
      %v2544 = vld [vmem:[%s2533 + $0x28] sm:$0xf]
      %v2545 = vld [vmem:[%s2533 + $0x2c] sm:$0xf]
      %v2546 = vld [vmem:[%s2533 + $0x30] sm:$0xf]
      %v2547 = vld [vmem:[%s2533 + $0x34] sm:$0xf]
      %v2548 = vld [vmem:[%s2533 + $0x38] sm:$0xf]
      %v2549 = vld [vmem:[%s2533 + $0x3c] sm:$0xf]
      %v2550 = vunpack.c.l.b16 %v2162
      %v2551 = vunpack.c.l.b16 %v2172
      %v2552 = vunpack.c.l.b16 %v2186
      %v2553 = vunpack.c.l.b16 %v2196
      %v2554 = vunpack.c.l.b16 %v2210
      %v2555 = vunpack.c.l.b16 %v2220
      %v2556 = vunpack.c.l.b16 %v2234
      %v2557 = vunpack.c.l.b16 %v2244
      %v2558 = vunpack.c.l.b16 %v2258
      %v2559 = vunpack.c.l.b16 %v2268
      %v2560 = vunpack.c.l.b16 %v2282
      %v2561 = vunpack.c.l.b16 %v2292
      %v2562 = vunpack.c.l.b16 %v2306
      %v2563 = vunpack.c.l.b16 %v2316
      %v2564 = vunpack.c.l.b16 %v2330
      %v2565 = vunpack.c.l.b16 %v2340
      %v2566 = vunpack.c.l.b16 %v2354
      %v2567 = vunpack.c.l.b16 %v2364
      %v2568 = vunpack.c.l.b16 %v2378
      %v2569 = vunpack.c.l.b16 %v2388
      %v2570 = vunpack.c.l.b16 %v2402
      %v2571 = vunpack.c.l.b16 %v2412
      %v2572 = vunpack.c.l.b16 %v2426
      %v2573 = vunpack.c.l.b16 %v2436
      %v2574 = vunpack.c.l.b16 %v2450
      %v2575 = vunpack.c.l.b16 %v2460
      %v2576 = vunpack.c.l.b16 %v2474
      %v2577 = vunpack.c.l.b16 %v2484
      %v2578 = vunpack.c.l.b16 %v2498
      %v2579 = vunpack.c.l.b16 %v2508
      %v2580 = vunpack.c.l.b16 %v2522
      %v2581 = vunpack.c.l.b16 %v2532
      %v2582 = vpack.c.b16 %v2551, %v2550
      %v2583 = vpack.c.b16 %v2553, %v2552
      %v2584 = vpack.c.b16 %v2555, %v2554
      %v2585 = vpack.c.b16 %v2557, %v2556
      %v2586 = vpack.c.b16 %v2559, %v2558
      %v2587 = vpack.c.b16 %v2561, %v2560
      %v2588 = vpack.c.b16 %v2563, %v2562
      %v2589 = vpack.c.b16 %v2565, %v2564
      %v2590 = vpack.c.b16 %v2567, %v2566
      %v2591 = vpack.c.b16 %v2569, %v2568
      %v2592 = vpack.c.b16 %v2571, %v2570
      %v2593 = vpack.c.b16 %v2573, %v2572
      %v2594 = vpack.c.b16 %v2575, %v2574
      %v2595 = vpack.c.b16 %v2577, %v2576
      %v2596 = vpack.c.b16 %v2579, %v2578
      %v2597 = vpack.c.b16 %v2581, %v2580
      %v2630 = vunpack.c.l.b16 %v2534
      %v2631 = vunpack.c.l.b16 %v2535
      %v2632 = vunpack.c.l.b16 %v2536
      %v2633 = vunpack.c.l.b16 %v2537
      %v2634 = vunpack.c.l.b16 %v2538
      %v2635 = vunpack.c.l.b16 %v2539
      %v2636 = vunpack.c.l.b16 %v2540
      %v2637 = vunpack.c.l.b16 %v2541
      %v2638 = vunpack.c.l.b16 %v2542
      %v2639 = vunpack.c.l.b16 %v2543
      %v2640 = vunpack.c.l.b16 %v2544
      %v2641 = vunpack.c.l.b16 %v2545
      %v2642 = vunpack.c.l.b16 %v2546
      %v2643 = vunpack.c.l.b16 %v2547
      %v2644 = vunpack.c.l.b16 %v2548
      %v2645 = vunpack.c.l.b16 %v2549
      %v2646 = vpack.c.b16 %v2631, %v2630
      %v2647 = vpack.c.b16 %v2633, %v2632
      %v2648 = vpack.c.b16 %v2635, %v2634
      %v2649 = vpack.c.b16 %v2637, %v2636
      %v2650 = vpack.c.b16 %v2639, %v2638
      %v2651 = vpack.c.b16 %v2641, %v2640
      %v2652 = vpack.c.b16 %v2643, %v2642
      %v2653 = vpack.c.b16 %v2645, %v2644
      %2662 = vmatprep.subr.bf16.mxu0 0
      %2663 = vmatpush1.bf16.msra.mxu0 %v2653
      %2664 = vmatprep.subr.bf16.mxu0 0
      %2665 = vmatpush1.bf16.msra.mxu0 %v2652
      %2666 = vmatprep.subr.bf16.mxu0 0
      %2667 = vmatpush1.bf16.msra.mxu0 %v2651
      %2668 = vmatprep.subr.bf16.mxu0 0
      %2669 = vmatpush1.bf16.msra.mxu0 %v2650
      %2670 = vmatprep.subr.bf16.mxu0 0
      %2671 = vmatpush1.bf16.msra.mxu0 %v2649
      %2672 = vmatprep.subr.bf16.mxu0 0
      %2673 = vmatpush1.bf16.msra.mxu0 %v2648
      %2674 = vmatprep.subr.bf16.mxu0 0
      %2675 = vmatpush1.bf16.msra.mxu0 %v2647
      %2676 = vmatprep.subr.bf16.mxu0 0
      %2677 = vmatpush1.bf16.msra.mxu0 %v2646
      %2678 = vmatprep.subr.bf16.mxu0 0
      %2679 = vmatpush2.bf16.msra.mxu0 0
      %2680 = vmatprep.subr.bf16.mxu0 0
      %2681 = vmatpush2.bf16.msra.mxu0 0
      %2682 = vmatprep.subr.bf16.mxu0 0
      %2683 = vmatpush2.bf16.msra.mxu0 0
      %2684 = vmatprep.subr.bf16.mxu0 0
      %2685 = vmatpush2.bf16.msra.mxu0 0
      %2686 = vmatprep.subr.bf16.mxu0 0
      %2687 = vmatpush2.bf16.msra.mxu0 0
      %2688 = vmatprep.subr.bf16.mxu0 0
      %2689 = vmatpush2.bf16.msra.mxu0 0
      %2690 = vmatprep.subr.bf16.mxu0 0
      %2691 = vmatpush2.bf16.msra.mxu0 0
      %2692 = vmatprep.subr.bf16.mxu0 0
      %2693 = vmatpush2.bf16.msra.mxu0 0
      %2694 = vmatprep.mubr.bf16.mxu0 0
      %2695 = vmatmul.mubr.bf16.gmra.mxu0 %v2582
      %v2696 = vpop.f32.mrf.mxu0
      %v2697 = vadd.f32 0.0, %v2696
      %v2698 = vpop.f32.mrf.mxu0
      %v2699 = vpop.f32.mrf.mxu0
      %v2700 = vadd.f32 0.0, %v2699
      %v2701 = vpop.f32.mrf.mxu0
      %2702 = vmatprep.mubr.bf16.mxu0 0
      %2703 = vmatmul.mubr.bf16.gmra.mxu0 %v2583
      %v2704 = vpop.f32.mrf.mxu0
      %v2705 = vadd.f32 0.0, %v2704
      %v2706 = vpop.f32.mrf.mxu0
      %v2707 = vpop.f32.mrf.mxu0
      %v2708 = vadd.f32 0.0, %v2707
      %v2709 = vpop.f32.mrf.mxu0
      %2710 = vmatprep.mubr.bf16.mxu0 0
      %2711 = vmatmul.mubr.bf16.gmra.mxu0 %v2584
      %v2712 = vpop.f32.mrf.mxu0
      %v2713 = vadd.f32 0.0, %v2712
      %v2714 = vpop.f32.mrf.mxu0
      %v2715 = vpop.f32.mrf.mxu0
      %v2716 = vadd.f32 0.0, %v2715
      %v2717 = vpop.f32.mrf.mxu0
      %2718 = vmatprep.mubr.bf16.mxu0 0
      %2719 = vmatmul.mubr.bf16.gmra.mxu0 %v2585
      %v2720 = vpop.f32.mrf.mxu0
      %v2721 = vadd.f32 0.0, %v2720
      %v2722 = vpop.f32.mrf.mxu0
      %v2723 = vpop.f32.mrf.mxu0
      %v2724 = vadd.f32 0.0, %v2723
      %v2725 = vpop.f32.mrf.mxu0
      %2726 = vmatprep.mubr.bf16.mxu0 0
      %2727 = vmatmul.mubr.bf16.gmra.mxu0 %v2586
      %v2728 = vpop.f32.mrf.mxu0
      %v2729 = vadd.f32 0.0, %v2728
      %v2730 = vpop.f32.mrf.mxu0
      %v2731 = vpop.f32.mrf.mxu0
      %v2732 = vadd.f32 0.0, %v2731
      %v2733 = vpop.f32.mrf.mxu0
      %2734 = vmatprep.mubr.bf16.mxu0 0
      %2735 = vmatmul.mubr.bf16.gmra.mxu0 %v2587
      %v2736 = vpop.f32.mrf.mxu0
      %v2737 = vadd.f32 0.0, %v2736
      %v2738 = vpop.f32.mrf.mxu0
      %v2739 = vpop.f32.mrf.mxu0
      %v2740 = vadd.f32 0.0, %v2739
      %v2741 = vpop.f32.mrf.mxu0
      %2742 = vmatprep.mubr.bf16.mxu0 0
      %2743 = vmatmul.mubr.bf16.gmra.mxu0 %v2588
      %v2744 = vpop.f32.mrf.mxu0
      %v2745 = vadd.f32 0.0, %v2744
      %v2746 = vpop.f32.mrf.mxu0
      %v2747 = vpop.f32.mrf.mxu0
      %v2748 = vadd.f32 0.0, %v2747
      %v2749 = vpop.f32.mrf.mxu0
      %2750 = vmatprep.mubr.bf16.mxu0 0
      %2751 = vmatmul.mubr.bf16.gmra.mxu0 %v2589
      %v2752 = vpop.f32.mrf.mxu0
      %v2753 = vadd.f32 0.0, %v2752
      %v2754 = vpop.f32.mrf.mxu0
      %v2755 = vpop.f32.mrf.mxu0
      %v2756 = vadd.f32 0.0, %v2755
      %v2757 = vpop.f32.mrf.mxu0
      %2758 = vmatprep.mubr.bf16.mxu0 0
      %2759 = vmatmul.mubr.bf16.gmra.mxu0 %v2590
      %v2760 = vpop.f32.mrf.mxu0
      %v2761 = vadd.f32 0.0, %v2760
      %v2762 = vpop.f32.mrf.mxu0
      %v2763 = vpop.f32.mrf.mxu0
      %v2764 = vadd.f32 0.0, %v2763
      %v2765 = vpop.f32.mrf.mxu0
      %2766 = vmatprep.mubr.bf16.mxu0 0
      %2767 = vmatmul.mubr.bf16.gmra.mxu0 %v2591
      %v2768 = vpop.f32.mrf.mxu0
      %v2769 = vadd.f32 0.0, %v2768
      %v2770 = vpop.f32.mrf.mxu0
      %v2771 = vpop.f32.mrf.mxu0
      %v2772 = vadd.f32 0.0, %v2771
      %v2773 = vpop.f32.mrf.mxu0
      %2774 = vmatprep.mubr.bf16.mxu0 0
      %2775 = vmatmul.mubr.bf16.gmra.mxu0 %v2592
      %v2776 = vpop.f32.mrf.mxu0
      %v2777 = vadd.f32 0.0, %v2776
      %v2778 = vpop.f32.mrf.mxu0
      %v2779 = vpop.f32.mrf.mxu0
      %v2780 = vadd.f32 0.0, %v2779
      %v2781 = vpop.f32.mrf.mxu0
      %2782 = vmatprep.mubr.bf16.mxu0 0
      %2783 = vmatmul.mubr.bf16.gmra.mxu0 %v2593
      %v2784 = vpop.f32.mrf.mxu0
      %v2785 = vadd.f32 0.0, %v2784
      %v2786 = vpop.f32.mrf.mxu0
      %v2787 = vpop.f32.mrf.mxu0
      %v2788 = vadd.f32 0.0, %v2787
      %v2789 = vpop.f32.mrf.mxu0
      %2790 = vmatprep.mubr.bf16.mxu0 0
      %2791 = vmatmul.mubr.bf16.gmra.mxu0 %v2594
      %v2792 = vpop.f32.mrf.mxu0
      %v2793 = vadd.f32 0.0, %v2792
      %v2794 = vpop.f32.mrf.mxu0
      %v2795 = vpop.f32.mrf.mxu0
      %v2796 = vadd.f32 0.0, %v2795
      %v2797 = vpop.f32.mrf.mxu0
      %2798 = vmatprep.mubr.bf16.mxu0 0
      %2799 = vmatmul.mubr.bf16.gmra.mxu0 %v2595
      %v2800 = vpop.f32.mrf.mxu0
      %v2801 = vadd.f32 0.0, %v2800
      %v2802 = vpop.f32.mrf.mxu0
      %v2803 = vpop.f32.mrf.mxu0
      %v2804 = vadd.f32 0.0, %v2803
      %v2805 = vpop.f32.mrf.mxu0
      %2806 = vmatprep.mubr.bf16.mxu0 0
      %2807 = vmatmul.mubr.bf16.gmra.mxu0 %v2596
      %v2808 = vpop.f32.mrf.mxu0
      %v2809 = vadd.f32 0.0, %v2808
      %v2810 = vpop.f32.mrf.mxu0
      %v2811 = vpop.f32.mrf.mxu0
      %v2812 = vadd.f32 0.0, %v2811
      %v2813 = vpop.f32.mrf.mxu0
      %2814 = vmatprep.mubr.bf16.mxu0 0
      %2815 = vmatmul.mubr.bf16.gmra.mxu0 %v2597
      %v2816 = vpop.f32.mrf.mxu0
      %v2817 = vadd.f32 0.0, %v2816
      %v2818 = vpop.f32.mrf.mxu0
      %v2819 = vpop.f32.mrf.mxu0
      %v2820 = vadd.f32 0.0, %v2819
      %v2821 = vpop.f32.mrf.mxu0
      %2822 = vdwg.mxu0
      %v2823 = vadd.f32 %v2069, %v2697
      %v2824 = vadd.f32 %v2070, %v2700
      %v2825 = vadd.f32 %v2071, %v2705
      %v2826 = vadd.f32 %v2072, %v2708
      %v2827 = vadd.f32 %v2073, %v2713
      %v2828 = vadd.f32 %v2074, %v2716
      %v2829 = vadd.f32 %v2075, %v2721
      %v2830 = vadd.f32 %v2076, %v2724
      %v2831 = vadd.f32 %v2077, %v2729
      %v2832 = vadd.f32 %v2078, %v2732
      %v2833 = vadd.f32 %v2079, %v2737
      %v2834 = vadd.f32 %v2080, %v2740
      %v2835 = vadd.f32 %v2081, %v2745
      %v2836 = vadd.f32 %v2082, %v2748
      %v2837 = vadd.f32 %v2083, %v2753
      %v2838 = vadd.f32 %v2084, %v2756
      %v2839 = vadd.f32 %v2085, %v2761
      %v2840 = vadd.f32 %v2086, %v2764
      %v2841 = vadd.f32 %v2087, %v2769
      %v2842 = vadd.f32 %v2088, %v2772
      %v2843 = vadd.f32 %v2089, %v2777
      %v2844 = vadd.f32 %v2090, %v2780
      %v2845 = vadd.f32 %v2091, %v2785
      %v2846 = vadd.f32 %v2092, %v2788
      %v2847 = vadd.f32 %v2093, %v2793
      %v2848 = vadd.f32 %v2094, %v2796
      %v2849 = vadd.f32 %v2095, %v2801
      %v2850 = vadd.f32 %v2096, %v2804
      %v2851 = vadd.f32 %v2097, %v2809
      %v2852 = vadd.f32 %v2098, %v2812
      %v2853 = vadd.f32 %v2099, %v2817
      %v2854 = vadd.f32 %v2100, %v2820
      %v2855 = vld [vmem:[%s1714] sm:$0xe]
      %v2856 = vld [vmem:[%s1714 + $0xc] sm:$0xe]
      %v2857 = vld [vmem:[%s1714 + $0x18] sm:$0xe]
      %v2858 = vld [vmem:[%s1714 + $0x24] sm:$0xe]
      %v2859 = vld [vmem:[%s1714 + $0x30] sm:$0xe]
      %v2860 = vld [vmem:[%s1714 + $0x3c] sm:$0xe]
      %v2861 = vld [vmem:[%s1714 + $0x48] sm:$0xe]
      %v2862 = vld [vmem:[%s1714 + $0x54] sm:$0xe]
      %v2863 = vld [vmem:[%s1714 + $0x60] sm:$0xe]
      %v2864 = vld [vmem:[%s1714 + $0x6c] sm:$0xe]
      %v2865 = vld [vmem:[%s1714 + $0x78] sm:$0xe]
      %v2866 = vld [vmem:[%s1714 + $0x84] sm:$0xe]
      %v2867 = vld [vmem:[%s1714 + $0x90] sm:$0xe]
      %v2868 = vld [vmem:[%s1714 + $0x9c] sm:$0xe]
      %v2869 = vld [vmem:[%s1714 + $0xa8] sm:$0xe]
      %v2870 = vld [vmem:[%s1714 + $0xb4] sm:$0xe]
      %v2919 = vrot.slane %v2855, 5
      %v2920 = vrot.slane %v2919, 4
      %v2921 = vrot.slane %v2102, 5
      %v2922 = vsel %vm1279, %v2920, %v2921
      %v2923 = vrot.slane %v2921, 4
      %v2924 = vrot.slane %v2103, 5
      %v2925 = vsel %vm1279, %v2923, %v2924
      %v2926 = vrot.slane %v2856, 5
      %v2927 = vrot.slane %v2926, 4
      %v2928 = vrot.slane %v2105, 5
      %v2929 = vsel %vm1279, %v2927, %v2928
      %v2930 = vrot.slane %v2928, 4
      %v2931 = vrot.slane %v2106, 5
      %v2932 = vsel %vm1279, %v2930, %v2931
      %v2933 = vrot.slane %v2857, 5
      %v2934 = vrot.slane %v2933, 4
      %v2935 = vrot.slane %v2108, 5
      %v2936 = vsel %vm1279, %v2934, %v2935
      %v2937 = vrot.slane %v2935, 4
      %v2938 = vrot.slane %v2109, 5
      %v2939 = vsel %vm1279, %v2937, %v2938
      %v2940 = vrot.slane %v2858, 5
      %v2941 = vrot.slane %v2940, 4
      %v2942 = vrot.slane %v2111, 5
      %v2943 = vsel %vm1279, %v2941, %v2942
      %v2944 = vrot.slane %v2942, 4
      %v2945 = vrot.slane %v2112, 5
      %v2946 = vsel %vm1279, %v2944, %v2945
      %v2947 = vrot.slane %v2859, 5
      %v2948 = vrot.slane %v2947, 4
      %v2949 = vrot.slane %v2114, 5
      %v2950 = vsel %vm1279, %v2948, %v2949
      %v2951 = vrot.slane %v2949, 4
      %v2952 = vrot.slane %v2115, 5
      %v2953 = vsel %vm1279, %v2951, %v2952
      %v2954 = vrot.slane %v2860, 5
      %v2955 = vrot.slane %v2954, 4
      %v2956 = vrot.slane %v2117, 5
      %v2957 = vsel %vm1279, %v2955, %v2956
      %v2958 = vrot.slane %v2956, 4
      %v2959 = vrot.slane %v2118, 5
      %v2960 = vsel %vm1279, %v2958, %v2959
      %v2961 = vrot.slane %v2861, 5
      %v2962 = vrot.slane %v2961, 4
      %v2963 = vrot.slane %v2120, 5
      %v2964 = vsel %vm1279, %v2962, %v2963
      %v2965 = vrot.slane %v2963, 4
      %v2966 = vrot.slane %v2121, 5
      %v2967 = vsel %vm1279, %v2965, %v2966
      %v2968 = vrot.slane %v2862, 5
      %v2969 = vrot.slane %v2968, 4
      %v2970 = vrot.slane %v2123, 5
      %v2971 = vsel %vm1279, %v2969, %v2970
      %v2972 = vrot.slane %v2970, 4
      %v2973 = vrot.slane %v2124, 5
      %v2974 = vsel %vm1279, %v2972, %v2973
      %v2975 = vrot.slane %v2863, 5
      %v2976 = vrot.slane %v2975, 4
      %v2977 = vrot.slane %v2126, 5
      %v2978 = vsel %vm1279, %v2976, %v2977
      %v2979 = vrot.slane %v2977, 4
      %v2980 = vrot.slane %v2127, 5
      %v2981 = vsel %vm1279, %v2979, %v2980
      %v2982 = vrot.slane %v2864, 5
      %v2983 = vrot.slane %v2982, 4
      %v2984 = vrot.slane %v2129, 5
      %v2985 = vsel %vm1279, %v2983, %v2984
      %v2986 = vrot.slane %v2984, 4
      %v2987 = vrot.slane %v2130, 5
      %v2988 = vsel %vm1279, %v2986, %v2987
      %v2989 = vrot.slane %v2865, 5
      %v2990 = vrot.slane %v2989, 4
      %v2991 = vrot.slane %v2132, 5
      %v2992 = vsel %vm1279, %v2990, %v2991
      %v2993 = vrot.slane %v2991, 4
      %v2994 = vrot.slane %v2133, 5
      %v2995 = vsel %vm1279, %v2993, %v2994
      %v2996 = vrot.slane %v2866, 5
      %v2997 = vrot.slane %v2996, 4
      %v2998 = vrot.slane %v2135, 5
      %v2999 = vsel %vm1279, %v2997, %v2998
      %v3000 = vrot.slane %v2998, 4
      %v3001 = vrot.slane %v2136, 5
      %v3002 = vsel %vm1279, %v3000, %v3001
      %v3003 = vrot.slane %v2867, 5
      %v3004 = vrot.slane %v3003, 4
      %v3005 = vrot.slane %v2138, 5
      %v3006 = vsel %vm1279, %v3004, %v3005
      %v3007 = vrot.slane %v3005, 4
      %v3008 = vrot.slane %v2139, 5
      %v3009 = vsel %vm1279, %v3007, %v3008
      %v3010 = vrot.slane %v2868, 5
      %v3011 = vrot.slane %v3010, 4
      %v3012 = vrot.slane %v2141, 5
      %v3013 = vsel %vm1279, %v3011, %v3012
      %v3014 = vrot.slane %v3012, 4
      %v3015 = vrot.slane %v2142, 5
      %v3016 = vsel %vm1279, %v3014, %v3015
      %v3017 = vrot.slane %v2869, 5
      %v3018 = vrot.slane %v3017, 4
      %v3019 = vrot.slane %v2144, 5
      %v3020 = vsel %vm1279, %v3018, %v3019
      %v3021 = vrot.slane %v3019, 4
      %v3022 = vrot.slane %v2145, 5
      %v3023 = vsel %vm1279, %v3021, %v3022
      %v3024 = vrot.slane %v2870, 5
      %v3025 = vrot.slane %v3024, 4
      %v3026 = vrot.slane %v2147, 5
      %v3027 = vsel %vm1279, %v3025, %v3026
      %v3028 = vrot.slane %v3026, 4
      %v3029 = vrot.slane %v2148, 5
      %v3030 = vsel %vm1279, %v3028, %v3029
      %s3031 = scalar_lea.vmem %s1, 320
      %v3032 = vld [vmem:[%s3031] sm:$0xf]
      %v3033 = vld [vmem:[%s3031 + $0x4] sm:$0xf]
      %v3034 = vld [vmem:[%s3031 + $0x8] sm:$0xf]
      %v3035 = vld [vmem:[%s3031 + $0xc] sm:$0xf]
      %v3036 = vld [vmem:[%s3031 + $0x10] sm:$0xf]
      %v3037 = vld [vmem:[%s3031 + $0x14] sm:$0xf]
      %v3038 = vld [vmem:[%s3031 + $0x18] sm:$0xf]
      %v3039 = vld [vmem:[%s3031 + $0x1c] sm:$0xf]
      %v3040 = vld [vmem:[%s3031 + $0x20] sm:$0xf]
      %v3041 = vld [vmem:[%s3031 + $0x24] sm:$0xf]
      %v3042 = vld [vmem:[%s3031 + $0x28] sm:$0xf]
      %v3043 = vld [vmem:[%s3031 + $0x2c] sm:$0xf]
      %v3044 = vld [vmem:[%s3031 + $0x30] sm:$0xf]
      %v3045 = vld [vmem:[%s3031 + $0x34] sm:$0xf]
      %v3046 = vld [vmem:[%s3031 + $0x38] sm:$0xf]
      %v3047 = vld [vmem:[%s3031 + $0x3c] sm:$0xf]
      %v3048 = vunpack.c.l.b16 %v2922
      %v3049 = vunpack.c.l.b16 %v2925
      %v3050 = vunpack.c.l.b16 %v2929
      %v3051 = vunpack.c.l.b16 %v2932
      %v3052 = vunpack.c.l.b16 %v2936
      %v3053 = vunpack.c.l.b16 %v2939
      %v3054 = vunpack.c.l.b16 %v2943
      %v3055 = vunpack.c.l.b16 %v2946
      %v3056 = vunpack.c.l.b16 %v2950
      %v3057 = vunpack.c.l.b16 %v2953
      %v3058 = vunpack.c.l.b16 %v2957
      %v3059 = vunpack.c.l.b16 %v2960
      %v3060 = vunpack.c.l.b16 %v2964
      %v3061 = vunpack.c.l.b16 %v2967
      %v3062 = vunpack.c.l.b16 %v2971
      %v3063 = vunpack.c.l.b16 %v2974
      %v3064 = vunpack.c.l.b16 %v2978
      %v3065 = vunpack.c.l.b16 %v2981
      %v3066 = vunpack.c.l.b16 %v2985
      %v3067 = vunpack.c.l.b16 %v2988
      %v3068 = vunpack.c.l.b16 %v2992
      %v3069 = vunpack.c.l.b16 %v2995
      %v3070 = vunpack.c.l.b16 %v2999
      %v3071 = vunpack.c.l.b16 %v3002
      %v3072 = vunpack.c.l.b16 %v3006
      %v3073 = vunpack.c.l.b16 %v3009
      %v3074 = vunpack.c.l.b16 %v3013
      %v3075 = vunpack.c.l.b16 %v3016
      %v3076 = vunpack.c.l.b16 %v3020
      %v3077 = vunpack.c.l.b16 %v3023
      %v3078 = vunpack.c.l.b16 %v3027
      %v3079 = vunpack.c.l.b16 %v3030
      %v3080 = vpack.c.b16 %v3049, %v3048
      %v3081 = vpack.c.b16 %v3051, %v3050
      %v3082 = vpack.c.b16 %v3053, %v3052
      %v3083 = vpack.c.b16 %v3055, %v3054
      %v3084 = vpack.c.b16 %v3057, %v3056
      %v3085 = vpack.c.b16 %v3059, %v3058
      %v3086 = vpack.c.b16 %v3061, %v3060
      %v3087 = vpack.c.b16 %v3063, %v3062
      %v3088 = vpack.c.b16 %v3065, %v3064
      %v3089 = vpack.c.b16 %v3067, %v3066
      %v3090 = vpack.c.b16 %v3069, %v3068
      %v3091 = vpack.c.b16 %v3071, %v3070
      %v3092 = vpack.c.b16 %v3073, %v3072
      %v3093 = vpack.c.b16 %v3075, %v3074
      %v3094 = vpack.c.b16 %v3077, %v3076
      %v3095 = vpack.c.b16 %v3079, %v3078
      %v3128 = vunpack.c.l.b16 %v3032
      %v3129 = vunpack.c.l.b16 %v3033
      %v3130 = vunpack.c.l.b16 %v3034
      %v3131 = vunpack.c.l.b16 %v3035
      %v3132 = vunpack.c.l.b16 %v3036
      %v3133 = vunpack.c.l.b16 %v3037
      %v3134 = vunpack.c.l.b16 %v3038
      %v3135 = vunpack.c.l.b16 %v3039
      %v3136 = vunpack.c.l.b16 %v3040
      %v3137 = vunpack.c.l.b16 %v3041
      %v3138 = vunpack.c.l.b16 %v3042
      %v3139 = vunpack.c.l.b16 %v3043
      %v3140 = vunpack.c.l.b16 %v3044
      %v3141 = vunpack.c.l.b16 %v3045
      %v3142 = vunpack.c.l.b16 %v3046
      %v3143 = vunpack.c.l.b16 %v3047
      %v3144 = vpack.c.b16 %v3129, %v3128
      %v3145 = vpack.c.b16 %v3131, %v3130
      %v3146 = vpack.c.b16 %v3133, %v3132
      %v3147 = vpack.c.b16 %v3135, %v3134
      %v3148 = vpack.c.b16 %v3137, %v3136
      %v3149 = vpack.c.b16 %v3139, %v3138
      %v3150 = vpack.c.b16 %v3141, %v3140
      %v3151 = vpack.c.b16 %v3143, %v3142
      %3160 = vmatprep.subr.bf16.mxu0 0
      %3161 = vmatpush1.bf16.msra.mxu0 %v3151
      %3162 = vmatprep.subr.bf16.mxu0 0
      %3163 = vmatpush1.bf16.msra.mxu0 %v3150
      %3164 = vmatprep.subr.bf16.mxu0 0
      %3165 = vmatpush1.bf16.msra.mxu0 %v3149
      %3166 = vmatprep.subr.bf16.mxu0 0
      %3167 = vmatpush1.bf16.msra.mxu0 %v3148
      %3168 = vmatprep.subr.bf16.mxu0 0
      %3169 = vmatpush1.bf16.msra.mxu0 %v3147
      %3170 = vmatprep.subr.bf16.mxu0 0
      %3171 = vmatpush1.bf16.msra.mxu0 %v3146
      %3172 = vmatprep.subr.bf16.mxu0 0
      %3173 = vmatpush1.bf16.msra.mxu0 %v3145
      %3174 = vmatprep.subr.bf16.mxu0 0
      %3175 = vmatpush1.bf16.msra.mxu0 %v3144
      %3176 = vmatprep.subr.bf16.mxu0 0
      %3177 = vmatpush2.bf16.msra.mxu0 0
      %3178 = vmatprep.subr.bf16.mxu0 0
      %3179 = vmatpush2.bf16.msra.mxu0 0
      %3180 = vmatprep.subr.bf16.mxu0 0
      %3181 = vmatpush2.bf16.msra.mxu0 0
      %3182 = vmatprep.subr.bf16.mxu0 0
      %3183 = vmatpush2.bf16.msra.mxu0 0
      %3184 = vmatprep.subr.bf16.mxu0 0
      %3185 = vmatpush2.bf16.msra.mxu0 0
      %3186 = vmatprep.subr.bf16.mxu0 0
      %3187 = vmatpush2.bf16.msra.mxu0 0
      %3188 = vmatprep.subr.bf16.mxu0 0
      %3189 = vmatpush2.bf16.msra.mxu0 0
      %3190 = vmatprep.subr.bf16.mxu0 0
      %3191 = vmatpush2.bf16.msra.mxu0 0
      %3192 = vmatprep.mubr.bf16.mxu0 0
      %3193 = vmatmul.mubr.bf16.gmra.mxu0 %v3080
      %v3194 = vpop.f32.mrf.mxu0
      %v3195 = vadd.f32 0.0, %v3194
      %v3196 = vpop.f32.mrf.mxu0
      %v3197 = vpop.f32.mrf.mxu0
      %v3198 = vadd.f32 0.0, %v3197
      %v3199 = vpop.f32.mrf.mxu0
      %3200 = vmatprep.mubr.bf16.mxu0 0
      %3201 = vmatmul.mubr.bf16.gmra.mxu0 %v3081
      %v3202 = vpop.f32.mrf.mxu0
      %v3203 = vadd.f32 0.0, %v3202
      %v3204 = vpop.f32.mrf.mxu0
      %v3205 = vpop.f32.mrf.mxu0
      %v3206 = vadd.f32 0.0, %v3205
      %v3207 = vpop.f32.mrf.mxu0
      %3208 = vmatprep.mubr.bf16.mxu0 0
      %3209 = vmatmul.mubr.bf16.gmra.mxu0 %v3082
      %v3210 = vpop.f32.mrf.mxu0
      %v3211 = vadd.f32 0.0, %v3210
      %v3212 = vpop.f32.mrf.mxu0
      %v3213 = vpop.f32.mrf.mxu0
      %v3214 = vadd.f32 0.0, %v3213
      %v3215 = vpop.f32.mrf.mxu0
      %3216 = vmatprep.mubr.bf16.mxu0 0
      %3217 = vmatmul.mubr.bf16.gmra.mxu0 %v3083
      %v3218 = vpop.f32.mrf.mxu0
      %v3219 = vadd.f32 0.0, %v3218
      %v3220 = vpop.f32.mrf.mxu0
      %v3221 = vpop.f32.mrf.mxu0
      %v3222 = vadd.f32 0.0, %v3221
      %v3223 = vpop.f32.mrf.mxu0
      %3224 = vmatprep.mubr.bf16.mxu0 0
      %3225 = vmatmul.mubr.bf16.gmra.mxu0 %v3084
      %v3226 = vpop.f32.mrf.mxu0
      %v3227 = vadd.f32 0.0, %v3226
      %v3228 = vpop.f32.mrf.mxu0
      %v3229 = vpop.f32.mrf.mxu0
      %v3230 = vadd.f32 0.0, %v3229
      %v3231 = vpop.f32.mrf.mxu0
      %3232 = vmatprep.mubr.bf16.mxu0 0
      %3233 = vmatmul.mubr.bf16.gmra.mxu0 %v3085
      %v3234 = vpop.f32.mrf.mxu0
      %v3235 = vadd.f32 0.0, %v3234
      %v3236 = vpop.f32.mrf.mxu0
      %v3237 = vpop.f32.mrf.mxu0
      %v3238 = vadd.f32 0.0, %v3237
      %v3239 = vpop.f32.mrf.mxu0
      %3240 = vmatprep.mubr.bf16.mxu0 0
      %3241 = vmatmul.mubr.bf16.gmra.mxu0 %v3086
      %v3242 = vpop.f32.mrf.mxu0
      %v3243 = vadd.f32 0.0, %v3242
      %v3244 = vpop.f32.mrf.mxu0
      %v3245 = vpop.f32.mrf.mxu0
      %v3246 = vadd.f32 0.0, %v3245
      %v3247 = vpop.f32.mrf.mxu0
      %3248 = vmatprep.mubr.bf16.mxu0 0
      %3249 = vmatmul.mubr.bf16.gmra.mxu0 %v3087
      %v3250 = vpop.f32.mrf.mxu0
      %v3251 = vadd.f32 0.0, %v3250
      %v3252 = vpop.f32.mrf.mxu0
      %v3253 = vpop.f32.mrf.mxu0
      %v3254 = vadd.f32 0.0, %v3253
      %v3255 = vpop.f32.mrf.mxu0
      %3256 = vmatprep.mubr.bf16.mxu0 0
      %3257 = vmatmul.mubr.bf16.gmra.mxu0 %v3088
      %v3258 = vpop.f32.mrf.mxu0
      %v3259 = vadd.f32 0.0, %v3258
      %v3260 = vpop.f32.mrf.mxu0
      %v3261 = vpop.f32.mrf.mxu0
      %v3262 = vadd.f32 0.0, %v3261
      %v3263 = vpop.f32.mrf.mxu0
      %3264 = vmatprep.mubr.bf16.mxu0 0
      %3265 = vmatmul.mubr.bf16.gmra.mxu0 %v3089
      %v3266 = vpop.f32.mrf.mxu0
      %v3267 = vadd.f32 0.0, %v3266
      %v3268 = vpop.f32.mrf.mxu0
      %v3269 = vpop.f32.mrf.mxu0
      %v3270 = vadd.f32 0.0, %v3269
      %v3271 = vpop.f32.mrf.mxu0
      %3272 = vmatprep.mubr.bf16.mxu0 0
      %3273 = vmatmul.mubr.bf16.gmra.mxu0 %v3090
      %v3274 = vpop.f32.mrf.mxu0
      %v3275 = vadd.f32 0.0, %v3274
      %v3276 = vpop.f32.mrf.mxu0
      %v3277 = vpop.f32.mrf.mxu0
      %v3278 = vadd.f32 0.0, %v3277
      %v3279 = vpop.f32.mrf.mxu0
      %3280 = vmatprep.mubr.bf16.mxu0 0
      %3281 = vmatmul.mubr.bf16.gmra.mxu0 %v3091
      %v3282 = vpop.f32.mrf.mxu0
      %v3283 = vadd.f32 0.0, %v3282
      %v3284 = vpop.f32.mrf.mxu0
      %v3285 = vpop.f32.mrf.mxu0
      %v3286 = vadd.f32 0.0, %v3285
      %v3287 = vpop.f32.mrf.mxu0
      %3288 = vmatprep.mubr.bf16.mxu0 0
      %3289 = vmatmul.mubr.bf16.gmra.mxu0 %v3092
      %v3290 = vpop.f32.mrf.mxu0
      %v3291 = vadd.f32 0.0, %v3290
      %v3292 = vpop.f32.mrf.mxu0
      %v3293 = vpop.f32.mrf.mxu0
      %v3294 = vadd.f32 0.0, %v3293
      %v3295 = vpop.f32.mrf.mxu0
      %3296 = vmatprep.mubr.bf16.mxu0 0
      %3297 = vmatmul.mubr.bf16.gmra.mxu0 %v3093
      %v3298 = vpop.f32.mrf.mxu0
      %v3299 = vadd.f32 0.0, %v3298
      %v3300 = vpop.f32.mrf.mxu0
      %v3301 = vpop.f32.mrf.mxu0
      %v3302 = vadd.f32 0.0, %v3301
      %v3303 = vpop.f32.mrf.mxu0
      %3304 = vmatprep.mubr.bf16.mxu0 0
      %3305 = vmatmul.mubr.bf16.gmra.mxu0 %v3094
      %v3306 = vpop.f32.mrf.mxu0
      %v3307 = vadd.f32 0.0, %v3306
      %v3308 = vpop.f32.mrf.mxu0
      %v3309 = vpop.f32.mrf.mxu0
      %v3310 = vadd.f32 0.0, %v3309
      %v3311 = vpop.f32.mrf.mxu0
      %3312 = vmatprep.mubr.bf16.mxu0 0
      %3313 = vmatmul.mubr.bf16.gmra.mxu0 %v3095
      %v3314 = vpop.f32.mrf.mxu0
      %v3315 = vadd.f32 0.0, %v3314
      %v3316 = vpop.f32.mrf.mxu0
      %v3317 = vpop.f32.mrf.mxu0
      %v3318 = vadd.f32 0.0, %v3317
      %v3319 = vpop.f32.mrf.mxu0
      %3320 = vdwg.mxu0
      %v3321 = vadd.f32 %v2823, %v3195
      %v3322 = vadd.f32 %v2824, %v3198
      %v3323 = vadd.f32 %v2825, %v3203
      %v3324 = vadd.f32 %v2826, %v3206
      %v3325 = vadd.f32 %v2827, %v3211
      %v3326 = vadd.f32 %v2828, %v3214
      %v3327 = vadd.f32 %v2829, %v3219
      %v3328 = vadd.f32 %v2830, %v3222
      %v3329 = vadd.f32 %v2831, %v3227
      %v3330 = vadd.f32 %v2832, %v3230
      %v3331 = vadd.f32 %v2833, %v3235
      %v3332 = vadd.f32 %v2834, %v3238
      %v3333 = vadd.f32 %v2835, %v3243
      %v3334 = vadd.f32 %v2836, %v3246
      %v3335 = vadd.f32 %v2837, %v3251
      %v3336 = vadd.f32 %v2838, %v3254
      %v3337 = vadd.f32 %v2839, %v3259
      %v3338 = vadd.f32 %v2840, %v3262
      %v3339 = vadd.f32 %v2841, %v3267
      %v3340 = vadd.f32 %v2842, %v3270
      %v3341 = vadd.f32 %v2843, %v3275
      %v3342 = vadd.f32 %v2844, %v3278
      %v3343 = vadd.f32 %v2845, %v3283
      %v3344 = vadd.f32 %v2846, %v3286
      %v3345 = vadd.f32 %v2847, %v3291
      %v3346 = vadd.f32 %v2848, %v3294
      %v3347 = vadd.f32 %v2849, %v3299
      %v3348 = vadd.f32 %v2850, %v3302
      %v3349 = vadd.f32 %v2851, %v3307
      %v3350 = vadd.f32 %v2852, %v3310
      %v3351 = vadd.f32 %v2853, %v3315
      %v3352 = vadd.f32 %v2854, %v3318
      %s3353 = scalar_lea.vmem %s172, 24
      %v3354 = vld [vmem:[%s3353] sm:$0xf]
      %v3355 = vld [vmem:[%s3353 + $0x4] sm:$0xf]
      %v3356 = vld [vmem:[%s3353 + $0xc] sm:$0xf]
      %v3357 = vld [vmem:[%s3353 + $0x10] sm:$0xf]
      %v3358 = vld [vmem:[%s3353 + $0x18] sm:$0xf]
      %v3359 = vld [vmem:[%s3353 + $0x1c] sm:$0xf]
      %v3360 = vld [vmem:[%s3353 + $0x24] sm:$0xf]
      %v3361 = vld [vmem:[%s3353 + $0x28] sm:$0xf]
      %v3362 = vld [vmem:[%s3353 + $0x30] sm:$0xf]
      %v3363 = vld [vmem:[%s3353 + $0x34] sm:$0xf]
      %v3364 = vld [vmem:[%s3353 + $0x3c] sm:$0xf]
      %v3365 = vld [vmem:[%s3353 + $0x40] sm:$0xf]
      %v3366 = vld [vmem:[%s3353 + $0x48] sm:$0xf]
      %v3367 = vld [vmem:[%s3353 + $0x4c] sm:$0xf]
      %v3368 = vld [vmem:[%s3353 + $0x54] sm:$0xf]
      %v3369 = vld [vmem:[%s3353 + $0x58] sm:$0xf]
      %v3370 = vld [vmem:[%s3353 + $0x60] sm:$0xf]
      %v3371 = vld [vmem:[%s3353 + $0x64] sm:$0xf]
      %v3372 = vld [vmem:[%s3353 + $0x6c] sm:$0xf]
      %v3373 = vld [vmem:[%s3353 + $0x70] sm:$0xf]
      %v3374 = vld [vmem:[%s3353 + $0x78] sm:$0xf]
      %v3375 = vld [vmem:[%s3353 + $0x7c] sm:$0xf]
      %v3376 = vld [vmem:[%s3353 + $0x84] sm:$0xf]
      %v3377 = vld [vmem:[%s3353 + $0x88] sm:$0xf]
      %v3378 = vld [vmem:[%s3353 + $0x90] sm:$0xf]
      %v3379 = vld [vmem:[%s3353 + $0x94] sm:$0xf]
      %v3380 = vld [vmem:[%s3353 + $0x9c] sm:$0xf]
      %v3381 = vld [vmem:[%s3353 + $0xa0] sm:$0xf]
      %v3382 = vld [vmem:[%s3353 + $0xa8] sm:$0xf]
      %v3383 = vld [vmem:[%s3353 + $0xac] sm:$0xf]
      %v3384 = vld [vmem:[%s3353 + $0xb4] sm:$0xf]
      %v3385 = vld [vmem:[%s3353 + $0xb8] sm:$0xf]
      %s3386 = scalar_lea.vmem %s1, 384
      %v3387 = vld [vmem:[%s3386] sm:$0xf]
      %v3388 = vld [vmem:[%s3386 + $0x4] sm:$0xf]
      %v3389 = vld [vmem:[%s3386 + $0x8] sm:$0xf]
      %v3390 = vld [vmem:[%s3386 + $0xc] sm:$0xf]
      %v3391 = vld [vmem:[%s3386 + $0x10] sm:$0xf]
      %v3392 = vld [vmem:[%s3386 + $0x14] sm:$0xf]
      %v3393 = vld [vmem:[%s3386 + $0x18] sm:$0xf]
      %v3394 = vld [vmem:[%s3386 + $0x1c] sm:$0xf]
      %v3395 = vld [vmem:[%s3386 + $0x20] sm:$0xf]
      %v3396 = vld [vmem:[%s3386 + $0x24] sm:$0xf]
      %v3397 = vld [vmem:[%s3386 + $0x28] sm:$0xf]
      %v3398 = vld [vmem:[%s3386 + $0x2c] sm:$0xf]
      %v3399 = vld [vmem:[%s3386 + $0x30] sm:$0xf]
      %v3400 = vld [vmem:[%s3386 + $0x34] sm:$0xf]
      %v3401 = vld [vmem:[%s3386 + $0x38] sm:$0xf]
      %v3402 = vld [vmem:[%s3386 + $0x3c] sm:$0xf]
      %v3435 = vunpack.c.l.b16 %v3354
      %v3436 = vunpack.c.l.b16 %v3355
      %v3437 = vunpack.c.l.b16 %v3356
      %v3438 = vunpack.c.l.b16 %v3357
      %v3439 = vunpack.c.l.b16 %v3358
      %v3440 = vunpack.c.l.b16 %v3359
      %v3441 = vunpack.c.l.b16 %v3360
      %v3442 = vunpack.c.l.b16 %v3361
      %v3443 = vunpack.c.l.b16 %v3362
      %v3444 = vunpack.c.l.b16 %v3363
      %v3445 = vunpack.c.l.b16 %v3364
      %v3446 = vunpack.c.l.b16 %v3365
      %v3447 = vunpack.c.l.b16 %v3366
      %v3448 = vunpack.c.l.b16 %v3367
      %v3449 = vunpack.c.l.b16 %v3368
      %v3450 = vunpack.c.l.b16 %v3369
      %v3451 = vunpack.c.l.b16 %v3370
      %v3452 = vunpack.c.l.b16 %v3371
      %v3453 = vunpack.c.l.b16 %v3372
      %v3454 = vunpack.c.l.b16 %v3373
      %v3455 = vunpack.c.l.b16 %v3374
      %v3456 = vunpack.c.l.b16 %v3375
      %v3457 = vunpack.c.l.b16 %v3376
      %v3458 = vunpack.c.l.b16 %v3377
      %v3459 = vunpack.c.l.b16 %v3378
      %v3460 = vunpack.c.l.b16 %v3379
      %v3461 = vunpack.c.l.b16 %v3380
      %v3462 = vunpack.c.l.b16 %v3381
      %v3463 = vunpack.c.l.b16 %v3382
      %v3464 = vunpack.c.l.b16 %v3383
      %v3465 = vunpack.c.l.b16 %v3384
      %v3466 = vunpack.c.l.b16 %v3385
      %v3467 = vpack.c.b16 %v3436, %v3435
      %v3468 = vpack.c.b16 %v3438, %v3437
      %v3469 = vpack.c.b16 %v3440, %v3439
      %v3470 = vpack.c.b16 %v3442, %v3441
      %v3471 = vpack.c.b16 %v3444, %v3443
      %v3472 = vpack.c.b16 %v3446, %v3445
      %v3473 = vpack.c.b16 %v3448, %v3447
      %v3474 = vpack.c.b16 %v3450, %v3449
      %v3475 = vpack.c.b16 %v3452, %v3451
      %v3476 = vpack.c.b16 %v3454, %v3453
      %v3477 = vpack.c.b16 %v3456, %v3455
      %v3478 = vpack.c.b16 %v3458, %v3457
      %v3479 = vpack.c.b16 %v3460, %v3459
      %v3480 = vpack.c.b16 %v3462, %v3461
      %v3481 = vpack.c.b16 %v3464, %v3463
      %v3482 = vpack.c.b16 %v3466, %v3465
      %v3515 = vunpack.c.l.b16 %v3387
      %v3516 = vunpack.c.l.b16 %v3388
      %v3517 = vunpack.c.l.b16 %v3389
      %v3518 = vunpack.c.l.b16 %v3390
      %v3519 = vunpack.c.l.b16 %v3391
      %v3520 = vunpack.c.l.b16 %v3392
      %v3521 = vunpack.c.l.b16 %v3393
      %v3522 = vunpack.c.l.b16 %v3394
      %v3523 = vunpack.c.l.b16 %v3395
      %v3524 = vunpack.c.l.b16 %v3396
      %v3525 = vunpack.c.l.b16 %v3397
      %v3526 = vunpack.c.l.b16 %v3398
      %v3527 = vunpack.c.l.b16 %v3399
      %v3528 = vunpack.c.l.b16 %v3400
      %v3529 = vunpack.c.l.b16 %v3401
      %v3530 = vunpack.c.l.b16 %v3402
      %v3531 = vpack.c.b16 %v3516, %v3515
      %v3532 = vpack.c.b16 %v3518, %v3517
      %v3533 = vpack.c.b16 %v3520, %v3519
      %v3534 = vpack.c.b16 %v3522, %v3521
      %v3535 = vpack.c.b16 %v3524, %v3523
      %v3536 = vpack.c.b16 %v3526, %v3525
      %v3537 = vpack.c.b16 %v3528, %v3527
      %v3538 = vpack.c.b16 %v3530, %v3529
      %3547 = vmatprep.subr.bf16.mxu0 0
      %3548 = vmatpush1.bf16.msra.mxu0 %v3538
      %3549 = vmatprep.subr.bf16.mxu0 0
      %3550 = vmatpush1.bf16.msra.mxu0 %v3537
      %3551 = vmatprep.subr.bf16.mxu0 0
      %3552 = vmatpush1.bf16.msra.mxu0 %v3536
      %3553 = vmatprep.subr.bf16.mxu0 0
      %3554 = vmatpush1.bf16.msra.mxu0 %v3535
      %3555 = vmatprep.subr.bf16.mxu0 0
      %3556 = vmatpush1.bf16.msra.mxu0 %v3534
      %3557 = vmatprep.subr.bf16.mxu0 0
      %3558 = vmatpush1.bf16.msra.mxu0 %v3533
      %3559 = vmatprep.subr.bf16.mxu0 0
      %3560 = vmatpush1.bf16.msra.mxu0 %v3532
      %3561 = vmatprep.subr.bf16.mxu0 0
      %3562 = vmatpush1.bf16.msra.mxu0 %v3531
      %3563 = vmatprep.subr.bf16.mxu0 0
      %3564 = vmatpush2.bf16.msra.mxu0 0
      %3565 = vmatprep.subr.bf16.mxu0 0
      %3566 = vmatpush2.bf16.msra.mxu0 0
      %3567 = vmatprep.subr.bf16.mxu0 0
      %3568 = vmatpush2.bf16.msra.mxu0 0
      %3569 = vmatprep.subr.bf16.mxu0 0
      %3570 = vmatpush2.bf16.msra.mxu0 0
      %3571 = vmatprep.subr.bf16.mxu0 0
      %3572 = vmatpush2.bf16.msra.mxu0 0
      %3573 = vmatprep.subr.bf16.mxu0 0
      %3574 = vmatpush2.bf16.msra.mxu0 0
      %3575 = vmatprep.subr.bf16.mxu0 0
      %3576 = vmatpush2.bf16.msra.mxu0 0
      %3577 = vmatprep.subr.bf16.mxu0 0
      %3578 = vmatpush2.bf16.msra.mxu0 0
      %3579 = vmatprep.mubr.bf16.mxu0 0
      %3580 = vmatmul.mubr.bf16.gmra.mxu0 %v3467
      %v3581 = vpop.f32.mrf.mxu0
      %v3582 = vadd.f32 0.0, %v3581
      %v3583 = vpop.f32.mrf.mxu0
      %v3584 = vpop.f32.mrf.mxu0
      %v3585 = vadd.f32 0.0, %v3584
      %v3586 = vpop.f32.mrf.mxu0
      %3587 = vmatprep.mubr.bf16.mxu0 0
      %3588 = vmatmul.mubr.bf16.gmra.mxu0 %v3468
      %v3589 = vpop.f32.mrf.mxu0
      %v3590 = vadd.f32 0.0, %v3589
      %v3591 = vpop.f32.mrf.mxu0
      %v3592 = vpop.f32.mrf.mxu0
      %v3593 = vadd.f32 0.0, %v3592
      %v3594 = vpop.f32.mrf.mxu0
      %3595 = vmatprep.mubr.bf16.mxu0 0
      %3596 = vmatmul.mubr.bf16.gmra.mxu0 %v3469
      %v3597 = vpop.f32.mrf.mxu0
      %v3598 = vadd.f32 0.0, %v3597
      %v3599 = vpop.f32.mrf.mxu0
      %v3600 = vpop.f32.mrf.mxu0
      %v3601 = vadd.f32 0.0, %v3600
      %v3602 = vpop.f32.mrf.mxu0
      %3603 = vmatprep.mubr.bf16.mxu0 0
      %3604 = vmatmul.mubr.bf16.gmra.mxu0 %v3470
      %v3605 = vpop.f32.mrf.mxu0
      %v3606 = vadd.f32 0.0, %v3605
      %v3607 = vpop.f32.mrf.mxu0
      %v3608 = vpop.f32.mrf.mxu0
      %v3609 = vadd.f32 0.0, %v3608
      %v3610 = vpop.f32.mrf.mxu0
      %3611 = vmatprep.mubr.bf16.mxu0 0
      %3612 = vmatmul.mubr.bf16.gmra.mxu0 %v3471
      %v3613 = vpop.f32.mrf.mxu0
      %v3614 = vadd.f32 0.0, %v3613
      %v3615 = vpop.f32.mrf.mxu0
      %v3616 = vpop.f32.mrf.mxu0
      %v3617 = vadd.f32 0.0, %v3616
      %v3618 = vpop.f32.mrf.mxu0
      %3619 = vmatprep.mubr.bf16.mxu0 0
      %3620 = vmatmul.mubr.bf16.gmra.mxu0 %v3472
      %v3621 = vpop.f32.mrf.mxu0
      %v3622 = vadd.f32 0.0, %v3621
      %v3623 = vpop.f32.mrf.mxu0
      %v3624 = vpop.f32.mrf.mxu0
      %v3625 = vadd.f32 0.0, %v3624
      %v3626 = vpop.f32.mrf.mxu0
      %3627 = vmatprep.mubr.bf16.mxu0 0
      %3628 = vmatmul.mubr.bf16.gmra.mxu0 %v3473
      %v3629 = vpop.f32.mrf.mxu0
      %v3630 = vadd.f32 0.0, %v3629
      %v3631 = vpop.f32.mrf.mxu0
      %v3632 = vpop.f32.mrf.mxu0
      %v3633 = vadd.f32 0.0, %v3632
      %v3634 = vpop.f32.mrf.mxu0
      %3635 = vmatprep.mubr.bf16.mxu0 0
      %3636 = vmatmul.mubr.bf16.gmra.mxu0 %v3474
      %v3637 = vpop.f32.mrf.mxu0
      %v3638 = vadd.f32 0.0, %v3637
      %v3639 = vpop.f32.mrf.mxu0
      %v3640 = vpop.f32.mrf.mxu0
      %v3641 = vadd.f32 0.0, %v3640
      %v3642 = vpop.f32.mrf.mxu0
      %3643 = vmatprep.mubr.bf16.mxu0 0
      %3644 = vmatmul.mubr.bf16.gmra.mxu0 %v3475
      %v3645 = vpop.f32.mrf.mxu0
      %v3646 = vadd.f32 0.0, %v3645
      %v3647 = vpop.f32.mrf.mxu0
      %v3648 = vpop.f32.mrf.mxu0
      %v3649 = vadd.f32 0.0, %v3648
      %v3650 = vpop.f32.mrf.mxu0
      %3651 = vmatprep.mubr.bf16.mxu0 0
      %3652 = vmatmul.mubr.bf16.gmra.mxu0 %v3476
      %v3653 = vpop.f32.mrf.mxu0
      %v3654 = vadd.f32 0.0, %v3653
      %v3655 = vpop.f32.mrf.mxu0
      %v3656 = vpop.f32.mrf.mxu0
      %v3657 = vadd.f32 0.0, %v3656
      %v3658 = vpop.f32.mrf.mxu0
      %3659 = vmatprep.mubr.bf16.mxu0 0
      %3660 = vmatmul.mubr.bf16.gmra.mxu0 %v3477
      %v3661 = vpop.f32.mrf.mxu0
      %v3662 = vadd.f32 0.0, %v3661
      %v3663 = vpop.f32.mrf.mxu0
      %v3664 = vpop.f32.mrf.mxu0
      %v3665 = vadd.f32 0.0, %v3664
      %v3666 = vpop.f32.mrf.mxu0
      %3667 = vmatprep.mubr.bf16.mxu0 0
      %3668 = vmatmul.mubr.bf16.gmra.mxu0 %v3478
      %v3669 = vpop.f32.mrf.mxu0
      %v3670 = vadd.f32 0.0, %v3669
      %v3671 = vpop.f32.mrf.mxu0
      %v3672 = vpop.f32.mrf.mxu0
      %v3673 = vadd.f32 0.0, %v3672
      %v3674 = vpop.f32.mrf.mxu0
      %3675 = vmatprep.mubr.bf16.mxu0 0
      %3676 = vmatmul.mubr.bf16.gmra.mxu0 %v3479
      %v3677 = vpop.f32.mrf.mxu0
      %v3678 = vadd.f32 0.0, %v3677
      %v3679 = vpop.f32.mrf.mxu0
      %v3680 = vpop.f32.mrf.mxu0
      %v3681 = vadd.f32 0.0, %v3680
      %v3682 = vpop.f32.mrf.mxu0
      %3683 = vmatprep.mubr.bf16.mxu0 0
      %3684 = vmatmul.mubr.bf16.gmra.mxu0 %v3480
      %v3685 = vpop.f32.mrf.mxu0
      %v3686 = vadd.f32 0.0, %v3685
      %v3687 = vpop.f32.mrf.mxu0
      %v3688 = vpop.f32.mrf.mxu0
      %v3689 = vadd.f32 0.0, %v3688
      %v3690 = vpop.f32.mrf.mxu0
      %3691 = vmatprep.mubr.bf16.mxu0 0
      %3692 = vmatmul.mubr.bf16.gmra.mxu0 %v3481
      %v3693 = vpop.f32.mrf.mxu0
      %v3694 = vadd.f32 0.0, %v3693
      %v3695 = vpop.f32.mrf.mxu0
      %v3696 = vpop.f32.mrf.mxu0
      %v3697 = vadd.f32 0.0, %v3696
      %v3698 = vpop.f32.mrf.mxu0
      %3699 = vmatprep.mubr.bf16.mxu0 0
      %3700 = vmatmul.mubr.bf16.gmra.mxu0 %v3482
      %v3701 = vpop.f32.mrf.mxu0
      %v3702 = vadd.f32 0.0, %v3701
      %v3703 = vpop.f32.mrf.mxu0
      %v3704 = vpop.f32.mrf.mxu0
      %v3705 = vadd.f32 0.0, %v3704
      %v3706 = vpop.f32.mrf.mxu0
      %3707 = vdwg.mxu0
      %v3708 = vadd.f32 %v3321, %v3582
      %v3709 = vadd.f32 %v3322, %v3585
      %v3710 = vadd.f32 %v3323, %v3590
      %v3711 = vadd.f32 %v3324, %v3593
      %v3712 = vadd.f32 %v3325, %v3598
      %v3713 = vadd.f32 %v3326, %v3601
      %v3714 = vadd.f32 %v3327, %v3606
      %v3715 = vadd.f32 %v3328, %v3609
      %v3716 = vadd.f32 %v3329, %v3614
      %v3717 = vadd.f32 %v3330, %v3617
      %v3718 = vadd.f32 %v3331, %v3622
      %v3719 = vadd.f32 %v3332, %v3625
      %v3720 = vadd.f32 %v3333, %v3630
      %v3721 = vadd.f32 %v3334, %v3633
      %v3722 = vadd.f32 %v3335, %v3638
      %v3723 = vadd.f32 %v3336, %v3641
      %v3724 = vadd.f32 %v3337, %v3646
      %v3725 = vadd.f32 %v3338, %v3649
      %v3726 = vadd.f32 %v3339, %v3654
      %v3727 = vadd.f32 %v3340, %v3657
      %v3728 = vadd.f32 %v3341, %v3662
      %v3729 = vadd.f32 %v3342, %v3665
      %v3730 = vadd.f32 %v3343, %v3670
      %v3731 = vadd.f32 %v3344, %v3673
      %v3732 = vadd.f32 %v3345, %v3678
      %v3733 = vadd.f32 %v3346, %v3681
      %v3734 = vadd.f32 %v3347, %v3686
      %v3735 = vadd.f32 %v3348, %v3689
      %v3736 = vadd.f32 %v3349, %v3694
      %v3737 = vadd.f32 %v3350, %v3697
      %v3738 = vadd.f32 %v3351, %v3702
      %v3739 = vadd.f32 %v3352, %v3705
      %v3740 = vld [vmem:[%s3353] sm:$0xf]
      %v3741 = vld [vmem:[%s3353 + $0x4] sm:$0xf]
      %v3742 = vld [vmem:[%s3353 + $0x8] sm:$0x1]
      %v3743 = vld [vmem:[%s3353 + $0xc] sm:$0xf]
      %v3744 = vld [vmem:[%s3353 + $0x10] sm:$0xf]
      %v3745 = vld [vmem:[%s3353 + $0x14] sm:$0x1]
      %v3746 = vld [vmem:[%s3353 + $0x18] sm:$0xf]
      %v3747 = vld [vmem:[%s3353 + $0x1c] sm:$0xf]
      %v3748 = vld [vmem:[%s3353 + $0x20] sm:$0x1]
      %v3749 = vld [vmem:[%s3353 + $0x24] sm:$0xf]
      %v3750 = vld [vmem:[%s3353 + $0x28] sm:$0xf]
      %v3751 = vld [vmem:[%s3353 + $0x2c] sm:$0x1]
      %v3752 = vld [vmem:[%s3353 + $0x30] sm:$0xf]
      %v3753 = vld [vmem:[%s3353 + $0x34] sm:$0xf]
      %v3754 = vld [vmem:[%s3353 + $0x38] sm:$0x1]
      %v3755 = vld [vmem:[%s3353 + $0x3c] sm:$0xf]
      %v3756 = vld [vmem:[%s3353 + $0x40] sm:$0xf]
      %v3757 = vld [vmem:[%s3353 + $0x44] sm:$0x1]
      %v3758 = vld [vmem:[%s3353 + $0x48] sm:$0xf]
      %v3759 = vld [vmem:[%s3353 + $0x4c] sm:$0xf]
      %v3760 = vld [vmem:[%s3353 + $0x50] sm:$0x1]
      %v3761 = vld [vmem:[%s3353 + $0x54] sm:$0xf]
      %v3762 = vld [vmem:[%s3353 + $0x58] sm:$0xf]
      %v3763 = vld [vmem:[%s3353 + $0x5c] sm:$0x1]
      %v3764 = vld [vmem:[%s3353 + $0x60] sm:$0xf]
      %v3765 = vld [vmem:[%s3353 + $0x64] sm:$0xf]
      %v3766 = vld [vmem:[%s3353 + $0x68] sm:$0x1]
      %v3767 = vld [vmem:[%s3353 + $0x6c] sm:$0xf]
      %v3768 = vld [vmem:[%s3353 + $0x70] sm:$0xf]
      %v3769 = vld [vmem:[%s3353 + $0x74] sm:$0x1]
      %v3770 = vld [vmem:[%s3353 + $0x78] sm:$0xf]
      %v3771 = vld [vmem:[%s3353 + $0x7c] sm:$0xf]
      %v3772 = vld [vmem:[%s3353 + $0x80] sm:$0x1]
      %v3773 = vld [vmem:[%s3353 + $0x84] sm:$0xf]
      %v3774 = vld [vmem:[%s3353 + $0x88] sm:$0xf]
      %v3775 = vld [vmem:[%s3353 + $0x8c] sm:$0x1]
      %v3776 = vld [vmem:[%s3353 + $0x90] sm:$0xf]
      %v3777 = vld [vmem:[%s3353 + $0x94] sm:$0xf]
      %v3778 = vld [vmem:[%s3353 + $0x98] sm:$0x1]
      %v3779 = vld [vmem:[%s3353 + $0x9c] sm:$0xf]
      %v3780 = vld [vmem:[%s3353 + $0xa0] sm:$0xf]
      %v3781 = vld [vmem:[%s3353 + $0xa4] sm:$0x1]
      %v3782 = vld [vmem:[%s3353 + $0xa8] sm:$0xf]
      %v3783 = vld [vmem:[%s3353 + $0xac] sm:$0xf]
      %v3784 = vld [vmem:[%s3353 + $0xb0] sm:$0x1]
      %v3785 = vld [vmem:[%s3353 + $0xb4] sm:$0xf]
      %v3786 = vld [vmem:[%s3353 + $0xb8] sm:$0xf]
      %v3787 = vld [vmem:[%s3353 + $0xbc] sm:$0x1]
      %v3789 = vshrl.u32 %v3740, 16
      %v3791 = vrot.slane %v3789, 4
      %v3792 = vshll.u32 %v3740, 16
      %v3794 = vrot.slane %v3792, 5
      %v3795 = vor.u32 %v3791, %v3794
      %v3796 = vrot.slane %v3795, 4
      %v3798 = vshll.u32 %v3741, 16
      %v3800 = vrot.slane %v3798, 5
      %v3801 = vsel %vm249, %v3796, %v3800
      %v3802 = vshrl.u32 %v3741, 16
      %v3804 = vrot.slane %v3802, 4
      %v3805 = vor.u32 %v3804, %v3800
      %v3806 = vrot.slane %v3805, 4
      %v3808 = vshll.u32 %v3742, 16
      %v3810 = vrot.slane %v3808, 5
      %v3811 = vsel %vm249, %v3806, %v3810
      %v3813 = vshrl.u32 %v3743, 16
      %v3815 = vrot.slane %v3813, 4
      %v3816 = vshll.u32 %v3743, 16
      %v3818 = vrot.slane %v3816, 5
      %v3819 = vor.u32 %v3815, %v3818
      %v3820 = vrot.slane %v3819, 4
      %v3822 = vshll.u32 %v3744, 16
      %v3824 = vrot.slane %v3822, 5
      %v3825 = vsel %vm249, %v3820, %v3824
      %v3826 = vshrl.u32 %v3744, 16
      %v3828 = vrot.slane %v3826, 4
      %v3829 = vor.u32 %v3828, %v3824
      %v3830 = vrot.slane %v3829, 4
      %v3832 = vshll.u32 %v3745, 16
      %v3834 = vrot.slane %v3832, 5
      %v3835 = vsel %vm249, %v3830, %v3834
      %v3837 = vshrl.u32 %v3746, 16
      %v3839 = vrot.slane %v3837, 4
      %v3840 = vshll.u32 %v3746, 16
      %v3842 = vrot.slane %v3840, 5
      %v3843 = vor.u32 %v3839, %v3842
      %v3844 = vrot.slane %v3843, 4
      %v3846 = vshll.u32 %v3747, 16
      %v3848 = vrot.slane %v3846, 5
      %v3849 = vsel %vm249, %v3844, %v3848
      %v3850 = vshrl.u32 %v3747, 16
      %v3852 = vrot.slane %v3850, 4
      %v3853 = vor.u32 %v3852, %v3848
      %v3854 = vrot.slane %v3853, 4
      %v3856 = vshll.u32 %v3748, 16
      %v3858 = vrot.slane %v3856, 5
      %v3859 = vsel %vm249, %v3854, %v3858
      %v3861 = vshrl.u32 %v3749, 16
      %v3863 = vrot.slane %v3861, 4
      %v3864 = vshll.u32 %v3749, 16
      %v3866 = vrot.slane %v3864, 5
      %v3867 = vor.u32 %v3863, %v3866
      %v3868 = vrot.slane %v3867, 4
      %v3870 = vshll.u32 %v3750, 16
      %v3872 = vrot.slane %v3870, 5
      %v3873 = vsel %vm249, %v3868, %v3872
      %v3874 = vshrl.u32 %v3750, 16
      %v3876 = vrot.slane %v3874, 4
      %v3877 = vor.u32 %v3876, %v3872
      %v3878 = vrot.slane %v3877, 4
      %v3880 = vshll.u32 %v3751, 16
      %v3882 = vrot.slane %v3880, 5
      %v3883 = vsel %vm249, %v3878, %v3882
      %v3885 = vshrl.u32 %v3752, 16
      %v3887 = vrot.slane %v3885, 4
      %v3888 = vshll.u32 %v3752, 16
      %v3890 = vrot.slane %v3888, 5
      %v3891 = vor.u32 %v3887, %v3890
      %v3892 = vrot.slane %v3891, 4
      %v3894 = vshll.u32 %v3753, 16
      %v3896 = vrot.slane %v3894, 5
      %v3897 = vsel %vm249, %v3892, %v3896
      %v3898 = vshrl.u32 %v3753, 16
      %v3900 = vrot.slane %v3898, 4
      %v3901 = vor.u32 %v3900, %v3896
      %v3902 = vrot.slane %v3901, 4
      %v3904 = vshll.u32 %v3754, 16
      %v3906 = vrot.slane %v3904, 5
      %v3907 = vsel %vm249, %v3902, %v3906
      %v3909 = vshrl.u32 %v3755, 16
      %v3911 = vrot.slane %v3909, 4
      %v3912 = vshll.u32 %v3755, 16
      %v3914 = vrot.slane %v3912, 5
      %v3915 = vor.u32 %v3911, %v3914
      %v3916 = vrot.slane %v3915, 4
      %v3918 = vshll.u32 %v3756, 16
      %v3920 = vrot.slane %v3918, 5
      %v3921 = vsel %vm249, %v3916, %v3920
      %v3922 = vshrl.u32 %v3756, 16
      %v3924 = vrot.slane %v3922, 4
      %v3925 = vor.u32 %v3924, %v3920
      %v3926 = vrot.slane %v3925, 4
      %v3928 = vshll.u32 %v3757, 16
      %v3930 = vrot.slane %v3928, 5
      %v3931 = vsel %vm249, %v3926, %v3930
      %v3933 = vshrl.u32 %v3758, 16
      %v3935 = vrot.slane %v3933, 4
      %v3936 = vshll.u32 %v3758, 16
      %v3938 = vrot.slane %v3936, 5
      %v3939 = vor.u32 %v3935, %v3938
      %v3940 = vrot.slane %v3939, 4
      %v3942 = vshll.u32 %v3759, 16
      %v3944 = vrot.slane %v3942, 5
      %v3945 = vsel %vm249, %v3940, %v3944
      %v3946 = vshrl.u32 %v3759, 16
      %v3948 = vrot.slane %v3946, 4
      %v3949 = vor.u32 %v3948, %v3944
      %v3950 = vrot.slane %v3949, 4
      %v3952 = vshll.u32 %v3760, 16
      %v3954 = vrot.slane %v3952, 5
      %v3955 = vsel %vm249, %v3950, %v3954
      %v3957 = vshrl.u32 %v3761, 16
      %v3959 = vrot.slane %v3957, 4
      %v3960 = vshll.u32 %v3761, 16
      %v3962 = vrot.slane %v3960, 5
      %v3963 = vor.u32 %v3959, %v3962
      %v3964 = vrot.slane %v3963, 4
      %v3966 = vshll.u32 %v3762, 16
      %v3968 = vrot.slane %v3966, 5
      %v3969 = vsel %vm249, %v3964, %v3968
      %v3970 = vshrl.u32 %v3762, 16
      %v3972 = vrot.slane %v3970, 4
      %v3973 = vor.u32 %v3972, %v3968
      %v3974 = vrot.slane %v3973, 4
      %v3976 = vshll.u32 %v3763, 16
      %v3978 = vrot.slane %v3976, 5
      %v3979 = vsel %vm249, %v3974, %v3978
      %v3981 = vshrl.u32 %v3764, 16
      %v3983 = vrot.slane %v3981, 4
      %v3984 = vshll.u32 %v3764, 16
      %v3986 = vrot.slane %v3984, 5
      %v3987 = vor.u32 %v3983, %v3986
      %v3988 = vrot.slane %v3987, 4
      %v3990 = vshll.u32 %v3765, 16
      %v3992 = vrot.slane %v3990, 5
      %v3993 = vsel %vm249, %v3988, %v3992
      %v3994 = vshrl.u32 %v3765, 16
      %v3996 = vrot.slane %v3994, 4
      %v3997 = vor.u32 %v3996, %v3992
      %v3998 = vrot.slane %v3997, 4
      %v4000 = vshll.u32 %v3766, 16
      %v4002 = vrot.slane %v4000, 5
      %v4003 = vsel %vm249, %v3998, %v4002
      %v4005 = vshrl.u32 %v3767, 16
      %v4007 = vrot.slane %v4005, 4
      %v4008 = vshll.u32 %v3767, 16
      %v4010 = vrot.slane %v4008, 5
      %v4011 = vor.u32 %v4007, %v4010
      %v4012 = vrot.slane %v4011, 4
      %v4014 = vshll.u32 %v3768, 16
      %v4016 = vrot.slane %v4014, 5
      %v4017 = vsel %vm249, %v4012, %v4016
      %v4018 = vshrl.u32 %v3768, 16
      %v4020 = vrot.slane %v4018, 4
      %v4021 = vor.u32 %v4020, %v4016
      %v4022 = vrot.slane %v4021, 4
      %v4024 = vshll.u32 %v3769, 16
      %v4026 = vrot.slane %v4024, 5
      %v4027 = vsel %vm249, %v4022, %v4026
      %v4029 = vshrl.u32 %v3770, 16
      %v4031 = vrot.slane %v4029, 4
      %v4032 = vshll.u32 %v3770, 16
      %v4034 = vrot.slane %v4032, 5
      %v4035 = vor.u32 %v4031, %v4034
      %v4036 = vrot.slane %v4035, 4
      %v4038 = vshll.u32 %v3771, 16
      %v4040 = vrot.slane %v4038, 5
      %v4041 = vsel %vm249, %v4036, %v4040
      %v4042 = vshrl.u32 %v3771, 16
      %v4044 = vrot.slane %v4042, 4
      %v4045 = vor.u32 %v4044, %v4040
      %v4046 = vrot.slane %v4045, 4
      %v4048 = vshll.u32 %v3772, 16
      %v4050 = vrot.slane %v4048, 5
      %v4051 = vsel %vm249, %v4046, %v4050
      %v4053 = vshrl.u32 %v3773, 16
      %v4055 = vrot.slane %v4053, 4
      %v4056 = vshll.u32 %v3773, 16
      %v4058 = vrot.slane %v4056, 5
      %v4059 = vor.u32 %v4055, %v4058
      %v4060 = vrot.slane %v4059, 4
      %v4062 = vshll.u32 %v3774, 16
      %v4064 = vrot.slane %v4062, 5
      %v4065 = vsel %vm249, %v4060, %v4064
      %v4066 = vshrl.u32 %v3774, 16
      %v4068 = vrot.slane %v4066, 4
      %v4069 = vor.u32 %v4068, %v4064
      %v4070 = vrot.slane %v4069, 4
      %v4072 = vshll.u32 %v3775, 16
      %v4074 = vrot.slane %v4072, 5
      %v4075 = vsel %vm249, %v4070, %v4074
      %v4077 = vshrl.u32 %v3776, 16
      %v4079 = vrot.slane %v4077, 4
      %v4080 = vshll.u32 %v3776, 16
      %v4082 = vrot.slane %v4080, 5
      %v4083 = vor.u32 %v4079, %v4082
      %v4084 = vrot.slane %v4083, 4
      %v4086 = vshll.u32 %v3777, 16
      %v4088 = vrot.slane %v4086, 5
      %v4089 = vsel %vm249, %v4084, %v4088
      %v4090 = vshrl.u32 %v3777, 16
      %v4092 = vrot.slane %v4090, 4
      %v4093 = vor.u32 %v4092, %v4088
      %v4094 = vrot.slane %v4093, 4
      %v4096 = vshll.u32 %v3778, 16
      %v4098 = vrot.slane %v4096, 5
      %v4099 = vsel %vm249, %v4094, %v4098
      %v4101 = vshrl.u32 %v3779, 16
      %v4103 = vrot.slane %v4101, 4
      %v4104 = vshll.u32 %v3779, 16
      %v4106 = vrot.slane %v4104, 5
      %v4107 = vor.u32 %v4103, %v4106
      %v4108 = vrot.slane %v4107, 4
      %v4110 = vshll.u32 %v3780, 16
      %v4112 = vrot.slane %v4110, 5
      %v4113 = vsel %vm249, %v4108, %v4112
      %v4114 = vshrl.u32 %v3780, 16
      %v4116 = vrot.slane %v4114, 4
      %v4117 = vor.u32 %v4116, %v4112
      %v4118 = vrot.slane %v4117, 4
      %v4120 = vshll.u32 %v3781, 16
      %v4122 = vrot.slane %v4120, 5
      %v4123 = vsel %vm249, %v4118, %v4122
      %v4125 = vshrl.u32 %v3782, 16
      %v4127 = vrot.slane %v4125, 4
      %v4128 = vshll.u32 %v3782, 16
      %v4130 = vrot.slane %v4128, 5
      %v4131 = vor.u32 %v4127, %v4130
      %v4132 = vrot.slane %v4131, 4
      %v4134 = vshll.u32 %v3783, 16
      %v4136 = vrot.slane %v4134, 5
      %v4137 = vsel %vm249, %v4132, %v4136
      %v4138 = vshrl.u32 %v3783, 16
      %v4140 = vrot.slane %v4138, 4
      %v4141 = vor.u32 %v4140, %v4136
      %v4142 = vrot.slane %v4141, 4
      %v4144 = vshll.u32 %v3784, 16
      %v4146 = vrot.slane %v4144, 5
      %v4147 = vsel %vm249, %v4142, %v4146
      %v4149 = vshrl.u32 %v3785, 16
      %v4151 = vrot.slane %v4149, 4
      %v4152 = vshll.u32 %v3785, 16
      %v4154 = vrot.slane %v4152, 5
      %v4155 = vor.u32 %v4151, %v4154
      %v4156 = vrot.slane %v4155, 4
      %v4158 = vshll.u32 %v3786, 16
      %v4160 = vrot.slane %v4158, 5
      %v4161 = vsel %vm249, %v4156, %v4160
      %v4162 = vshrl.u32 %v3786, 16
      %v4164 = vrot.slane %v4162, 4
      %v4165 = vor.u32 %v4164, %v4160
      %v4166 = vrot.slane %v4165, 4
      %v4168 = vshll.u32 %v3787, 16
      %v4170 = vrot.slane %v4168, 5
      %v4171 = vsel %vm249, %v4166, %v4170
      %s4172 = scalar_lea.vmem %s1, 448
      %v4173 = vld [vmem:[%s4172] sm:$0xf]
      %v4174 = vld [vmem:[%s4172 + $0x4] sm:$0xf]
      %v4175 = vld [vmem:[%s4172 + $0x8] sm:$0xf]
      %v4176 = vld [vmem:[%s4172 + $0xc] sm:$0xf]
      %v4177 = vld [vmem:[%s4172 + $0x10] sm:$0xf]
      %v4178 = vld [vmem:[%s4172 + $0x14] sm:$0xf]
      %v4179 = vld [vmem:[%s4172 + $0x18] sm:$0xf]
      %v4180 = vld [vmem:[%s4172 + $0x1c] sm:$0xf]
      %v4181 = vld [vmem:[%s4172 + $0x20] sm:$0xf]
      %v4182 = vld [vmem:[%s4172 + $0x24] sm:$0xf]
      %v4183 = vld [vmem:[%s4172 + $0x28] sm:$0xf]
      %v4184 = vld [vmem:[%s4172 + $0x2c] sm:$0xf]
      %v4185 = vld [vmem:[%s4172 + $0x30] sm:$0xf]
      %v4186 = vld [vmem:[%s4172 + $0x34] sm:$0xf]
      %v4187 = vld [vmem:[%s4172 + $0x38] sm:$0xf]
      %v4188 = vld [vmem:[%s4172 + $0x3c] sm:$0xf]
      %v4189 = vunpack.c.l.b16 %v3801
      %v4190 = vunpack.c.l.b16 %v3811
      %v4191 = vunpack.c.l.b16 %v3825
      %v4192 = vunpack.c.l.b16 %v3835
      %v4193 = vunpack.c.l.b16 %v3849
      %v4194 = vunpack.c.l.b16 %v3859
      %v4195 = vunpack.c.l.b16 %v3873
      %v4196 = vunpack.c.l.b16 %v3883
      %v4197 = vunpack.c.l.b16 %v3897
      %v4198 = vunpack.c.l.b16 %v3907
      %v4199 = vunpack.c.l.b16 %v3921
      %v4200 = vunpack.c.l.b16 %v3931
      %v4201 = vunpack.c.l.b16 %v3945
      %v4202 = vunpack.c.l.b16 %v3955
      %v4203 = vunpack.c.l.b16 %v3969
      %v4204 = vunpack.c.l.b16 %v3979
      %v4205 = vunpack.c.l.b16 %v3993
      %v4206 = vunpack.c.l.b16 %v4003
      %v4207 = vunpack.c.l.b16 %v4017
      %v4208 = vunpack.c.l.b16 %v4027
      %v4209 = vunpack.c.l.b16 %v4041
      %v4210 = vunpack.c.l.b16 %v4051
      %v4211 = vunpack.c.l.b16 %v4065
      %v4212 = vunpack.c.l.b16 %v4075
      %v4213 = vunpack.c.l.b16 %v4089
      %v4214 = vunpack.c.l.b16 %v4099
      %v4215 = vunpack.c.l.b16 %v4113
      %v4216 = vunpack.c.l.b16 %v4123
      %v4217 = vunpack.c.l.b16 %v4137
      %v4218 = vunpack.c.l.b16 %v4147
      %v4219 = vunpack.c.l.b16 %v4161
      %v4220 = vunpack.c.l.b16 %v4171
      %v4221 = vpack.c.b16 %v4190, %v4189
      %v4222 = vpack.c.b16 %v4192, %v4191
      %v4223 = vpack.c.b16 %v4194, %v4193
      %v4224 = vpack.c.b16 %v4196, %v4195
      %v4225 = vpack.c.b16 %v4198, %v4197
      %v4226 = vpack.c.b16 %v4200, %v4199
      %v4227 = vpack.c.b16 %v4202, %v4201
      %v4228 = vpack.c.b16 %v4204, %v4203
      %v4229 = vpack.c.b16 %v4206, %v4205
      %v4230 = vpack.c.b16 %v4208, %v4207
      %v4231 = vpack.c.b16 %v4210, %v4209
      %v4232 = vpack.c.b16 %v4212, %v4211
      %v4233 = vpack.c.b16 %v4214, %v4213
      %v4234 = vpack.c.b16 %v4216, %v4215
      %v4235 = vpack.c.b16 %v4218, %v4217
      %v4236 = vpack.c.b16 %v4220, %v4219
      %v4269 = vunpack.c.l.b16 %v4173
      %v4270 = vunpack.c.l.b16 %v4174
      %v4271 = vunpack.c.l.b16 %v4175
      %v4272 = vunpack.c.l.b16 %v4176
      %v4273 = vunpack.c.l.b16 %v4177
      %v4274 = vunpack.c.l.b16 %v4178
      %v4275 = vunpack.c.l.b16 %v4179
      %v4276 = vunpack.c.l.b16 %v4180
      %v4277 = vunpack.c.l.b16 %v4181
      %v4278 = vunpack.c.l.b16 %v4182
      %v4279 = vunpack.c.l.b16 %v4183
      %v4280 = vunpack.c.l.b16 %v4184
      %v4281 = vunpack.c.l.b16 %v4185
      %v4282 = vunpack.c.l.b16 %v4186
      %v4283 = vunpack.c.l.b16 %v4187
      %v4284 = vunpack.c.l.b16 %v4188
      %v4285 = vpack.c.b16 %v4270, %v4269
      %v4286 = vpack.c.b16 %v4272, %v4271
      %v4287 = vpack.c.b16 %v4274, %v4273
      %v4288 = vpack.c.b16 %v4276, %v4275
      %v4289 = vpack.c.b16 %v4278, %v4277
      %v4290 = vpack.c.b16 %v4280, %v4279
      %v4291 = vpack.c.b16 %v4282, %v4281
      %v4292 = vpack.c.b16 %v4284, %v4283
      %4301 = vmatprep.subr.bf16.mxu0 0
      %4302 = vmatpush1.bf16.msra.mxu0 %v4292
      %4303 = vmatprep.subr.bf16.mxu0 0
      %4304 = vmatpush1.bf16.msra.mxu0 %v4291
      %4305 = vmatprep.subr.bf16.mxu0 0
      %4306 = vmatpush1.bf16.msra.mxu0 %v4290
      %4307 = vmatprep.subr.bf16.mxu0 0
      %4308 = vmatpush1.bf16.msra.mxu0 %v4289
      %4309 = vmatprep.subr.bf16.mxu0 0
      %4310 = vmatpush1.bf16.msra.mxu0 %v4288
      %4311 = vmatprep.subr.bf16.mxu0 0
      %4312 = vmatpush1.bf16.msra.mxu0 %v4287
      %4313 = vmatprep.subr.bf16.mxu0 0
      %4314 = vmatpush1.bf16.msra.mxu0 %v4286
      %4315 = vmatprep.subr.bf16.mxu0 0
      %4316 = vmatpush1.bf16.msra.mxu0 %v4285
      %4317 = vmatprep.subr.bf16.mxu0 0
      %4318 = vmatpush2.bf16.msra.mxu0 0
      %4319 = vmatprep.subr.bf16.mxu0 0
      %4320 = vmatpush2.bf16.msra.mxu0 0
      %4321 = vmatprep.subr.bf16.mxu0 0
      %4322 = vmatpush2.bf16.msra.mxu0 0
      %4323 = vmatprep.subr.bf16.mxu0 0
      %4324 = vmatpush2.bf16.msra.mxu0 0
      %4325 = vmatprep.subr.bf16.mxu0 0
      %4326 = vmatpush2.bf16.msra.mxu0 0
      %4327 = vmatprep.subr.bf16.mxu0 0
      %4328 = vmatpush2.bf16.msra.mxu0 0
      %4329 = vmatprep.subr.bf16.mxu0 0
      %4330 = vmatpush2.bf16.msra.mxu0 0
      %4331 = vmatprep.subr.bf16.mxu0 0
      %4332 = vmatpush2.bf16.msra.mxu0 0
      %4333 = vmatprep.mubr.bf16.mxu0 0
      %4334 = vmatmul.mubr.bf16.gmra.mxu0 %v4221
      %v4335 = vpop.f32.mrf.mxu0
      %v4336 = vadd.f32 0.0, %v4335
      %v4337 = vpop.f32.mrf.mxu0
      %v4338 = vpop.f32.mrf.mxu0
      %v4339 = vadd.f32 0.0, %v4338
      %v4340 = vpop.f32.mrf.mxu0
      %4341 = vmatprep.mubr.bf16.mxu0 0
      %4342 = vmatmul.mubr.bf16.gmra.mxu0 %v4222
      %v4343 = vpop.f32.mrf.mxu0
      %v4344 = vadd.f32 0.0, %v4343
      %v4345 = vpop.f32.mrf.mxu0
      %v4346 = vpop.f32.mrf.mxu0
      %v4347 = vadd.f32 0.0, %v4346
      %v4348 = vpop.f32.mrf.mxu0
      %4349 = vmatprep.mubr.bf16.mxu0 0
      %4350 = vmatmul.mubr.bf16.gmra.mxu0 %v4223
      %v4351 = vpop.f32.mrf.mxu0
      %v4352 = vadd.f32 0.0, %v4351
      %v4353 = vpop.f32.mrf.mxu0
      %v4354 = vpop.f32.mrf.mxu0
      %v4355 = vadd.f32 0.0, %v4354
      %v4356 = vpop.f32.mrf.mxu0
      %4357 = vmatprep.mubr.bf16.mxu0 0
      %4358 = vmatmul.mubr.bf16.gmra.mxu0 %v4224
      %v4359 = vpop.f32.mrf.mxu0
      %v4360 = vadd.f32 0.0, %v4359
      %v4361 = vpop.f32.mrf.mxu0
      %v4362 = vpop.f32.mrf.mxu0
      %v4363 = vadd.f32 0.0, %v4362
      %v4364 = vpop.f32.mrf.mxu0
      %4365 = vmatprep.mubr.bf16.mxu0 0
      %4366 = vmatmul.mubr.bf16.gmra.mxu0 %v4225
      %v4367 = vpop.f32.mrf.mxu0
      %v4368 = vadd.f32 0.0, %v4367
      %v4369 = vpop.f32.mrf.mxu0
      %v4370 = vpop.f32.mrf.mxu0
      %v4371 = vadd.f32 0.0, %v4370
      %v4372 = vpop.f32.mrf.mxu0
      %4373 = vmatprep.mubr.bf16.mxu0 0
      %4374 = vmatmul.mubr.bf16.gmra.mxu0 %v4226
      %v4375 = vpop.f32.mrf.mxu0
      %v4376 = vadd.f32 0.0, %v4375
      %v4377 = vpop.f32.mrf.mxu0
      %v4378 = vpop.f32.mrf.mxu0
      %v4379 = vadd.f32 0.0, %v4378
      %v4380 = vpop.f32.mrf.mxu0
      %4381 = vmatprep.mubr.bf16.mxu0 0
      %4382 = vmatmul.mubr.bf16.gmra.mxu0 %v4227
      %v4383 = vpop.f32.mrf.mxu0
      %v4384 = vadd.f32 0.0, %v4383
      %v4385 = vpop.f32.mrf.mxu0
      %v4386 = vpop.f32.mrf.mxu0
      %v4387 = vadd.f32 0.0, %v4386
      %v4388 = vpop.f32.mrf.mxu0
      %4389 = vmatprep.mubr.bf16.mxu0 0
      %4390 = vmatmul.mubr.bf16.gmra.mxu0 %v4228
      %v4391 = vpop.f32.mrf.mxu0
      %v4392 = vadd.f32 0.0, %v4391
      %v4393 = vpop.f32.mrf.mxu0
      %v4394 = vpop.f32.mrf.mxu0
      %v4395 = vadd.f32 0.0, %v4394
      %v4396 = vpop.f32.mrf.mxu0
      %4397 = vmatprep.mubr.bf16.mxu0 0
      %4398 = vmatmul.mubr.bf16.gmra.mxu0 %v4229
      %v4399 = vpop.f32.mrf.mxu0
      %v4400 = vadd.f32 0.0, %v4399
      %v4401 = vpop.f32.mrf.mxu0
      %v4402 = vpop.f32.mrf.mxu0
      %v4403 = vadd.f32 0.0, %v4402
      %v4404 = vpop.f32.mrf.mxu0
      %4405 = vmatprep.mubr.bf16.mxu0 0
      %4406 = vmatmul.mubr.bf16.gmra.mxu0 %v4230
      %v4407 = vpop.f32.mrf.mxu0
      %v4408 = vadd.f32 0.0, %v4407
      %v4409 = vpop.f32.mrf.mxu0
      %v4410 = vpop.f32.mrf.mxu0
      %v4411 = vadd.f32 0.0, %v4410
      %v4412 = vpop.f32.mrf.mxu0
      %4413 = vmatprep.mubr.bf16.mxu0 0
      %4414 = vmatmul.mubr.bf16.gmra.mxu0 %v4231
      %v4415 = vpop.f32.mrf.mxu0
      %v4416 = vadd.f32 0.0, %v4415
      %v4417 = vpop.f32.mrf.mxu0
      %v4418 = vpop.f32.mrf.mxu0
      %v4419 = vadd.f32 0.0, %v4418
      %v4420 = vpop.f32.mrf.mxu0
      %4421 = vmatprep.mubr.bf16.mxu0 0
      %4422 = vmatmul.mubr.bf16.gmra.mxu0 %v4232
      %v4423 = vpop.f32.mrf.mxu0
      %v4424 = vadd.f32 0.0, %v4423
      %v4425 = vpop.f32.mrf.mxu0
      %v4426 = vpop.f32.mrf.mxu0
      %v4427 = vadd.f32 0.0, %v4426
      %v4428 = vpop.f32.mrf.mxu0
      %4429 = vmatprep.mubr.bf16.mxu0 0
      %4430 = vmatmul.mubr.bf16.gmra.mxu0 %v4233
      %v4431 = vpop.f32.mrf.mxu0
      %v4432 = vadd.f32 0.0, %v4431
      %v4433 = vpop.f32.mrf.mxu0
      %v4434 = vpop.f32.mrf.mxu0
      %v4435 = vadd.f32 0.0, %v4434
      %v4436 = vpop.f32.mrf.mxu0
      %4437 = vmatprep.mubr.bf16.mxu0 0
      %4438 = vmatmul.mubr.bf16.gmra.mxu0 %v4234
      %v4439 = vpop.f32.mrf.mxu0
      %v4440 = vadd.f32 0.0, %v4439
      %v4441 = vpop.f32.mrf.mxu0
      %v4442 = vpop.f32.mrf.mxu0
      %v4443 = vadd.f32 0.0, %v4442
      %v4444 = vpop.f32.mrf.mxu0
      %4445 = vmatprep.mubr.bf16.mxu0 0
      %4446 = vmatmul.mubr.bf16.gmra.mxu0 %v4235
      %v4447 = vpop.f32.mrf.mxu0
      %v4448 = vadd.f32 0.0, %v4447
      %v4449 = vpop.f32.mrf.mxu0
      %v4450 = vpop.f32.mrf.mxu0
      %v4451 = vadd.f32 0.0, %v4450
      %v4452 = vpop.f32.mrf.mxu0
      %4453 = vmatprep.mubr.bf16.mxu0 0
      %4454 = vmatmul.mubr.bf16.gmra.mxu0 %v4236
      %v4455 = vpop.f32.mrf.mxu0
      %v4456 = vadd.f32 0.0, %v4455
      %v4457 = vpop.f32.mrf.mxu0
      %v4458 = vpop.f32.mrf.mxu0
      %v4459 = vadd.f32 0.0, %v4458
      %v4460 = vpop.f32.mrf.mxu0
      %4461 = vdwg.mxu0
      %v4462 = vadd.f32 %v3708, %v4336
      %v4463 = vadd.f32 %v3709, %v4339
      %v4464 = vadd.f32 %v3710, %v4344
      %v4465 = vadd.f32 %v3711, %v4347
      %v4466 = vadd.f32 %v3712, %v4352
      %v4467 = vadd.f32 %v3713, %v4355
      %v4468 = vadd.f32 %v3714, %v4360
      %v4469 = vadd.f32 %v3715, %v4363
      %v4470 = vadd.f32 %v3716, %v4368
      %v4471 = vadd.f32 %v3717, %v4371
      %v4472 = vadd.f32 %v3718, %v4376
      %v4473 = vadd.f32 %v3719, %v4379
      %v4474 = vadd.f32 %v3720, %v4384
      %v4475 = vadd.f32 %v3721, %v4387
      %v4476 = vadd.f32 %v3722, %v4392
      %v4477 = vadd.f32 %v3723, %v4395
      %v4478 = vadd.f32 %v3724, %v4400
      %v4479 = vadd.f32 %v3725, %v4403
      %v4480 = vadd.f32 %v3726, %v4408
      %v4481 = vadd.f32 %v3727, %v4411
      %v4482 = vadd.f32 %v3728, %v4416
      %v4483 = vadd.f32 %v3729, %v4419
      %v4484 = vadd.f32 %v3730, %v4424
      %v4485 = vadd.f32 %v3731, %v4427
      %v4486 = vadd.f32 %v3732, %v4432
      %v4487 = vadd.f32 %v3733, %v4435
      %v4488 = vadd.f32 %v3734, %v4440
      %v4489 = vadd.f32 %v3735, %v4443
      %v4490 = vadd.f32 %v3736, %v4448
      %v4491 = vadd.f32 %v3737, %v4451
      %v4492 = vadd.f32 %v3738, %v4456
      %v4493 = vadd.f32 %v3739, %v4459
      %v4494 = vld [vmem:[%s3353] sm:$0xe]
      %v4495 = vld [vmem:[%s3353 + $0xc] sm:$0xe]
      %v4496 = vld [vmem:[%s3353 + $0x18] sm:$0xe]
      %v4497 = vld [vmem:[%s3353 + $0x24] sm:$0xe]
      %v4498 = vld [vmem:[%s3353 + $0x30] sm:$0xe]
      %v4499 = vld [vmem:[%s3353 + $0x3c] sm:$0xe]
      %v4500 = vld [vmem:[%s3353 + $0x48] sm:$0xe]
      %v4501 = vld [vmem:[%s3353 + $0x54] sm:$0xe]
      %v4502 = vld [vmem:[%s3353 + $0x60] sm:$0xe]
      %v4503 = vld [vmem:[%s3353 + $0x6c] sm:$0xe]
      %v4504 = vld [vmem:[%s3353 + $0x78] sm:$0xe]
      %v4505 = vld [vmem:[%s3353 + $0x84] sm:$0xe]
      %v4506 = vld [vmem:[%s3353 + $0x90] sm:$0xe]
      %v4507 = vld [vmem:[%s3353 + $0x9c] sm:$0xe]
      %v4508 = vld [vmem:[%s3353 + $0xa8] sm:$0xe]
      %v4509 = vld [vmem:[%s3353 + $0xb4] sm:$0xe]
      %v4558 = vrot.slane %v4494, 5
      %v4559 = vrot.slane %v4558, 4
      %v4560 = vrot.slane %v3741, 5
      %v4561 = vsel %vm1279, %v4559, %v4560
      %v4562 = vrot.slane %v4560, 4
      %v4563 = vrot.slane %v3742, 5
      %v4564 = vsel %vm1279, %v4562, %v4563
      %v4565 = vrot.slane %v4495, 5
      %v4566 = vrot.slane %v4565, 4
      %v4567 = vrot.slane %v3744, 5
      %v4568 = vsel %vm1279, %v4566, %v4567
      %v4569 = vrot.slane %v4567, 4
      %v4570 = vrot.slane %v3745, 5
      %v4571 = vsel %vm1279, %v4569, %v4570
      %v4572 = vrot.slane %v4496, 5
      %v4573 = vrot.slane %v4572, 4
      %v4574 = vrot.slane %v3747, 5
      %v4575 = vsel %vm1279, %v4573, %v4574
      %v4576 = vrot.slane %v4574, 4
      %v4577 = vrot.slane %v3748, 5
      %v4578 = vsel %vm1279, %v4576, %v4577
      %v4579 = vrot.slane %v4497, 5
      %v4580 = vrot.slane %v4579, 4
      %v4581 = vrot.slane %v3750, 5
      %v4582 = vsel %vm1279, %v4580, %v4581
      %v4583 = vrot.slane %v4581, 4
      %v4584 = vrot.slane %v3751, 5
      %v4585 = vsel %vm1279, %v4583, %v4584
      %v4586 = vrot.slane %v4498, 5
      %v4587 = vrot.slane %v4586, 4
      %v4588 = vrot.slane %v3753, 5
      %v4589 = vsel %vm1279, %v4587, %v4588
      %v4590 = vrot.slane %v4588, 4
      %v4591 = vrot.slane %v3754, 5
      %v4592 = vsel %vm1279, %v4590, %v4591
      %v4593 = vrot.slane %v4499, 5
      %v4594 = vrot.slane %v4593, 4
      %v4595 = vrot.slane %v3756, 5
      %v4596 = vsel %vm1279, %v4594, %v4595
      %v4597 = vrot.slane %v4595, 4
      %v4598 = vrot.slane %v3757, 5
      %v4599 = vsel %vm1279, %v4597, %v4598
      %v4600 = vrot.slane %v4500, 5
      %v4601 = vrot.slane %v4600, 4
      %v4602 = vrot.slane %v3759, 5
      %v4603 = vsel %vm1279, %v4601, %v4602
      %v4604 = vrot.slane %v4602, 4
      %v4605 = vrot.slane %v3760, 5
      %v4606 = vsel %vm1279, %v4604, %v4605
      %v4607 = vrot.slane %v4501, 5
      %v4608 = vrot.slane %v4607, 4
      %v4609 = vrot.slane %v3762, 5
      %v4610 = vsel %vm1279, %v4608, %v4609
      %v4611 = vrot.slane %v4609, 4
      %v4612 = vrot.slane %v3763, 5
      %v4613 = vsel %vm1279, %v4611, %v4612
      %v4614 = vrot.slane %v4502, 5
      %v4615 = vrot.slane %v4614, 4
      %v4616 = vrot.slane %v3765, 5
      %v4617 = vsel %vm1279, %v4615, %v4616
      %v4618 = vrot.slane %v4616, 4
      %v4619 = vrot.slane %v3766, 5
      %v4620 = vsel %vm1279, %v4618, %v4619
      %v4621 = vrot.slane %v4503, 5
      %v4622 = vrot.slane %v4621, 4
      %v4623 = vrot.slane %v3768, 5
      %v4624 = vsel %vm1279, %v4622, %v4623
      %v4625 = vrot.slane %v4623, 4
      %v4626 = vrot.slane %v3769, 5
      %v4627 = vsel %vm1279, %v4625, %v4626
      %v4628 = vrot.slane %v4504, 5
      %v4629 = vrot.slane %v4628, 4
      %v4630 = vrot.slane %v3771, 5
      %v4631 = vsel %vm1279, %v4629, %v4630
      %v4632 = vrot.slane %v4630, 4
      %v4633 = vrot.slane %v3772, 5
      %v4634 = vsel %vm1279, %v4632, %v4633
      %v4635 = vrot.slane %v4505, 5
      %v4636 = vrot.slane %v4635, 4
      %v4637 = vrot.slane %v3774, 5
      %v4638 = vsel %vm1279, %v4636, %v4637
      %v4639 = vrot.slane %v4637, 4
      %v4640 = vrot.slane %v3775, 5
      %v4641 = vsel %vm1279, %v4639, %v4640
      %v4642 = vrot.slane %v4506, 5
      %v4643 = vrot.slane %v4642, 4
      %v4644 = vrot.slane %v3777, 5
      %v4645 = vsel %vm1279, %v4643, %v4644
      %v4646 = vrot.slane %v4644, 4
      %v4647 = vrot.slane %v3778, 5
      %v4648 = vsel %vm1279, %v4646, %v4647
      %v4649 = vrot.slane %v4507, 5
      %v4650 = vrot.slane %v4649, 4
      %v4651 = vrot.slane %v3780, 5
      %v4652 = vsel %vm1279, %v4650, %v4651
      %v4653 = vrot.slane %v4651, 4
      %v4654 = vrot.slane %v3781, 5
      %v4655 = vsel %vm1279, %v4653, %v4654
      %v4656 = vrot.slane %v4508, 5
      %v4657 = vrot.slane %v4656, 4
      %v4658 = vrot.slane %v3783, 5
      %v4659 = vsel %vm1279, %v4657, %v4658
      %v4660 = vrot.slane %v4658, 4
      %v4661 = vrot.slane %v3784, 5
      %v4662 = vsel %vm1279, %v4660, %v4661
      %v4663 = vrot.slane %v4509, 5
      %v4664 = vrot.slane %v4663, 4
      %v4665 = vrot.slane %v3786, 5
      %v4666 = vsel %vm1279, %v4664, %v4665
      %v4667 = vrot.slane %v4665, 4
      %v4668 = vrot.slane %v3787, 5
      %v4669 = vsel %vm1279, %v4667, %v4668
      %s4670 = scalar_lea.vmem %s1, 512
      %v4671 = vld [vmem:[%s4670] sm:$0xf]
      %v4672 = vld [vmem:[%s4670 + $0x4] sm:$0xf]
      %v4673 = vld [vmem:[%s4670 + $0x8] sm:$0xf]
      %v4674 = vld [vmem:[%s4670 + $0xc] sm:$0xf]
      %v4675 = vld [vmem:[%s4670 + $0x10] sm:$0xf]
      %v4676 = vld [vmem:[%s4670 + $0x14] sm:$0xf]
      %v4677 = vld [vmem:[%s4670 + $0x18] sm:$0xf]
      %v4678 = vld [vmem:[%s4670 + $0x1c] sm:$0xf]
      %v4679 = vld [vmem:[%s4670 + $0x20] sm:$0xf]
      %v4680 = vld [vmem:[%s4670 + $0x24] sm:$0xf]
      %v4681 = vld [vmem:[%s4670 + $0x28] sm:$0xf]
      %v4682 = vld [vmem:[%s4670 + $0x2c] sm:$0xf]
      %v4683 = vld [vmem:[%s4670 + $0x30] sm:$0xf]
      %v4684 = vld [vmem:[%s4670 + $0x34] sm:$0xf]
      %v4685 = vld [vmem:[%s4670 + $0x38] sm:$0xf]
      %v4686 = vld [vmem:[%s4670 + $0x3c] sm:$0xf]
      %v4687 = vunpack.c.l.b16 %v4561
      %v4688 = vunpack.c.l.b16 %v4564
      %v4689 = vunpack.c.l.b16 %v4568
      %v4690 = vunpack.c.l.b16 %v4571
      %v4691 = vunpack.c.l.b16 %v4575
      %v4692 = vunpack.c.l.b16 %v4578
      %v4693 = vunpack.c.l.b16 %v4582
      %v4694 = vunpack.c.l.b16 %v4585
      %v4695 = vunpack.c.l.b16 %v4589
      %v4696 = vunpack.c.l.b16 %v4592
      %v4697 = vunpack.c.l.b16 %v4596
      %v4698 = vunpack.c.l.b16 %v4599
      %v4699 = vunpack.c.l.b16 %v4603
      %v4700 = vunpack.c.l.b16 %v4606
      %v4701 = vunpack.c.l.b16 %v4610
      %v4702 = vunpack.c.l.b16 %v4613
      %v4703 = vunpack.c.l.b16 %v4617
      %v4704 = vunpack.c.l.b16 %v4620
      %v4705 = vunpack.c.l.b16 %v4624
      %v4706 = vunpack.c.l.b16 %v4627
      %v4707 = vunpack.c.l.b16 %v4631
      %v4708 = vunpack.c.l.b16 %v4634
      %v4709 = vunpack.c.l.b16 %v4638
      %v4710 = vunpack.c.l.b16 %v4641
      %v4711 = vunpack.c.l.b16 %v4645
      %v4712 = vunpack.c.l.b16 %v4648
      %v4713 = vunpack.c.l.b16 %v4652
      %v4714 = vunpack.c.l.b16 %v4655
      %v4715 = vunpack.c.l.b16 %v4659
      %v4716 = vunpack.c.l.b16 %v4662
      %v4717 = vunpack.c.l.b16 %v4666
      %v4718 = vunpack.c.l.b16 %v4669
      %v4719 = vpack.c.b16 %v4688, %v4687
      %v4720 = vpack.c.b16 %v4690, %v4689
      %v4721 = vpack.c.b16 %v4692, %v4691
      %v4722 = vpack.c.b16 %v4694, %v4693
      %v4723 = vpack.c.b16 %v4696, %v4695
      %v4724 = vpack.c.b16 %v4698, %v4697
      %v4725 = vpack.c.b16 %v4700, %v4699
      %v4726 = vpack.c.b16 %v4702, %v4701
      %v4727 = vpack.c.b16 %v4704, %v4703
      %v4728 = vpack.c.b16 %v4706, %v4705
      %v4729 = vpack.c.b16 %v4708, %v4707
      %v4730 = vpack.c.b16 %v4710, %v4709
      %v4731 = vpack.c.b16 %v4712, %v4711
      %v4732 = vpack.c.b16 %v4714, %v4713
      %v4733 = vpack.c.b16 %v4716, %v4715
      %v4734 = vpack.c.b16 %v4718, %v4717
      %v4767 = vunpack.c.l.b16 %v4671
      %v4768 = vunpack.c.l.b16 %v4672
      %v4769 = vunpack.c.l.b16 %v4673
      %v4770 = vunpack.c.l.b16 %v4674
      %v4771 = vunpack.c.l.b16 %v4675
      %v4772 = vunpack.c.l.b16 %v4676
      %v4773 = vunpack.c.l.b16 %v4677
      %v4774 = vunpack.c.l.b16 %v4678
      %v4775 = vunpack.c.l.b16 %v4679
      %v4776 = vunpack.c.l.b16 %v4680
      %v4777 = vunpack.c.l.b16 %v4681
      %v4778 = vunpack.c.l.b16 %v4682
      %v4779 = vunpack.c.l.b16 %v4683
      %v4780 = vunpack.c.l.b16 %v4684
      %v4781 = vunpack.c.l.b16 %v4685
      %v4782 = vunpack.c.l.b16 %v4686
      %v4783 = vpack.c.b16 %v4768, %v4767
      %v4784 = vpack.c.b16 %v4770, %v4769
      %v4785 = vpack.c.b16 %v4772, %v4771
      %v4786 = vpack.c.b16 %v4774, %v4773
      %v4787 = vpack.c.b16 %v4776, %v4775
      %v4788 = vpack.c.b16 %v4778, %v4777
      %v4789 = vpack.c.b16 %v4780, %v4779
      %v4790 = vpack.c.b16 %v4782, %v4781
      %4799 = vmatprep.subr.bf16.mxu0 0
      %4800 = vmatpush1.bf16.msra.mxu0 %v4790
      %4801 = vmatprep.subr.bf16.mxu0 0
      %4802 = vmatpush1.bf16.msra.mxu0 %v4789
      %4803 = vmatprep.subr.bf16.mxu0 0
      %4804 = vmatpush1.bf16.msra.mxu0 %v4788
      %4805 = vmatprep.subr.bf16.mxu0 0
      %4806 = vmatpush1.bf16.msra.mxu0 %v4787
      %4807 = vmatprep.subr.bf16.mxu0 0
      %4808 = vmatpush1.bf16.msra.mxu0 %v4786
      %4809 = vmatprep.subr.bf16.mxu0 0
      %4810 = vmatpush1.bf16.msra.mxu0 %v4785
      %4811 = vmatprep.subr.bf16.mxu0 0
      %4812 = vmatpush1.bf16.msra.mxu0 %v4784
      %4813 = vmatprep.subr.bf16.mxu0 0
      %4814 = vmatpush1.bf16.msra.mxu0 %v4783
      %4815 = vmatprep.subr.bf16.mxu0 0
      %4816 = vmatpush2.bf16.msra.mxu0 0
      %4817 = vmatprep.subr.bf16.mxu0 0
      %4818 = vmatpush2.bf16.msra.mxu0 0
      %4819 = vmatprep.subr.bf16.mxu0 0
      %4820 = vmatpush2.bf16.msra.mxu0 0
      %4821 = vmatprep.subr.bf16.mxu0 0
      %4822 = vmatpush2.bf16.msra.mxu0 0
      %4823 = vmatprep.subr.bf16.mxu0 0
      %4824 = vmatpush2.bf16.msra.mxu0 0
      %4825 = vmatprep.subr.bf16.mxu0 0
      %4826 = vmatpush2.bf16.msra.mxu0 0
      %4827 = vmatprep.subr.bf16.mxu0 0
      %4828 = vmatpush2.bf16.msra.mxu0 0
      %4829 = vmatprep.subr.bf16.mxu0 0
      %4830 = vmatpush2.bf16.msra.mxu0 0
      %4831 = vmatprep.mubr.bf16.mxu0 0
      %4832 = vmatmul.mubr.bf16.gmra.mxu0 %v4719
      %v4833 = vpop.f32.mrf.mxu0
      %v4834 = vadd.f32 0.0, %v4833
      %v4835 = vpop.f32.mrf.mxu0
      %v4836 = vpop.f32.mrf.mxu0
      %v4837 = vadd.f32 0.0, %v4836
      %v4838 = vpop.f32.mrf.mxu0
      %4839 = vmatprep.mubr.bf16.mxu0 0
      %4840 = vmatmul.mubr.bf16.gmra.mxu0 %v4720
      %v4841 = vpop.f32.mrf.mxu0
      %v4842 = vadd.f32 0.0, %v4841
      %v4843 = vpop.f32.mrf.mxu0
      %v4844 = vpop.f32.mrf.mxu0
      %v4845 = vadd.f32 0.0, %v4844
      %v4846 = vpop.f32.mrf.mxu0
      %4847 = vmatprep.mubr.bf16.mxu0 0
      %4848 = vmatmul.mubr.bf16.gmra.mxu0 %v4721
      %v4849 = vpop.f32.mrf.mxu0
      %v4850 = vadd.f32 0.0, %v4849
      %v4851 = vpop.f32.mrf.mxu0
      %v4852 = vpop.f32.mrf.mxu0
      %v4853 = vadd.f32 0.0, %v4852
      %v4854 = vpop.f32.mrf.mxu0
      %4855 = vmatprep.mubr.bf16.mxu0 0
      %4856 = vmatmul.mubr.bf16.gmra.mxu0 %v4722
      %v4857 = vpop.f32.mrf.mxu0
      %v4858 = vadd.f32 0.0, %v4857
      %v4859 = vpop.f32.mrf.mxu0
      %v4860 = vpop.f32.mrf.mxu0
      %v4861 = vadd.f32 0.0, %v4860
      %v4862 = vpop.f32.mrf.mxu0
      %4863 = vmatprep.mubr.bf16.mxu0 0
      %4864 = vmatmul.mubr.bf16.gmra.mxu0 %v4723
      %v4865 = vpop.f32.mrf.mxu0
      %v4866 = vadd.f32 0.0, %v4865
      %v4867 = vpop.f32.mrf.mxu0
      %v4868 = vpop.f32.mrf.mxu0
      %v4869 = vadd.f32 0.0, %v4868
      %v4870 = vpop.f32.mrf.mxu0
      %4871 = vmatprep.mubr.bf16.mxu0 0
      %4872 = vmatmul.mubr.bf16.gmra.mxu0 %v4724
      %v4873 = vpop.f32.mrf.mxu0
      %v4874 = vadd.f32 0.0, %v4873
      %v4875 = vpop.f32.mrf.mxu0
      %v4876 = vpop.f32.mrf.mxu0
      %v4877 = vadd.f32 0.0, %v4876
      %v4878 = vpop.f32.mrf.mxu0
      %4879 = vmatprep.mubr.bf16.mxu0 0
      %4880 = vmatmul.mubr.bf16.gmra.mxu0 %v4725
      %v4881 = vpop.f32.mrf.mxu0
      %v4882 = vadd.f32 0.0, %v4881
      %v4883 = vpop.f32.mrf.mxu0
      %v4884 = vpop.f32.mrf.mxu0
      %v4885 = vadd.f32 0.0, %v4884
      %v4886 = vpop.f32.mrf.mxu0
      %4887 = vmatprep.mubr.bf16.mxu0 0
      %4888 = vmatmul.mubr.bf16.gmra.mxu0 %v4726
      %v4889 = vpop.f32.mrf.mxu0
      %v4890 = vadd.f32 0.0, %v4889
      %v4891 = vpop.f32.mrf.mxu0
      %v4892 = vpop.f32.mrf.mxu0
      %v4893 = vadd.f32 0.0, %v4892
      %v4894 = vpop.f32.mrf.mxu0
      %4895 = vmatprep.mubr.bf16.mxu0 0
      %4896 = vmatmul.mubr.bf16.gmra.mxu0 %v4727
      %v4897 = vpop.f32.mrf.mxu0
      %v4898 = vadd.f32 0.0, %v4897
      %v4899 = vpop.f32.mrf.mxu0
      %v4900 = vpop.f32.mrf.mxu0
      %v4901 = vadd.f32 0.0, %v4900
      %v4902 = vpop.f32.mrf.mxu0
      %4903 = vmatprep.mubr.bf16.mxu0 0
      %4904 = vmatmul.mubr.bf16.gmra.mxu0 %v4728
      %v4905 = vpop.f32.mrf.mxu0
      %v4906 = vadd.f32 0.0, %v4905
      %v4907 = vpop.f32.mrf.mxu0
      %v4908 = vpop.f32.mrf.mxu0
      %v4909 = vadd.f32 0.0, %v4908
      %v4910 = vpop.f32.mrf.mxu0
      %4911 = vmatprep.mubr.bf16.mxu0 0
      %4912 = vmatmul.mubr.bf16.gmra.mxu0 %v4729
      %v4913 = vpop.f32.mrf.mxu0
      %v4914 = vadd.f32 0.0, %v4913
      %v4915 = vpop.f32.mrf.mxu0
      %v4916 = vpop.f32.mrf.mxu0
      %v4917 = vadd.f32 0.0, %v4916
      %v4918 = vpop.f32.mrf.mxu0
      %4919 = vmatprep.mubr.bf16.mxu0 0
      %4920 = vmatmul.mubr.bf16.gmra.mxu0 %v4730
      %v4921 = vpop.f32.mrf.mxu0
      %v4922 = vadd.f32 0.0, %v4921
      %v4923 = vpop.f32.mrf.mxu0
      %v4924 = vpop.f32.mrf.mxu0
      %v4925 = vadd.f32 0.0, %v4924
      %v4926 = vpop.f32.mrf.mxu0
      %4927 = vmatprep.mubr.bf16.mxu0 0
      %4928 = vmatmul.mubr.bf16.gmra.mxu0 %v4731
      %v4929 = vpop.f32.mrf.mxu0
      %v4930 = vadd.f32 0.0, %v4929
      %v4931 = vpop.f32.mrf.mxu0
      %v4932 = vpop.f32.mrf.mxu0
      %v4933 = vadd.f32 0.0, %v4932
      %v4934 = vpop.f32.mrf.mxu0
      %4935 = vmatprep.mubr.bf16.mxu0 0
      %4936 = vmatmul.mubr.bf16.gmra.mxu0 %v4732
      %v4937 = vpop.f32.mrf.mxu0
      %v4938 = vadd.f32 0.0, %v4937
      %v4939 = vpop.f32.mrf.mxu0
      %v4940 = vpop.f32.mrf.mxu0
      %v4941 = vadd.f32 0.0, %v4940
      %v4942 = vpop.f32.mrf.mxu0
      %4943 = vmatprep.mubr.bf16.mxu0 0
      %4944 = vmatmul.mubr.bf16.gmra.mxu0 %v4733
      %v4945 = vpop.f32.mrf.mxu0
      %v4946 = vadd.f32 0.0, %v4945
      %v4947 = vpop.f32.mrf.mxu0
      %v4948 = vpop.f32.mrf.mxu0
      %v4949 = vadd.f32 0.0, %v4948
      %v4950 = vpop.f32.mrf.mxu0
      %4951 = vmatprep.mubr.bf16.mxu0 0
      %4952 = vmatmul.mubr.bf16.gmra.mxu0 %v4734
      %v4953 = vpop.f32.mrf.mxu0
      %v4954 = vadd.f32 0.0, %v4953
      %v4955 = vpop.f32.mrf.mxu0
      %v4956 = vpop.f32.mrf.mxu0
      %v4957 = vadd.f32 0.0, %v4956
      %v4958 = vpop.f32.mrf.mxu0
      %4959 = vdwg.mxu0
      %v4960 = vadd.f32 %v4462, %v4834
      %v4961 = vadd.f32 %v4463, %v4837
      %v4962 = vadd.f32 %v4464, %v4842
      %v4963 = vadd.f32 %v4465, %v4845
      %v4964 = vadd.f32 %v4466, %v4850
      %v4965 = vadd.f32 %v4467, %v4853
      %v4966 = vadd.f32 %v4468, %v4858
      %v4967 = vadd.f32 %v4469, %v4861
      %v4968 = vadd.f32 %v4470, %v4866
      %v4969 = vadd.f32 %v4471, %v4869
      %v4970 = vadd.f32 %v4472, %v4874
      %v4971 = vadd.f32 %v4473, %v4877
      %v4972 = vadd.f32 %v4474, %v4882
      %v4973 = vadd.f32 %v4475, %v4885
      %v4974 = vadd.f32 %v4476, %v4890
      %v4975 = vadd.f32 %v4477, %v4893
      %v4976 = vadd.f32 %v4478, %v4898
      %v4977 = vadd.f32 %v4479, %v4901
      %v4978 = vadd.f32 %v4480, %v4906
      %v4979 = vadd.f32 %v4481, %v4909
      %v4980 = vadd.f32 %v4482, %v4914
      %v4981 = vadd.f32 %v4483, %v4917
      %v4982 = vadd.f32 %v4484, %v4922
      %v4983 = vadd.f32 %v4485, %v4925
      %v4984 = vadd.f32 %v4486, %v4930
      %v4985 = vadd.f32 %v4487, %v4933
      %v4986 = vadd.f32 %v4488, %v4938
      %v4987 = vadd.f32 %v4489, %v4941
      %v4988 = vadd.f32 %v4490, %v4946
      %v4989 = vadd.f32 %v4491, %v4949
      %v4990 = vadd.f32 %v4492, %v4954
      %v4991 = vadd.f32 %v4493, %v4957
      %v4992 = vpack.c.bf16 %v4961, %v4960
      %v4993 = vpack.c.bf16 %v4963, %v4962
      %v4994 = vpack.c.bf16 %v4965, %v4964
      %v4995 = vpack.c.bf16 %v4967, %v4966
      %v4996 = vpack.c.bf16 %v4969, %v4968
      %v4997 = vpack.c.bf16 %v4971, %v4970
      %v4998 = vpack.c.bf16 %v4973, %v4972
      %v4999 = vpack.c.bf16 %v4975, %v4974
      %v5000 = vpack.c.bf16 %v4977, %v4976
      %v5001 = vpack.c.bf16 %v4979, %v4978
      %v5002 = vpack.c.bf16 %v4981, %v4980
      %v5003 = vpack.c.bf16 %v4983, %v4982
      %v5004 = vpack.c.bf16 %v4985, %v4984
      %v5005 = vpack.c.bf16 %v4987, %v4986
      %v5006 = vpack.c.bf16 %v4989, %v4988
      %v5007 = vpack.c.bf16 %v4991, %v4990
      %v5024 = vunpack.c.l.b16 %v4992
      %v5025 = vunpack.c.h.b16 %v4992
      %v5026 = vunpack.c.l.b16 %v4993
      %v5027 = vunpack.c.h.b16 %v4993
      %v5028 = vunpack.c.l.b16 %v4994
      %v5029 = vunpack.c.h.b16 %v4994
      %v5030 = vunpack.c.l.b16 %v4995
      %v5031 = vunpack.c.h.b16 %v4995
      %v5032 = vunpack.c.l.b16 %v4996
      %v5033 = vunpack.c.h.b16 %v4996
      %v5034 = vunpack.c.l.b16 %v4997
      %v5035 = vunpack.c.h.b16 %v4997
      %v5036 = vunpack.c.l.b16 %v4998
      %v5037 = vunpack.c.h.b16 %v4998
      %v5038 = vunpack.c.l.b16 %v4999
      %v5039 = vunpack.c.h.b16 %v4999
      %v5040 = vunpack.c.l.b16 %v5000
      %v5041 = vunpack.c.h.b16 %v5000
      %v5042 = vunpack.c.l.b16 %v5001
      %v5043 = vunpack.c.h.b16 %v5001
      %v5044 = vunpack.c.l.b16 %v5002
      %v5045 = vunpack.c.h.b16 %v5002
      %v5046 = vunpack.c.l.b16 %v5003
      %v5047 = vunpack.c.h.b16 %v5003
      %v5048 = vunpack.c.l.b16 %v5004
      %v5049 = vunpack.c.h.b16 %v5004
      %v5050 = vunpack.c.l.b16 %v5005
      %v5051 = vunpack.c.h.b16 %v5005
      %v5052 = vunpack.c.l.b16 %v5006
      %v5053 = vunpack.c.h.b16 %v5006
      %v5054 = vunpack.c.l.b16 %v5007
      %v5055 = vunpack.c.h.b16 %v5007
      %v5056 = vpack.c.b16 %v5024, %v5024
      %v5057 = vpack.c.b16 %v5025, %v5025
      %v5058 = vpack.c.b16 %v5026, %v5026
      %v5059 = vpack.c.b16 %v5027, %v5027
      %v5060 = vpack.c.b16 %v5028, %v5028
      %v5061 = vpack.c.b16 %v5029, %v5029
      %v5062 = vpack.c.b16 %v5030, %v5030
      %v5063 = vpack.c.b16 %v5031, %v5031
      %v5064 = vpack.c.b16 %v5032, %v5032
      %v5065 = vpack.c.b16 %v5033, %v5033
      %v5066 = vpack.c.b16 %v5034, %v5034
      %v5067 = vpack.c.b16 %v5035, %v5035
      %v5068 = vpack.c.b16 %v5036, %v5036
      %v5069 = vpack.c.b16 %v5037, %v5037
      %v5070 = vpack.c.b16 %v5038, %v5038
      %v5071 = vpack.c.b16 %v5039, %v5039
      %v5072 = vpack.c.b16 %v5040, %v5040
      %v5073 = vpack.c.b16 %v5041, %v5041
      %v5074 = vpack.c.b16 %v5042, %v5042
      %v5075 = vpack.c.b16 %v5043, %v5043
      %v5076 = vpack.c.b16 %v5044, %v5044
      %v5077 = vpack.c.b16 %v5045, %v5045
      %v5078 = vpack.c.b16 %v5046, %v5046
      %v5079 = vpack.c.b16 %v5047, %v5047
      %v5080 = vpack.c.b16 %v5048, %v5048
      %v5081 = vpack.c.b16 %v5049, %v5049
      %v5082 = vpack.c.b16 %v5050, %v5050
      %v5083 = vpack.c.b16 %v5051, %v5051
      %v5084 = vpack.c.b16 %v5052, %v5052
      %v5085 = vpack.c.b16 %v5053, %v5053
      %v5086 = vpack.c.b16 %v5054, %v5054
      %v5087 = vpack.c.b16 %v5055, %v5055
      %5120 = vst [vmem:[%s177] sm:$0xf] %v5056
      %5121 = vst [vmem:[%s177 + $0x4] sm:$0xf] %v5057
      %5122 = vst [vmem:[%s177 + $0x8] sm:$0xf] %v5058
      %5123 = vst [vmem:[%s177 + $0xc] sm:$0xf] %v5059
      %5124 = vst [vmem:[%s177 + $0x10] sm:$0xf] %v5060
      %5125 = vst [vmem:[%s177 + $0x14] sm:$0xf] %v5061
      %5126 = vst [vmem:[%s177 + $0x18] sm:$0xf] %v5062
      %5127 = vst [vmem:[%s177 + $0x1c] sm:$0xf] %v5063
      %5128 = vst [vmem:[%s177 + $0x20] sm:$0xf] %v5064
      %5129 = vst [vmem:[%s177 + $0x24] sm:$0xf] %v5065
      %5130 = vst [vmem:[%s177 + $0x28] sm:$0xf] %v5066
      %5131 = vst [vmem:[%s177 + $0x2c] sm:$0xf] %v5067
      %5132 = vst [vmem:[%s177 + $0x30] sm:$0xf] %v5068
      %5133 = vst [vmem:[%s177 + $0x34] sm:$0xf] %v5069
      %5134 = vst [vmem:[%s177 + $0x38] sm:$0xf] %v5070
      %5135 = vst [vmem:[%s177 + $0x3c] sm:$0xf] %v5071
      %5136 = vst [vmem:[%s177 + $0x40] sm:$0xf] %v5072
      %5137 = vst [vmem:[%s177 + $0x44] sm:$0xf] %v5073
      %5138 = vst [vmem:[%s177 + $0x48] sm:$0xf] %v5074
      %5139 = vst [vmem:[%s177 + $0x4c] sm:$0xf] %v5075
      %5140 = vst [vmem:[%s177 + $0x50] sm:$0xf] %v5076
      %5141 = vst [vmem:[%s177 + $0x54] sm:$0xf] %v5077
      %5142 = vst [vmem:[%s177 + $0x58] sm:$0xf] %v5078
      %5143 = vst [vmem:[%s177 + $0x5c] sm:$0xf] %v5079
      %5144 = vst [vmem:[%s177 + $0x60] sm:$0xf] %v5080
      %5145 = vst [vmem:[%s177 + $0x64] sm:$0xf] %v5081
      %5146 = vst [vmem:[%s177 + $0x68] sm:$0xf] %v5082
      %5147 = vst [vmem:[%s177 + $0x6c] sm:$0xf] %v5083
      %5148 = vst [vmem:[%s177 + $0x70] sm:$0xf] %v5084
      %5149 = vst [vmem:[%s177 + $0x74] sm:$0xf] %v5085
      %5150 = vst [vmem:[%s177 + $0x78] sm:$0xf] %v5086
      %5151 = vst [vmem:[%s177 + $0x7c] sm:$0xf] %v5087
      %v5152 = vadd.f32 %v4960, %v4961
      %v5153 = vadd.f32 %v5152, %v4962
      %v5154 = vadd.f32 %v5153, %v4963
      %v5155 = vadd.f32 %v5154, %v4964
      %v5156 = vadd.f32 %v5155, %v4965
      %v5157 = vadd.f32 %v5156, %v4966
      %v5158 = vadd.f32 %v5157, %v4967
      %v5159 = vadd.f32 %v5158, %v4968
      %v5160 = vadd.f32 %v5159, %v4969
      %v5161 = vadd.f32 %v5160, %v4970
      %v5162 = vadd.f32 %v5161, %v4971
      %v5163 = vadd.f32 %v5162, %v4972
      %v5164 = vadd.f32 %v5163, %v4973
      %v5165 = vadd.f32 %v5164, %v4974
      %v5166 = vadd.f32 %v5165, %v4975
      %v5167 = vadd.f32 %v5166, %v4976
      %v5168 = vadd.f32 %v5167, %v4977
      %v5169 = vadd.f32 %v5168, %v4978
      %v5170 = vadd.f32 %v5169, %v4979
      %v5171 = vadd.f32 %v5170, %v4980
      %v5172 = vadd.f32 %v5171, %v4981
      %v5173 = vadd.f32 %v5172, %v4982
      %v5174 = vadd.f32 %v5173, %v4983
      %v5175 = vadd.f32 %v5174, %v4984
      %v5176 = vadd.f32 %v5175, %v4985
      %v5177 = vadd.f32 %v5176, %v4986
      %v5178 = vadd.f32 %v5177, %v4987
      %v5179 = vadd.f32 %v5178, %v4988
      %v5180 = vadd.f32 %v5179, %v4989
      %v5181 = vadd.f32 %v5180, %v4990
      %v5182 = vadd.f32 %v5181, %v4991
      %v5183 = vrot.slane %v5182, 4
      %v5184 = vadd.f32 %v5182, %v5183
      %v5185 = vrot.slane %v5184, 2
      %v5186 = vadd.f32 %v5184, %v5185
      %v5187 = vrot.slane %v5186, 1
      %v5188 = vadd.f32 %v5186, %v5187
      %5189 = vst [vmem:[%s181] sm:$0x1] %v5188
      %v5190 = vmul.f32 %v4960, %v4960
      %v5191 = vmul.f32 %v4961, %v4961
      %v5192 = vmul.f32 %v4962, %v4962
      %v5193 = vmul.f32 %v4963, %v4963
      %v5194 = vmul.f32 %v4964, %v4964
      %v5195 = vmul.f32 %v4965, %v4965
      %v5196 = vmul.f32 %v4966, %v4966
      %v5197 = vmul.f32 %v4967, %v4967
      %v5198 = vmul.f32 %v4968, %v4968
      %v5199 = vmul.f32 %v4969, %v4969
      %v5200 = vmul.f32 %v4970, %v4970
      %v5201 = vmul.f32 %v4971, %v4971
      %v5202 = vmul.f32 %v4972, %v4972
      %v5203 = vmul.f32 %v4973, %v4973
      %v5204 = vmul.f32 %v4974, %v4974
      %v5205 = vmul.f32 %v4975, %v4975
      %v5206 = vmul.f32 %v4976, %v4976
      %v5207 = vmul.f32 %v4977, %v4977
      %v5208 = vmul.f32 %v4978, %v4978
      %v5209 = vmul.f32 %v4979, %v4979
      %v5210 = vmul.f32 %v4980, %v4980
      %v5211 = vmul.f32 %v4981, %v4981
      %v5212 = vmul.f32 %v4982, %v4982
      %v5213 = vmul.f32 %v4983, %v4983
      %v5214 = vmul.f32 %v4984, %v4984
      %v5215 = vmul.f32 %v4985, %v4985
      %v5216 = vmul.f32 %v4986, %v4986
      %v5217 = vmul.f32 %v4987, %v4987
      %v5218 = vmul.f32 %v4988, %v4988
      %v5219 = vmul.f32 %v4989, %v4989
      %v5220 = vmul.f32 %v4990, %v4990
      %v5221 = vmul.f32 %v4991, %v4991
      %v5222 = vadd.f32 %v5190, %v5191
      %v5223 = vadd.f32 %v5222, %v5192
      %v5224 = vadd.f32 %v5223, %v5193
      %v5225 = vadd.f32 %v5224, %v5194
      %v5226 = vadd.f32 %v5225, %v5195
      %v5227 = vadd.f32 %v5226, %v5196
      %v5228 = vadd.f32 %v5227, %v5197
      %v5229 = vadd.f32 %v5228, %v5198
      %v5230 = vadd.f32 %v5229, %v5199
      %v5231 = vadd.f32 %v5230, %v5200
      %v5232 = vadd.f32 %v5231, %v5201
      %v5233 = vadd.f32 %v5232, %v5202
      %v5234 = vadd.f32 %v5233, %v5203
      %v5235 = vadd.f32 %v5234, %v5204
      %v5236 = vadd.f32 %v5235, %v5205
      %v5237 = vadd.f32 %v5236, %v5206
      %v5238 = vadd.f32 %v5237, %v5207
      %v5239 = vadd.f32 %v5238, %v5208
      %v5240 = vadd.f32 %v5239, %v5209
      %v5241 = vadd.f32 %v5240, %v5210
      %v5242 = vadd.f32 %v5241, %v5211
      %v5243 = vadd.f32 %v5242, %v5212
      %v5244 = vadd.f32 %v5243, %v5213
      %v5245 = vadd.f32 %v5244, %v5214
      %v5246 = vadd.f32 %v5245, %v5215
      %v5247 = vadd.f32 %v5246, %v5216
      %v5248 = vadd.f32 %v5247, %v5217
      %v5249 = vadd.f32 %v5248, %v5218
      %v5250 = vadd.f32 %v5249, %v5219
      %v5251 = vadd.f32 %v5250, %v5220
      %v5252 = vadd.f32 %v5251, %v5221
      %v5253 = vrot.slane %v5252, 4
      %v5254 = vadd.f32 %v5252, %v5253
      %v5255 = vrot.slane %v5254, 2
      %v5256 = vadd.f32 %v5254, %v5255
      %v5257 = vrot.slane %v5256, 1
      %v5258 = vadd.f32 %v5256, %v5257
      %5259 = vst [vmem:[%s181 + $0x1] sm:$0x1] %v5258
      %p5260 = scmp.lt.s32.totalorder %s15, 1
      %s5261 = scalar_select %p5260, %s15, 1
      %s5262 = smul.addr %s5261, 32
      %s5263 = smul.addr %s5262, 4
      %s5264 = scalar_lea.vmem %s2, %s5263
      %p5265 = scmp.lt.s32.totalorder %s15, 1
      %s5266 = scalar_select %p5265, %s15, 1
      %s5267 = smul.addr %s5266, 2
      %s5268 = scalar_lea.vmem %s3, %s5267
      // Predicated region
      $region29: #{bottleneck_bn.7} parent=27 // pred_check
        %p5269 = pneg %p80
      $region30: #{bottleneck_bn.7} parent=27 // pred_check_branch
        %5271 = sbr.rel (%p5269) target = $region32
      $region31: #{bottleneck_bn.7} parent=27 // pred_region
        _
      $region32: #{bottleneck_bn.7} parent=27 // pred_fallthru
        _
      // Predicated region
      $region33: #{bottleneck_bn.7} parent=27 // pred_check
        %p5272 = pneg %p106
      $region34: #{bottleneck_bn.7} parent=27 // pred_check_branch
        %5274 = sbr.rel (%p5272) target = $region36
      $region35: #{bottleneck_bn.7} parent=27 // pred_region
        _
      $region36: #{bottleneck_bn.7} parent=27 // pred_fallthru
        _
    $region28: #{bottleneck_bn.7} parent=5 // pred_fallthru
      _
    %p5275 = scmp.le.s32.totalorder 2, %s10
    // Predicated region
    $region37: #{bottleneck_bn.7} parent=5 // pred_check
      %p5276 = pneg %p5275
    $region38: #{bottleneck_bn.7} parent=5 // pred_check_branch
      %5278 = sbr.rel (%p5276) target = $region40
    $region39: #{bottleneck_bn.7} parent=5 // pred_region
      %s5279 = ssub.s32 %s10, 2
      // Predicated region
      $region41: #{bottleneck_bn.7} parent=39 // pred_check
        %p5280 = pneg %p86
      $region42: #{bottleneck_bn.7} parent=39 // pred_check_branch
        %5282 = sbr.rel (%p5280) target = $region44
      $region43: #{bottleneck_bn.7} parent=39 // pred_region
        %p5283 = scmp.lt.s32.totalorder %s16, 1
        %s5284 = scalar_select %p5283, %s16, 1
        %s5285 = smul.addr %s5284, 32
        %s5286 = smul.addr %s5285, 4
        %s5287 = scalar_lea.vmem %s2, %s5286
      $region44: #{bottleneck_bn.7} parent=39 // pred_fallthru
        _
      // Predicated region
      $region45: #{bottleneck_bn.7} parent=39 // pred_check
        %p5288 = pneg %p112
      $region46: #{bottleneck_bn.7} parent=39 // pred_check_branch
        %5290 = sbr.rel (%p5288) target = $region48
      $region47: #{bottleneck_bn.7} parent=39 // pred_region
        %p5291 = scmp.lt.s32.totalorder %s16, 1
        %s5292 = scalar_select %p5291, %s16, 1
        %s5293 = smul.addr %s5292, 2
        %s5294 = scalar_lea.vmem %s3, %s5293
      $region48: #{bottleneck_bn.7} parent=39 // pred_fallthru
        _
    $region40: #{bottleneck_bn.7} parent=5 // pred_fallthru
      _
  $region6: #{bottleneck_bn.7} parent=0 // loop_footer
    %s14 = sadd.s32 1, %s10
  $region7: #{bottleneck_bn.7} parent=0 // loop_footer_branch
    %9 = sbr.rel target = $region3
  $region8: #{bottleneck_bn.7} parent=0 // loop_exit
    _

</llo_original>
